<compile_context>
chip_gen: v5e
topology: v5e:2x2
jax: 0.10.0
libtpu: 0.0.40
codegen_flags: <defaults>
</compile_context>

<pallas_src>
import functools

import jax
import jax.numpy as jnp
from jax import lax
from jax.experimental import pallas as pl
from jax.experimental.pallas import tpu as pltpu

LANE = 128
SUBLANE = 8


def _round_up(x, m):
    return ((x + m - 1) // m) * m


def _basic_block_kernel(x_ref, w1_ref, s1_ref, b1_ref, w2_ref, s2_ref, b2_ref,
                        o_ref, h1_ref, *, th, n_strips, unroll):
    # x_ref : (1, H+2, W1g+2, CP) bf16  spatially (1 top/bot, 2 left) + channel
    #                                   zero-padded input
    # w*_ref: (3, 3, CP, CP)      bf16  conv weights (HWIO, channel padded)
    # s*/b* : (1, CP)             f32   folded BN scale / bias
    # o_ref : (1, H, W, CP)       f32   output
    # h1_ref: (H+2, W1g, CP)      bf16  VMEM scratch: zero-haloed conv1 output
    H, W, CP = o_ref.shape[1], o_ref.shape[2], o_ref.shape[3]
    W1g = h1_ref.shape[1]

    # Row halo of h1 (rows 0 and H+1) must be zero.  Zero it every step (only
    # 2 rows) so each grid step is fully independent (megacore-safe).
    zrow = jnp.zeros((W1g, CP), dtype=h1_ref.dtype)
    h1_ref[0, :, :] = zrow
    h1_ref[H + 1, :, :] = zrow

    # Column-halo handling folded into BN scale/bias: grid column jj of the
    # conv1 output maps to image column jj-1; outside [1, W] both scale and
    # bias are zeroed so relu(acc*0 + 0) == 0.  No extra select pass needed.
    jj = lax.broadcasted_iota(jnp.int32, (1, W1g, 1), 1)
    col_ok = ((jj >= 1) & (jj <= W)).astype(jnp.float32)
    s1m = s1_ref[...].reshape(1, 1, CP) * col_ok          # (1, W1g, CP)
    b1m = b1_ref[...].reshape(1, 1, CP) * col_ok
    s2v = s2_ref[...].reshape(1, 1, CP)
    b2v = b2_ref[...].reshape(1, 1, CP)

    # ---- conv1 + bn1 + relu, strip by strip (vreg-resident accumulator) ----
    # grid column jj computes conv1 output column jj-1 (so the strip stores
    # directly into the zero-haloed h1 layout conv2 needs).
    def conv1_strip(s, carry):
        r0 = pl.multiple_of(s * th, th)
        acc = jnp.zeros((th * W1g, CP), jnp.float32)
        for kh in range(3):
            for kw in range(3):
                patch = x_ref[0, pl.ds(r0 + kh, th), pl.ds(kw, W1g), :]
                acc = acc + jnp.dot(patch.reshape(th * W1g, CP),
                                    w1_ref[kh, kw],
                                    preferred_element_type=jnp.float32)
        h = jnp.maximum(acc.reshape(th, W1g, CP) * s1m + b1m, 0.0)
        h1_ref[pl.ds(r0 + 1, th), :, :] = h.astype(h1_ref.dtype)
        return carry

    lax.fori_loop(0, n_strips, conv1_strip, 0, unroll=unroll)

    # ---- conv2 + bn2 + residual + relu, strip by strip --------------------
    def conv2_strip(s, carry):
        r0 = pl.multiple_of(s * th, th)
        acc = jnp.zeros((th * W, CP), jnp.float32)
        for kh in range(3):
            for kw in range(3):
                patch = h1_ref[pl.ds(r0 + kh, th), pl.ds(kw, W), :]
                acc = acc + jnp.dot(patch.reshape(th * W, CP),
                                    w2_ref[kh, kw],
                                    preferred_element_type=jnp.float32)
        residual = x_ref[0, pl.ds(r0 + 1, th), pl.ds(2, W), :].astype(jnp.float32)
        out = jnp.maximum(acc.reshape(th, W, CP) * s2v + b2v + residual, 0.0)
        o_ref[0, pl.ds(r0, th), :, :] = out.astype(o_ref.dtype)
        return carry

    lax.fori_loop(0, n_strips, conv2_strip, 0, unroll=unroll)


def basic_block_pallas(x_nchw, w1_hwio, s1, b1, w2_hwio, s2, b2):
    """BasicBlock forward (stride=1, downsample=None), BN in inference mode.

    x_nchw: (N, C, H, W) float32; conv weights in HWIO. Returns (N, C, H, W).
    """
    x = jnp.transpose(x_nchw, (0, 2, 3, 1)).astype(jnp.float32)   # -> NHWC
    N, H, W, C = x.shape
    assert w1_hwio.shape[3] == C, "downsample=None requires Cin == Cout"

    CP = _round_up(max(C, LANE), LANE)       # lane-dense channel count
    W1g = _round_up(W + 2, SUBLANE)          # zero-haloed conv1-output width
    Hp, Wp = H + 2, W1g + 2                  # padded input extents

    # Row-strip size for in-kernel accumulation (keeps accumulators in vregs).
    th = SUBLANE if H % SUBLANE == 0 else H
    n_strips = H // th
    unroll = n_strips <= 4

    # One-time zero padding + bf16 cast in the wrapper (MXU-native operands).
    xpad = jnp.pad(x, ((0, 0), (1, 1), (2, Wp - W - 2), (0, CP - C)))
    xpad = xpad.astype(jnp.bfloat16)

    def pad_w(w):   # (3,3,I,O) -> (3,3,CP,CP) bf16
        return jnp.pad(w.astype(jnp.float32),
                       ((0, 0), (0, 0),
                        (0, CP - w.shape[2]),
                        (0, CP - w.shape[3]))).astype(jnp.bfloat16)

    def pad_v(v):   # (C,) -> (1, CP) f32
        return jnp.pad(v.astype(jnp.float32), (0, CP - v.shape[0])).reshape(1, CP)

    w1p, w2p = pad_w(w1_hwio), pad_w(w2_hwio)
    s1p, b1p, s2p, b2p = pad_v(s1), pad_v(b1), pad_v(s2), pad_v(b2)

    # Generation-aware scoped-VMEM budget (v5e/v6e: 128 MiB phys, v7x: 64 MiB).
    try:
        vmem_cap = int(getattr(pltpu.get_tpu_info(), "vmem_capacity_bytes",
                               64 * 1024 * 1024))
    except Exception:
        vmem_cap = 64 * 1024 * 1024
    vmem_limit = int(min(100 * 1024 * 1024, (vmem_cap * 3) // 4))

    kernel = functools.partial(_basic_block_kernel, th=th,
                               n_strips=n_strips, unroll=unroll)

    out = pl.pallas_call(
        kernel,
        out_shape=jax.ShapeDtypeStruct((N, H, W, CP), jnp.float32),
        grid_spec=pltpu.PrefetchScalarGridSpec(
            num_scalar_prefetch=0,
            grid=(N,),
            in_specs=[
                pl.BlockSpec((1, Hp, Wp, CP), lambda n: (n, 0, 0, 0)),
                pl.BlockSpec((3, 3, CP, CP), lambda n: (0, 0, 0, 0)),
                pl.BlockSpec((1, CP), lambda n: (0, 0)),
                pl.BlockSpec((1, CP), lambda n: (0, 0)),
                pl.BlockSpec((3, 3, CP, CP), lambda n: (0, 0, 0, 0)),
                pl.BlockSpec((1, CP), lambda n: (0, 0)),
                pl.BlockSpec((1, CP), lambda n: (0, 0)),
            ],
            out_specs=pl.BlockSpec((1, H, W, CP), lambda n: (n, 0, 0, 0)),
            scratch_shapes=[pltpu.VMEM((H + 2, W1g, CP), jnp.bfloat16)],
        ),
        compiler_params=pltpu.CompilerParams(
            dimension_semantics=("parallel",),        # batch steps independent
            vmem_limit_bytes=vmem_limit,
        ),
    )(xpad, w1p, s1p, b1p, w2p, s2p, b2p)

    # Drop channel padding, back to NCHW.
    # TODO(synk): when chaining BasicBlocks, keep activations in padded NHWC
    # layout end-to-end and transpose/slice only at network boundaries.
    return jnp.transpose(out[..., :C], (0, 3, 1, 2))


# --------------------------- reference (plain JAX) ---------------------------
def basic_block_ref(x_nchw, w1_oihw, s1, b1, w2_oihw, s2, b2):
    dn = ('NCHW', 'OIHW', 'NCHW')

    def conv(x, w):
        return lax.conv_general_dilated(x, w, window_strides=(1, 1),
                                        padding=((1, 1), (1, 1)),
                                        dimension_numbers=dn)

    def bn(x, s, b):
        return x * s[None, :, None, None] + b[None, :, None, None]

    out = jnp.maximum(bn(conv(x_nchw, w1_oihw), s1, b1), 0.0)
    out = bn(conv(out, w2_oihw), s2, b2) + x_nchw
    return jnp.maximum(out, 0.0)


if __name__ == "__main__":
    N, C, H, W = 2, 4, 16, 16           # in_planes = planes = 4, stride = 1
    planes = 4
    eps = 1e-5

    key = jax.random.PRNGKey(0)
    ks = jax.random.split(key, 11)

    x = jax.random.normal(ks[0], (N, C, H, W), jnp.float32)

    # conv weights, PyTorch layout (O, I, kh, kw)
    std = (2.0 / (9.0 * planes)) ** 0.5
    w1_oihw = jax.random.normal(ks[1], (planes, C, 3, 3), jnp.float32) * std
    w2_oihw = jax.random.normal(ks[2], (planes, planes, 3, 3), jnp.float32) * std

    # BatchNorm params (eval mode, running stats)
    gamma1 = 0.5 + jax.random.uniform(ks[3], (planes,), jnp.float32)
    beta1 = 0.1 * jax.random.normal(ks[4], (planes,), jnp.float32)
    mean1 = 0.1 * jax.random.normal(ks[5], (planes,), jnp.float32)
    var1 = 0.5 + jax.random.uniform(ks[6], (planes,), jnp.float32)
    gamma2 = 0.5 + jax.random.uniform(ks[7], (planes,), jnp.float32)
    beta2 = 0.1 * jax.random.normal(ks[8], (planes,), jnp.float32)
    mean2 = 0.1 * jax.random.normal(ks[9], (planes,), jnp.float32)
    var2 = 0.5 + jax.random.uniform(ks[10], (planes,), jnp.float32)

    # Fold BN into per-channel scale/bias
    s1 = gamma1 / jnp.sqrt(var1 + eps)
    b1 = beta1 - mean1 * s1
    s2 = gamma2 / jnp.sqrt(var2 + eps)
    b2 = beta2 - mean2 * s2

    # Conv weights OIHW -> HWIO for the NHWC kernel
    w1_hwio = jnp.transpose(w1_oihw, (2, 3, 1, 0))
    w2_hwio = jnp.transpose(w2_oihw, (2, 3, 1, 0))

    out = jax.jit(basic_block_pallas)(x, w1_hwio, s1, b1, w2_hwio, s2, b2)
    out = jax.block_until_ready(out)

    ref = basic_block_ref(x, w1_oihw, s1, b1, w2_oihw, s2, b2)
    assert out.shape == (N, C, H, W)
    # bf16 operands (f32 accumulation) -> loosen tolerance vs the f32 reference.
    assert jnp.allclose(out, ref, rtol=3e-2, atol=3e-2), \
        f"max abs err = {jnp.max(jnp.abs(out - ref))}"

    # TODO(synk): BatchNorm is implemented in inference mode (running stats);
    # PyTorch training-mode batch statistics are not reproduced.
    print("KERNEL_OK")
</pallas_src>

<mosaic_0001>
module attributes {stable_mosaic.version = 11 : i64} {
  func.func @_basic_block_kernel(%arg0: i32, %arg1: memref<1x18x26x128xbf16, #tpu.memory_space<vmem>>, %arg2: memref<3x3x128x128xbf16, #tpu.memory_space<vmem>>, %arg3: memref<1x128xf32, #tpu.memory_space<vmem>>, %arg4: memref<1x128xf32, #tpu.memory_space<vmem>>, %arg5: memref<3x3x128x128xbf16, #tpu.memory_space<vmem>>, %arg6: memref<1x128xf32, #tpu.memory_space<vmem>>, %arg7: memref<1x128xf32, #tpu.memory_space<vmem>>, %arg8: memref<1x16x16x128xf32, #tpu.memory_space<vmem>>, %arg9: memref<18x24x128xbf16, #tpu.memory_space<vmem>>) attributes {dimension_semantics = [#tpu.dimension_semantics<parallel>], iteration_bounds = array<i64: 2>, scalar_prefetch = 0 : i64, scratch_operands = 1 : i64, tpu.core_type = #tpu.core_type<tc>, window_params = [{transform_indices = @transform_0, window_bounds = array<i64: 1, 18, 26, 128>}, {pipeline_mode = #tpu.pipeline_mode<synchronous>, transform_indices = @transform_1, window_bounds = array<i64: 3, 3, 128, 128>}, {pipeline_mode = #tpu.pipeline_mode<synchronous>, transform_indices = @transform_2, window_bounds = array<i64: 1, 128>}, {pipeline_mode = #tpu.pipeline_mode<synchronous>, transform_indices = @transform_3, window_bounds = array<i64: 1, 128>}, {pipeline_mode = #tpu.pipeline_mode<synchronous>, transform_indices = @transform_4, window_bounds = array<i64: 3, 3, 128, 128>}, {pipeline_mode = #tpu.pipeline_mode<synchronous>, transform_indices = @transform_5, window_bounds = array<i64: 1, 128>}, {pipeline_mode = #tpu.pipeline_mode<synchronous>, transform_indices = @transform_6, window_bounds = array<i64: 1, 128>}, {transform_indices = @transform_7, window_bounds = array<i64: 1, 16, 16, 128>}]} {
    %cst = arith.constant 0.000000e+00 : bf16
    %0 = vector.broadcast %cst : bf16 to vector<24x128xbf16>
    %c0 = arith.constant 0 : index
    %c0_0 = arith.constant 0 : index
    %c0_1 = arith.constant 0 : index
    %1 = vector.load %arg9[%c0, %c0_0, %c0_1] : memref<18x24x128xbf16, #tpu.memory_space<vmem>>, vector<1x24x128xbf16>
    %2 = vector.shape_cast %1 : vector<1x24x128xbf16> to vector<24x128xbf16>
    %3 = vector.shape_cast %0 : vector<24x128xbf16> to vector<1x24x128xbf16>
    tpu.vector_store %arg9[%c0, %c0_0, %c0_1], %3 {strides = array<i32>} : memref<18x24x128xbf16, #tpu.memory_space<vmem>>, vector<1x24x128xbf16>,
    %c17 = arith.constant 17 : index
    %c0_2 = arith.constant 0 : index
    %c0_3 = arith.constant 0 : index
    %4 = vector.load %arg9[%c17, %c0_2, %c0_3] : memref<18x24x128xbf16, #tpu.memory_space<vmem>>, vector<1x24x128xbf16>
    %5 = vector.shape_cast %4 : vector<1x24x128xbf16> to vector<24x128xbf16>
    %6 = vector.shape_cast %0 : vector<24x128xbf16> to vector<1x24x128xbf16>
    tpu.vector_store %arg9[%c17, %c0_2, %c0_3], %6 {strides = array<i32>} : memref<18x24x128xbf16, #tpu.memory_space<vmem>>, vector<1x24x128xbf16>,
    %7 = tpu.iota {dimensions = array<i32: 1>} : vector<1x24x1xi32>
    %c1_i32 = arith.constant 1 : i32
    %8 = vector.broadcast %c1_i32 : i32 to vector<1x24x1xi32>
    %9 = arith.cmpi sge, %7, %8 : vector<1x24x1xi32>
    %c16_i32 = arith.constant 16 : i32
    %10 = vector.broadcast %c16_i32 : i32 to vector<1x24x1xi32>
    %11 = arith.cmpi sle, %7, %10 : vector<1x24x1xi32>
    %12 = arith.andi %9, %11 : vector<1x24x1xi1>
    %13 = arith.extui %12 : vector<1x24x1xi1> to vector<1x24x1xi32>
    %14 = arith.sitofp %13 : vector<1x24x1xi32> to vector<1x24x1xf32>
    %c0_4 = arith.constant 0 : index
    %c0_5 = arith.constant 0 : index
    %15 = vector.load %arg3[%c0_4, %c0_5] : memref<1x128xf32, #tpu.memory_space<vmem>>, vector<1x128xf32>
    %16 = vector.shape_cast %15 : vector<1x128xf32> to vector<1x1x128xf32>
    %17 = vector.broadcast %16 : vector<1x1x128xf32> to vector<1x24x128xf32>
    %18 = vector.broadcast %14 : vector<1x24x1xf32> to vector<1x24x128xf32>
    %19 = arith.mulf %17, %18 : vector<1x24x128xf32>
    %c0_6 = arith.constant 0 : index
    %c0_7 = arith.constant 0 : index
    %20 = vector.load %arg4[%c0_6, %c0_7] : memref<1x128xf32, #tpu.memory_space<vmem>>, vector<1x128xf32>
    %21 = vector.shape_cast %20 : vector<1x128xf32> to vector<1x1x128xf32>
    %22 = vector.broadcast %21 : vector<1x1x128xf32> to vector<1x24x128xf32>
    %23 = vector.broadcast %14 : vector<1x24x1xf32> to vector<1x24x128xf32>
    %24 = arith.mulf %22, %23 : vector<1x24x128xf32>
    %c0_8 = arith.constant 0 : index
    %c0_9 = arith.constant 0 : index
    %25 = vector.load %arg6[%c0_8, %c0_9] : memref<1x128xf32, #tpu.memory_space<vmem>>, vector<1x128xf32>
    %26 = vector.shape_cast %25 : vector<1x128xf32> to vector<1x1x128xf32>
    %c0_10 = arith.constant 0 : index
    %c0_11 = arith.constant 0 : index
    %27 = vector.load %arg7[%c0_10, %c0_11] : memref<1x128xf32, #tpu.memory_space<vmem>>, vector<1x128xf32>
    %28 = vector.shape_cast %27 : vector<1x128xf32> to vector<1x1x128xf32>
    %c0_i32 = arith.constant 0 : i32
    %c8_i32 = arith.constant 8 : i32
    %29 = arith.muli %c0_i32, %c8_i32 : i32
    %30 = tpu.assume_multiple %29, 8 : i32
    %cst_12 = arith.constant 0.000000e+00 : f32
    %31 = vector.broadcast %cst_12 : f32 to vector<192x128xf32>
    %c0_i32_13 = arith.constant 0 : i32
    %32 = arith.addi %30, %c0_i32_13 : i32
    %c0_14 = arith.constant 0 : index
    %33 = arith.index_cast %32 : i32 to index
    %c0_15 = arith.constant 0 : index
    %c0_16 = arith.constant 0 : index
    %34 = vector.load %arg1[%c0_14, %33, %c0_15, %c0_16] : memref<1x18x26x128xbf16, #tpu.memory_space<vmem>>, vector<1x8x24x128xbf16>
    %35 = vector.shape_cast %34 : vector<1x8x24x128xbf16> to vector<8x24x128xbf16>
    %36 = vector.shape_cast %35 : vector<8x24x128xbf16> to vector<192x128xbf16>
    %c0_17 = arith.constant 0 : index
    %c0_18 = arith.constant 0 : index
    %c0_19 = arith.constant 0 : index
    %c0_20 = arith.constant 0 : index
    %37 = vector.load %arg2[%c0_17, %c0_18, %c0_19, %c0_20] : memref<3x3x128x128xbf16, #tpu.memory_space<vmem>>, vector<1x1x128x128xbf16>
    %38 = vector.shape_cast %37 : vector<1x1x128x128xbf16> to vector<128x128xbf16>
    %cst_21 = arith.constant dense<0.000000e+00> : vector<192x128xf32>
    %39 = tpu.matmul %36, %38, %cst_21 {dimension_numbers = #tpu.dot_dimension_numbers<[1], [0], [0], [1], [0, 0, 1, 1], [], []>} : vector<192x128xbf16>, vector<128x128xbf16>, vector<192x128xf32> -> vector<192x128xf32>
    %40 = arith.addf %31, %39 : vector<192x128xf32>
    %c0_i32_22 = arith.constant 0 : i32
    %41 = arith.addi %30, %c0_i32_22 : i32
    %c0_23 = arith.constant 0 : index
    %42 = arith.index_cast %41 : i32 to index
    %c1 = arith.constant 1 : index
    %c0_24 = arith.constant 0 : index
    %43 = vector.load %arg1[%c0_23, %42, %c1, %c0_24] : memref<1x18x26x128xbf16, #tpu.memory_space<vmem>>, vector<1x8x24x128xbf16>
    %44 = vector.shape_cast %43 : vector<1x8x24x128xbf16> to vector<8x24x128xbf16>
    %45 = vector.shape_cast %44 : vector<8x24x128xbf16> to vector<192x128xbf16>
    %c0_25 = arith.constant 0 : index
    %c1_26 = arith.constant 1 : index
    %c0_27 = arith.constant 0 : index
    %c0_28 = arith.constant 0 : index
    %46 = vector.load %arg2[%c0_25, %c1_26, %c0_27, %c0_28] : memref<3x3x128x128xbf16, #tpu.memory_space<vmem>>, vector<1x1x128x128xbf16>
    %47 = vector.shape_cast %46 : vector<1x1x128x128xbf16> to vector<128x128xbf16>
    %cst_29 = arith.constant dense<0.000000e+00> : vector<192x128xf32>
    %48 = tpu.matmul %45, %47, %cst_29 {dimension_numbers = #tpu.dot_dimension_numbers<[1], [0], [0], [1], [0, 0, 1, 1], [], []>} : vector<192x128xbf16>, vector<128x128xbf16>, vector<192x128xf32> -> vector<192x128xf32>
    %49 = arith.addf %40, %48 : vector<192x128xf32>
    %c0_i32_30 = arith.constant 0 : i32
    %50 = arith.addi %30, %c0_i32_30 : i32
    %c0_31 = arith.constant 0 : index
    %51 = arith.index_cast %50 : i32 to index
    %c2 = arith.constant 2 : index
    %c0_32 = arith.constant 0 : index
    %52 = vector.load %arg1[%c0_31, %51, %c2, %c0_32] : memref<1x18x26x128xbf16, #tpu.memory_space<vmem>>, vector<1x8x24x128xbf16>
    %53 = vector.shape_cast %52 : vector<1x8x24x128xbf16> to vector<8x24x128xbf16>
    %54 = vector.shape_cast %53 : vector<8x24x128xbf16> to vector<192x128xbf16>
    %c0_33 = arith.constant 0 : index
    %c2_34 = arith.constant 2 : index
    %c0_35 = arith.constant 0 : index
    %c0_36 = arith.constant 0 : index
    %55 = vector.load %arg2[%c0_33, %c2_34, %c0_35, %c0_36] : memref<3x3x128x128xbf16, #tpu.memory_space<vmem>>, vector<1x1x128x128xbf16>
    %56 = vector.shape_cast %55 : vector<1x1x128x128xbf16> to vector<128x128xbf16>
    %cst_37 = arith.constant dense<0.000000e+00> : vector<192x128xf32>
    %57 = tpu.matmul %54, %56, %cst_37 {dimension_numbers = #tpu.dot_dimension_numbers<[1], [0], [0], [1], [0, 0, 1, 1], [], []>} : vector<192x128xbf16>, vector<128x128xbf16>, vector<192x128xf32> -> vector<192x128xf32>
    %58 = arith.addf %49, %57 : vector<192x128xf32>
    %c1_i32_38 = arith.constant 1 : i32
    %59 = arith.addi %30, %c1_i32_38 : i32
    %c0_39 = arith.constant 0 : index
    %60 = arith.index_cast %59 : i32 to index
    %c0_40 = arith.constant 0 : index
    %c0_41 = arith.constant 0 : index
    %61 = vector.load %arg1[%c0_39, %60, %c0_40, %c0_41] : memref<1x18x26x128xbf16, #tpu.memory_space<vmem>>, vector<1x8x24x128xbf16>
    %62 = vector.shape_cast %61 : vector<1x8x24x128xbf16> to vector<8x24x128xbf16>
    %63 = vector.shape_cast %62 : vector<8x24x128xbf16> to vector<192x128xbf16>
    %c1_42 = arith.constant 1 : index
    %c0_43 = arith.constant 0 : index
    %c0_44 = arith.constant 0 : index
    %c0_45 = arith.constant 0 : index
    %64 = vector.load %arg2[%c1_42, %c0_43, %c0_44, %c0_45] : memref<3x3x128x128xbf16, #tpu.memory_space<vmem>>, vector<1x1x128x128xbf16>
    %65 = vector.shape_cast %64 : vector<1x1x128x128xbf16> to vector<128x128xbf16>
    %cst_46 = arith.constant dense<0.000000e+00> : vector<192x128xf32>
    %66 = tpu.matmul %63, %65, %cst_46 {dimension_numbers = #tpu.dot_dimension_numbers<[1], [0], [0], [1], [0, 0, 1, 1], [], []>} : vector<192x128xbf16>, vector<128x128xbf16>, vector<192x128xf32> -> vector<192x128xf32>
    %67 = arith.addf %58, %66 : vector<192x128xf32>
    %c1_i32_47 = arith.constant 1 : i32
    %68 = arith.addi %30, %c1_i32_47 : i32
    %c0_48 = arith.constant 0 : index
    %69 = arith.index_cast %68 : i32 to index
    %c1_49 = arith.constant 1 : index
    %c0_50 = arith.constant 0 : index
    %70 = vector.load %arg1[%c0_48, %69, %c1_49, %c0_50] : memref<1x18x26x128xbf16, #tpu.memory_space<vmem>>, vector<1x8x24x128xbf16>
    %71 = vector.shape_cast %70 : vector<1x8x24x128xbf16> to vector<8x24x128xbf16>
    %72 = vector.shape_cast %71 : vector<8x24x128xbf16> to vector<192x128xbf16>
    %c1_51 = arith.constant 1 : index
    %c1_52 = arith.constant 1 : index
    %c0_53 = arith.constant 0 : index
    %c0_54 = arith.constant 0 : index
    %73 = vector.load %arg2[%c1_51, %c1_52, %c0_53, %c0_54] : memref<3x3x128x128xbf16, #tpu.memory_space<vmem>>, vector<1x1x128x128xbf16>
    %74 = vector.shape_cast %73 : vector<1x1x128x128xbf16> to vector<128x128xbf16>
    %cst_55 = arith.constant dense<0.000000e+00> : vector<192x128xf32>
    %75 = tpu.matmul %72, %74, %cst_55 {dimension_numbers = #tpu.dot_dimension_numbers<[1], [0], [0], [1], [0, 0, 1, 1], [], []>} : vector<192x128xbf16>, vector<128x128xbf16>, vector<192x128xf32> -> vector<192x128xf32>
    %76 = arith.addf %67, %75 : vector<192x128xf32>
    %c1_i32_56 = arith.constant 1 : i32
    %77 = arith.addi %30, %c1_i32_56 : i32
    %c0_57 = arith.constant 0 : index
    %78 = arith.index_cast %77 : i32 to index
    %c2_58 = arith.constant 2 : index
    %c0_59 = arith.constant 0 : index
    %79 = vector.load %arg1[%c0_57, %78, %c2_58, %c0_59] : memref<1x18x26x128xbf16, #tpu.memory_space<vmem>>, vector<1x8x24x128xbf16>
    %80 = vector.shape_cast %79 : vector<1x8x24x128xbf16> to vector<8x24x128xbf16>
    %81 = vector.shape_cast %80 : vector<8x24x128xbf16> to vector<192x128xbf16>
    %c1_60 = arith.constant 1 : index
    %c2_61 = arith.constant 2 : index
    %c0_62 = arith.constant 0 : index
    %c0_63 = arith.constant 0 : index
    %82 = vector.load %arg2[%c1_60, %c2_61, %c0_62, %c0_63] : memref<3x3x128x128xbf16, #tpu.memory_space<vmem>>, vector<1x1x128x128xbf16>
    %83 = vector.shape_cast %82 : vector<1x1x128x128xbf16> to vector<128x128xbf16>
    %cst_64 = arith.constant dense<0.000000e+00> : vector<192x128xf32>
    %84 = tpu.matmul %81, %83, %cst_64 {dimension_numbers = #tpu.dot_dimension_numbers<[1], [0], [0], [1], [0, 0, 1, 1], [], []>} : vector<192x128xbf16>, vector<128x128xbf16>, vector<192x128xf32> -> vector<192x128xf32>
    %85 = arith.addf %76, %84 : vector<192x128xf32>
    %c2_i32 = arith.constant 2 : i32
    %86 = arith.addi %30, %c2_i32 : i32
    %c0_65 = arith.constant 0 : index
    %87 = arith.index_cast %86 : i32 to index
    %c0_66 = arith.constant 0 : index
    %c0_67 = arith.constant 0 : index
    %88 = vector.load %arg1[%c0_65, %87, %c0_66, %c0_67] : memref<1x18x26x128xbf16, #tpu.memory_space<vmem>>, vector<1x8x24x128xbf16>
    %89 = vector.shape_cast %88 : vector<1x8x24x128xbf16> to vector<8x24x128xbf16>
    %90 = vector.shape_cast %89 : vector<8x24x128xbf16> to vector<192x128xbf16>
    %c2_68 = arith.constant 2 : index
    %c0_69 = arith.constant 0 : index
    %c0_70 = arith.constant 0 : index
    %c0_71 = arith.constant 0 : index
    %91 = vector.load %arg2[%c2_68, %c0_69, %c0_70, %c0_71] : memref<3x3x128x128xbf16, #tpu.memory_space<vmem>>, vector<1x1x128x128xbf16>
    %92 = vector.shape_cast %91 : vector<1x1x128x128xbf16> to vector<128x128xbf16>
    %cst_72 = arith.constant dense<0.000000e+00> : vector<192x128xf32>
    %93 = tpu.matmul %90, %92, %cst_72 {dimension_numbers = #tpu.dot_dimension_numbers<[1], [0], [0], [1], [0, 0, 1, 1], [], []>} : vector<192x128xbf16>, vector<128x128xbf16>, vector<192x128xf32> -> vector<192x128xf32>
    %94 = arith.addf %85, %93 : vector<192x128xf32>
    %c2_i32_73 = arith.constant 2 : i32
    %95 = arith.addi %30, %c2_i32_73 : i32
    %c0_74 = arith.constant 0 : index
    %96 = arith.index_cast %95 : i32 to index
    %c1_75 = arith.constant 1 : index
    %c0_76 = arith.constant 0 : index
    %97 = vector.load %arg1[%c0_74, %96, %c1_75, %c0_76] : memref<1x18x26x128xbf16, #tpu.memory_space<vmem>>, vector<1x8x24x128xbf16>
    %98 = vector.shape_cast %97 : vector<1x8x24x128xbf16> to vector<8x24x128xbf16>
    %99 = vector.shape_cast %98 : vector<8x24x128xbf16> to vector<192x128xbf16>
    %c2_77 = arith.constant 2 : index
    %c1_78 = arith.constant 1 : index
    %c0_79 = arith.constant 0 : index
    %c0_80 = arith.constant 0 : index
    %100 = vector.load %arg2[%c2_77, %c1_78, %c0_79, %c0_80] : memref<3x3x128x128xbf16, #tpu.memory_space<vmem>>, vector<1x1x128x128xbf16>
    %101 = vector.shape_cast %100 : vector<1x1x128x128xbf16> to vector<128x128xbf16>
    %cst_81 = arith.constant dense<0.000000e+00> : vector<192x128xf32>
    %102 = tpu.matmul %99, %101, %cst_81 {dimension_numbers = #tpu.dot_dimension_numbers<[1], [0], [0], [1], [0, 0, 1, 1], [], []>} : vector<192x128xbf16>, vector<128x128xbf16>, vector<192x128xf32> -> vector<192x128xf32>
    %103 = arith.addf %94, %102 : vector<192x128xf32>
    %c2_i32_82 = arith.constant 2 : i32
    %104 = arith.addi %30, %c2_i32_82 : i32
    %c0_83 = arith.constant 0 : index
    %105 = arith.index_cast %104 : i32 to index
    %c2_84 = arith.constant 2 : index
    %c0_85 = arith.constant 0 : index
    %106 = vector.load %arg1[%c0_83, %105, %c2_84, %c0_85] : memref<1x18x26x128xbf16, #tpu.memory_space<vmem>>, vector<1x8x24x128xbf16>
    %107 = vector.shape_cast %106 : vector<1x8x24x128xbf16> to vector<8x24x128xbf16>
    %108 = vector.shape_cast %107 : vector<8x24x128xbf16> to vector<192x128xbf16>
    %c2_86 = arith.constant 2 : index
    %c2_87 = arith.constant 2 : index
    %c0_88 = arith.constant 0 : index
    %c0_89 = arith.constant 0 : index
    %109 = vector.load %arg2[%c2_86, %c2_87, %c0_88, %c0_89] : memref<3x3x128x128xbf16, #tpu.memory_space<vmem>>, vector<1x1x128x128xbf16>
    %110 = vector.shape_cast %109 : vector<1x1x128x128xbf16> to vector<128x128xbf16>
    %cst_90 = arith.constant dense<0.000000e+00> : vector<192x128xf32>
    %111 = tpu.matmul %108, %110, %cst_90 {dimension_numbers = #tpu.dot_dimension_numbers<[1], [0], [0], [1], [0, 0, 1, 1], [], []>} : vector<192x128xbf16>, vector<128x128xbf16>, vector<192x128xf32> -> vector<192x128xf32>
    %112 = arith.addf %103, %111 : vector<192x128xf32>
    %113 = vector.shape_cast %112 : vector<192x128xf32> to vector<8x24x128xf32>
    %114 = vector.broadcast %19 : vector<1x24x128xf32> to vector<8x24x128xf32>
    %115 = arith.mulf %113, %114 : vector<8x24x128xf32>
    %116 = vector.broadcast %24 : vector<1x24x128xf32> to vector<8x24x128xf32>
    %117 = arith.addf %115, %116 : vector<8x24x128xf32>
    %cst_91 = arith.constant 0.000000e+00 : f32
    %118 = vector.broadcast %cst_91 : f32 to vector<8x24x128xf32>
    %119 = arith.maximumf %117, %118 : vector<8x24x128xf32>
    %120 = arith.truncf %119 : vector<8x24x128xf32> to vector<8x24x128xbf16>
    %c1_i32_92 = arith.constant 1 : i32
    %121 = arith.addi %30, %c1_i32_92 : i32
    %122 = arith.index_cast %121 : i32 to index
    %c0_93 = arith.constant 0 : index
    %c0_94 = arith.constant 0 : index
    %123 = vector.load %arg9[%122, %c0_93, %c0_94] : memref<18x24x128xbf16, #tpu.memory_space<vmem>>, vector<8x24x128xbf16>
    tpu.vector_store %arg9[%122, %c0_93, %c0_94], %120 {strides = array<i32>} : memref<18x24x128xbf16, #tpu.memory_space<vmem>>, vector<8x24x128xbf16>,
    %c1_i32_95 = arith.constant 1 : i32
    %c8_i32_96 = arith.constant 8 : i32
    %124 = arith.muli %c1_i32_95, %c8_i32_96 : i32
    %125 = tpu.assume_multiple %124, 8 : i32
    %cst_97 = arith.constant 0.000000e+00 : f32
    %126 = vector.broadcast %cst_97 : f32 to vector<192x128xf32>
    %c0_i32_98 = arith.constant 0 : i32
    %127 = arith.addi %125, %c0_i32_98 : i32
    %c0_99 = arith.constant 0 : index
    %128 = arith.index_cast %127 : i32 to index
    %c0_100 = arith.constant 0 : index
    %c0_101 = arith.constant 0 : index
    %129 = vector.load %arg1[%c0_99, %128, %c0_100, %c0_101] : memref<1x18x26x128xbf16, #tpu.memory_space<vmem>>, vector<1x8x24x128xbf16>
    %130 = vector.shape_cast %129 : vector<1x8x24x128xbf16> to vector<8x24x128xbf16>
    %131 = vector.shape_cast %130 : vector<8x24x128xbf16> to vector<192x128xbf16>
    %c0_102 = arith.constant 0 : index
    %c0_103 = arith.constant 0 : index
    %c0_104 = arith.constant 0 : index
    %c0_105 = arith.constant 0 : index
    %132 = vector.load %arg2[%c0_102, %c0_103, %c0_104, %c0_105] : memref<3x3x128x128xbf16, #tpu.memory_space<vmem>>, vector<1x1x128x128xbf16>
    %133 = vector.shape_cast %132 : vector<1x1x128x128xbf16> to vector<128x128xbf16>
    %cst_106 = arith.constant dense<0.000000e+00> : vector<192x128xf32>
    %134 = tpu.matmul %131, %133, %cst_106 {dimension_numbers = #tpu.dot_dimension_numbers<[1], [0], [0], [1], [0, 0, 1, 1], [], []>} : vector<192x128xbf16>, vector<128x128xbf16>, vector<192x128xf32> -> vector<192x128xf32>
    %135 = arith.addf %126, %134 : vector<192x128xf32>
    %c0_i32_107 = arith.constant 0 : i32
    %136 = arith.addi %125, %c0_i32_107 : i32
    %c0_108 = arith.constant 0 : index
    %137 = arith.index_cast %136 : i32 to index
    %c1_109 = arith.constant 1 : index
    %c0_110 = arith.constant 0 : index
    %138 = vector.load %arg1[%c0_108, %137, %c1_109, %c0_110] : memref<1x18x26x128xbf16, #tpu.memory_space<vmem>>, vector<1x8x24x128xbf16>
    %139 = vector.shape_cast %138 : vector<1x8x24x128xbf16> to vector<8x24x128xbf16>
    %140 = vector.shape_cast %139 : vector<8x24x128xbf16> to vector<192x128xbf16>
    %c0_111 = arith.constant 0 : index
    %c1_112 = arith.constant 1 : index
    %c0_113 = arith.constant 0 : index
    %c0_114 = arith.constant 0 : index
    %141 = vector.load %arg2[%c0_111, %c1_112, %c0_113, %c0_114] : memref<3x3x128x128xbf16, #tpu.memory_space<vmem>>, vector<1x1x128x128xbf16>
    %142 = vector.shape_cast %141 : vector<1x1x128x128xbf16> to vector<128x128xbf16>
    %cst_115 = arith.constant dense<0.000000e+00> : vector<192x128xf32>
    %143 = tpu.matmul %140, %142, %cst_115 {dimension_numbers = #tpu.dot_dimension_numbers<[1], [0], [0], [1], [0, 0, 1, 1], [], []>} : vector<192x128xbf16>, vector<128x128xbf16>, vector<192x128xf32> -> vector<192x128xf32>
    %144 = arith.addf %135, %143 : vector<192x128xf32>
    %c0_i32_116 = arith.constant 0 : i32
    %145 = arith.addi %125, %c0_i32_116 : i32
    %c0_117 = arith.constant 0 : index
    %146 = arith.index_cast %145 : i32 to index
    %c2_118 = arith.constant 2 : index
    %c0_119 = arith.constant 0 : index
    %147 = vector.load %arg1[%c0_117, %146, %c2_118, %c0_119] : memref<1x18x26x128xbf16, #tpu.memory_space<vmem>>, vector<1x8x24x128xbf16>
    %148 = vector.shape_cast %147 : vector<1x8x24x128xbf16> to vector<8x24x128xbf16>
    %149 = vector.shape_cast %148 : vector<8x24x128xbf16> to vector<192x128xbf16>
    %c0_120 = arith.constant 0 : index
    %c2_121 = arith.constant 2 : index
    %c0_122 = arith.constant 0 : index
    %c0_123 = arith.constant 0 : index
    %150 = vector.load %arg2[%c0_120, %c2_121, %c0_122, %c0_123] : memref<3x3x128x128xbf16, #tpu.memory_space<vmem>>, vector<1x1x128x128xbf16>
    %151 = vector.shape_cast %150 : vector<1x1x128x128xbf16> to vector<128x128xbf16>
    %cst_124 = arith.constant dense<0.000000e+00> : vector<192x128xf32>
    %152 = tpu.matmul %149, %151, %cst_124 {dimension_numbers = #tpu.dot_dimension_numbers<[1], [0], [0], [1], [0, 0, 1, 1], [], []>} : vector<192x128xbf16>, vector<128x128xbf16>, vector<192x128xf32> -> vector<192x128xf32>
    %153 = arith.addf %144, %152 : vector<192x128xf32>
    %c1_i32_125 = arith.constant 1 : i32
    %154 = arith.addi %125, %c1_i32_125 : i32
    %c0_126 = arith.constant 0 : index
    %155 = arith.index_cast %154 : i32 to index
    %c0_127 = arith.constant 0 : index
    %c0_128 = arith.constant 0 : index
    %156 = vector.load %arg1[%c0_126, %155, %c0_127, %c0_128] : memref<1x18x26x128xbf16, #tpu.memory_space<vmem>>, vector<1x8x24x128xbf16>
    %157 = vector.shape_cast %156 : vector<1x8x24x128xbf16> to vector<8x24x128xbf16>
    %158 = vector.shape_cast %157 : vector<8x24x128xbf16> to vector<192x128xbf16>
    %c1_129 = arith.constant 1 : index
    %c0_130 = arith.constant 0 : index
    %c0_131 = arith.constant 0 : index
    %c0_132 = arith.constant 0 : index
    %159 = vector.load %arg2[%c1_129, %c0_130, %c0_131, %c0_132] : memref<3x3x128x128xbf16, #tpu.memory_space<vmem>>, vector<1x1x128x128xbf16>
    %160 = vector.shape_cast %159 : vector<1x1x128x128xbf16> to vector<128x128xbf16>
    %cst_133 = arith.constant dense<0.000000e+00> : vector<192x128xf32>
    %161 = tpu.matmul %158, %160, %cst_133 {dimension_numbers = #tpu.dot_dimension_numbers<[1], [0], [0], [1], [0, 0, 1, 1], [], []>} : vector<192x128xbf16>, vector<128x128xbf16>, vector<192x128xf32> -> vector<192x128xf32>
    %162 = arith.addf %153, %161 : vector<192x128xf32>
    %c1_i32_134 = arith.constant 1 : i32
    %163 = arith.addi %125, %c1_i32_134 : i32
    %c0_135 = arith.constant 0 : index
    %164 = arith.index_cast %163 : i32 to index
    %c1_136 = arith.constant 1 : index
    %c0_137 = arith.constant 0 : index
    %165 = vector.load %arg1[%c0_135, %164, %c1_136, %c0_137] : memref<1x18x26x128xbf16, #tpu.memory_space<vmem>>, vector<1x8x24x128xbf16>
    %166 = vector.shape_cast %165 : vector<1x8x24x128xbf16> to vector<8x24x128xbf16>
    %167 = vector.shape_cast %166 : vector<8x24x128xbf16> to vector<192x128xbf16>
    %c1_138 = arith.constant 1 : index
    %c1_139 = arith.constant 1 : index
    %c0_140 = arith.constant 0 : index
    %c0_141 = arith.constant 0 : index
    %168 = vector.load %arg2[%c1_138, %c1_139, %c0_140, %c0_141] : memref<3x3x128x128xbf16, #tpu.memory_space<vmem>>, vector<1x1x128x128xbf16>
    %169 = vector.shape_cast %168 : vector<1x1x128x128xbf16> to vector<128x128xbf16>
    %cst_142 = arith.constant dense<0.000000e+00> : vector<192x128xf32>
    %170 = tpu.matmul %167, %169, %cst_142 {dimension_numbers = #tpu.dot_dimension_numbers<[1], [0], [0], [1], [0, 0, 1, 1], [], []>} : vector<192x128xbf16>, vector<128x128xbf16>, vector<192x128xf32> -> vector<192x128xf32>
    %171 = arith.addf %162, %170 : vector<192x128xf32>
    %c1_i32_143 = arith.constant 1 : i32
    %172 = arith.addi %125, %c1_i32_143 : i32
    %c0_144 = arith.constant 0 : index
    %173 = arith.index_cast %172 : i32 to index
    %c2_145 = arith.constant 2 : index
    %c0_146 = arith.constant 0 : index
    %174 = vector.load %arg1[%c0_144, %173, %c2_145, %c0_146] : memref<1x18x26x128xbf16, #tpu.memory_space<vmem>>, vector<1x8x24x128xbf16>
    %175 = vector.shape_cast %174 : vector<1x8x24x128xbf16> to vector<8x24x128xbf16>
    %176 = vector.shape_cast %175 : vector<8x24x128xbf16> to vector<192x128xbf16>
    %c1_147 = arith.constant 1 : index
    %c2_148 = arith.constant 2 : index
    %c0_149 = arith.constant 0 : index
    %c0_150 = arith.constant 0 : index
    %177 = vector.load %arg2[%c1_147, %c2_148, %c0_149, %c0_150] : memref<3x3x128x128xbf16, #tpu.memory_space<vmem>>, vector<1x1x128x128xbf16>
    %178 = vector.shape_cast %177 : vector<1x1x128x128xbf16> to vector<128x128xbf16>
    %cst_151 = arith.constant dense<0.000000e+00> : vector<192x128xf32>
    %179 = tpu.matmul %176, %178, %cst_151 {dimension_numbers = #tpu.dot_dimension_numbers<[1], [0], [0], [1], [0, 0, 1, 1], [], []>} : vector<192x128xbf16>, vector<128x128xbf16>, vector<192x128xf32> -> vector<192x128xf32>
    %180 = arith.addf %171, %179 : vector<192x128xf32>
    %c2_i32_152 = arith.constant 2 : i32
    %181 = arith.addi %125, %c2_i32_152 : i32
    %c0_153 = arith.constant 0 : index
    %182 = arith.index_cast %181 : i32 to index
    %c0_154 = arith.constant 0 : index
    %c0_155 = arith.constant 0 : index
    %183 = vector.load %arg1[%c0_153, %182, %c0_154, %c0_155] : memref<1x18x26x128xbf16, #tpu.memory_space<vmem>>, vector<1x8x24x128xbf16>
    %184 = vector.shape_cast %183 : vector<1x8x24x128xbf16> to vector<8x24x128xbf16>
    %185 = vector.shape_cast %184 : vector<8x24x128xbf16> to vector<192x128xbf16>
    %c2_156 = arith.constant 2 : index
    %c0_157 = arith.constant 0 : index
    %c0_158 = arith.constant 0 : index
    %c0_159 = arith.constant 0 : index
    %186 = vector.load %arg2[%c2_156, %c0_157, %c0_158, %c0_159] : memref<3x3x128x128xbf16, #tpu.memory_space<vmem>>, vector<1x1x128x128xbf16>
    %187 = vector.shape_cast %186 : vector<1x1x128x128xbf16> to vector<128x128xbf16>
    %cst_160 = arith.constant dense<0.000000e+00> : vector<192x128xf32>
    %188 = tpu.matmul %185, %187, %cst_160 {dimension_numbers = #tpu.dot_dimension_numbers<[1], [0], [0], [1], [0, 0, 1, 1], [], []>} : vector<192x128xbf16>, vector<128x128xbf16>, vector<192x128xf32> -> vector<192x128xf32>
    %189 = arith.addf %180, %188 : vector<192x128xf32>
    %c2_i32_161 = arith.constant 2 : i32
    %190 = arith.addi %125, %c2_i32_161 : i32
    %c0_162 = arith.constant 0 : index
    %191 = arith.index_cast %190 : i32 to index
    %c1_163 = arith.constant 1 : index
    %c0_164 = arith.constant 0 : index
    %192 = vector.load %arg1[%c0_162, %191, %c1_163, %c0_164] : memref<1x18x26x128xbf16, #tpu.memory_space<vmem>>, vector<1x8x24x128xbf16>
    %193 = vector.shape_cast %192 : vector<1x8x24x128xbf16> to vector<8x24x128xbf16>
    %194 = vector.shape_cast %193 : vector<8x24x128xbf16> to vector<192x128xbf16>
    %c2_165 = arith.constant 2 : index
    %c1_166 = arith.constant 1 : index
    %c0_167 = arith.constant 0 : index
    %c0_168 = arith.constant 0 : index
    %195 = vector.load %arg2[%c2_165, %c1_166, %c0_167, %c0_168] : memref<3x3x128x128xbf16, #tpu.memory_space<vmem>>, vector<1x1x128x128xbf16>
    %196 = vector.shape_cast %195 : vector<1x1x128x128xbf16> to vector<128x128xbf16>
    %cst_169 = arith.constant dense<0.000000e+00> : vector<192x128xf32>
    %197 = tpu.matmul %194, %196, %cst_169 {dimension_numbers = #tpu.dot_dimension_numbers<[1], [0], [0], [1], [0, 0, 1, 1], [], []>} : vector<192x128xbf16>, vector<128x128xbf16>, vector<192x128xf32> -> vector<192x128xf32>
    %198 = arith.addf %189, %197 : vector<192x128xf32>
    %c2_i32_170 = arith.constant 2 : i32
    %199 = arith.addi %125, %c2_i32_170 : i32
    %c0_171 = arith.constant 0 : index
    %200 = arith.index_cast %199 : i32 to index
    %c2_172 = arith.constant 2 : index
    %c0_173 = arith.constant 0 : index
    %201 = vector.load %arg1[%c0_171, %200, %c2_172, %c0_173] : memref<1x18x26x128xbf16, #tpu.memory_space<vmem>>, vector<1x8x24x128xbf16>
    %202 = vector.shape_cast %201 : vector<1x8x24x128xbf16> to vector<8x24x128xbf16>
    %203 = vector.shape_cast %202 : vector<8x24x128xbf16> to vector<192x128xbf16>
    %c2_174 = arith.constant 2 : index
    %c2_175 = arith.constant 2 : index
    %c0_176 = arith.constant 0 : index
    %c0_177 = arith.constant 0 : index
    %204 = vector.load %arg2[%c2_174, %c2_175, %c0_176, %c0_177] : memref<3x3x128x128xbf16, #tpu.memory_space<vmem>>, vector<1x1x128x128xbf16>
    %205 = vector.shape_cast %204 : vector<1x1x128x128xbf16> to vector<128x128xbf16>
    %cst_178 = arith.constant dense<0.000000e+00> : vector<192x128xf32>
    %206 = tpu.matmul %203, %205, %cst_178 {dimension_numbers = #tpu.dot_dimension_numbers<[1], [0], [0], [1], [0, 0, 1, 1], [], []>} : vector<192x128xbf16>, vector<128x128xbf16>, vector<192x128xf32> -> vector<192x128xf32>
    %207 = arith.addf %198, %206 : vector<192x128xf32>
    %208 = vector.shape_cast %207 : vector<192x128xf32> to vector<8x24x128xf32>
    %209 = vector.broadcast %19 : vector<1x24x128xf32> to vector<8x24x128xf32>
    %210 = arith.mulf %208, %209 : vector<8x24x128xf32>
    %211 = vector.broadcast %24 : vector<1x24x128xf32> to vector<8x24x128xf32>
    %212 = arith.addf %210, %211 : vector<8x24x128xf32>
    %cst_179 = arith.constant 0.000000e+00 : f32
    %213 = vector.broadcast %cst_179 : f32 to vector<8x24x128xf32>
    %214 = arith.maximumf %212, %213 : vector<8x24x128xf32>
    %215 = arith.truncf %214 : vector<8x24x128xf32> to vector<8x24x128xbf16>
    %c1_i32_180 = arith.constant 1 : i32
    %216 = arith.addi %125, %c1_i32_180 : i32
    %217 = arith.index_cast %216 : i32 to index
    %c0_181 = arith.constant 0 : index
    %c0_182 = arith.constant 0 : index
    %218 = vector.load %arg9[%217, %c0_181, %c0_182] : memref<18x24x128xbf16, #tpu.memory_space<vmem>>, vector<8x24x128xbf16>
    tpu.vector_store %arg9[%217, %c0_181, %c0_182], %215 {strides = array<i32>} : memref<18x24x128xbf16, #tpu.memory_space<vmem>>, vector<8x24x128xbf16>,
    %c2_i32_183 = arith.constant 2 : i32
    %c0_i32_184 = arith.constant 0 : i32
    %c8_i32_185 = arith.constant 8 : i32
    %219 = arith.muli %c0_i32_184, %c8_i32_185 : i32
    %220 = tpu.assume_multiple %219, 8 : i32
    %cst_186 = arith.constant 0.000000e+00 : f32
    %221 = vector.broadcast %cst_186 : f32 to vector<128x128xf32>
    %c0_i32_187 = arith.constant 0 : i32
    %222 = arith.addi %220, %c0_i32_187 : i32
    %223 = arith.index_cast %222 : i32 to index
    %c0_188 = arith.constant 0 : index
    %c0_189 = arith.constant 0 : index
    %224 = vector.load %arg9[%223, %c0_188, %c0_189] : memref<18x24x128xbf16, #tpu.memory_space<vmem>>, vector<8x16x128xbf16>
    %225 = vector.shape_cast %224 : vector<8x16x128xbf16> to vector<128x128xbf16>
    %c0_190 = arith.constant 0 : index
    %c0_191 = arith.constant 0 : index
    %c0_192 = arith.constant 0 : index
    %c0_193 = arith.constant 0 : index
    %226 = vector.load %arg5[%c0_190, %c0_191, %c0_192, %c0_193] : memref<3x3x128x128xbf16, #tpu.memory_space<vmem>>, vector<1x1x128x128xbf16>
    %227 = vector.shape_cast %226 : vector<1x1x128x128xbf16> to vector<128x128xbf16>
    %cst_194 = arith.constant dense<0.000000e+00> : vector<128x128xf32>
    %228 = tpu.matmul %225, %227, %cst_194 {dimension_numbers = #tpu.dot_dimension_numbers<[1], [0], [0], [1], [0, 0, 1, 1], [], []>} : vector<128x128xbf16>, vector<128x128xbf16>, vector<128x128xf32> -> vector<128x128xf32>
    %229 = arith.addf %221, %228 : vector<128x128xf32>
    %c0_i32_195 = arith.constant 0 : i32
    %230 = arith.addi %220, %c0_i32_195 : i32
    %231 = arith.index_cast %230 : i32 to index
    %c1_196 = arith.constant 1 : index
    %c0_197 = arith.constant 0 : index
    %232 = vector.load %arg9[%231, %c1_196, %c0_197] : memref<18x24x128xbf16, #tpu.memory_space<vmem>>, vector<8x16x128xbf16>
    %233 = vector.shape_cast %232 : vector<8x16x128xbf16> to vector<128x128xbf16>
    %c0_198 = arith.constant 0 : index
    %c1_199 = arith.constant 1 : index
    %c0_200 = arith.constant 0 : index
    %c0_201 = arith.constant 0 : index
    %234 = vector.load %arg5[%c0_198, %c1_199, %c0_200, %c0_201] : memref<3x3x128x128xbf16, #tpu.memory_space<vmem>>, vector<1x1x128x128xbf16>
    %235 = vector.shape_cast %234 : vector<1x1x128x128xbf16> to vector<128x128xbf16>
    %cst_202 = arith.constant dense<0.000000e+00> : vector<128x128xf32>
    %236 = tpu.matmul %233, %235, %cst_202 {dimension_numbers = #tpu.dot_dimension_numbers<[1], [0], [0], [1], [0, 0, 1, 1], [], []>} : vector<128x128xbf16>, vector<128x128xbf16>, vector<128x128xf32> -> vector<128x128xf32>
    %237 = arith.addf %229, %236 : vector<128x128xf32>
    %c0_i32_203 = arith.constant 0 : i32
    %238 = arith.addi %220, %c0_i32_203 : i32
    %239 = arith.index_cast %238 : i32 to index
    %c2_204 = arith.constant 2 : index
    %c0_205 = arith.constant 0 : index
    %240 = vector.load %arg9[%239, %c2_204, %c0_205] : memref<18x24x128xbf16, #tpu.memory_space<vmem>>, vector<8x16x128xbf16>
    %241 = vector.shape_cast %240 : vector<8x16x128xbf16> to vector<128x128xbf16>
    %c0_206 = arith.constant 0 : index
    %c2_207 = arith.constant 2 : index
    %c0_208 = arith.constant 0 : index
    %c0_209 = arith.constant 0 : index
    %242 = vector.load %arg5[%c0_206, %c2_207, %c0_208, %c0_209] : memref<3x3x128x128xbf16, #tpu.memory_space<vmem>>, vector<1x1x128x128xbf16>
    %243 = vector.shape_cast %242 : vector<1x1x128x128xbf16> to vector<128x128xbf16>
    %cst_210 = arith.constant dense<0.000000e+00> : vector<128x128xf32>
    %244 = tpu.matmul %241, %243, %cst_210 {dimension_numbers = #tpu.dot_dimension_numbers<[1], [0], [0], [1], [0, 0, 1, 1], [], []>} : vector<128x128xbf16>, vector<128x128xbf16>, vector<128x128xf32> -> vector<128x128xf32>
    %245 = arith.addf %237, %244 : vector<128x128xf32>
    %c1_i32_211 = arith.constant 1 : i32
    %246 = arith.addi %220, %c1_i32_211 : i32
    %247 = arith.index_cast %246 : i32 to index
    %c0_212 = arith.constant 0 : index
    %c0_213 = arith.constant 0 : index
    %248 = vector.load %arg9[%247, %c0_212, %c0_213] : memref<18x24x128xbf16, #tpu.memory_space<vmem>>, vector<8x16x128xbf16>
    %249 = vector.shape_cast %248 : vector<8x16x128xbf16> to vector<128x128xbf16>
    %c1_214 = arith.constant 1 : index
    %c0_215 = arith.constant 0 : index
    %c0_216 = arith.constant 0 : index
    %c0_217 = arith.constant 0 : index
    %250 = vector.load %arg5[%c1_214, %c0_215, %c0_216, %c0_217] : memref<3x3x128x128xbf16, #tpu.memory_space<vmem>>, vector<1x1x128x128xbf16>
    %251 = vector.shape_cast %250 : vector<1x1x128x128xbf16> to vector<128x128xbf16>
    %cst_218 = arith.constant dense<0.000000e+00> : vector<128x128xf32>
    %252 = tpu.matmul %249, %251, %cst_218 {dimension_numbers = #tpu.dot_dimension_numbers<[1], [0], [0], [1], [0, 0, 1, 1], [], []>} : vector<128x128xbf16>, vector<128x128xbf16>, vector<128x128xf32> -> vector<128x128xf32>
    %253 = arith.addf %245, %252 : vector<128x128xf32>
    %c1_i32_219 = arith.constant 1 : i32
    %254 = arith.addi %220, %c1_i32_219 : i32
    %255 = arith.index_cast %254 : i32 to index
    %c1_220 = arith.constant 1 : index
    %c0_221 = arith.constant 0 : index
    %256 = vector.load %arg9[%255, %c1_220, %c0_221] : memref<18x24x128xbf16, #tpu.memory_space<vmem>>, vector<8x16x128xbf16>
    %257 = vector.shape_cast %256 : vector<8x16x128xbf16> to vector<128x128xbf16>
    %c1_222 = arith.constant 1 : index
    %c1_223 = arith.constant 1 : index
    %c0_224 = arith.constant 0 : index
    %c0_225 = arith.constant 0 : index
    %258 = vector.load %arg5[%c1_222, %c1_223, %c0_224, %c0_225] : memref<3x3x128x128xbf16, #tpu.memory_space<vmem>>, vector<1x1x128x128xbf16>
    %259 = vector.shape_cast %258 : vector<1x1x128x128xbf16> to vector<128x128xbf16>
    %cst_226 = arith.constant dense<0.000000e+00> : vector<128x128xf32>
    %260 = tpu.matmul %257, %259, %cst_226 {dimension_numbers = #tpu.dot_dimension_numbers<[1], [0], [0], [1], [0, 0, 1, 1], [], []>} : vector<128x128xbf16>, vector<128x128xbf16>, vector<128x128xf32> -> vector<128x128xf32>
    %261 = arith.addf %253, %260 : vector<128x128xf32>
    %c1_i32_227 = arith.constant 1 : i32
    %262 = arith.addi %220, %c1_i32_227 : i32
    %263 = arith.index_cast %262 : i32 to index
    %c2_228 = arith.constant 2 : index
    %c0_229 = arith.constant 0 : index
    %264 = vector.load %arg9[%263, %c2_228, %c0_229] : memref<18x24x128xbf16, #tpu.memory_space<vmem>>, vector<8x16x128xbf16>
    %265 = vector.shape_cast %264 : vector<8x16x128xbf16> to vector<128x128xbf16>
    %c1_230 = arith.constant 1 : index
    %c2_231 = arith.constant 2 : index
    %c0_232 = arith.constant 0 : index
    %c0_233 = arith.constant 0 : index
    %266 = vector.load %arg5[%c1_230, %c2_231, %c0_232, %c0_233] : memref<3x3x128x128xbf16, #tpu.memory_space<vmem>>, vector<1x1x128x128xbf16>
    %267 = vector.shape_cast %266 : vector<1x1x128x128xbf16> to vector<128x128xbf16>
    %cst_234 = arith.constant dense<0.000000e+00> : vector<128x128xf32>
    %268 = tpu.matmul %265, %267, %cst_234 {dimension_numbers = #tpu.dot_dimension_numbers<[1], [0], [0], [1], [0, 0, 1, 1], [], []>} : vector<128x128xbf16>, vector<128x128xbf16>, vector<128x128xf32> -> vector<128x128xf32>
    %269 = arith.addf %261, %268 : vector<128x128xf32>
    %c2_i32_235 = arith.constant 2 : i32
    %270 = arith.addi %220, %c2_i32_235 : i32
    %271 = arith.index_cast %270 : i32 to index
    %c0_236 = arith.constant 0 : index
    %c0_237 = arith.constant 0 : index
    %272 = vector.load %arg9[%271, %c0_236, %c0_237] : memref<18x24x128xbf16, #tpu.memory_space<vmem>>, vector<8x16x128xbf16>
    %273 = vector.shape_cast %272 : vector<8x16x128xbf16> to vector<128x128xbf16>
    %c2_238 = arith.constant 2 : index
    %c0_239 = arith.constant 0 : index
    %c0_240 = arith.constant 0 : index
    %c0_241 = arith.constant 0 : index
    %274 = vector.load %arg5[%c2_238, %c0_239, %c0_240, %c0_241] : memref<3x3x128x128xbf16, #tpu.memory_space<vmem>>, vector<1x1x128x128xbf16>
    %275 = vector.shape_cast %274 : vector<1x1x128x128xbf16> to vector<128x128xbf16>
    %cst_242 = arith.constant dense<0.000000e+00> : vector<128x128xf32>
    %276 = tpu.matmul %273, %275, %cst_242 {dimension_numbers = #tpu.dot_dimension_numbers<[1], [0], [0], [1], [0, 0, 1, 1], [], []>} : vector<128x128xbf16>, vector<128x128xbf16>, vector<128x128xf32> -> vector<128x128xf32>
    %277 = arith.addf %269, %276 : vector<128x128xf32>
    %c2_i32_243 = arith.constant 2 : i32
    %278 = arith.addi %220, %c2_i32_243 : i32
    %279 = arith.index_cast %278 : i32 to index
    %c1_244 = arith.constant 1 : index
    %c0_245 = arith.constant 0 : index
    %280 = vector.load %arg9[%279, %c1_244, %c0_245] : memref<18x24x128xbf16, #tpu.memory_space<vmem>>, vector<8x16x128xbf16>
    %281 = vector.shape_cast %280 : vector<8x16x128xbf16> to vector<128x128xbf16>
    %c2_246 = arith.constant 2 : index
    %c1_247 = arith.constant 1 : index
    %c0_248 = arith.constant 0 : index
    %c0_249 = arith.constant 0 : index
    %282 = vector.load %arg5[%c2_246, %c1_247, %c0_248, %c0_249] : memref<3x3x128x128xbf16, #tpu.memory_space<vmem>>, vector<1x1x128x128xbf16>
    %283 = vector.shape_cast %282 : vector<1x1x128x128xbf16> to vector<128x128xbf16>
    %cst_250 = arith.constant dense<0.000000e+00> : vector<128x128xf32>
    %284 = tpu.matmul %281, %283, %cst_250 {dimension_numbers = #tpu.dot_dimension_numbers<[1], [0], [0], [1], [0, 0, 1, 1], [], []>} : vector<128x128xbf16>, vector<128x128xbf16>, vector<128x128xf32> -> vector<128x128xf32>
    %285 = arith.addf %277, %284 : vector<128x128xf32>
    %c2_i32_251 = arith.constant 2 : i32
    %286 = arith.addi %220, %c2_i32_251 : i32
    %287 = arith.index_cast %286 : i32 to index
    %c2_252 = arith.constant 2 : index
    %c0_253 = arith.constant 0 : index
    %288 = vector.load %arg9[%287, %c2_252, %c0_253] : memref<18x24x128xbf16, #tpu.memory_space<vmem>>, vector<8x16x128xbf16>
    %289 = vector.shape_cast %288 : vector<8x16x128xbf16> to vector<128x128xbf16>
    %c2_254 = arith.constant 2 : index
    %c2_255 = arith.constant 2 : index
    %c0_256 = arith.constant 0 : index
    %c0_257 = arith.constant 0 : index
    %290 = vector.load %arg5[%c2_254, %c2_255, %c0_256, %c0_257] : memref<3x3x128x128xbf16, #tpu.memory_space<vmem>>, vector<1x1x128x128xbf16>
    %291 = vector.shape_cast %290 : vector<1x1x128x128xbf16> to vector<128x128xbf16>
    %cst_258 = arith.constant dense<0.000000e+00> : vector<128x128xf32>
    %292 = tpu.matmul %289, %291, %cst_258 {dimension_numbers = #tpu.dot_dimension_numbers<[1], [0], [0], [1], [0, 0, 1, 1], [], []>} : vector<128x128xbf16>, vector<128x128xbf16>, vector<128x128xf32> -> vector<128x128xf32>
    %293 = arith.addf %285, %292 : vector<128x128xf32>
    %c1_i32_259 = arith.constant 1 : i32
    %294 = arith.addi %220, %c1_i32_259 : i32
    %c0_260 = arith.constant 0 : index
    %295 = arith.index_cast %294 : i32 to index
    %c2_261 = arith.constant 2 : index
    %c0_262 = arith.constant 0 : index
    %296 = vector.load %arg1[%c0_260, %295, %c2_261, %c0_262] : memref<1x18x26x128xbf16, #tpu.memory_space<vmem>>, vector<1x8x16x128xbf16>
    %297 = vector.shape_cast %296 : vector<1x8x16x128xbf16> to vector<8x16x128xbf16>
    %298 = arith.extf %297 : vector<8x16x128xbf16> to vector<8x16x128xf32>
    %299 = vector.shape_cast %293 : vector<128x128xf32> to vector<8x16x128xf32>
    %300 = vector.broadcast %26 : vector<1x1x128xf32> to vector<8x16x128xf32>
    %301 = arith.mulf %299, %300 : vector<8x16x128xf32>
    %302 = vector.broadcast %28 : vector<1x1x128xf32> to vector<8x16x128xf32>
    %303 = arith.addf %301, %302 : vector<8x16x128xf32>
    %304 = arith.addf %303, %298 : vector<8x16x128xf32>
    %cst_263 = arith.constant 0.000000e+00 : f32
    %305 = vector.broadcast %cst_263 : f32 to vector<8x16x128xf32>
    %306 = arith.maximumf %304, %305 : vector<8x16x128xf32>
    %c0_264 = arith.constant 0 : index
    %307 = arith.index_cast %220 : i32 to index
    %c0_265 = arith.constant 0 : index
    %c0_266 = arith.constant 0 : index
    %308 = vector.load %arg8[%c0_264, %307, %c0_265, %c0_266] : memref<1x16x16x128xf32, #tpu.memory_space<vmem>>, vector<1x8x16x128xf32>
    %309 = vector.shape_cast %308 : vector<1x8x16x128xf32> to vector<8x16x128xf32>
    %310 = vector.shape_cast %306 : vector<8x16x128xf32> to vector<1x8x16x128xf32>
    tpu.vector_store %arg8[%c0_264, %307, %c0_265, %c0_266], %310 {strides = array<i32>} : memref<1x16x16x128xf32, #tpu.memory_space<vmem>>, vector<1x8x16x128xf32>,
    %c1_i32_267 = arith.constant 1 : i32
    %c8_i32_268 = arith.constant 8 : i32
    %311 = arith.muli %c1_i32_267, %c8_i32_268 : i32
    %312 = tpu.assume_multiple %311, 8 : i32
    %cst_269 = arith.constant 0.000000e+00 : f32
    %313 = vector.broadcast %cst_269 : f32 to vector<128x128xf32>
    %c0_i32_270 = arith.constant 0 : i32
    %314 = arith.addi %312, %c0_i32_270 : i32
    %315 = arith.index_cast %314 : i32 to index
    %c0_271 = arith.constant 0 : index
    %c0_272 = arith.constant 0 : index
    %316 = vector.load %arg9[%315, %c0_271, %c0_272] : memref<18x24x128xbf16, #tpu.memory_space<vmem>>, vector<8x16x128xbf16>
    %317 = vector.shape_cast %316 : vector<8x16x128xbf16> to vector<128x128xbf16>
    %c0_273 = arith.constant 0 : index
    %c0_274 = arith.constant 0 : index
    %c0_275 = arith.constant 0 : index
    %c0_276 = arith.constant 0 : index
    %318 = vector.load %arg5[%c0_273, %c0_274, %c0_275, %c0_276] : memref<3x3x128x128xbf16, #tpu.memory_space<vmem>>, vector<1x1x128x128xbf16>
    %319 = vector.shape_cast %318 : vector<1x1x128x128xbf16> to vector<128x128xbf16>
    %cst_277 = arith.constant dense<0.000000e+00> : vector<128x128xf32>
    %320 = tpu.matmul %317, %319, %cst_277 {dimension_numbers = #tpu.dot_dimension_numbers<[1], [0], [0], [1], [0, 0, 1, 1], [], []>} : vector<128x128xbf16>, vector<128x128xbf16>, vector<128x128xf32> -> vector<128x128xf32>
    %321 = arith.addf %313, %320 : vector<128x128xf32>
    %c0_i32_278 = arith.constant 0 : i32
    %322 = arith.addi %312, %c0_i32_278 : i32
    %323 = arith.index_cast %322 : i32 to index
    %c1_279 = arith.constant 1 : index
    %c0_280 = arith.constant 0 : index
    %324 = vector.load %arg9[%323, %c1_279, %c0_280] : memref<18x24x128xbf16, #tpu.memory_space<vmem>>, vector<8x16x128xbf16>
    %325 = vector.shape_cast %324 : vector<8x16x128xbf16> to vector<128x128xbf16>
    %c0_281 = arith.constant 0 : index
    %c1_282 = arith.constant 1 : index
    %c0_283 = arith.constant 0 : index
    %c0_284 = arith.constant 0 : index
    %326 = vector.load %arg5[%c0_281, %c1_282, %c0_283, %c0_284] : memref<3x3x128x128xbf16, #tpu.memory_space<vmem>>, vector<1x1x128x128xbf16>
    %327 = vector.shape_cast %326 : vector<1x1x128x128xbf16> to vector<128x128xbf16>
    %cst_285 = arith.constant dense<0.000000e+00> : vector<128x128xf32>
    %328 = tpu.matmul %325, %327, %cst_285 {dimension_numbers = #tpu.dot_dimension_numbers<[1], [0], [0], [1], [0, 0, 1, 1], [], []>} : vector<128x128xbf16>, vector<128x128xbf16>, vector<128x128xf32> -> vector<128x128xf32>
    %329 = arith.addf %321, %328 : vector<128x128xf32>
    %c0_i32_286 = arith.constant 0 : i32
    %330 = arith.addi %312, %c0_i32_286 : i32
    %331 = arith.index_cast %330 : i32 to index
    %c2_287 = arith.constant 2 : index
    %c0_288 = arith.constant 0 : index
    %332 = vector.load %arg9[%331, %c2_287, %c0_288] : memref<18x24x128xbf16, #tpu.memory_space<vmem>>, vector<8x16x128xbf16>
    %333 = vector.shape_cast %332 : vector<8x16x128xbf16> to vector<128x128xbf16>
    %c0_289 = arith.constant 0 : index
    %c2_290 = arith.constant 2 : index
    %c0_291 = arith.constant 0 : index
    %c0_292 = arith.constant 0 : index
    %334 = vector.load %arg5[%c0_289, %c2_290, %c0_291, %c0_292] : memref<3x3x128x128xbf16, #tpu.memory_space<vmem>>, vector<1x1x128x128xbf16>
    %335 = vector.shape_cast %334 : vector<1x1x128x128xbf16> to vector<128x128xbf16>
    %cst_293 = arith.constant dense<0.000000e+00> : vector<128x128xf32>
    %336 = tpu.matmul %333, %335, %cst_293 {dimension_numbers = #tpu.dot_dimension_numbers<[1], [0], [0], [1], [0, 0, 1, 1], [], []>} : vector<128x128xbf16>, vector<128x128xbf16>, vector<128x128xf32> -> vector<128x128xf32>
    %337 = arith.addf %329, %336 : vector<128x128xf32>
    %c1_i32_294 = arith.constant 1 : i32
    %338 = arith.addi %312, %c1_i32_294 : i32
    %339 = arith.index_cast %338 : i32 to index
    %c0_295 = arith.constant 0 : index
    %c0_296 = arith.constant 0 : index
    %340 = vector.load %arg9[%339, %c0_295, %c0_296] : memref<18x24x128xbf16, #tpu.memory_space<vmem>>, vector<8x16x128xbf16>
    %341 = vector.shape_cast %340 : vector<8x16x128xbf16> to vector<128x128xbf16>
    %c1_297 = arith.constant 1 : index
    %c0_298 = arith.constant 0 : index
    %c0_299 = arith.constant 0 : index
    %c0_300 = arith.constant 0 : index
    %342 = vector.load %arg5[%c1_297, %c0_298, %c0_299, %c0_300] : memref<3x3x128x128xbf16, #tpu.memory_space<vmem>>, vector<1x1x128x128xbf16>
    %343 = vector.shape_cast %342 : vector<1x1x128x128xbf16> to vector<128x128xbf16>
    %cst_301 = arith.constant dense<0.000000e+00> : vector<128x128xf32>
    %344 = tpu.matmul %341, %343, %cst_301 {dimension_numbers = #tpu.dot_dimension_numbers<[1], [0], [0], [1], [0, 0, 1, 1], [], []>} : vector<128x128xbf16>, vector<128x128xbf16>, vector<128x128xf32> -> vector<128x128xf32>
    %345 = arith.addf %337, %344 : vector<128x128xf32>
    %c1_i32_302 = arith.constant 1 : i32
    %346 = arith.addi %312, %c1_i32_302 : i32
    %347 = arith.index_cast %346 : i32 to index
    %c1_303 = arith.constant 1 : index
    %c0_304 = arith.constant 0 : index
    %348 = vector.load %arg9[%347, %c1_303, %c0_304] : memref<18x24x128xbf16, #tpu.memory_space<vmem>>, vector<8x16x128xbf16>
    %349 = vector.shape_cast %348 : vector<8x16x128xbf16> to vector<128x128xbf16>
    %c1_305 = arith.constant 1 : index
    %c1_306 = arith.constant 1 : index
    %c0_307 = arith.constant 0 : index
    %c0_308 = arith.constant 0 : index
    %350 = vector.load %arg5[%c1_305, %c1_306, %c0_307, %c0_308] : memref<3x3x128x128xbf16, #tpu.memory_space<vmem>>, vector<1x1x128x128xbf16>
    %351 = vector.shape_cast %350 : vector<1x1x128x128xbf16> to vector<128x128xbf16>
    %cst_309 = arith.constant dense<0.000000e+00> : vector<128x128xf32>
    %352 = tpu.matmul %349, %351, %cst_309 {dimension_numbers = #tpu.dot_dimension_numbers<[1], [0], [0], [1], [0, 0, 1, 1], [], []>} : vector<128x128xbf16>, vector<128x128xbf16>, vector<128x128xf32> -> vector<128x128xf32>
    %353 = arith.addf %345, %352 : vector<128x128xf32>
    %c1_i32_310 = arith.constant 1 : i32
    %354 = arith.addi %312, %c1_i32_310 : i32
    %355 = arith.index_cast %354 : i32 to index
    %c2_311 = arith.constant 2 : index
    %c0_312 = arith.constant 0 : index
    %356 = vector.load %arg9[%355, %c2_311, %c0_312] : memref<18x24x128xbf16, #tpu.memory_space<vmem>>, vector<8x16x128xbf16>
    %357 = vector.shape_cast %356 : vector<8x16x128xbf16> to vector<128x128xbf16>
    %c1_313 = arith.constant 1 : index
    %c2_314 = arith.constant 2 : index
    %c0_315 = arith.constant 0 : index
    %c0_316 = arith.constant 0 : index
    %358 = vector.load %arg5[%c1_313, %c2_314, %c0_315, %c0_316] : memref<3x3x128x128xbf16, #tpu.memory_space<vmem>>, vector<1x1x128x128xbf16>
    %359 = vector.shape_cast %358 : vector<1x1x128x128xbf16> to vector<128x128xbf16>
    %cst_317 = arith.constant dense<0.000000e+00> : vector<128x128xf32>
    %360 = tpu.matmul %357, %359, %cst_317 {dimension_numbers = #tpu.dot_dimension_numbers<[1], [0], [0], [1], [0, 0, 1, 1], [], []>} : vector<128x128xbf16>, vector<128x128xbf16>, vector<128x128xf32> -> vector<128x128xf32>
    %361 = arith.addf %353, %360 : vector<128x128xf32>
    %c2_i32_318 = arith.constant 2 : i32
    %362 = arith.addi %312, %c2_i32_318 : i32
    %363 = arith.index_cast %362 : i32 to index
    %c0_319 = arith.constant 0 : index
    %c0_320 = arith.constant 0 : index
    %364 = vector.load %arg9[%363, %c0_319, %c0_320] : memref<18x24x128xbf16, #tpu.memory_space<vmem>>, vector<8x16x128xbf16>
    %365 = vector.shape_cast %364 : vector<8x16x128xbf16> to vector<128x128xbf16>
    %c2_321 = arith.constant 2 : index
    %c0_322 = arith.constant 0 : index
    %c0_323 = arith.constant 0 : index
    %c0_324 = arith.constant 0 : index
    %366 = vector.load %arg5[%c2_321, %c0_322, %c0_323, %c0_324] : memref<3x3x128x128xbf16, #tpu.memory_space<vmem>>, vector<1x1x128x128xbf16>
    %367 = vector.shape_cast %366 : vector<1x1x128x128xbf16> to vector<128x128xbf16>
    %cst_325 = arith.constant dense<0.000000e+00> : vector<128x128xf32>
    %368 = tpu.matmul %365, %367, %cst_325 {dimension_numbers = #tpu.dot_dimension_numbers<[1], [0], [0], [1], [0, 0, 1, 1], [], []>} : vector<128x128xbf16>, vector<128x128xbf16>, vector<128x128xf32> -> vector<128x128xf32>
    %369 = arith.addf %361, %368 : vector<128x128xf32>
    %c2_i32_326 = arith.constant 2 : i32
    %370 = arith.addi %312, %c2_i32_326 : i32
    %371 = arith.index_cast %370 : i32 to index
    %c1_327 = arith.constant 1 : index
    %c0_328 = arith.constant 0 : index
    %372 = vector.load %arg9[%371, %c1_327, %c0_328] : memref<18x24x128xbf16, #tpu.memory_space<vmem>>, vector<8x16x128xbf16>
    %373 = vector.shape_cast %372 : vector<8x16x128xbf16> to vector<128x128xbf16>
    %c2_329 = arith.constant 2 : index
    %c1_330 = arith.constant 1 : index
    %c0_331 = arith.constant 0 : index
    %c0_332 = arith.constant 0 : index
    %374 = vector.load %arg5[%c2_329, %c1_330, %c0_331, %c0_332] : memref<3x3x128x128xbf16, #tpu.memory_space<vmem>>, vector<1x1x128x128xbf16>
    %375 = vector.shape_cast %374 : vector<1x1x128x128xbf16> to vector<128x128xbf16>
    %cst_333 = arith.constant dense<0.000000e+00> : vector<128x128xf32>
    %376 = tpu.matmul %373, %375, %cst_333 {dimension_numbers = #tpu.dot_dimension_numbers<[1], [0], [0], [1], [0, 0, 1, 1], [], []>} : vector<128x128xbf16>, vector<128x128xbf16>, vector<128x128xf32> -> vector<128x128xf32>
    %377 = arith.addf %369, %376 : vector<128x128xf32>
    %c2_i32_334 = arith.constant 2 : i32
    %378 = arith.addi %312, %c2_i32_334 : i32
    %379 = arith.index_cast %378 : i32 to index
    %c2_335 = arith.constant 2 : index
    %c0_336 = arith.constant 0 : index
    %380 = vector.load %arg9[%379, %c2_335, %c0_336] : memref<18x24x128xbf16, #tpu.memory_space<vmem>>, vector<8x16x128xbf16>
    %381 = vector.shape_cast %380 : vector<8x16x128xbf16> to vector<128x128xbf16>
    %c2_337 = arith.constant 2 : index
    %c2_338 = arith.constant 2 : index
    %c0_339 = arith.constant 0 : index
    %c0_340 = arith.constant 0 : index
    %382 = vector.load %arg5[%c2_337, %c2_338, %c0_339, %c0_340] : memref<3x3x128x128xbf16, #tpu.memory_space<vmem>>, vector<1x1x128x128xbf16>
    %383 = vector.shape_cast %382 : vector<1x1x128x128xbf16> to vector<128x128xbf16>
    %cst_341 = arith.constant dense<0.000000e+00> : vector<128x128xf32>
    %384 = tpu.matmul %381, %383, %cst_341 {dimension_numbers = #tpu.dot_dimension_numbers<[1], [0], [0], [1], [0, 0, 1, 1], [], []>} : vector<128x128xbf16>, vector<128x128xbf16>, vector<128x128xf32> -> vector<128x128xf32>
    %385 = arith.addf %377, %384 : vector<128x128xf32>
    %c1_i32_342 = arith.constant 1 : i32
    %386 = arith.addi %312, %c1_i32_342 : i32
    %c0_343 = arith.constant 0 : index
    %387 = arith.index_cast %386 : i32 to index
    %c2_344 = arith.constant 2 : index
    %c0_345 = arith.constant 0 : index
    %388 = vector.load %arg1[%c0_343, %387, %c2_344, %c0_345] : memref<1x18x26x128xbf16, #tpu.memory_space<vmem>>, vector<1x8x16x128xbf16>
    %389 = vector.shape_cast %388 : vector<1x8x16x128xbf16> to vector<8x16x128xbf16>
    %390 = arith.extf %389 : vector<8x16x128xbf16> to vector<8x16x128xf32>
    %391 = vector.shape_cast %385 : vector<128x128xf32> to vector<8x16x128xf32>
    %392 = vector.broadcast %26 : vector<1x1x128xf32> to vector<8x16x128xf32>
    %393 = arith.mulf %391, %392 : vector<8x16x128xf32>
    %394 = vector.broadcast %28 : vector<1x1x128xf32> to vector<8x16x128xf32>
    %395 = arith.addf %393, %394 : vector<8x16x128xf32>
    %396 = arith.addf %395, %390 : vector<8x16x128xf32>
    %cst_346 = arith.constant 0.000000e+00 : f32
    %397 = vector.broadcast %cst_346 : f32 to vector<8x16x128xf32>
    %398 = arith.maximumf %396, %397 : vector<8x16x128xf32>
    %c0_347 = arith.constant 0 : index
    %399 = arith.index_cast %312 : i32 to index
    %c0_348 = arith.constant 0 : index
    %c0_349 = arith.constant 0 : index
    %400 = vector.load %arg8[%c0_347, %399, %c0_348, %c0_349] : memref<1x16x16x128xf32, #tpu.memory_space<vmem>>, vector<1x8x16x128xf32>
    %401 = vector.shape_cast %400 : vector<1x8x16x128xf32> to vector<8x16x128xf32>
    %402 = vector.shape_cast %398 : vector<8x16x128xf32> to vector<1x8x16x128xf32>
    tpu.vector_store %arg8[%c0_347, %399, %c0_348, %c0_349], %402 {strides = array<i32>} : memref<1x16x16x128xf32, #tpu.memory_space<vmem>>, vector<1x8x16x128xf32>,
    %c2_i32_350 = arith.constant 2 : i32
    return
  }
  func.func @transform_0(%arg0: i32) -> (i32, i32, i32, i32) {
    %c0_i32 = arith.constant 0 : i32
    %c0_i32_0 = arith.constant 0 : i32
    %c0_i32_1 = arith.constant 0 : i32
    %c0_i32_2 = arith.constant 0 : i32
    return %arg0, %c0_i32, %c0_i32_0, %c0_i32_1 : i32, i32, i32, i32
  }
  func.func @transform_1(%arg0: i32) -> (i32, i32, i32, i32) {
    %c0_i32 = arith.constant 0 : i32
    %c0_i32_0 = arith.constant 0 : i32
    %c0_i32_1 = arith.constant 0 : i32
    %c0_i32_2 = arith.constant 0 : i32
    %c0_i32_3 = arith.constant 0 : i32
    return %c0_i32, %c0_i32_0, %c0_i32_1, %c0_i32_2 : i32, i32, i32, i32
  }
  func.func @transform_2(%arg0: i32) -> (i32, i32) {
    %c0_i32 = arith.constant 0 : i32
    %c0_i32_0 = arith.constant 0 : i32
    %c0_i32_1 = arith.constant 0 : i32
    return %c0_i32, %c0_i32_0 : i32, i32
  }
  func.func @transform_3(%arg0: i32) -> (i32, i32) {
    %c0_i32 = arith.constant 0 : i32
    %c0_i32_0 = arith.constant 0 : i32
    %c0_i32_1 = arith.constant 0 : i32
    return %c0_i32, %c0_i32_0 : i32, i32
  }
  func.func @transform_4(%arg0: i32) -> (i32, i32, i32, i32) {
    %c0_i32 = arith.constant 0 : i32
    %c0_i32_0 = arith.constant 0 : i32
    %c0_i32_1 = arith.constant 0 : i32
    %c0_i32_2 = arith.constant 0 : i32
    %c0_i32_3 = arith.constant 0 : i32
    return %c0_i32, %c0_i32_0, %c0_i32_1, %c0_i32_2 : i32, i32, i32, i32
  }
  func.func @transform_5(%arg0: i32) -> (i32, i32) {
    %c0_i32 = arith.constant 0 : i32
    %c0_i32_0 = arith.constant 0 : i32
    %c0_i32_1 = arith.constant 0 : i32
    return %c0_i32, %c0_i32_0 : i32, i32
  }
  func.func @transform_6(%arg0: i32) -> (i32, i32) {
    %c0_i32 = arith.constant 0 : i32
    %c0_i32_0 = arith.constant 0 : i32
    %c0_i32_1 = arith.constant 0 : i32
    return %c0_i32, %c0_i32_0 : i32, i32
  }
  func.func @transform_7(%arg0: i32) -> (i32, i32, i32, i32) {
    %c0_i32 = arith.constant 0 : i32
    %c0_i32_0 = arith.constant 0 : i32
    %c0_i32_1 = arith.constant 0 : i32
    %c0_i32_2 = arith.constant 0 : i32
    return %arg0, %c0_i32, %c0_i32_0, %c0_i32_1 : i32, i32, i32, i32
  }
}

</mosaic_0001>

<llo_original>
// kernel: basic_block_pallas.1
$region0: #{basic_block_pallas.1}
  #allocation0 [shape = 'u32[]', space=smem, size = 0x4, offset = 0x4, fixed_abs, tag = 'smem constant byte address 0x4 - core index']
  #allocation1 [shape = 'u32[72,128]{1,0:T(1,128)}', space=vmem, size = 0x9000, scoped, tag = 'internal scratch']
  #allocation2 [shape = 'bf16[18,24,128]{2,1,0:T(8,128)(2,1)}', space=vmem, size = 0x1b000, scoped, tag = 'scratch operand']
  %s0 = inlined_call_operand.vmem [shape: bf16[2,18,26,128], index: 0, kind: input, shape index: {}]
  %s1 = inlined_call_operand.vmem [shape: bf16[3,3,128,128], index: 1, kind: input, shape index: {}]
  %s2 = inlined_call_operand.vmem [shape: f32[1,128], index: 2, kind: input, shape index: {}]
  %s3 = inlined_call_operand.vmem [shape: f32[1,128], index: 3, kind: input, shape index: {}]
  %s4 = inlined_call_operand.vmem [shape: bf16[3,3,128,128], index: 4, kind: input, shape index: {}]
  %s5 = inlined_call_operand.vmem [shape: f32[1,128], index: 5, kind: input, shape index: {}]
  %s6 = inlined_call_operand.vmem [shape: f32[1,128], index: 6, kind: input, shape index: {}]
  %s7 = inlined_call_operand.vmem [shape: f32[2,16,16,128], index: 7, kind: output, shape index: {}]
  %s8 = sld [smem:[#allocation0]]
  $region61: #{basic_block_pallas.1} parent=0
    _
  %s10 = ssub.s32 1, %s8
  %s11 = scalar_select 0, %s10, %s8
  loop: start=0, step=1, limit=4
  $region2: #{basic_block_pallas.1} parent=0 // loop_pre_header
    _
  $region3: #{basic_block_pallas.1} parent=0 // loop_header
    %s13 = sphi 0, %s17
    %p14 = scmp.ge.s32.totalorder %s13, 4
    %s23 = sphi 0, %s25
    %s26 = sphi 0, %s23
    %s27 = sphi 0, %s26
    %s43 = sphi 0, %s27
    %s47 = sphi 0, %s47
    %s49 = sphi 0, %s47
    %s50 = sphi 0, %s49
    %s64 = sphi 0, %s50
    %s68 = sphi 0, %s68
    %s70 = sphi 0, %s68
    %s71 = sphi 0, %s70
    %s85 = sphi 0, %s71
    %s89 = sphi 0, %s89
    %s91 = sphi 0, %s89
    %s92 = sphi 0, %s91
    %s106 = sphi 0, %s92
    %s110 = sphi 0, %s110
    %s112 = sphi 0, %s110
    %s113 = sphi 0, %s112
    %s127 = sphi 0, %s113
    %s131 = sphi 0, %s131
    %s133 = sphi 0, %s131
    %s134 = sphi 0, %s133
    %s148 = sphi 0, %s134
    %s152 = sphi 0, %s152
    %s154 = sphi 0, %s152
    %s155 = sphi 0, %s154
    %s169 = sphi 0, %s155
    %s175 = sphi 0, %s177
    %s178 = sphi 0, %s175
    %s179 = sphi 0, %s178
    %s195 = sphi 0, %s179
  $region4: #{basic_block_pallas.1} parent=0 // loop_header_branch
    %16 = sbr.rel (%p14) target = $region8
  $region5: #{basic_block_pallas.1} parent=0 // loop_body
    %s18 = ssub.s32 %s13, 1
    %s19 = ssub.s32 %s13, 2
    %s20 = sadd.s32 %s13, 1
    %s21 = ssub.s32 %s13, %s20
    %p22 = scmp.eq.s32.totalorder %s21, 0
    %s24 = sadd.s32 %s23, 1
    %s25 = scalar_select %p22, %s23, %s24
    %p28 = pneg %p22
    %p29 = scmp.eq.s32.totalorder %s13, 1
    %p30 = por %p28, %p29
    %p31 = scmp.ne.s32.totalorder %s23, %s26
    %p32 = scmp.eq.s32.totalorder %s13, 0
    %p33 = por %p31, %p32
    %p34 = scmp.ne.s32.totalorder %s23, %s26
    %p35 = scmp.eq.s32.totalorder %s18, 1
    %p36 = por %p34, %p35
    %p37 = scmp.ne.s32.totalorder %s26, %s27
    %p38 = scmp.eq.s32.totalorder %s18, 0
    %p39 = por %p37, %p38
    %p40 = scmp.ne.s32.totalorder %s26, %s27
    %p41 = scmp.eq.s32.totalorder %s19, 1
    %p42 = por %p40, %p41
    %p44 = scmp.ne.s32.totalorder %s27, %s43
    %p45 = scmp.eq.s32.totalorder %s19, 0
    %p46 = por %p44, %p45
    %s48 = sadd.s32 %s47, 1
    %p51 = scmp.eq.s32.totalorder %s13, 1
    %p52 = scmp.ne.s32.totalorder %s47, %s49
    %p53 = scmp.eq.s32.totalorder %s13, 0
    %p54 = por %p52, %p53
    %p55 = scmp.ne.s32.totalorder %s47, %s49
    %p56 = scmp.eq.s32.totalorder %s18, 1
    %p57 = por %p55, %p56
    %p58 = scmp.ne.s32.totalorder %s49, %s50
    %p59 = scmp.eq.s32.totalorder %s18, 0
    %p60 = por %p58, %p59
    %p61 = scmp.ne.s32.totalorder %s49, %s50
    %p62 = scmp.eq.s32.totalorder %s19, 1
    %p63 = por %p61, %p62
    %p65 = scmp.ne.s32.totalorder %s50, %s64
    %p66 = scmp.eq.s32.totalorder %s19, 0
    %p67 = por %p65, %p66
    %s69 = sadd.s32 %s68, 1
    %p72 = scmp.eq.s32.totalorder %s13, 1
    %p73 = scmp.ne.s32.totalorder %s68, %s70
    %p74 = scmp.eq.s32.totalorder %s13, 0
    %p75 = por %p73, %p74
    %p76 = scmp.ne.s32.totalorder %s68, %s70
    %p77 = scmp.eq.s32.totalorder %s18, 1
    %p78 = por %p76, %p77
    %p79 = scmp.ne.s32.totalorder %s70, %s71
    %p80 = scmp.eq.s32.totalorder %s18, 0
    %p81 = por %p79, %p80
    %p82 = scmp.ne.s32.totalorder %s70, %s71
    %p83 = scmp.eq.s32.totalorder %s19, 1
    %p84 = por %p82, %p83
    %p86 = scmp.ne.s32.totalorder %s71, %s85
    %p87 = scmp.eq.s32.totalorder %s19, 0
    %p88 = por %p86, %p87
    %s90 = sadd.s32 %s89, 1
    %p93 = scmp.eq.s32.totalorder %s13, 1
    %p94 = scmp.ne.s32.totalorder %s89, %s91
    %p95 = scmp.eq.s32.totalorder %s13, 0
    %p96 = por %p94, %p95
    %p97 = scmp.ne.s32.totalorder %s89, %s91
    %p98 = scmp.eq.s32.totalorder %s18, 1
    %p99 = por %p97, %p98
    %p100 = scmp.ne.s32.totalorder %s91, %s92
    %p101 = scmp.eq.s32.totalorder %s18, 0
    %p102 = por %p100, %p101
    %p103 = scmp.ne.s32.totalorder %s91, %s92
    %p104 = scmp.eq.s32.totalorder %s19, 1
    %p105 = por %p103, %p104
    %p107 = scmp.ne.s32.totalorder %s92, %s106
    %p108 = scmp.eq.s32.totalorder %s19, 0
    %p109 = por %p107, %p108
    %s111 = sadd.s32 %s110, 1
    %p114 = scmp.eq.s32.totalorder %s13, 1
    %p115 = scmp.ne.s32.totalorder %s110, %s112
    %p116 = scmp.eq.s32.totalorder %s13, 0
    %p117 = por %p115, %p116
    %p118 = scmp.ne.s32.totalorder %s110, %s112
    %p119 = scmp.eq.s32.totalorder %s18, 1
    %p120 = por %p118, %p119
    %p121 = scmp.ne.s32.totalorder %s112, %s113
    %p122 = scmp.eq.s32.totalorder %s18, 0
    %p123 = por %p121, %p122
    %p124 = scmp.ne.s32.totalorder %s112, %s113
    %p125 = scmp.eq.s32.totalorder %s19, 1
    %p126 = por %p124, %p125
    %p128 = scmp.ne.s32.totalorder %s113, %s127
    %p129 = scmp.eq.s32.totalorder %s19, 0
    %p130 = por %p128, %p129
    %s132 = sadd.s32 %s131, 1
    %p135 = scmp.eq.s32.totalorder %s13, 1
    %p136 = scmp.ne.s32.totalorder %s131, %s133
    %p137 = scmp.eq.s32.totalorder %s13, 0
    %p138 = por %p136, %p137
    %p139 = scmp.ne.s32.totalorder %s131, %s133
    %p140 = scmp.eq.s32.totalorder %s18, 1
    %p141 = por %p139, %p140
    %p142 = scmp.ne.s32.totalorder %s133, %s134
    %p143 = scmp.eq.s32.totalorder %s18, 0
    %p144 = por %p142, %p143
    %p145 = scmp.ne.s32.totalorder %s133, %s134
    %p146 = scmp.eq.s32.totalorder %s19, 1
    %p147 = por %p145, %p146
    %p149 = scmp.ne.s32.totalorder %s134, %s148
    %p150 = scmp.eq.s32.totalorder %s19, 0
    %p151 = por %p149, %p150
    %s153 = sadd.s32 %s152, 1
    %p156 = scmp.eq.s32.totalorder %s13, 1
    %p157 = scmp.ne.s32.totalorder %s152, %s154
    %p158 = scmp.eq.s32.totalorder %s13, 0
    %p159 = por %p157, %p158
    %p160 = scmp.ne.s32.totalorder %s152, %s154
    %p161 = scmp.eq.s32.totalorder %s18, 1
    %p162 = por %p160, %p161
    %p163 = scmp.ne.s32.totalorder %s154, %s155
    %p164 = scmp.eq.s32.totalorder %s18, 0
    %p165 = por %p163, %p164
    %p166 = scmp.ne.s32.totalorder %s154, %s155
    %p167 = scmp.eq.s32.totalorder %s19, 1
    %p168 = por %p166, %p167
    %p170 = scmp.ne.s32.totalorder %s155, %s169
    %p171 = scmp.eq.s32.totalorder %s19, 0
    %p172 = por %p170, %p171
    %s173 = ssub.s32 %s13, %s20
    %p174 = scmp.eq.s32.totalorder %s173, 0
    %s176 = sadd.s32 %s175, 1
    %s177 = scalar_select %p174, %s175, %s176
    %p180 = pneg %p174
    %p181 = scmp.eq.s32.totalorder %s13, 1
    %p182 = por %p180, %p181
    %p183 = scmp.ne.s32.totalorder %s175, %s178
    %p184 = scmp.eq.s32.totalorder %s13, 0
    %p185 = por %p183, %p184
    %p186 = scmp.ne.s32.totalorder %s175, %s178
    %p187 = scmp.eq.s32.totalorder %s18, 1
    %p188 = por %p186, %p187
    %p189 = scmp.ne.s32.totalorder %s178, %s179
    %p190 = scmp.eq.s32.totalorder %s18, 0
    %p191 = por %p189, %p190
    %p192 = scmp.ne.s32.totalorder %s178, %s179
    %p193 = scmp.eq.s32.totalorder %s19, 1
    %p194 = por %p192, %p193
    %p196 = scmp.ne.s32.totalorder %s179, %s195
    %p197 = scmp.eq.s32.totalorder %s19, 0
    %p198 = por %p196, %p197
    %p199 = scmp.le.s32.totalorder 1, %s13
    %p200 = scmp.lt.s32.totalorder %s13, 3
    %p201 = pnand %p199, %p200
    %p202 = pneg %p201
    // Predicated region
    $region9: #{basic_block_pallas.1} parent=5 // pred_check
      _
    $region10: #{basic_block_pallas.1} parent=5 // pred_check_branch
      %204 = sbr.rel (%p201) target = $region12
    $region11: #{basic_block_pallas.1} parent=5 // pred_region
      %s205 = ssub.s32 %s13, 1
      // Predicated region
      $region13: #{basic_block_pallas.1} parent=11 // pred_check
        %p206 = pneg %p60
      $region14: #{basic_block_pallas.1} parent=11 // pred_check_branch
        %208 = sbr.rel (%p206) target = $region16
      $region15: #{basic_block_pallas.1} parent=11 // pred_region
        _
      $region16: #{basic_block_pallas.1} parent=11 // pred_fallthru
        _
      // Predicated region
      $region17: #{basic_block_pallas.1} parent=11 // pred_check
        %p209 = pneg %p81
      $region18: #{basic_block_pallas.1} parent=11 // pred_check_branch
        %211 = sbr.rel (%p209) target = $region20
      $region19: #{basic_block_pallas.1} parent=11 // pred_region
        _
      $region20: #{basic_block_pallas.1} parent=11 // pred_fallthru
        _
      // Predicated region
      $region21: #{basic_block_pallas.1} parent=11 // pred_check
        %p212 = pneg %p102
      $region22: #{basic_block_pallas.1} parent=11 // pred_check_branch
        %214 = sbr.rel (%p212) target = $region24
      $region23: #{basic_block_pallas.1} parent=11 // pred_region
        _
      $region24: #{basic_block_pallas.1} parent=11 // pred_fallthru
        _
      // Predicated region
      $region25: #{basic_block_pallas.1} parent=11 // pred_check
        %p215 = pneg %p123
      $region26: #{basic_block_pallas.1} parent=11 // pred_check_branch
        %217 = sbr.rel (%p215) target = $region28
      $region27: #{basic_block_pallas.1} parent=11 // pred_region
        _
      $region28: #{basic_block_pallas.1} parent=11 // pred_fallthru
        _
      // Predicated region
      $region29: #{basic_block_pallas.1} parent=11 // pred_check
        %p218 = pneg %p144
      $region30: #{basic_block_pallas.1} parent=11 // pred_check_branch
        %220 = sbr.rel (%p218) target = $region32
      $region31: #{basic_block_pallas.1} parent=11 // pred_region
        _
      $region32: #{basic_block_pallas.1} parent=11 // pred_fallthru
        _
      // Predicated region
      $region33: #{basic_block_pallas.1} parent=11 // pred_check
        %p221 = pneg %p165
      $region34: #{basic_block_pallas.1} parent=11 // pred_check_branch
        %223 = sbr.rel (%p221) target = $region36
      $region35: #{basic_block_pallas.1} parent=11 // pred_region
        _
      $region36: #{basic_block_pallas.1} parent=11 // pred_fallthru
        _
    $region12: #{basic_block_pallas.1} parent=5 // pred_fallthru
      _
    %p224 = scmp.lt.s32.totalorder %s13, 2
    // Predicated region
    $region37: #{basic_block_pallas.1} parent=5 // pred_check
      %p225 = pneg %p224
    $region38: #{basic_block_pallas.1} parent=5 // pred_check_branch
      %227 = sbr.rel (%p225) target = $region40
    $region39: #{basic_block_pallas.1} parent=5 // pred_region
      // Predicated region
      $region41: #{basic_block_pallas.1} parent=39 // pred_check
        %p228 = pneg %p33
      $region42: #{basic_block_pallas.1} parent=39 // pred_check_branch
        %230 = sbr.rel (%p228) target = $region44
      $region43: #{basic_block_pallas.1} parent=39 // pred_region
        %p231 = scmp.lt.s32.totalorder %s13, 1
        %s232 = scalar_select %p231, %s13, 1
        %s233 = smul.addr %s232, 72
        %s234 = smul.addr %s233, 4
        %s235 = scalar_lea.vmem %s0, %s234
      $region44: #{basic_block_pallas.1} parent=39 // pred_fallthru
        _
    $region40: #{basic_block_pallas.1} parent=5 // pred_fallthru
      _
    %p236 = scmp.le.s32.totalorder 1, %s13
    %p237 = scmp.lt.s32.totalorder %s13, 3
    %p238 = pnand %p236, %p237
    %p239 = pneg %p238
    // Predicated region
    $region45: #{basic_block_pallas.1} parent=5 // pred_check
      _
    $region46: #{basic_block_pallas.1} parent=5 // pred_check_branch
      %241 = sbr.rel (%p238) target = $region48
    $region47: #{basic_block_pallas.1} parent=5 // pred_region
      %s242 = ssub.s32 %s13, 1
      %p243 = scmp.lt.s32.totalorder %s18, 1
      %s244 = scalar_select %p243, %s18, 1
      %s245 = smul.addr %s244, 72
      %s246 = smul.addr %s245, 4
      %s247 = scalar_lea.vmem %s0, %s246
      %p248 = pneg %p39
      %p249 = pneg %p36
      %p250 = pneg %p60
      %p251 = pneg %p57
      %p252 = pneg %p81
      %p253 = pneg %p78
      %p254 = pneg %p102
      %p255 = pneg %p99
      %p256 = pneg %p123
      %p257 = pneg %p120
      %p258 = pneg %p144
      %p259 = pneg %p141
      %p260 = pneg %p165
      %p261 = pneg %p162
      %p262 = pneg %p191
      %p263 = pneg %p188
      %p264 = scmp.lt.s32.totalorder %s18, 1
      %s265 = scalar_select %p264, %s18, 1
      %s266 = smul.addr %s265, 32
      %s267 = smul.addr %s266, 8
      %s268 = scalar_lea.vmem %s7, %s267
      %p269 = scmp.lt.s32.totalorder %s18, 1
      %s270 = scalar_select %p269, %s18, 1
      %s271 = smul.addr %s270, 72
      %s272 = smul.addr %s271, 4
      %s273 = scalar_lea.vmem %s0, %s272
      %p274 = scmp.lt.s32.totalorder %s18, 1
      %s275 = scalar_select %p274, %s18, 1
      %s276 = smul.addr %s275, 32
      %s277 = smul.addr %s276, 8
      %s278 = scalar_lea.vmem %s7, %s277
      %280 = vst [vmem:[#allocation2] sm:$0xf] 0
      %281 = vst [vmem:[#allocation2 + $0x4] sm:$0xf] 0
      %282 = vst [vmem:[#allocation2 + $0x8] sm:$0xf] 0
      %s283 = scalar_lea.vmem [#allocation2], 204
      %284 = vst [vmem:[%s283] sm:$0xf] 0
      %285 = vst [vmem:[%s283 + $0x4] sm:$0xf] 0
      %286 = vst [vmem:[%s283 + $0x8] sm:$0xf] 0
      %v287 = vlaneseq
      %v288 = vshrl.u32 %v287, 7
      %v289 = vadd.s32 %v288, 8
      %v290 = vadd.s32 %v288, 16
      %vm291 = vcmp.ge.s32.totalorder %v288, 1
      %vm292 = vcmp.ge.s32.totalorder %v289, 1
      %vm293 = vcmp.ge.s32.totalorder %v290, 1
      %vm294 = vcmp.le.s32.totalorder %v288, 16
      %vm295 = vcmp.le.s32.totalorder %v289, 16
      %vm296 = vcmp.le.s32.totalorder %v290, 16
      %vm297 = vmand %vm291, %vm294
      %vm298 = vmand %vm292, %vm295
      %vm299 = vmand %vm293, %vm296
      %v300 = vsel %vm297, 1, 0
      %v301 = vsel %vm298, 1, 0
      %v302 = vsel %vm299, 1, 0
      %v303 = vcvt.s32.f32 %v300
      %v304 = vcvt.s32.f32 %v301
      %v305 = vcvt.s32.f32 %v302
      %v306 = vld [vmem:[%s2] sm:$0x1]
      %v308 = vperm.slane %v306, 0
      %v310 = vmul.f32 %v308, %v303
      %v311 = vmul.f32 %v308, %v304
      %v312 = vmul.f32 %v308, %v305
      %v313 = vld [vmem:[%s3] sm:$0x1]
      %v315 = vperm.slane %v313, 0
      %v317 = vmul.f32 %v315, %v303
      %v318 = vmul.f32 %v315, %v304
      %v319 = vmul.f32 %v315, %v305
      %v320 = vld [vmem:[%s5] sm:$0x1]
      %v321 = vld [vmem:[%s6] sm:$0x1]
      %s322 = smul.u32 0, 4
      %s323 = smul.addr %s322, 4
      %s324 = scalar_lea.vmem %s273, %s323
      %v325 = vld [vmem:[%s324] sm:$0xf]
      %v326 = vld [vmem:[%s324 + $0x4] sm:$0xf]
      %v327 = vld [vmem:[%s324 + $0x8] sm:$0xf]
      %v328 = vld [vmem:[%s324 + $0x10] sm:$0xf]
      %v329 = vld [vmem:[%s324 + $0x14] sm:$0xf]
      %v330 = vld [vmem:[%s324 + $0x18] sm:$0xf]
      %v331 = vld [vmem:[%s324 + $0x20] sm:$0xf]
      %v332 = vld [vmem:[%s324 + $0x24] sm:$0xf]
      %v333 = vld [vmem:[%s324 + $0x28] sm:$0xf]
      %v334 = vld [vmem:[%s324 + $0x30] sm:$0xf]
      %v335 = vld [vmem:[%s324 + $0x34] sm:$0xf]
      %v336 = vld [vmem:[%s324 + $0x38] sm:$0xf]
      %v337 = vld [vmem:[%s324 + $0x40] sm:$0xf]
      %v338 = vld [vmem:[%s324 + $0x44] sm:$0xf]
      %v339 = vld [vmem:[%s324 + $0x48] sm:$0xf]
      %v340 = vld [vmem:[%s324 + $0x50] sm:$0xf]
      %v341 = vld [vmem:[%s324 + $0x54] sm:$0xf]
      %v342 = vld [vmem:[%s324 + $0x58] sm:$0xf]
      %v343 = vld [vmem:[%s324 + $0x60] sm:$0xf]
      %v344 = vld [vmem:[%s324 + $0x64] sm:$0xf]
      %v345 = vld [vmem:[%s324 + $0x68] sm:$0xf]
      %v346 = vld [vmem:[%s324 + $0x70] sm:$0xf]
      %v347 = vld [vmem:[%s324 + $0x74] sm:$0xf]
      %v348 = vld [vmem:[%s324 + $0x78] sm:$0xf]
      %v349 = vld [vmem:[%s1] sm:$0xf]
      %v350 = vld [vmem:[%s1 + $0x4] sm:$0xf]
      %v351 = vld [vmem:[%s1 + $0x8] sm:$0xf]
      %v352 = vld [vmem:[%s1 + $0xc] sm:$0xf]
      %v353 = vld [vmem:[%s1 + $0x10] sm:$0xf]
      %v354 = vld [vmem:[%s1 + $0x14] sm:$0xf]
      %v355 = vld [vmem:[%s1 + $0x18] sm:$0xf]
      %v356 = vld [vmem:[%s1 + $0x1c] sm:$0xf]
      %v357 = vld [vmem:[%s1 + $0x20] sm:$0xf]
      %v358 = vld [vmem:[%s1 + $0x24] sm:$0xf]
      %v359 = vld [vmem:[%s1 + $0x28] sm:$0xf]
      %v360 = vld [vmem:[%s1 + $0x2c] sm:$0xf]
      %v361 = vld [vmem:[%s1 + $0x30] sm:$0xf]
      %v362 = vld [vmem:[%s1 + $0x34] sm:$0xf]
      %v363 = vld [vmem:[%s1 + $0x38] sm:$0xf]
      %v364 = vld [vmem:[%s1 + $0x3c] sm:$0xf]
      %v365 = vld [vmem:[%s324 + $0xc] sm:$0x1]
      %v366 = vld [vmem:[%s324 + $0x1c] sm:$0x1]
      %v367 = vld [vmem:[%s324 + $0x2c] sm:$0x1]
      %v368 = vld [vmem:[%s324 + $0x3c] sm:$0x1]
      %v369 = vld [vmem:[%s324 + $0x4c] sm:$0x1]
      %v370 = vld [vmem:[%s324 + $0x5c] sm:$0x1]
      %v371 = vld [vmem:[%s324 + $0x6c] sm:$0x1]
      %v372 = vld [vmem:[%s324 + $0x7c] sm:$0x1]
      %vm373 = vsmask.f32 3328
      %vm374 = vsmask.f32 7440
      %vm375 = vmor %vm373, %vm374
      %v377 = vshrl.u32 %v325, 16
      %v379 = vrot.slane %v377, 4
      %v380 = vshll.u32 %v325, 16
      %v382 = vrot.slane %v380, 5
      %v383 = vor.u32 %v379, %v382
      %v384 = vrot.slane %v383, 4
      %v386 = vshll.u32 %v326, 16
      %v388 = vrot.slane %v386, 5
      %v389 = vsel %vm375, %v384, %v388
      %v390 = vshrl.u32 %v326, 16
      %v392 = vrot.slane %v390, 4
      %v393 = vor.u32 %v392, %v388
      %v394 = vrot.slane %v393, 4
      %v396 = vshll.u32 %v327, 16
      %v398 = vrot.slane %v396, 5
      %v399 = vsel %vm375, %v394, %v398
      %v400 = vshrl.u32 %v327, 16
      %v402 = vrot.slane %v400, 4
      %v403 = vor.u32 %v402, %v398
      %v404 = vrot.slane %v403, 4
      %v406 = vshll.u32 %v365, 16
      %v408 = vrot.slane %v406, 5
      %v409 = vsel %vm375, %v404, %v408
      %v411 = vshrl.u32 %v328, 16
      %v413 = vrot.slane %v411, 4
      %v414 = vshll.u32 %v328, 16
      %v416 = vrot.slane %v414, 5
      %v417 = vor.u32 %v413, %v416
      %v418 = vrot.slane %v417, 4
      %v420 = vshll.u32 %v329, 16
      %v422 = vrot.slane %v420, 5
      %v423 = vsel %vm375, %v418, %v422
      %v424 = vshrl.u32 %v329, 16
      %v426 = vrot.slane %v424, 4
      %v427 = vor.u32 %v426, %v422
      %v428 = vrot.slane %v427, 4
      %v430 = vshll.u32 %v330, 16
      %v432 = vrot.slane %v430, 5
      %v433 = vsel %vm375, %v428, %v432
      %v434 = vshrl.u32 %v330, 16
      %v436 = vrot.slane %v434, 4
      %v437 = vor.u32 %v436, %v432
      %v438 = vrot.slane %v437, 4
      %v440 = vshll.u32 %v366, 16
      %v442 = vrot.slane %v440, 5
      %v443 = vsel %vm375, %v438, %v442
      %v445 = vshrl.u32 %v331, 16
      %v447 = vrot.slane %v445, 4
      %v448 = vshll.u32 %v331, 16
      %v450 = vrot.slane %v448, 5
      %v451 = vor.u32 %v447, %v450
      %v452 = vrot.slane %v451, 4
      %v454 = vshll.u32 %v332, 16
      %v456 = vrot.slane %v454, 5
      %v457 = vsel %vm375, %v452, %v456
      %v458 = vshrl.u32 %v332, 16
      %v460 = vrot.slane %v458, 4
      %v461 = vor.u32 %v460, %v456
      %v462 = vrot.slane %v461, 4
      %v464 = vshll.u32 %v333, 16
      %v466 = vrot.slane %v464, 5
      %v467 = vsel %vm375, %v462, %v466
      %v468 = vshrl.u32 %v333, 16
      %v470 = vrot.slane %v468, 4
      %v471 = vor.u32 %v470, %v466
      %v472 = vrot.slane %v471, 4
      %v474 = vshll.u32 %v367, 16
      %v476 = vrot.slane %v474, 5
      %v477 = vsel %vm375, %v472, %v476
      %v479 = vshrl.u32 %v334, 16
      %v481 = vrot.slane %v479, 4
      %v482 = vshll.u32 %v334, 16
      %v484 = vrot.slane %v482, 5
      %v485 = vor.u32 %v481, %v484
      %v486 = vrot.slane %v485, 4
      %v488 = vshll.u32 %v335, 16
      %v490 = vrot.slane %v488, 5
      %v491 = vsel %vm375, %v486, %v490
      %v492 = vshrl.u32 %v335, 16
      %v494 = vrot.slane %v492, 4
      %v495 = vor.u32 %v494, %v490
      %v496 = vrot.slane %v495, 4
      %v498 = vshll.u32 %v336, 16
      %v500 = vrot.slane %v498, 5
      %v501 = vsel %vm375, %v496, %v500
      %v502 = vshrl.u32 %v336, 16
      %v504 = vrot.slane %v502, 4
      %v505 = vor.u32 %v504, %v500
      %v506 = vrot.slane %v505, 4
      %v508 = vshll.u32 %v368, 16
      %v510 = vrot.slane %v508, 5
      %v511 = vsel %vm375, %v506, %v510
      %v513 = vshrl.u32 %v337, 16
      %v515 = vrot.slane %v513, 4
      %v516 = vshll.u32 %v337, 16
      %v518 = vrot.slane %v516, 5
      %v519 = vor.u32 %v515, %v518
      %v520 = vrot.slane %v519, 4
      %v522 = vshll.u32 %v338, 16
      %v524 = vrot.slane %v522, 5
      %v525 = vsel %vm375, %v520, %v524
      %v526 = vshrl.u32 %v338, 16
      %v528 = vrot.slane %v526, 4
      %v529 = vor.u32 %v528, %v524
      %v530 = vrot.slane %v529, 4
      %v532 = vshll.u32 %v339, 16
      %v534 = vrot.slane %v532, 5
      %v535 = vsel %vm375, %v530, %v534
      %v536 = vshrl.u32 %v339, 16
      %v538 = vrot.slane %v536, 4
      %v539 = vor.u32 %v538, %v534
      %v540 = vrot.slane %v539, 4
      %v542 = vshll.u32 %v369, 16
      %v544 = vrot.slane %v542, 5
      %v545 = vsel %vm375, %v540, %v544
      %v547 = vshrl.u32 %v340, 16
      %v549 = vrot.slane %v547, 4
      %v550 = vshll.u32 %v340, 16
      %v552 = vrot.slane %v550, 5
      %v553 = vor.u32 %v549, %v552
      %v554 = vrot.slane %v553, 4
      %v556 = vshll.u32 %v341, 16
      %v558 = vrot.slane %v556, 5
      %v559 = vsel %vm375, %v554, %v558
      %v560 = vshrl.u32 %v341, 16
      %v562 = vrot.slane %v560, 4
      %v563 = vor.u32 %v562, %v558
      %v564 = vrot.slane %v563, 4
      %v566 = vshll.u32 %v342, 16
      %v568 = vrot.slane %v566, 5
      %v569 = vsel %vm375, %v564, %v568
      %v570 = vshrl.u32 %v342, 16
      %v572 = vrot.slane %v570, 4
      %v573 = vor.u32 %v572, %v568
      %v574 = vrot.slane %v573, 4
      %v576 = vshll.u32 %v370, 16
      %v578 = vrot.slane %v576, 5
      %v579 = vsel %vm375, %v574, %v578
      %v581 = vshrl.u32 %v343, 16
      %v583 = vrot.slane %v581, 4
      %v584 = vshll.u32 %v343, 16
      %v586 = vrot.slane %v584, 5
      %v587 = vor.u32 %v583, %v586
      %v588 = vrot.slane %v587, 4
      %v590 = vshll.u32 %v344, 16
      %v592 = vrot.slane %v590, 5
      %v593 = vsel %vm375, %v588, %v592
      %v594 = vshrl.u32 %v344, 16
      %v596 = vrot.slane %v594, 4
      %v597 = vor.u32 %v596, %v592
      %v598 = vrot.slane %v597, 4
      %v600 = vshll.u32 %v345, 16
      %v602 = vrot.slane %v600, 5
      %v603 = vsel %vm375, %v598, %v602
      %v604 = vshrl.u32 %v345, 16
      %v606 = vrot.slane %v604, 4
      %v607 = vor.u32 %v606, %v602
      %v608 = vrot.slane %v607, 4
      %v610 = vshll.u32 %v371, 16
      %v612 = vrot.slane %v610, 5
      %v613 = vsel %vm375, %v608, %v612
      %v615 = vshrl.u32 %v346, 16
      %v617 = vrot.slane %v615, 4
      %v618 = vshll.u32 %v346, 16
      %v620 = vrot.slane %v618, 5
      %v621 = vor.u32 %v617, %v620
      %v622 = vrot.slane %v621, 4
      %v624 = vshll.u32 %v347, 16
      %v626 = vrot.slane %v624, 5
      %v627 = vsel %vm375, %v622, %v626
      %v628 = vshrl.u32 %v347, 16
      %v630 = vrot.slane %v628, 4
      %v631 = vor.u32 %v630, %v626
      %v632 = vrot.slane %v631, 4
      %v634 = vshll.u32 %v348, 16
      %v636 = vrot.slane %v634, 5
      %v637 = vsel %vm375, %v632, %v636
      %v638 = vshrl.u32 %v348, 16
      %v640 = vrot.slane %v638, 4
      %v641 = vor.u32 %v640, %v636
      %v642 = vrot.slane %v641, 4
      %v644 = vshll.u32 %v372, 16
      %v646 = vrot.slane %v644, 5
      %v647 = vsel %vm375, %v642, %v646
      %s648 = scalar_lea.vmem %s1, 64
      %v649 = vld [vmem:[%s648] sm:$0xf]
      %v650 = vld [vmem:[%s648 + $0x4] sm:$0xf]
      %v651 = vld [vmem:[%s648 + $0x8] sm:$0xf]
      %v652 = vld [vmem:[%s648 + $0xc] sm:$0xf]
      %v653 = vld [vmem:[%s648 + $0x10] sm:$0xf]
      %v654 = vld [vmem:[%s648 + $0x14] sm:$0xf]
      %v655 = vld [vmem:[%s648 + $0x18] sm:$0xf]
      %v656 = vld [vmem:[%s648 + $0x1c] sm:$0xf]
      %v657 = vld [vmem:[%s648 + $0x20] sm:$0xf]
      %v658 = vld [vmem:[%s648 + $0x24] sm:$0xf]
      %v659 = vld [vmem:[%s648 + $0x28] sm:$0xf]
      %v660 = vld [vmem:[%s648 + $0x2c] sm:$0xf]
      %v661 = vld [vmem:[%s648 + $0x30] sm:$0xf]
      %v662 = vld [vmem:[%s648 + $0x34] sm:$0xf]
      %v663 = vld [vmem:[%s648 + $0x38] sm:$0xf]
      %v664 = vld [vmem:[%s648 + $0x3c] sm:$0xf]
      %v665 = vunpack.c.l.b16 %v389
      %v666 = vunpack.c.l.b16 %v399
      %v667 = vunpack.c.l.b16 %v409
      %v668 = vunpack.c.l.b16 %v423
      %v669 = vunpack.c.l.b16 %v433
      %v670 = vunpack.c.l.b16 %v443
      %v671 = vunpack.c.l.b16 %v457
      %v672 = vunpack.c.l.b16 %v467
      %v673 = vunpack.c.l.b16 %v477
      %v674 = vunpack.c.l.b16 %v491
      %v675 = vunpack.c.l.b16 %v501
      %v676 = vunpack.c.l.b16 %v511
      %v677 = vunpack.c.l.b16 %v525
      %v678 = vunpack.c.l.b16 %v535
      %v679 = vunpack.c.l.b16 %v545
      %v680 = vunpack.c.l.b16 %v559
      %v681 = vunpack.c.l.b16 %v569
      %v682 = vunpack.c.l.b16 %v579
      %v683 = vunpack.c.l.b16 %v593
      %v684 = vunpack.c.l.b16 %v603
      %v685 = vunpack.c.l.b16 %v613
      %v686 = vunpack.c.l.b16 %v627
      %v687 = vunpack.c.l.b16 %v637
      %v688 = vunpack.c.l.b16 %v647
      %v689 = vpack.c.b16 %v666, %v665
      %v690 = vpack.c.b16 %v668, %v667
      %v691 = vpack.c.b16 %v670, %v669
      %v692 = vpack.c.b16 %v672, %v671
      %v693 = vpack.c.b16 %v674, %v673
      %v694 = vpack.c.b16 %v676, %v675
      %v695 = vpack.c.b16 %v678, %v677
      %v696 = vpack.c.b16 %v680, %v679
      %v697 = vpack.c.b16 %v682, %v681
      %v698 = vpack.c.b16 %v684, %v683
      %v699 = vpack.c.b16 %v686, %v685
      %v700 = vpack.c.b16 %v688, %v687
      %v729 = vunpack.c.l.b16 %v649
      %v730 = vunpack.c.l.b16 %v650
      %v731 = vunpack.c.l.b16 %v651
      %v732 = vunpack.c.l.b16 %v652
      %v733 = vunpack.c.l.b16 %v653
      %v734 = vunpack.c.l.b16 %v654
      %v735 = vunpack.c.l.b16 %v655
      %v736 = vunpack.c.l.b16 %v656
      %v737 = vunpack.c.l.b16 %v657
      %v738 = vunpack.c.l.b16 %v658
      %v739 = vunpack.c.l.b16 %v659
      %v740 = vunpack.c.l.b16 %v660
      %v741 = vunpack.c.l.b16 %v661
      %v742 = vunpack.c.l.b16 %v662
      %v743 = vunpack.c.l.b16 %v663
      %v744 = vunpack.c.l.b16 %v664
      %v745 = vpack.c.b16 %v730, %v729
      %v746 = vpack.c.b16 %v732, %v731
      %v747 = vpack.c.b16 %v734, %v733
      %v748 = vpack.c.b16 %v736, %v735
      %v749 = vpack.c.b16 %v738, %v737
      %v750 = vpack.c.b16 %v740, %v739
      %v751 = vpack.c.b16 %v742, %v741
      %v752 = vpack.c.b16 %v744, %v743
      %761 = vmatpush.bf16.msra.mxu0 %v752
      %762 = vmatpush.bf16.msra.mxu0 %v751
      %763 = vmatpush.bf16.msra.mxu0 %v750
      %764 = vmatpush.bf16.msra.mxu0 %v749
      %765 = vmatpush.bf16.msra.mxu0 %v748
      %766 = vmatpush.bf16.msra.mxu0 %v747
      %767 = vmatpush.bf16.msra.mxu0 %v746
      %768 = vmatpush.bf16.msra.mxu0 %v745
      %769 = vmatmul.bf16.gmra.mxu0 %v689
      %v770 = vpop.f32.mrf.mxu0
      %v771 = vadd.f32 0.0, %v770
      %v772 = vpop.f32.mrf.mxu0
      %v773 = vadd.f32 0.0, %v772
      %774 = vmatmul.bf16.gmra.mxu0 %v690
      %v775 = vpop.f32.mrf.mxu0
      %v776 = vadd.f32 0.0, %v775
      %v777 = vpop.f32.mrf.mxu0
      %v778 = vadd.f32 0.0, %v777
      %779 = vmatmul.bf16.gmra.mxu0 %v691
      %v780 = vpop.f32.mrf.mxu0
      %v781 = vadd.f32 0.0, %v780
      %v782 = vpop.f32.mrf.mxu0
      %v783 = vadd.f32 0.0, %v782
      %784 = vmatmul.bf16.gmra.mxu0 %v692
      %v785 = vpop.f32.mrf.mxu0
      %v786 = vadd.f32 0.0, %v785
      %v787 = vpop.f32.mrf.mxu0
      %v788 = vadd.f32 0.0, %v787
      %789 = vmatmul.bf16.gmra.mxu0 %v693
      %v790 = vpop.f32.mrf.mxu0
      %v791 = vadd.f32 0.0, %v790
      %v792 = vpop.f32.mrf.mxu0
      %v793 = vadd.f32 0.0, %v792
      %794 = vmatmul.bf16.gmra.mxu0 %v694
      %v795 = vpop.f32.mrf.mxu0
      %v796 = vadd.f32 0.0, %v795
      %v797 = vpop.f32.mrf.mxu0
      %v798 = vadd.f32 0.0, %v797
      %799 = vmatmul.bf16.gmra.mxu0 %v695
      %v800 = vpop.f32.mrf.mxu0
      %v801 = vadd.f32 0.0, %v800
      %v802 = vpop.f32.mrf.mxu0
      %v803 = vadd.f32 0.0, %v802
      %804 = vmatmul.bf16.gmra.mxu0 %v696
      %v805 = vpop.f32.mrf.mxu0
      %v806 = vadd.f32 0.0, %v805
      %v807 = vpop.f32.mrf.mxu0
      %v808 = vadd.f32 0.0, %v807
      %809 = vmatmul.bf16.gmra.mxu0 %v697
      %v810 = vpop.f32.mrf.mxu0
      %v811 = vadd.f32 0.0, %v810
      %v812 = vpop.f32.mrf.mxu0
      %v813 = vadd.f32 0.0, %v812
      %814 = vmatmul.bf16.gmra.mxu0 %v698
      %v815 = vpop.f32.mrf.mxu0
      %v816 = vadd.f32 0.0, %v815
      %v817 = vpop.f32.mrf.mxu0
      %v818 = vadd.f32 0.0, %v817
      %819 = vmatmul.bf16.gmra.mxu0 %v699
      %v820 = vpop.f32.mrf.mxu0
      %v821 = vadd.f32 0.0, %v820
      %v822 = vpop.f32.mrf.mxu0
      %v823 = vadd.f32 0.0, %v822
      %824 = vmatmul.bf16.gmra.mxu0 %v700
      %v825 = vpop.f32.mrf.mxu0
      %v826 = vadd.f32 0.0, %v825
      %v827 = vpop.f32.mrf.mxu0
      %v828 = vadd.f32 0.0, %v827
      %829 = vdwg.mxu0
      %v854 = vunpack.c.l.b16 %v325
      %v855 = vunpack.c.l.b16 %v326
      %v856 = vunpack.c.l.b16 %v327
      %v857 = vunpack.c.l.b16 %v328
      %v858 = vunpack.c.l.b16 %v329
      %v859 = vunpack.c.l.b16 %v330
      %v860 = vunpack.c.l.b16 %v331
      %v861 = vunpack.c.l.b16 %v332
      %v862 = vunpack.c.l.b16 %v333
      %v863 = vunpack.c.l.b16 %v334
      %v864 = vunpack.c.l.b16 %v335
      %v865 = vunpack.c.l.b16 %v336
      %v866 = vunpack.c.l.b16 %v337
      %v867 = vunpack.c.l.b16 %v338
      %v868 = vunpack.c.l.b16 %v339
      %v869 = vunpack.c.l.b16 %v340
      %v870 = vunpack.c.l.b16 %v341
      %v871 = vunpack.c.l.b16 %v342
      %v872 = vunpack.c.l.b16 %v343
      %v873 = vunpack.c.l.b16 %v344
      %v874 = vunpack.c.l.b16 %v345
      %v875 = vunpack.c.l.b16 %v346
      %v876 = vunpack.c.l.b16 %v347
      %v877 = vunpack.c.l.b16 %v348
      %v878 = vpack.c.b16 %v855, %v854
      %v879 = vpack.c.b16 %v857, %v856
      %v880 = vpack.c.b16 %v859, %v858
      %v881 = vpack.c.b16 %v861, %v860
      %v882 = vpack.c.b16 %v863, %v862
      %v883 = vpack.c.b16 %v865, %v864
      %v884 = vpack.c.b16 %v867, %v866
      %v885 = vpack.c.b16 %v869, %v868
      %v886 = vpack.c.b16 %v871, %v870
      %v887 = vpack.c.b16 %v873, %v872
      %v888 = vpack.c.b16 %v875, %v874
      %v889 = vpack.c.b16 %v877, %v876
      %v918 = vunpack.c.l.b16 %v349
      %v919 = vunpack.c.l.b16 %v350
      %v920 = vunpack.c.l.b16 %v351
      %v921 = vunpack.c.l.b16 %v352
      %v922 = vunpack.c.l.b16 %v353
      %v923 = vunpack.c.l.b16 %v354
      %v924 = vunpack.c.l.b16 %v355
      %v925 = vunpack.c.l.b16 %v356
      %v926 = vunpack.c.l.b16 %v357
      %v927 = vunpack.c.l.b16 %v358
      %v928 = vunpack.c.l.b16 %v359
      %v929 = vunpack.c.l.b16 %v360
      %v930 = vunpack.c.l.b16 %v361
      %v931 = vunpack.c.l.b16 %v362
      %v932 = vunpack.c.l.b16 %v363
      %v933 = vunpack.c.l.b16 %v364
      %v934 = vpack.c.b16 %v919, %v918
      %v935 = vpack.c.b16 %v921, %v920
      %v936 = vpack.c.b16 %v923, %v922
      %v937 = vpack.c.b16 %v925, %v924
      %v938 = vpack.c.b16 %v927, %v926
      %v939 = vpack.c.b16 %v929, %v928
      %v940 = vpack.c.b16 %v931, %v930
      %v941 = vpack.c.b16 %v933, %v932
      %950 = vmatpush.bf16.msra.mxu0 %v941
      %951 = vmatpush.bf16.msra.mxu0 %v940
      %952 = vmatpush.bf16.msra.mxu0 %v939
      %953 = vmatpush.bf16.msra.mxu0 %v938
      %954 = vmatpush.bf16.msra.mxu0 %v937
      %955 = vmatpush.bf16.msra.mxu0 %v936
      %956 = vmatpush.bf16.msra.mxu0 %v935
      %957 = vmatpush.bf16.msra.mxu0 %v934
      %958 = vmatmul.bf16.gmra.mxu0 %v878
      %v959 = vpop.f32.mrf.mxu0
      %v960 = vadd.f32 %v771, %v959
      %v961 = vpop.f32.mrf.mxu0
      %v962 = vadd.f32 %v773, %v961
      %963 = vmatmul.bf16.gmra.mxu0 %v879
      %v964 = vpop.f32.mrf.mxu0
      %v965 = vadd.f32 %v776, %v964
      %v966 = vpop.f32.mrf.mxu0
      %v967 = vadd.f32 %v778, %v966
      %968 = vmatmul.bf16.gmra.mxu0 %v880
      %v969 = vpop.f32.mrf.mxu0
      %v970 = vadd.f32 %v781, %v969
      %v971 = vpop.f32.mrf.mxu0
      %v972 = vadd.f32 %v783, %v971
      %973 = vmatmul.bf16.gmra.mxu0 %v881
      %v974 = vpop.f32.mrf.mxu0
      %v975 = vadd.f32 %v786, %v974
      %v976 = vpop.f32.mrf.mxu0
      %v977 = vadd.f32 %v788, %v976
      %978 = vmatmul.bf16.gmra.mxu0 %v882
      %v979 = vpop.f32.mrf.mxu0
      %v980 = vadd.f32 %v791, %v979
      %v981 = vpop.f32.mrf.mxu0
      %v982 = vadd.f32 %v793, %v981
      %983 = vmatmul.bf16.gmra.mxu0 %v883
      %v984 = vpop.f32.mrf.mxu0
      %v985 = vadd.f32 %v796, %v984
      %v986 = vpop.f32.mrf.mxu0
      %v987 = vadd.f32 %v798, %v986
      %988 = vmatmul.bf16.gmra.mxu0 %v884
      %v989 = vpop.f32.mrf.mxu0
      %v990 = vadd.f32 %v801, %v989
      %v991 = vpop.f32.mrf.mxu0
      %v992 = vadd.f32 %v803, %v991
      %993 = vmatmul.bf16.gmra.mxu0 %v885
      %v994 = vpop.f32.mrf.mxu0
      %v995 = vadd.f32 %v806, %v994
      %v996 = vpop.f32.mrf.mxu0
      %v997 = vadd.f32 %v808, %v996
      %998 = vmatmul.bf16.gmra.mxu0 %v886
      %v999 = vpop.f32.mrf.mxu0
      %v1000 = vadd.f32 %v811, %v999
      %v1001 = vpop.f32.mrf.mxu0
      %v1002 = vadd.f32 %v813, %v1001
      %1003 = vmatmul.bf16.gmra.mxu0 %v887
      %v1004 = vpop.f32.mrf.mxu0
      %v1005 = vadd.f32 %v816, %v1004
      %v1006 = vpop.f32.mrf.mxu0
      %v1007 = vadd.f32 %v818, %v1006
      %1008 = vmatmul.bf16.gmra.mxu0 %v888
      %v1009 = vpop.f32.mrf.mxu0
      %v1010 = vadd.f32 %v821, %v1009
      %v1011 = vpop.f32.mrf.mxu0
      %v1012 = vadd.f32 %v823, %v1011
      %1013 = vmatmul.bf16.gmra.mxu0 %v889
      %v1014 = vpop.f32.mrf.mxu0
      %v1015 = vadd.f32 %v826, %v1014
      %v1016 = vpop.f32.mrf.mxu0
      %v1017 = vadd.f32 %v828, %v1016
      %1018 = vdwg.mxu0
      %v1019 = vld [vmem:[%s324] sm:$0xe]
      %v1020 = vld [vmem:[%s324 + $0x10] sm:$0xe]
      %v1021 = vld [vmem:[%s324 + $0x20] sm:$0xe]
      %v1022 = vld [vmem:[%s324 + $0x30] sm:$0xe]
      %v1023 = vld [vmem:[%s324 + $0x40] sm:$0xe]
      %v1024 = vld [vmem:[%s324 + $0x50] sm:$0xe]
      %v1025 = vld [vmem:[%s324 + $0x60] sm:$0xe]
      %v1026 = vld [vmem:[%s324 + $0x70] sm:$0xe]
      %vm1043 = vcmask 1042432
      %vm1044 = vcmask 1046532
      %vm1045 = vmor %vm1043, %vm1044
      %v1046 = vrot.slane %v1019, 5
      %v1047 = vrot.slane %v1046, 4
      %v1048 = vrot.slane %v326, 5
      %v1049 = vsel %vm1045, %v1047, %v1048
      %v1050 = vrot.slane %v1048, 4
      %v1051 = vrot.slane %v327, 5
      %v1052 = vsel %vm1045, %v1050, %v1051
      %v1053 = vrot.slane %v1051, 4
      %v1054 = vrot.slane %v365, 5
      %v1055 = vsel %vm1045, %v1053, %v1054
      %v1056 = vrot.slane %v1020, 5
      %v1057 = vrot.slane %v1056, 4
      %v1058 = vrot.slane %v329, 5
      %v1059 = vsel %vm1045, %v1057, %v1058
      %v1060 = vrot.slane %v1058, 4
      %v1061 = vrot.slane %v330, 5
      %v1062 = vsel %vm1045, %v1060, %v1061
      %v1063 = vrot.slane %v1061, 4
      %v1064 = vrot.slane %v366, 5
      %v1065 = vsel %vm1045, %v1063, %v1064
      %v1066 = vrot.slane %v1021, 5
      %v1067 = vrot.slane %v1066, 4
      %v1068 = vrot.slane %v332, 5
      %v1069 = vsel %vm1045, %v1067, %v1068
      %v1070 = vrot.slane %v1068, 4
      %v1071 = vrot.slane %v333, 5
      %v1072 = vsel %vm1045, %v1070, %v1071
      %v1073 = vrot.slane %v1071, 4
      %v1074 = vrot.slane %v367, 5
      %v1075 = vsel %vm1045, %v1073, %v1074
      %v1076 = vrot.slane %v1022, 5
      %v1077 = vrot.slane %v1076, 4
      %v1078 = vrot.slane %v335, 5
      %v1079 = vsel %vm1045, %v1077, %v1078
      %v1080 = vrot.slane %v1078, 4
      %v1081 = vrot.slane %v336, 5
      %v1082 = vsel %vm1045, %v1080, %v1081
      %v1083 = vrot.slane %v1081, 4
      %v1084 = vrot.slane %v368, 5
      %v1085 = vsel %vm1045, %v1083, %v1084
      %v1086 = vrot.slane %v1023, 5
      %v1087 = vrot.slane %v1086, 4
      %v1088 = vrot.slane %v338, 5
      %v1089 = vsel %vm1045, %v1087, %v1088
      %v1090 = vrot.slane %v1088, 4
      %v1091 = vrot.slane %v339, 5
      %v1092 = vsel %vm1045, %v1090, %v1091
      %v1093 = vrot.slane %v1091, 4
      %v1094 = vrot.slane %v369, 5
      %v1095 = vsel %vm1045, %v1093, %v1094
      %v1096 = vrot.slane %v1024, 5
      %v1097 = vrot.slane %v1096, 4
      %v1098 = vrot.slane %v341, 5
      %v1099 = vsel %vm1045, %v1097, %v1098
      %v1100 = vrot.slane %v1098, 4
      %v1101 = vrot.slane %v342, 5
      %v1102 = vsel %vm1045, %v1100, %v1101
      %v1103 = vrot.slane %v1101, 4
      %v1104 = vrot.slane %v370, 5
      %v1105 = vsel %vm1045, %v1103, %v1104
      %v1106 = vrot.slane %v1025, 5
      %v1107 = vrot.slane %v1106, 4
      %v1108 = vrot.slane %v344, 5
      %v1109 = vsel %vm1045, %v1107, %v1108
      %v1110 = vrot.slane %v1108, 4
      %v1111 = vrot.slane %v345, 5
      %v1112 = vsel %vm1045, %v1110, %v1111
      %v1113 = vrot.slane %v1111, 4
      %v1114 = vrot.slane %v371, 5
      %v1115 = vsel %vm1045, %v1113, %v1114
      %v1116 = vrot.slane %v1026, 5
      %v1117 = vrot.slane %v1116, 4
      %v1118 = vrot.slane %v347, 5
      %v1119 = vsel %vm1045, %v1117, %v1118
      %v1120 = vrot.slane %v1118, 4
      %v1121 = vrot.slane %v348, 5
      %v1122 = vsel %vm1045, %v1120, %v1121
      %v1123 = vrot.slane %v1121, 4
      %v1124 = vrot.slane %v372, 5
      %v1125 = vsel %vm1045, %v1123, %v1124
      %s1126 = scalar_lea.vmem %s1, 128
      %v1127 = vld [vmem:[%s1126] sm:$0xf]
      %v1128 = vld [vmem:[%s1126 + $0x4] sm:$0xf]
      %v1129 = vld [vmem:[%s1126 + $0x8] sm:$0xf]
      %v1130 = vld [vmem:[%s1126 + $0xc] sm:$0xf]
      %v1131 = vld [vmem:[%s1126 + $0x10] sm:$0xf]
      %v1132 = vld [vmem:[%s1126 + $0x14] sm:$0xf]
      %v1133 = vld [vmem:[%s1126 + $0x18] sm:$0xf]
      %v1134 = vld [vmem:[%s1126 + $0x1c] sm:$0xf]
      %v1135 = vld [vmem:[%s1126 + $0x20] sm:$0xf]
      %v1136 = vld [vmem:[%s1126 + $0x24] sm:$0xf]
      %v1137 = vld [vmem:[%s1126 + $0x28] sm:$0xf]
      %v1138 = vld [vmem:[%s1126 + $0x2c] sm:$0xf]
      %v1139 = vld [vmem:[%s1126 + $0x30] sm:$0xf]
      %v1140 = vld [vmem:[%s1126 + $0x34] sm:$0xf]
      %v1141 = vld [vmem:[%s1126 + $0x38] sm:$0xf]
      %v1142 = vld [vmem:[%s1126 + $0x3c] sm:$0xf]
      %v1143 = vunpack.c.l.b16 %v1049
      %v1144 = vunpack.c.l.b16 %v1052
      %v1145 = vunpack.c.l.b16 %v1055
      %v1146 = vunpack.c.l.b16 %v1059
      %v1147 = vunpack.c.l.b16 %v1062
      %v1148 = vunpack.c.l.b16 %v1065
      %v1149 = vunpack.c.l.b16 %v1069
      %v1150 = vunpack.c.l.b16 %v1072
      %v1151 = vunpack.c.l.b16 %v1075
      %v1152 = vunpack.c.l.b16 %v1079
      %v1153 = vunpack.c.l.b16 %v1082
      %v1154 = vunpack.c.l.b16 %v1085
      %v1155 = vunpack.c.l.b16 %v1089
      %v1156 = vunpack.c.l.b16 %v1092
      %v1157 = vunpack.c.l.b16 %v1095
      %v1158 = vunpack.c.l.b16 %v1099
      %v1159 = vunpack.c.l.b16 %v1102
      %v1160 = vunpack.c.l.b16 %v1105
      %v1161 = vunpack.c.l.b16 %v1109
      %v1162 = vunpack.c.l.b16 %v1112
      %v1163 = vunpack.c.l.b16 %v1115
      %v1164 = vunpack.c.l.b16 %v1119
      %v1165 = vunpack.c.l.b16 %v1122
      %v1166 = vunpack.c.l.b16 %v1125
      %v1167 = vpack.c.b16 %v1144, %v1143
      %v1168 = vpack.c.b16 %v1146, %v1145
      %v1169 = vpack.c.b16 %v1148, %v1147
      %v1170 = vpack.c.b16 %v1150, %v1149
      %v1171 = vpack.c.b16 %v1152, %v1151
      %v1172 = vpack.c.b16 %v1154, %v1153
      %v1173 = vpack.c.b16 %v1156, %v1155
      %v1174 = vpack.c.b16 %v1158, %v1157
      %v1175 = vpack.c.b16 %v1160, %v1159
      %v1176 = vpack.c.b16 %v1162, %v1161
      %v1177 = vpack.c.b16 %v1164, %v1163
      %v1178 = vpack.c.b16 %v1166, %v1165
      %v1207 = vunpack.c.l.b16 %v1127
      %v1208 = vunpack.c.l.b16 %v1128
      %v1209 = vunpack.c.l.b16 %v1129
      %v1210 = vunpack.c.l.b16 %v1130
      %v1211 = vunpack.c.l.b16 %v1131
      %v1212 = vunpack.c.l.b16 %v1132
      %v1213 = vunpack.c.l.b16 %v1133
      %v1214 = vunpack.c.l.b16 %v1134
      %v1215 = vunpack.c.l.b16 %v1135
      %v1216 = vunpack.c.l.b16 %v1136
      %v1217 = vunpack.c.l.b16 %v1137
      %v1218 = vunpack.c.l.b16 %v1138
      %v1219 = vunpack.c.l.b16 %v1139
      %v1220 = vunpack.c.l.b16 %v1140
      %v1221 = vunpack.c.l.b16 %v1141
      %v1222 = vunpack.c.l.b16 %v1142
      %v1223 = vpack.c.b16 %v1208, %v1207
      %v1224 = vpack.c.b16 %v1210, %v1209
      %v1225 = vpack.c.b16 %v1212, %v1211
      %v1226 = vpack.c.b16 %v1214, %v1213
      %v1227 = vpack.c.b16 %v1216, %v1215
      %v1228 = vpack.c.b16 %v1218, %v1217
      %v1229 = vpack.c.b16 %v1220, %v1219
      %v1230 = vpack.c.b16 %v1222, %v1221
      %1239 = vmatpush.bf16.msra.mxu0 %v1230
      %1240 = vmatpush.bf16.msra.mxu0 %v1229
      %1241 = vmatpush.bf16.msra.mxu0 %v1228
      %1242 = vmatpush.bf16.msra.mxu0 %v1227
      %1243 = vmatpush.bf16.msra.mxu0 %v1226
      %1244 = vmatpush.bf16.msra.mxu0 %v1225
      %1245 = vmatpush.bf16.msra.mxu0 %v1224
      %1246 = vmatpush.bf16.msra.mxu0 %v1223
      %1247 = vmatmul.bf16.gmra.mxu0 %v1167
      %v1248 = vpop.f32.mrf.mxu0
      %v1249 = vadd.f32 0.0, %v1248
      %v1250 = vpop.f32.mrf.mxu0
      %v1251 = vadd.f32 0.0, %v1250
      %1252 = vmatmul.bf16.gmra.mxu0 %v1168
      %v1253 = vpop.f32.mrf.mxu0
      %v1254 = vadd.f32 0.0, %v1253
      %v1255 = vpop.f32.mrf.mxu0
      %v1256 = vadd.f32 0.0, %v1255
      %1257 = vmatmul.bf16.gmra.mxu0 %v1169
      %v1258 = vpop.f32.mrf.mxu0
      %v1259 = vadd.f32 0.0, %v1258
      %v1260 = vpop.f32.mrf.mxu0
      %v1261 = vadd.f32 0.0, %v1260
      %1262 = vmatmul.bf16.gmra.mxu0 %v1170
      %v1263 = vpop.f32.mrf.mxu0
      %v1264 = vadd.f32 0.0, %v1263
      %v1265 = vpop.f32.mrf.mxu0
      %v1266 = vadd.f32 0.0, %v1265
      %1267 = vmatmul.bf16.gmra.mxu0 %v1171
      %v1268 = vpop.f32.mrf.mxu0
      %v1269 = vadd.f32 0.0, %v1268
      %v1270 = vpop.f32.mrf.mxu0
      %v1271 = vadd.f32 0.0, %v1270
      %1272 = vmatmul.bf16.gmra.mxu0 %v1172
      %v1273 = vpop.f32.mrf.mxu0
      %v1274 = vadd.f32 0.0, %v1273
      %v1275 = vpop.f32.mrf.mxu0
      %v1276 = vadd.f32 0.0, %v1275
      %1277 = vmatmul.bf16.gmra.mxu0 %v1173
      %v1278 = vpop.f32.mrf.mxu0
      %v1279 = vadd.f32 0.0, %v1278
      %v1280 = vpop.f32.mrf.mxu0
      %v1281 = vadd.f32 0.0, %v1280
      %1282 = vmatmul.bf16.gmra.mxu0 %v1174
      %v1283 = vpop.f32.mrf.mxu0
      %v1284 = vadd.f32 0.0, %v1283
      %v1285 = vpop.f32.mrf.mxu0
      %v1286 = vadd.f32 0.0, %v1285
      %1287 = vmatmul.bf16.gmra.mxu0 %v1175
      %v1288 = vpop.f32.mrf.mxu0
      %v1289 = vadd.f32 0.0, %v1288
      %v1290 = vpop.f32.mrf.mxu0
      %v1291 = vadd.f32 0.0, %v1290
      %1292 = vmatmul.bf16.gmra.mxu0 %v1176
      %v1293 = vpop.f32.mrf.mxu0
      %v1294 = vadd.f32 0.0, %v1293
      %v1295 = vpop.f32.mrf.mxu0
      %v1296 = vadd.f32 0.0, %v1295
      %1297 = vmatmul.bf16.gmra.mxu0 %v1177
      %v1298 = vpop.f32.mrf.mxu0
      %v1299 = vadd.f32 0.0, %v1298
      %v1300 = vpop.f32.mrf.mxu0
      %v1301 = vadd.f32 0.0, %v1300
      %1302 = vmatmul.bf16.gmra.mxu0 %v1178
      %v1303 = vpop.f32.mrf.mxu0
      %v1304 = vadd.f32 0.0, %v1303
      %v1305 = vpop.f32.mrf.mxu0
      %v1306 = vadd.f32 0.0, %v1305
      %1307 = vdwg.mxu0
      %v1308 = vadd.f32 %v960, %v1249
      %v1309 = vadd.f32 %v962, %v1251
      %v1310 = vadd.f32 %v965, %v1254
      %v1311 = vadd.f32 %v967, %v1256
      %v1312 = vadd.f32 %v970, %v1259
      %v1313 = vadd.f32 %v972, %v1261
      %v1314 = vadd.f32 %v975, %v1264
      %v1315 = vadd.f32 %v977, %v1266
      %v1316 = vadd.f32 %v980, %v1269
      %v1317 = vadd.f32 %v982, %v1271
      %v1318 = vadd.f32 %v985, %v1274
      %v1319 = vadd.f32 %v987, %v1276
      %v1320 = vadd.f32 %v990, %v1279
      %v1321 = vadd.f32 %v992, %v1281
      %v1322 = vadd.f32 %v995, %v1284
      %v1323 = vadd.f32 %v997, %v1286
      %v1324 = vadd.f32 %v1000, %v1289
      %v1325 = vadd.f32 %v1002, %v1291
      %v1326 = vadd.f32 %v1005, %v1294
      %v1327 = vadd.f32 %v1007, %v1296
      %v1328 = vadd.f32 %v1010, %v1299
      %v1329 = vadd.f32 %v1012, %v1301
      %v1330 = vadd.f32 %v1015, %v1304
      %v1331 = vadd.f32 %v1017, %v1306
      %s1332 = sadd.s32 0, 1
      %s1333 = smul.u32 %s1332, 4
      %s1334 = smul.addr %s1333, 4
      %s1335 = scalar_lea.vmem %s273, %s1334
      %v1336 = vld [vmem:[%s1335] sm:$0xf]
      %v1337 = vld [vmem:[%s1335 + $0x4] sm:$0xf]
      %v1338 = vld [vmem:[%s1335 + $0x8] sm:$0xf]
      %v1339 = vld [vmem:[%s1335 + $0x10] sm:$0xf]
      %v1340 = vld [vmem:[%s1335 + $0x14] sm:$0xf]
      %v1341 = vld [vmem:[%s1335 + $0x18] sm:$0xf]
      %v1342 = vld [vmem:[%s1335 + $0x20] sm:$0xf]
      %v1343 = vld [vmem:[%s1335 + $0x24] sm:$0xf]
      %v1344 = vld [vmem:[%s1335 + $0x28] sm:$0xf]
      %v1345 = vld [vmem:[%s1335 + $0x30] sm:$0xf]
      %v1346 = vld [vmem:[%s1335 + $0x34] sm:$0xf]
      %v1347 = vld [vmem:[%s1335 + $0x38] sm:$0xf]
      %v1348 = vld [vmem:[%s1335 + $0x40] sm:$0xf]
      %v1349 = vld [vmem:[%s1335 + $0x44] sm:$0xf]
      %v1350 = vld [vmem:[%s1335 + $0x48] sm:$0xf]
      %v1351 = vld [vmem:[%s1335 + $0x50] sm:$0xf]
      %v1352 = vld [vmem:[%s1335 + $0x54] sm:$0xf]
      %v1353 = vld [vmem:[%s1335 + $0x58] sm:$0xf]
      %v1354 = vld [vmem:[%s1335 + $0x60] sm:$0xf]
      %v1355 = vld [vmem:[%s1335 + $0x64] sm:$0xf]
      %v1356 = vld [vmem:[%s1335 + $0x68] sm:$0xf]
      %v1357 = vld [vmem:[%s1335 + $0x70] sm:$0xf]
      %v1358 = vld [vmem:[%s1335 + $0x74] sm:$0xf]
      %v1359 = vld [vmem:[%s1335 + $0x78] sm:$0xf]
      %s1360 = scalar_lea.vmem %s1, 192
      %v1361 = vld [vmem:[%s1360] sm:$0xf]
      %v1362 = vld [vmem:[%s1360 + $0x4] sm:$0xf]
      %v1363 = vld [vmem:[%s1360 + $0x8] sm:$0xf]
      %v1364 = vld [vmem:[%s1360 + $0xc] sm:$0xf]
      %v1365 = vld [vmem:[%s1360 + $0x10] sm:$0xf]
      %v1366 = vld [vmem:[%s1360 + $0x14] sm:$0xf]
      %v1367 = vld [vmem:[%s1360 + $0x18] sm:$0xf]
      %v1368 = vld [vmem:[%s1360 + $0x1c] sm:$0xf]
      %v1369 = vld [vmem:[%s1360 + $0x20] sm:$0xf]
      %v1370 = vld [vmem:[%s1360 + $0x24] sm:$0xf]
      %v1371 = vld [vmem:[%s1360 + $0x28] sm:$0xf]
      %v1372 = vld [vmem:[%s1360 + $0x2c] sm:$0xf]
      %v1373 = vld [vmem:[%s1360 + $0x30] sm:$0xf]
      %v1374 = vld [vmem:[%s1360 + $0x34] sm:$0xf]
      %v1375 = vld [vmem:[%s1360 + $0x38] sm:$0xf]
      %v1376 = vld [vmem:[%s1360 + $0x3c] sm:$0xf]
      %v1401 = vunpack.c.l.b16 %v1336
      %v1402 = vunpack.c.l.b16 %v1337
      %v1403 = vunpack.c.l.b16 %v1338
      %v1404 = vunpack.c.l.b16 %v1339
      %v1405 = vunpack.c.l.b16 %v1340
      %v1406 = vunpack.c.l.b16 %v1341
      %v1407 = vunpack.c.l.b16 %v1342
      %v1408 = vunpack.c.l.b16 %v1343
      %v1409 = vunpack.c.l.b16 %v1344
      %v1410 = vunpack.c.l.b16 %v1345
      %v1411 = vunpack.c.l.b16 %v1346
      %v1412 = vunpack.c.l.b16 %v1347
      %v1413 = vunpack.c.l.b16 %v1348
      %v1414 = vunpack.c.l.b16 %v1349
      %v1415 = vunpack.c.l.b16 %v1350
      %v1416 = vunpack.c.l.b16 %v1351
      %v1417 = vunpack.c.l.b16 %v1352
      %v1418 = vunpack.c.l.b16 %v1353
      %v1419 = vunpack.c.l.b16 %v1354
      %v1420 = vunpack.c.l.b16 %v1355
      %v1421 = vunpack.c.l.b16 %v1356
      %v1422 = vunpack.c.l.b16 %v1357
      %v1423 = vunpack.c.l.b16 %v1358
      %v1424 = vunpack.c.l.b16 %v1359
      %v1425 = vpack.c.b16 %v1402, %v1401
      %v1426 = vpack.c.b16 %v1404, %v1403
      %v1427 = vpack.c.b16 %v1406, %v1405
      %v1428 = vpack.c.b16 %v1408, %v1407
      %v1429 = vpack.c.b16 %v1410, %v1409
      %v1430 = vpack.c.b16 %v1412, %v1411
      %v1431 = vpack.c.b16 %v1414, %v1413
      %v1432 = vpack.c.b16 %v1416, %v1415
      %v1433 = vpack.c.b16 %v1418, %v1417
      %v1434 = vpack.c.b16 %v1420, %v1419
      %v1435 = vpack.c.b16 %v1422, %v1421
      %v1436 = vpack.c.b16 %v1424, %v1423
      %v1465 = vunpack.c.l.b16 %v1361
      %v1466 = vunpack.c.l.b16 %v1362
      %v1467 = vunpack.c.l.b16 %v1363
      %v1468 = vunpack.c.l.b16 %v1364
      %v1469 = vunpack.c.l.b16 %v1365
      %v1470 = vunpack.c.l.b16 %v1366
      %v1471 = vunpack.c.l.b16 %v1367
      %v1472 = vunpack.c.l.b16 %v1368
      %v1473 = vunpack.c.l.b16 %v1369
      %v1474 = vunpack.c.l.b16 %v1370
      %v1475 = vunpack.c.l.b16 %v1371
      %v1476 = vunpack.c.l.b16 %v1372
      %v1477 = vunpack.c.l.b16 %v1373
      %v1478 = vunpack.c.l.b16 %v1374
      %v1479 = vunpack.c.l.b16 %v1375
      %v1480 = vunpack.c.l.b16 %v1376
      %v1481 = vpack.c.b16 %v1466, %v1465
      %v1482 = vpack.c.b16 %v1468, %v1467
      %v1483 = vpack.c.b16 %v1470, %v1469
      %v1484 = vpack.c.b16 %v1472, %v1471
      %v1485 = vpack.c.b16 %v1474, %v1473
      %v1486 = vpack.c.b16 %v1476, %v1475
      %v1487 = vpack.c.b16 %v1478, %v1477
      %v1488 = vpack.c.b16 %v1480, %v1479
      %1497 = vmatpush.bf16.msra.mxu0 %v1488
      %1498 = vmatpush.bf16.msra.mxu0 %v1487
      %1499 = vmatpush.bf16.msra.mxu0 %v1486
      %1500 = vmatpush.bf16.msra.mxu0 %v1485
      %1501 = vmatpush.bf16.msra.mxu0 %v1484
      %1502 = vmatpush.bf16.msra.mxu0 %v1483
      %1503 = vmatpush.bf16.msra.mxu0 %v1482
      %1504 = vmatpush.bf16.msra.mxu0 %v1481
      %1505 = vmatmul.bf16.gmra.mxu0 %v1425
      %v1506 = vpop.f32.mrf.mxu0
      %v1507 = vadd.f32 0.0, %v1506
      %v1508 = vpop.f32.mrf.mxu0
      %v1509 = vadd.f32 0.0, %v1508
      %1510 = vmatmul.bf16.gmra.mxu0 %v1426
      %v1511 = vpop.f32.mrf.mxu0
      %v1512 = vadd.f32 0.0, %v1511
      %v1513 = vpop.f32.mrf.mxu0
      %v1514 = vadd.f32 0.0, %v1513
      %1515 = vmatmul.bf16.gmra.mxu0 %v1427
      %v1516 = vpop.f32.mrf.mxu0
      %v1517 = vadd.f32 0.0, %v1516
      %v1518 = vpop.f32.mrf.mxu0
      %v1519 = vadd.f32 0.0, %v1518
      %1520 = vmatmul.bf16.gmra.mxu0 %v1428
      %v1521 = vpop.f32.mrf.mxu0
      %v1522 = vadd.f32 0.0, %v1521
      %v1523 = vpop.f32.mrf.mxu0
      %v1524 = vadd.f32 0.0, %v1523
      %1525 = vmatmul.bf16.gmra.mxu0 %v1429
      %v1526 = vpop.f32.mrf.mxu0
      %v1527 = vadd.f32 0.0, %v1526
      %v1528 = vpop.f32.mrf.mxu0
      %v1529 = vadd.f32 0.0, %v1528
      %1530 = vmatmul.bf16.gmra.mxu0 %v1430
      %v1531 = vpop.f32.mrf.mxu0
      %v1532 = vadd.f32 0.0, %v1531
      %v1533 = vpop.f32.mrf.mxu0
      %v1534 = vadd.f32 0.0, %v1533
      %1535 = vmatmul.bf16.gmra.mxu0 %v1431
      %v1536 = vpop.f32.mrf.mxu0
      %v1537 = vadd.f32 0.0, %v1536
      %v1538 = vpop.f32.mrf.mxu0
      %v1539 = vadd.f32 0.0, %v1538
      %1540 = vmatmul.bf16.gmra.mxu0 %v1432
      %v1541 = vpop.f32.mrf.mxu0
      %v1542 = vadd.f32 0.0, %v1541
      %v1543 = vpop.f32.mrf.mxu0
      %v1544 = vadd.f32 0.0, %v1543
      %1545 = vmatmul.bf16.gmra.mxu0 %v1433
      %v1546 = vpop.f32.mrf.mxu0
      %v1547 = vadd.f32 0.0, %v1546
      %v1548 = vpop.f32.mrf.mxu0
      %v1549 = vadd.f32 0.0, %v1548
      %1550 = vmatmul.bf16.gmra.mxu0 %v1434
      %v1551 = vpop.f32.mrf.mxu0
      %v1552 = vadd.f32 0.0, %v1551
      %v1553 = vpop.f32.mrf.mxu0
      %v1554 = vadd.f32 0.0, %v1553
      %1555 = vmatmul.bf16.gmra.mxu0 %v1435
      %v1556 = vpop.f32.mrf.mxu0
      %v1557 = vadd.f32 0.0, %v1556
      %v1558 = vpop.f32.mrf.mxu0
      %v1559 = vadd.f32 0.0, %v1558
      %1560 = vmatmul.bf16.gmra.mxu0 %v1436
      %v1561 = vpop.f32.mrf.mxu0
      %v1562 = vadd.f32 0.0, %v1561
      %v1563 = vpop.f32.mrf.mxu0
      %v1564 = vadd.f32 0.0, %v1563
      %1565 = vdwg.mxu0
      %v1566 = vadd.f32 %v1308, %v1507
      %v1567 = vadd.f32 %v1309, %v1509
      %v1568 = vadd.f32 %v1310, %v1512
      %v1569 = vadd.f32 %v1311, %v1514
      %v1570 = vadd.f32 %v1312, %v1517
      %v1571 = vadd.f32 %v1313, %v1519
      %v1572 = vadd.f32 %v1314, %v1522
      %v1573 = vadd.f32 %v1315, %v1524
      %v1574 = vadd.f32 %v1316, %v1527
      %v1575 = vadd.f32 %v1317, %v1529
      %v1576 = vadd.f32 %v1318, %v1532
      %v1577 = vadd.f32 %v1319, %v1534
      %v1578 = vadd.f32 %v1320, %v1537
      %v1579 = vadd.f32 %v1321, %v1539
      %v1580 = vadd.f32 %v1322, %v1542
      %v1581 = vadd.f32 %v1323, %v1544
      %v1582 = vadd.f32 %v1324, %v1547
      %v1583 = vadd.f32 %v1325, %v1549
      %v1584 = vadd.f32 %v1326, %v1552
      %v1585 = vadd.f32 %v1327, %v1554
      %v1586 = vadd.f32 %v1328, %v1557
      %v1587 = vadd.f32 %v1329, %v1559
      %v1588 = vadd.f32 %v1330, %v1562
      %v1589 = vadd.f32 %v1331, %v1564
      %v1590 = vld [vmem:[%s1335] sm:$0xf]
      %v1591 = vld [vmem:[%s1335 + $0x4] sm:$0xf]
      %v1592 = vld [vmem:[%s1335 + $0x8] sm:$0xf]
      %v1593 = vld [vmem:[%s1335 + $0xc] sm:$0x1]
      %v1594 = vld [vmem:[%s1335 + $0x10] sm:$0xf]
      %v1595 = vld [vmem:[%s1335 + $0x14] sm:$0xf]
      %v1596 = vld [vmem:[%s1335 + $0x18] sm:$0xf]
      %v1597 = vld [vmem:[%s1335 + $0x1c] sm:$0x1]
      %v1598 = vld [vmem:[%s1335 + $0x20] sm:$0xf]
      %v1599 = vld [vmem:[%s1335 + $0x24] sm:$0xf]
      %v1600 = vld [vmem:[%s1335 + $0x28] sm:$0xf]
      %v1601 = vld [vmem:[%s1335 + $0x2c] sm:$0x1]
      %v1602 = vld [vmem:[%s1335 + $0x30] sm:$0xf]
      %v1603 = vld [vmem:[%s1335 + $0x34] sm:$0xf]
      %v1604 = vld [vmem:[%s1335 + $0x38] sm:$0xf]
      %v1605 = vld [vmem:[%s1335 + $0x3c] sm:$0x1]
      %v1606 = vld [vmem:[%s1335 + $0x40] sm:$0xf]
      %v1607 = vld [vmem:[%s1335 + $0x44] sm:$0xf]
      %v1608 = vld [vmem:[%s1335 + $0x48] sm:$0xf]
      %v1609 = vld [vmem:[%s1335 + $0x4c] sm:$0x1]
      %v1610 = vld [vmem:[%s1335 + $0x50] sm:$0xf]
      %v1611 = vld [vmem:[%s1335 + $0x54] sm:$0xf]
      %v1612 = vld [vmem:[%s1335 + $0x58] sm:$0xf]
      %v1613 = vld [vmem:[%s1335 + $0x5c] sm:$0x1]
      %v1614 = vld [vmem:[%s1335 + $0x60] sm:$0xf]
      %v1615 = vld [vmem:[%s1335 + $0x64] sm:$0xf]
      %v1616 = vld [vmem:[%s1335 + $0x68] sm:$0xf]
      %v1617 = vld [vmem:[%s1335 + $0x6c] sm:$0x1]
      %v1618 = vld [vmem:[%s1335 + $0x70] sm:$0xf]
      %v1619 = vld [vmem:[%s1335 + $0x74] sm:$0xf]
      %v1620 = vld [vmem:[%s1335 + $0x78] sm:$0xf]
      %v1621 = vld [vmem:[%s1335 + $0x7c] sm:$0x1]
      %v1623 = vshrl.u32 %v1590, 16
      %v1625 = vrot.slane %v1623, 4
      %v1626 = vshll.u32 %v1590, 16
      %v1628 = vrot.slane %v1626, 5
      %v1629 = vor.u32 %v1625, %v1628
      %v1630 = vrot.slane %v1629, 4
      %v1632 = vshll.u32 %v1591, 16
      %v1634 = vrot.slane %v1632, 5
      %v1635 = vsel %vm375, %v1630, %v1634
      %v1636 = vshrl.u32 %v1591, 16
      %v1638 = vrot.slane %v1636, 4
      %v1639 = vor.u32 %v1638, %v1634
      %v1640 = vrot.slane %v1639, 4
      %v1642 = vshll.u32 %v1592, 16
      %v1644 = vrot.slane %v1642, 5
      %v1645 = vsel %vm375, %v1640, %v1644
      %v1646 = vshrl.u32 %v1592, 16
      %v1648 = vrot.slane %v1646, 4
      %v1649 = vor.u32 %v1648, %v1644
      %v1650 = vrot.slane %v1649, 4
      %v1652 = vshll.u32 %v1593, 16
      %v1654 = vrot.slane %v1652, 5
      %v1655 = vsel %vm375, %v1650, %v1654
      %v1657 = vshrl.u32 %v1594, 16
      %v1659 = vrot.slane %v1657, 4
      %v1660 = vshll.u32 %v1594, 16
      %v1662 = vrot.slane %v1660, 5
      %v1663 = vor.u32 %v1659, %v1662
      %v1664 = vrot.slane %v1663, 4
      %v1666 = vshll.u32 %v1595, 16
      %v1668 = vrot.slane %v1666, 5
      %v1669 = vsel %vm375, %v1664, %v1668
      %v1670 = vshrl.u32 %v1595, 16
      %v1672 = vrot.slane %v1670, 4
      %v1673 = vor.u32 %v1672, %v1668
      %v1674 = vrot.slane %v1673, 4
      %v1676 = vshll.u32 %v1596, 16
      %v1678 = vrot.slane %v1676, 5
      %v1679 = vsel %vm375, %v1674, %v1678
      %v1680 = vshrl.u32 %v1596, 16
      %v1682 = vrot.slane %v1680, 4
      %v1683 = vor.u32 %v1682, %v1678
      %v1684 = vrot.slane %v1683, 4
      %v1686 = vshll.u32 %v1597, 16
      %v1688 = vrot.slane %v1686, 5
      %v1689 = vsel %vm375, %v1684, %v1688
      %v1691 = vshrl.u32 %v1598, 16
      %v1693 = vrot.slane %v1691, 4
      %v1694 = vshll.u32 %v1598, 16
      %v1696 = vrot.slane %v1694, 5
      %v1697 = vor.u32 %v1693, %v1696
      %v1698 = vrot.slane %v1697, 4
      %v1700 = vshll.u32 %v1599, 16
      %v1702 = vrot.slane %v1700, 5
      %v1703 = vsel %vm375, %v1698, %v1702
      %v1704 = vshrl.u32 %v1599, 16
      %v1706 = vrot.slane %v1704, 4
      %v1707 = vor.u32 %v1706, %v1702
      %v1708 = vrot.slane %v1707, 4
      %v1710 = vshll.u32 %v1600, 16
      %v1712 = vrot.slane %v1710, 5
      %v1713 = vsel %vm375, %v1708, %v1712
      %v1714 = vshrl.u32 %v1600, 16
      %v1716 = vrot.slane %v1714, 4
      %v1717 = vor.u32 %v1716, %v1712
      %v1718 = vrot.slane %v1717, 4
      %v1720 = vshll.u32 %v1601, 16
      %v1722 = vrot.slane %v1720, 5
      %v1723 = vsel %vm375, %v1718, %v1722
      %v1725 = vshrl.u32 %v1602, 16
      %v1727 = vrot.slane %v1725, 4
      %v1728 = vshll.u32 %v1602, 16
      %v1730 = vrot.slane %v1728, 5
      %v1731 = vor.u32 %v1727, %v1730
      %v1732 = vrot.slane %v1731, 4
      %v1734 = vshll.u32 %v1603, 16
      %v1736 = vrot.slane %v1734, 5
      %v1737 = vsel %vm375, %v1732, %v1736
      %v1738 = vshrl.u32 %v1603, 16
      %v1740 = vrot.slane %v1738, 4
      %v1741 = vor.u32 %v1740, %v1736
      %v1742 = vrot.slane %v1741, 4
      %v1744 = vshll.u32 %v1604, 16
      %v1746 = vrot.slane %v1744, 5
      %v1747 = vsel %vm375, %v1742, %v1746
      %v1748 = vshrl.u32 %v1604, 16
      %v1750 = vrot.slane %v1748, 4
      %v1751 = vor.u32 %v1750, %v1746
      %v1752 = vrot.slane %v1751, 4
      %v1754 = vshll.u32 %v1605, 16
      %v1756 = vrot.slane %v1754, 5
      %v1757 = vsel %vm375, %v1752, %v1756
      %v1759 = vshrl.u32 %v1606, 16
      %v1761 = vrot.slane %v1759, 4
      %v1762 = vshll.u32 %v1606, 16
      %v1764 = vrot.slane %v1762, 5
      %v1765 = vor.u32 %v1761, %v1764
      %v1766 = vrot.slane %v1765, 4
      %v1768 = vshll.u32 %v1607, 16
      %v1770 = vrot.slane %v1768, 5
      %v1771 = vsel %vm375, %v1766, %v1770
      %v1772 = vshrl.u32 %v1607, 16
      %v1774 = vrot.slane %v1772, 4
      %v1775 = vor.u32 %v1774, %v1770
      %v1776 = vrot.slane %v1775, 4
      %v1778 = vshll.u32 %v1608, 16
      %v1780 = vrot.slane %v1778, 5
      %v1781 = vsel %vm375, %v1776, %v1780
      %v1782 = vshrl.u32 %v1608, 16
      %v1784 = vrot.slane %v1782, 4
      %v1785 = vor.u32 %v1784, %v1780
      %v1786 = vrot.slane %v1785, 4
      %v1788 = vshll.u32 %v1609, 16
      %v1790 = vrot.slane %v1788, 5
      %v1791 = vsel %vm375, %v1786, %v1790
      %v1793 = vshrl.u32 %v1610, 16
      %v1795 = vrot.slane %v1793, 4
      %v1796 = vshll.u32 %v1610, 16
      %v1798 = vrot.slane %v1796, 5
      %v1799 = vor.u32 %v1795, %v1798
      %v1800 = vrot.slane %v1799, 4
      %v1802 = vshll.u32 %v1611, 16
      %v1804 = vrot.slane %v1802, 5
      %v1805 = vsel %vm375, %v1800, %v1804
      %v1806 = vshrl.u32 %v1611, 16
      %v1808 = vrot.slane %v1806, 4
      %v1809 = vor.u32 %v1808, %v1804
      %v1810 = vrot.slane %v1809, 4
      %v1812 = vshll.u32 %v1612, 16
      %v1814 = vrot.slane %v1812, 5
      %v1815 = vsel %vm375, %v1810, %v1814
      %v1816 = vshrl.u32 %v1612, 16
      %v1818 = vrot.slane %v1816, 4
      %v1819 = vor.u32 %v1818, %v1814
      %v1820 = vrot.slane %v1819, 4
      %v1822 = vshll.u32 %v1613, 16
      %v1824 = vrot.slane %v1822, 5
      %v1825 = vsel %vm375, %v1820, %v1824
      %v1827 = vshrl.u32 %v1614, 16
      %v1829 = vrot.slane %v1827, 4
      %v1830 = vshll.u32 %v1614, 16
      %v1832 = vrot.slane %v1830, 5
      %v1833 = vor.u32 %v1829, %v1832
      %v1834 = vrot.slane %v1833, 4
      %v1836 = vshll.u32 %v1615, 16
      %v1838 = vrot.slane %v1836, 5
      %v1839 = vsel %vm375, %v1834, %v1838
      %v1840 = vshrl.u32 %v1615, 16
      %v1842 = vrot.slane %v1840, 4
      %v1843 = vor.u32 %v1842, %v1838
      %v1844 = vrot.slane %v1843, 4
      %v1846 = vshll.u32 %v1616, 16
      %v1848 = vrot.slane %v1846, 5
      %v1849 = vsel %vm375, %v1844, %v1848
      %v1850 = vshrl.u32 %v1616, 16
      %v1852 = vrot.slane %v1850, 4
      %v1853 = vor.u32 %v1852, %v1848
      %v1854 = vrot.slane %v1853, 4
      %v1856 = vshll.u32 %v1617, 16
      %v1858 = vrot.slane %v1856, 5
      %v1859 = vsel %vm375, %v1854, %v1858
      %v1861 = vshrl.u32 %v1618, 16
      %v1863 = vrot.slane %v1861, 4
      %v1864 = vshll.u32 %v1618, 16
      %v1866 = vrot.slane %v1864, 5
      %v1867 = vor.u32 %v1863, %v1866
      %v1868 = vrot.slane %v1867, 4
      %v1870 = vshll.u32 %v1619, 16
      %v1872 = vrot.slane %v1870, 5
      %v1873 = vsel %vm375, %v1868, %v1872
      %v1874 = vshrl.u32 %v1619, 16
      %v1876 = vrot.slane %v1874, 4
      %v1877 = vor.u32 %v1876, %v1872
      %v1878 = vrot.slane %v1877, 4
      %v1880 = vshll.u32 %v1620, 16
      %v1882 = vrot.slane %v1880, 5
      %v1883 = vsel %vm375, %v1878, %v1882
      %v1884 = vshrl.u32 %v1620, 16
      %v1886 = vrot.slane %v1884, 4
      %v1887 = vor.u32 %v1886, %v1882
      %v1888 = vrot.slane %v1887, 4
      %v1890 = vshll.u32 %v1621, 16
      %v1892 = vrot.slane %v1890, 5
      %v1893 = vsel %vm375, %v1888, %v1892
      %s1894 = scalar_lea.vmem %s1, 256
      %v1895 = vld [vmem:[%s1894] sm:$0xf]
      %v1896 = vld [vmem:[%s1894 + $0x4] sm:$0xf]
      %v1897 = vld [vmem:[%s1894 + $0x8] sm:$0xf]
      %v1898 = vld [vmem:[%s1894 + $0xc] sm:$0xf]
      %v1899 = vld [vmem:[%s1894 + $0x10] sm:$0xf]
      %v1900 = vld [vmem:[%s1894 + $0x14] sm:$0xf]
      %v1901 = vld [vmem:[%s1894 + $0x18] sm:$0xf]
      %v1902 = vld [vmem:[%s1894 + $0x1c] sm:$0xf]
      %v1903 = vld [vmem:[%s1894 + $0x20] sm:$0xf]
      %v1904 = vld [vmem:[%s1894 + $0x24] sm:$0xf]
      %v1905 = vld [vmem:[%s1894 + $0x28] sm:$0xf]
      %v1906 = vld [vmem:[%s1894 + $0x2c] sm:$0xf]
      %v1907 = vld [vmem:[%s1894 + $0x30] sm:$0xf]
      %v1908 = vld [vmem:[%s1894 + $0x34] sm:$0xf]
      %v1909 = vld [vmem:[%s1894 + $0x38] sm:$0xf]
      %v1910 = vld [vmem:[%s1894 + $0x3c] sm:$0xf]
      %v1911 = vunpack.c.l.b16 %v1635
      %v1912 = vunpack.c.l.b16 %v1645
      %v1913 = vunpack.c.l.b16 %v1655
      %v1914 = vunpack.c.l.b16 %v1669
      %v1915 = vunpack.c.l.b16 %v1679
      %v1916 = vunpack.c.l.b16 %v1689
      %v1917 = vunpack.c.l.b16 %v1703
      %v1918 = vunpack.c.l.b16 %v1713
      %v1919 = vunpack.c.l.b16 %v1723
      %v1920 = vunpack.c.l.b16 %v1737
      %v1921 = vunpack.c.l.b16 %v1747
      %v1922 = vunpack.c.l.b16 %v1757
      %v1923 = vunpack.c.l.b16 %v1771
      %v1924 = vunpack.c.l.b16 %v1781
      %v1925 = vunpack.c.l.b16 %v1791
      %v1926 = vunpack.c.l.b16 %v1805
      %v1927 = vunpack.c.l.b16 %v1815
      %v1928 = vunpack.c.l.b16 %v1825
      %v1929 = vunpack.c.l.b16 %v1839
      %v1930 = vunpack.c.l.b16 %v1849
      %v1931 = vunpack.c.l.b16 %v1859
      %v1932 = vunpack.c.l.b16 %v1873
      %v1933 = vunpack.c.l.b16 %v1883
      %v1934 = vunpack.c.l.b16 %v1893
      %v1935 = vpack.c.b16 %v1912, %v1911
      %v1936 = vpack.c.b16 %v1914, %v1913
      %v1937 = vpack.c.b16 %v1916, %v1915
      %v1938 = vpack.c.b16 %v1918, %v1917
      %v1939 = vpack.c.b16 %v1920, %v1919
      %v1940 = vpack.c.b16 %v1922, %v1921
      %v1941 = vpack.c.b16 %v1924, %v1923
      %v1942 = vpack.c.b16 %v1926, %v1925
      %v1943 = vpack.c.b16 %v1928, %v1927
      %v1944 = vpack.c.b16 %v1930, %v1929
      %v1945 = vpack.c.b16 %v1932, %v1931
      %v1946 = vpack.c.b16 %v1934, %v1933
      %v1975 = vunpack.c.l.b16 %v1895
      %v1976 = vunpack.c.l.b16 %v1896
      %v1977 = vunpack.c.l.b16 %v1897
      %v1978 = vunpack.c.l.b16 %v1898
      %v1979 = vunpack.c.l.b16 %v1899
      %v1980 = vunpack.c.l.b16 %v1900
      %v1981 = vunpack.c.l.b16 %v1901
      %v1982 = vunpack.c.l.b16 %v1902
      %v1983 = vunpack.c.l.b16 %v1903
      %v1984 = vunpack.c.l.b16 %v1904
      %v1985 = vunpack.c.l.b16 %v1905
      %v1986 = vunpack.c.l.b16 %v1906
      %v1987 = vunpack.c.l.b16 %v1907
      %v1988 = vunpack.c.l.b16 %v1908
      %v1989 = vunpack.c.l.b16 %v1909
      %v1990 = vunpack.c.l.b16 %v1910
      %v1991 = vpack.c.b16 %v1976, %v1975
      %v1992 = vpack.c.b16 %v1978, %v1977
      %v1993 = vpack.c.b16 %v1980, %v1979
      %v1994 = vpack.c.b16 %v1982, %v1981
      %v1995 = vpack.c.b16 %v1984, %v1983
      %v1996 = vpack.c.b16 %v1986, %v1985
      %v1997 = vpack.c.b16 %v1988, %v1987
      %v1998 = vpack.c.b16 %v1990, %v1989
      %2007 = vmatpush.bf16.msra.mxu0 %v1998
      %2008 = vmatpush.bf16.msra.mxu0 %v1997
      %2009 = vmatpush.bf16.msra.mxu0 %v1996
      %2010 = vmatpush.bf16.msra.mxu0 %v1995
      %2011 = vmatpush.bf16.msra.mxu0 %v1994
      %2012 = vmatpush.bf16.msra.mxu0 %v1993
      %2013 = vmatpush.bf16.msra.mxu0 %v1992
      %2014 = vmatpush.bf16.msra.mxu0 %v1991
      %2015 = vmatmul.bf16.gmra.mxu0 %v1935
      %v2016 = vpop.f32.mrf.mxu0
      %v2017 = vadd.f32 0.0, %v2016
      %v2018 = vpop.f32.mrf.mxu0
      %v2019 = vadd.f32 0.0, %v2018
      %2020 = vmatmul.bf16.gmra.mxu0 %v1936
      %v2021 = vpop.f32.mrf.mxu0
      %v2022 = vadd.f32 0.0, %v2021
      %v2023 = vpop.f32.mrf.mxu0
      %v2024 = vadd.f32 0.0, %v2023
      %2025 = vmatmul.bf16.gmra.mxu0 %v1937
      %v2026 = vpop.f32.mrf.mxu0
      %v2027 = vadd.f32 0.0, %v2026
      %v2028 = vpop.f32.mrf.mxu0
      %v2029 = vadd.f32 0.0, %v2028
      %2030 = vmatmul.bf16.gmra.mxu0 %v1938
      %v2031 = vpop.f32.mrf.mxu0
      %v2032 = vadd.f32 0.0, %v2031
      %v2033 = vpop.f32.mrf.mxu0
      %v2034 = vadd.f32 0.0, %v2033
      %2035 = vmatmul.bf16.gmra.mxu0 %v1939
      %v2036 = vpop.f32.mrf.mxu0
      %v2037 = vadd.f32 0.0, %v2036
      %v2038 = vpop.f32.mrf.mxu0
      %v2039 = vadd.f32 0.0, %v2038
      %2040 = vmatmul.bf16.gmra.mxu0 %v1940
      %v2041 = vpop.f32.mrf.mxu0
      %v2042 = vadd.f32 0.0, %v2041
      %v2043 = vpop.f32.mrf.mxu0
      %v2044 = vadd.f32 0.0, %v2043
      %2045 = vmatmul.bf16.gmra.mxu0 %v1941
      %v2046 = vpop.f32.mrf.mxu0
      %v2047 = vadd.f32 0.0, %v2046
      %v2048 = vpop.f32.mrf.mxu0
      %v2049 = vadd.f32 0.0, %v2048
      %2050 = vmatmul.bf16.gmra.mxu0 %v1942
      %v2051 = vpop.f32.mrf.mxu0
      %v2052 = vadd.f32 0.0, %v2051
      %v2053 = vpop.f32.mrf.mxu0
      %v2054 = vadd.f32 0.0, %v2053
      %2055 = vmatmul.bf16.gmra.mxu0 %v1943
      %v2056 = vpop.f32.mrf.mxu0
      %v2057 = vadd.f32 0.0, %v2056
      %v2058 = vpop.f32.mrf.mxu0
      %v2059 = vadd.f32 0.0, %v2058
      %2060 = vmatmul.bf16.gmra.mxu0 %v1944
      %v2061 = vpop.f32.mrf.mxu0
      %v2062 = vadd.f32 0.0, %v2061
      %v2063 = vpop.f32.mrf.mxu0
      %v2064 = vadd.f32 0.0, %v2063
      %2065 = vmatmul.bf16.gmra.mxu0 %v1945
      %v2066 = vpop.f32.mrf.mxu0
      %v2067 = vadd.f32 0.0, %v2066
      %v2068 = vpop.f32.mrf.mxu0
      %v2069 = vadd.f32 0.0, %v2068
      %2070 = vmatmul.bf16.gmra.mxu0 %v1946
      %v2071 = vpop.f32.mrf.mxu0
      %v2072 = vadd.f32 0.0, %v2071
      %v2073 = vpop.f32.mrf.mxu0
      %v2074 = vadd.f32 0.0, %v2073
      %2075 = vdwg.mxu0
      %v2076 = vadd.f32 %v1566, %v2017
      %v2077 = vadd.f32 %v1567, %v2019
      %v2078 = vadd.f32 %v1568, %v2022
      %v2079 = vadd.f32 %v1569, %v2024
      %v2080 = vadd.f32 %v1570, %v2027
      %v2081 = vadd.f32 %v1571, %v2029
      %v2082 = vadd.f32 %v1572, %v2032
      %v2083 = vadd.f32 %v1573, %v2034
      %v2084 = vadd.f32 %v1574, %v2037
      %v2085 = vadd.f32 %v1575, %v2039
      %v2086 = vadd.f32 %v1576, %v2042
      %v2087 = vadd.f32 %v1577, %v2044
      %v2088 = vadd.f32 %v1578, %v2047
      %v2089 = vadd.f32 %v1579, %v2049
      %v2090 = vadd.f32 %v1580, %v2052
      %v2091 = vadd.f32 %v1581, %v2054
      %v2092 = vadd.f32 %v1582, %v2057
      %v2093 = vadd.f32 %v1583, %v2059
      %v2094 = vadd.f32 %v1584, %v2062
      %v2095 = vadd.f32 %v1585, %v2064
      %v2096 = vadd.f32 %v1586, %v2067
      %v2097 = vadd.f32 %v1587, %v2069
      %v2098 = vadd.f32 %v1588, %v2072
      %v2099 = vadd.f32 %v1589, %v2074
      %v2100 = vld [vmem:[%s1335] sm:$0xe]
      %v2101 = vld [vmem:[%s1335 + $0x10] sm:$0xe]
      %v2102 = vld [vmem:[%s1335 + $0x20] sm:$0xe]
      %v2103 = vld [vmem:[%s1335 + $0x30] sm:$0xe]
      %v2104 = vld [vmem:[%s1335 + $0x40] sm:$0xe]
      %v2105 = vld [vmem:[%s1335 + $0x50] sm:$0xe]
      %v2106 = vld [vmem:[%s1335 + $0x60] sm:$0xe]
      %v2107 = vld [vmem:[%s1335 + $0x70] sm:$0xe]
      %v2140 = vrot.slane %v2100, 5
      %v2141 = vrot.slane %v2140, 4
      %v2142 = vrot.slane %v1591, 5
      %v2143 = vsel %vm1045, %v2141, %v2142
      %v2144 = vrot.slane %v2142, 4
      %v2145 = vrot.slane %v1592, 5
      %v2146 = vsel %vm1045, %v2144, %v2145
      %v2147 = vrot.slane %v2145, 4
      %v2148 = vrot.slane %v1593, 5
      %v2149 = vsel %vm1045, %v2147, %v2148
      %v2150 = vrot.slane %v2101, 5
      %v2151 = vrot.slane %v2150, 4
      %v2152 = vrot.slane %v1595, 5
      %v2153 = vsel %vm1045, %v2151, %v2152
      %v2154 = vrot.slane %v2152, 4
      %v2155 = vrot.slane %v1596, 5
      %v2156 = vsel %vm1045, %v2154, %v2155
      %v2157 = vrot.slane %v2155, 4
      %v2158 = vrot.slane %v1597, 5
      %v2159 = vsel %vm1045, %v2157, %v2158
      %v2160 = vrot.slane %v2102, 5
      %v2161 = vrot.slane %v2160, 4
      %v2162 = vrot.slane %v1599, 5
      %v2163 = vsel %vm1045, %v2161, %v2162
      %v2164 = vrot.slane %v2162, 4
      %v2165 = vrot.slane %v1600, 5
      %v2166 = vsel %vm1045, %v2164, %v2165
      %v2167 = vrot.slane %v2165, 4
      %v2168 = vrot.slane %v1601, 5
      %v2169 = vsel %vm1045, %v2167, %v2168
      %v2170 = vrot.slane %v2103, 5
      %v2171 = vrot.slane %v2170, 4
      %v2172 = vrot.slane %v1603, 5
      %v2173 = vsel %vm1045, %v2171, %v2172
      %v2174 = vrot.slane %v2172, 4
      %v2175 = vrot.slane %v1604, 5
      %v2176 = vsel %vm1045, %v2174, %v2175
      %v2177 = vrot.slane %v2175, 4
      %v2178 = vrot.slane %v1605, 5
      %v2179 = vsel %vm1045, %v2177, %v2178
      %v2180 = vrot.slane %v2104, 5
      %v2181 = vrot.slane %v2180, 4
      %v2182 = vrot.slane %v1607, 5
      %v2183 = vsel %vm1045, %v2181, %v2182
      %v2184 = vrot.slane %v2182, 4
      %v2185 = vrot.slane %v1608, 5
      %v2186 = vsel %vm1045, %v2184, %v2185
      %v2187 = vrot.slane %v2185, 4
      %v2188 = vrot.slane %v1609, 5
      %v2189 = vsel %vm1045, %v2187, %v2188
      %v2190 = vrot.slane %v2105, 5
      %v2191 = vrot.slane %v2190, 4
      %v2192 = vrot.slane %v1611, 5
      %v2193 = vsel %vm1045, %v2191, %v2192
      %v2194 = vrot.slane %v2192, 4
      %v2195 = vrot.slane %v1612, 5
      %v2196 = vsel %vm1045, %v2194, %v2195
      %v2197 = vrot.slane %v2195, 4
      %v2198 = vrot.slane %v1613, 5
      %v2199 = vsel %vm1045, %v2197, %v2198
      %v2200 = vrot.slane %v2106, 5
      %v2201 = vrot.slane %v2200, 4
      %v2202 = vrot.slane %v1615, 5
      %v2203 = vsel %vm1045, %v2201, %v2202
      %v2204 = vrot.slane %v2202, 4
      %v2205 = vrot.slane %v1616, 5
      %v2206 = vsel %vm1045, %v2204, %v2205
      %v2207 = vrot.slane %v2205, 4
      %v2208 = vrot.slane %v1617, 5
      %v2209 = vsel %vm1045, %v2207, %v2208
      %v2210 = vrot.slane %v2107, 5
      %v2211 = vrot.slane %v2210, 4
      %v2212 = vrot.slane %v1619, 5
      %v2213 = vsel %vm1045, %v2211, %v2212
      %v2214 = vrot.slane %v2212, 4
      %v2215 = vrot.slane %v1620, 5
      %v2216 = vsel %vm1045, %v2214, %v2215
      %v2217 = vrot.slane %v2215, 4
      %v2218 = vrot.slane %v1621, 5
      %v2219 = vsel %vm1045, %v2217, %v2218
      %s2220 = scalar_lea.vmem %s1, 320
      %v2221 = vld [vmem:[%s2220] sm:$0xf]
      %v2222 = vld [vmem:[%s2220 + $0x4] sm:$0xf]
      %v2223 = vld [vmem:[%s2220 + $0x8] sm:$0xf]
      %v2224 = vld [vmem:[%s2220 + $0xc] sm:$0xf]
      %v2225 = vld [vmem:[%s2220 + $0x10] sm:$0xf]
      %v2226 = vld [vmem:[%s2220 + $0x14] sm:$0xf]
      %v2227 = vld [vmem:[%s2220 + $0x18] sm:$0xf]
      %v2228 = vld [vmem:[%s2220 + $0x1c] sm:$0xf]
      %v2229 = vld [vmem:[%s2220 + $0x20] sm:$0xf]
      %v2230 = vld [vmem:[%s2220 + $0x24] sm:$0xf]
      %v2231 = vld [vmem:[%s2220 + $0x28] sm:$0xf]
      %v2232 = vld [vmem:[%s2220 + $0x2c] sm:$0xf]
      %v2233 = vld [vmem:[%s2220 + $0x30] sm:$0xf]
      %v2234 = vld [vmem:[%s2220 + $0x34] sm:$0xf]
      %v2235 = vld [vmem:[%s2220 + $0x38] sm:$0xf]
      %v2236 = vld [vmem:[%s2220 + $0x3c] sm:$0xf]
      %v2237 = vunpack.c.l.b16 %v2143
      %v2238 = vunpack.c.l.b16 %v2146
      %v2239 = vunpack.c.l.b16 %v2149
      %v2240 = vunpack.c.l.b16 %v2153
      %v2241 = vunpack.c.l.b16 %v2156
      %v2242 = vunpack.c.l.b16 %v2159
      %v2243 = vunpack.c.l.b16 %v2163
      %v2244 = vunpack.c.l.b16 %v2166
      %v2245 = vunpack.c.l.b16 %v2169
      %v2246 = vunpack.c.l.b16 %v2173
      %v2247 = vunpack.c.l.b16 %v2176
      %v2248 = vunpack.c.l.b16 %v2179
      %v2249 = vunpack.c.l.b16 %v2183
      %v2250 = vunpack.c.l.b16 %v2186
      %v2251 = vunpack.c.l.b16 %v2189
      %v2252 = vunpack.c.l.b16 %v2193
      %v2253 = vunpack.c.l.b16 %v2196
      %v2254 = vunpack.c.l.b16 %v2199
      %v2255 = vunpack.c.l.b16 %v2203
      %v2256 = vunpack.c.l.b16 %v2206
      %v2257 = vunpack.c.l.b16 %v2209
      %v2258 = vunpack.c.l.b16 %v2213
      %v2259 = vunpack.c.l.b16 %v2216
      %v2260 = vunpack.c.l.b16 %v2219
      %v2261 = vpack.c.b16 %v2238, %v2237
      %v2262 = vpack.c.b16 %v2240, %v2239
      %v2263 = vpack.c.b16 %v2242, %v2241
      %v2264 = vpack.c.b16 %v2244, %v2243
      %v2265 = vpack.c.b16 %v2246, %v2245
      %v2266 = vpack.c.b16 %v2248, %v2247
      %v2267 = vpack.c.b16 %v2250, %v2249
      %v2268 = vpack.c.b16 %v2252, %v2251
      %v2269 = vpack.c.b16 %v2254, %v2253
      %v2270 = vpack.c.b16 %v2256, %v2255
      %v2271 = vpack.c.b16 %v2258, %v2257
      %v2272 = vpack.c.b16 %v2260, %v2259
      %v2301 = vunpack.c.l.b16 %v2221
      %v2302 = vunpack.c.l.b16 %v2222
      %v2303 = vunpack.c.l.b16 %v2223
      %v2304 = vunpack.c.l.b16 %v2224
      %v2305 = vunpack.c.l.b16 %v2225
      %v2306 = vunpack.c.l.b16 %v2226
      %v2307 = vunpack.c.l.b16 %v2227
      %v2308 = vunpack.c.l.b16 %v2228
      %v2309 = vunpack.c.l.b16 %v2229
      %v2310 = vunpack.c.l.b16 %v2230
      %v2311 = vunpack.c.l.b16 %v2231
      %v2312 = vunpack.c.l.b16 %v2232
      %v2313 = vunpack.c.l.b16 %v2233
      %v2314 = vunpack.c.l.b16 %v2234
      %v2315 = vunpack.c.l.b16 %v2235
      %v2316 = vunpack.c.l.b16 %v2236
      %v2317 = vpack.c.b16 %v2302, %v2301
      %v2318 = vpack.c.b16 %v2304, %v2303
      %v2319 = vpack.c.b16 %v2306, %v2305
      %v2320 = vpack.c.b16 %v2308, %v2307
      %v2321 = vpack.c.b16 %v2310, %v2309
      %v2322 = vpack.c.b16 %v2312, %v2311
      %v2323 = vpack.c.b16 %v2314, %v2313
      %v2324 = vpack.c.b16 %v2316, %v2315
      %2333 = vmatpush.bf16.msra.mxu0 %v2324
      %2334 = vmatpush.bf16.msra.mxu0 %v2323
      %2335 = vmatpush.bf16.msra.mxu0 %v2322
      %2336 = vmatpush.bf16.msra.mxu0 %v2321
      %2337 = vmatpush.bf16.msra.mxu0 %v2320
      %2338 = vmatpush.bf16.msra.mxu0 %v2319
      %2339 = vmatpush.bf16.msra.mxu0 %v2318
      %2340 = vmatpush.bf16.msra.mxu0 %v2317
      %2341 = vmatmul.bf16.gmra.mxu0 %v2261
      %v2342 = vpop.f32.mrf.mxu0
      %v2343 = vadd.f32 0.0, %v2342
      %v2344 = vpop.f32.mrf.mxu0
      %v2345 = vadd.f32 0.0, %v2344
      %2346 = vmatmul.bf16.gmra.mxu0 %v2262
      %v2347 = vpop.f32.mrf.mxu0
      %v2348 = vadd.f32 0.0, %v2347
      %v2349 = vpop.f32.mrf.mxu0
      %v2350 = vadd.f32 0.0, %v2349
      %2351 = vmatmul.bf16.gmra.mxu0 %v2263
      %v2352 = vpop.f32.mrf.mxu0
      %v2353 = vadd.f32 0.0, %v2352
      %v2354 = vpop.f32.mrf.mxu0
      %v2355 = vadd.f32 0.0, %v2354
      %2356 = vmatmul.bf16.gmra.mxu0 %v2264
      %v2357 = vpop.f32.mrf.mxu0
      %v2358 = vadd.f32 0.0, %v2357
      %v2359 = vpop.f32.mrf.mxu0
      %v2360 = vadd.f32 0.0, %v2359
      %2361 = vmatmul.bf16.gmra.mxu0 %v2265
      %v2362 = vpop.f32.mrf.mxu0
      %v2363 = vadd.f32 0.0, %v2362
      %v2364 = vpop.f32.mrf.mxu0
      %v2365 = vadd.f32 0.0, %v2364
      %2366 = vmatmul.bf16.gmra.mxu0 %v2266
      %v2367 = vpop.f32.mrf.mxu0
      %v2368 = vadd.f32 0.0, %v2367
      %v2369 = vpop.f32.mrf.mxu0
      %v2370 = vadd.f32 0.0, %v2369
      %2371 = vmatmul.bf16.gmra.mxu0 %v2267
      %v2372 = vpop.f32.mrf.mxu0
      %v2373 = vadd.f32 0.0, %v2372
      %v2374 = vpop.f32.mrf.mxu0
      %v2375 = vadd.f32 0.0, %v2374
      %2376 = vmatmul.bf16.gmra.mxu0 %v2268
      %v2377 = vpop.f32.mrf.mxu0
      %v2378 = vadd.f32 0.0, %v2377
      %v2379 = vpop.f32.mrf.mxu0
      %v2380 = vadd.f32 0.0, %v2379
      %2381 = vmatmul.bf16.gmra.mxu0 %v2269
      %v2382 = vpop.f32.mrf.mxu0
      %v2383 = vadd.f32 0.0, %v2382
      %v2384 = vpop.f32.mrf.mxu0
      %v2385 = vadd.f32 0.0, %v2384
      %2386 = vmatmul.bf16.gmra.mxu0 %v2270
      %v2387 = vpop.f32.mrf.mxu0
      %v2388 = vadd.f32 0.0, %v2387
      %v2389 = vpop.f32.mrf.mxu0
      %v2390 = vadd.f32 0.0, %v2389
      %2391 = vmatmul.bf16.gmra.mxu0 %v2271
      %v2392 = vpop.f32.mrf.mxu0
      %v2393 = vadd.f32 0.0, %v2392
      %v2394 = vpop.f32.mrf.mxu0
      %v2395 = vadd.f32 0.0, %v2394
      %2396 = vmatmul.bf16.gmra.mxu0 %v2272
      %v2397 = vpop.f32.mrf.mxu0
      %v2398 = vadd.f32 0.0, %v2397
      %v2399 = vpop.f32.mrf.mxu0
      %v2400 = vadd.f32 0.0, %v2399
      %2401 = vdwg.mxu0
      %v2402 = vadd.f32 %v2076, %v2343
      %v2403 = vadd.f32 %v2077, %v2345
      %v2404 = vadd.f32 %v2078, %v2348
      %v2405 = vadd.f32 %v2079, %v2350
      %v2406 = vadd.f32 %v2080, %v2353
      %v2407 = vadd.f32 %v2081, %v2355
      %v2408 = vadd.f32 %v2082, %v2358
      %v2409 = vadd.f32 %v2083, %v2360
      %v2410 = vadd.f32 %v2084, %v2363
      %v2411 = vadd.f32 %v2085, %v2365
      %v2412 = vadd.f32 %v2086, %v2368
      %v2413 = vadd.f32 %v2087, %v2370
      %v2414 = vadd.f32 %v2088, %v2373
      %v2415 = vadd.f32 %v2089, %v2375
      %v2416 = vadd.f32 %v2090, %v2378
      %v2417 = vadd.f32 %v2091, %v2380
      %v2418 = vadd.f32 %v2092, %v2383
      %v2419 = vadd.f32 %v2093, %v2385
      %v2420 = vadd.f32 %v2094, %v2388
      %v2421 = vadd.f32 %v2095, %v2390
      %v2422 = vadd.f32 %v2096, %v2393
      %v2423 = vadd.f32 %v2097, %v2395
      %v2424 = vadd.f32 %v2098, %v2398
      %v2425 = vadd.f32 %v2099, %v2400
      %s2426 = sadd.s32 0, 2
      %s2427 = smul.u32 %s2426, 4
      %s2428 = smul.addr %s2427, 4
      %s2429 = scalar_lea.vmem %s273, %s2428
      %v2430 = vld [vmem:[%s2429] sm:$0xf]
      %v2431 = vld [vmem:[%s2429 + $0x4] sm:$0xf]
      %v2432 = vld [vmem:[%s2429 + $0x8] sm:$0xf]
      %v2433 = vld [vmem:[%s2429 + $0x10] sm:$0xf]
      %v2434 = vld [vmem:[%s2429 + $0x14] sm:$0xf]
      %v2435 = vld [vmem:[%s2429 + $0x18] sm:$0xf]
      %v2436 = vld [vmem:[%s2429 + $0x20] sm:$0xf]
      %v2437 = vld [vmem:[%s2429 + $0x24] sm:$0xf]
      %v2438 = vld [vmem:[%s2429 + $0x28] sm:$0xf]
      %v2439 = vld [vmem:[%s2429 + $0x30] sm:$0xf]
      %v2440 = vld [vmem:[%s2429 + $0x34] sm:$0xf]
      %v2441 = vld [vmem:[%s2429 + $0x38] sm:$0xf]
      %v2442 = vld [vmem:[%s2429 + $0x40] sm:$0xf]
      %v2443 = vld [vmem:[%s2429 + $0x44] sm:$0xf]
      %v2444 = vld [vmem:[%s2429 + $0x48] sm:$0xf]
      %v2445 = vld [vmem:[%s2429 + $0x50] sm:$0xf]
      %v2446 = vld [vmem:[%s2429 + $0x54] sm:$0xf]
      %v2447 = vld [vmem:[%s2429 + $0x58] sm:$0xf]
      %v2448 = vld [vmem:[%s2429 + $0x60] sm:$0xf]
      %v2449 = vld [vmem:[%s2429 + $0x64] sm:$0xf]
      %v2450 = vld [vmem:[%s2429 + $0x68] sm:$0xf]
      %v2451 = vld [vmem:[%s2429 + $0x70] sm:$0xf]
      %v2452 = vld [vmem:[%s2429 + $0x74] sm:$0xf]
      %v2453 = vld [vmem:[%s2429 + $0x78] sm:$0xf]
      %s2454 = scalar_lea.vmem %s1, 384
      %v2455 = vld [vmem:[%s2454] sm:$0xf]
      %v2456 = vld [vmem:[%s2454 + $0x4] sm:$0xf]
      %v2457 = vld [vmem:[%s2454 + $0x8] sm:$0xf]
      %v2458 = vld [vmem:[%s2454 + $0xc] sm:$0xf]
      %v2459 = vld [vmem:[%s2454 + $0x10] sm:$0xf]
      %v2460 = vld [vmem:[%s2454 + $0x14] sm:$0xf]
      %v2461 = vld [vmem:[%s2454 + $0x18] sm:$0xf]
      %v2462 = vld [vmem:[%s2454 + $0x1c] sm:$0xf]
      %v2463 = vld [vmem:[%s2454 + $0x20] sm:$0xf]
      %v2464 = vld [vmem:[%s2454 + $0x24] sm:$0xf]
      %v2465 = vld [vmem:[%s2454 + $0x28] sm:$0xf]
      %v2466 = vld [vmem:[%s2454 + $0x2c] sm:$0xf]
      %v2467 = vld [vmem:[%s2454 + $0x30] sm:$0xf]
      %v2468 = vld [vmem:[%s2454 + $0x34] sm:$0xf]
      %v2469 = vld [vmem:[%s2454 + $0x38] sm:$0xf]
      %v2470 = vld [vmem:[%s2454 + $0x3c] sm:$0xf]
      %v2495 = vunpack.c.l.b16 %v2430
      %v2496 = vunpack.c.l.b16 %v2431
      %v2497 = vunpack.c.l.b16 %v2432
      %v2498 = vunpack.c.l.b16 %v2433
      %v2499 = vunpack.c.l.b16 %v2434
      %v2500 = vunpack.c.l.b16 %v2435
      %v2501 = vunpack.c.l.b16 %v2436
      %v2502 = vunpack.c.l.b16 %v2437
      %v2503 = vunpack.c.l.b16 %v2438
      %v2504 = vunpack.c.l.b16 %v2439
      %v2505 = vunpack.c.l.b16 %v2440
      %v2506 = vunpack.c.l.b16 %v2441
      %v2507 = vunpack.c.l.b16 %v2442
      %v2508 = vunpack.c.l.b16 %v2443
      %v2509 = vunpack.c.l.b16 %v2444
      %v2510 = vunpack.c.l.b16 %v2445
      %v2511 = vunpack.c.l.b16 %v2446
      %v2512 = vunpack.c.l.b16 %v2447
      %v2513 = vunpack.c.l.b16 %v2448
      %v2514 = vunpack.c.l.b16 %v2449
      %v2515 = vunpack.c.l.b16 %v2450
      %v2516 = vunpack.c.l.b16 %v2451
      %v2517 = vunpack.c.l.b16 %v2452
      %v2518 = vunpack.c.l.b16 %v2453
      %v2519 = vpack.c.b16 %v2496, %v2495
      %v2520 = vpack.c.b16 %v2498, %v2497
      %v2521 = vpack.c.b16 %v2500, %v2499
      %v2522 = vpack.c.b16 %v2502, %v2501
      %v2523 = vpack.c.b16 %v2504, %v2503
      %v2524 = vpack.c.b16 %v2506, %v2505
      %v2525 = vpack.c.b16 %v2508, %v2507
      %v2526 = vpack.c.b16 %v2510, %v2509
      %v2527 = vpack.c.b16 %v2512, %v2511
      %v2528 = vpack.c.b16 %v2514, %v2513
      %v2529 = vpack.c.b16 %v2516, %v2515
      %v2530 = vpack.c.b16 %v2518, %v2517
      %v2559 = vunpack.c.l.b16 %v2455
      %v2560 = vunpack.c.l.b16 %v2456
      %v2561 = vunpack.c.l.b16 %v2457
      %v2562 = vunpack.c.l.b16 %v2458
      %v2563 = vunpack.c.l.b16 %v2459
      %v2564 = vunpack.c.l.b16 %v2460
      %v2565 = vunpack.c.l.b16 %v2461
      %v2566 = vunpack.c.l.b16 %v2462
      %v2567 = vunpack.c.l.b16 %v2463
      %v2568 = vunpack.c.l.b16 %v2464
      %v2569 = vunpack.c.l.b16 %v2465
      %v2570 = vunpack.c.l.b16 %v2466
      %v2571 = vunpack.c.l.b16 %v2467
      %v2572 = vunpack.c.l.b16 %v2468
      %v2573 = vunpack.c.l.b16 %v2469
      %v2574 = vunpack.c.l.b16 %v2470
      %v2575 = vpack.c.b16 %v2560, %v2559
      %v2576 = vpack.c.b16 %v2562, %v2561
      %v2577 = vpack.c.b16 %v2564, %v2563
      %v2578 = vpack.c.b16 %v2566, %v2565
      %v2579 = vpack.c.b16 %v2568, %v2567
      %v2580 = vpack.c.b16 %v2570, %v2569
      %v2581 = vpack.c.b16 %v2572, %v2571
      %v2582 = vpack.c.b16 %v2574, %v2573
      %2591 = vmatpush.bf16.msra.mxu0 %v2582
      %2592 = vmatpush.bf16.msra.mxu0 %v2581
      %2593 = vmatpush.bf16.msra.mxu0 %v2580
      %2594 = vmatpush.bf16.msra.mxu0 %v2579
      %2595 = vmatpush.bf16.msra.mxu0 %v2578
      %2596 = vmatpush.bf16.msra.mxu0 %v2577
      %2597 = vmatpush.bf16.msra.mxu0 %v2576
      %2598 = vmatpush.bf16.msra.mxu0 %v2575
      %2599 = vmatmul.bf16.gmra.mxu0 %v2519
      %v2600 = vpop.f32.mrf.mxu0
      %v2601 = vadd.f32 0.0, %v2600
      %v2602 = vpop.f32.mrf.mxu0
      %v2603 = vadd.f32 0.0, %v2602
      %2604 = vmatmul.bf16.gmra.mxu0 %v2520
      %v2605 = vpop.f32.mrf.mxu0
      %v2606 = vadd.f32 0.0, %v2605
      %v2607 = vpop.f32.mrf.mxu0
      %v2608 = vadd.f32 0.0, %v2607
      %2609 = vmatmul.bf16.gmra.mxu0 %v2521
      %v2610 = vpop.f32.mrf.mxu0
      %v2611 = vadd.f32 0.0, %v2610
      %v2612 = vpop.f32.mrf.mxu0
      %v2613 = vadd.f32 0.0, %v2612
      %2614 = vmatmul.bf16.gmra.mxu0 %v2522
      %v2615 = vpop.f32.mrf.mxu0
      %v2616 = vadd.f32 0.0, %v2615
      %v2617 = vpop.f32.mrf.mxu0
      %v2618 = vadd.f32 0.0, %v2617
      %2619 = vmatmul.bf16.gmra.mxu0 %v2523
      %v2620 = vpop.f32.mrf.mxu0
      %v2621 = vadd.f32 0.0, %v2620
      %v2622 = vpop.f32.mrf.mxu0
      %v2623 = vadd.f32 0.0, %v2622
      %2624 = vmatmul.bf16.gmra.mxu0 %v2524
      %v2625 = vpop.f32.mrf.mxu0
      %v2626 = vadd.f32 0.0, %v2625
      %v2627 = vpop.f32.mrf.mxu0
      %v2628 = vadd.f32 0.0, %v2627
      %2629 = vmatmul.bf16.gmra.mxu0 %v2525
      %v2630 = vpop.f32.mrf.mxu0
      %v2631 = vadd.f32 0.0, %v2630
      %v2632 = vpop.f32.mrf.mxu0
      %v2633 = vadd.f32 0.0, %v2632
      %2634 = vmatmul.bf16.gmra.mxu0 %v2526
      %v2635 = vpop.f32.mrf.mxu0
      %v2636 = vadd.f32 0.0, %v2635
      %v2637 = vpop.f32.mrf.mxu0
      %v2638 = vadd.f32 0.0, %v2637
      %2639 = vmatmul.bf16.gmra.mxu0 %v2527
      %v2640 = vpop.f32.mrf.mxu0
      %v2641 = vadd.f32 0.0, %v2640
      %v2642 = vpop.f32.mrf.mxu0
      %v2643 = vadd.f32 0.0, %v2642
      %2644 = vmatmul.bf16.gmra.mxu0 %v2528
      %v2645 = vpop.f32.mrf.mxu0
      %v2646 = vadd.f32 0.0, %v2645
      %v2647 = vpop.f32.mrf.mxu0
      %v2648 = vadd.f32 0.0, %v2647
      %2649 = vmatmul.bf16.gmra.mxu0 %v2529
      %v2650 = vpop.f32.mrf.mxu0
      %v2651 = vadd.f32 0.0, %v2650
      %v2652 = vpop.f32.mrf.mxu0
      %v2653 = vadd.f32 0.0, %v2652
      %2654 = vmatmul.bf16.gmra.mxu0 %v2530
      %v2655 = vpop.f32.mrf.mxu0
      %v2656 = vadd.f32 0.0, %v2655
      %v2657 = vpop.f32.mrf.mxu0
      %v2658 = vadd.f32 0.0, %v2657
      %2659 = vdwg.mxu0
      %v2660 = vadd.f32 %v2402, %v2601
      %v2661 = vadd.f32 %v2403, %v2603
      %v2662 = vadd.f32 %v2404, %v2606
      %v2663 = vadd.f32 %v2405, %v2608
      %v2664 = vadd.f32 %v2406, %v2611
      %v2665 = vadd.f32 %v2407, %v2613
      %v2666 = vadd.f32 %v2408, %v2616
      %v2667 = vadd.f32 %v2409, %v2618
      %v2668 = vadd.f32 %v2410, %v2621
      %v2669 = vadd.f32 %v2411, %v2623
      %v2670 = vadd.f32 %v2412, %v2626
      %v2671 = vadd.f32 %v2413, %v2628
      %v2672 = vadd.f32 %v2414, %v2631
      %v2673 = vadd.f32 %v2415, %v2633
      %v2674 = vadd.f32 %v2416, %v2636
      %v2675 = vadd.f32 %v2417, %v2638
      %v2676 = vadd.f32 %v2418, %v2641
      %v2677 = vadd.f32 %v2419, %v2643
      %v2678 = vadd.f32 %v2420, %v2646
      %v2679 = vadd.f32 %v2421, %v2648
      %v2680 = vadd.f32 %v2422, %v2651
      %v2681 = vadd.f32 %v2423, %v2653
      %v2682 = vadd.f32 %v2424, %v2656
      %v2683 = vadd.f32 %v2425, %v2658
      %v2684 = vld [vmem:[%s2429] sm:$0xf]
      %v2685 = vld [vmem:[%s2429 + $0x4] sm:$0xf]
      %v2686 = vld [vmem:[%s2429 + $0x8] sm:$0xf]
      %v2687 = vld [vmem:[%s2429 + $0xc] sm:$0x1]
      %v2688 = vld [vmem:[%s2429 + $0x10] sm:$0xf]
      %v2689 = vld [vmem:[%s2429 + $0x14] sm:$0xf]
      %v2690 = vld [vmem:[%s2429 + $0x18] sm:$0xf]
      %v2691 = vld [vmem:[%s2429 + $0x1c] sm:$0x1]
      %v2692 = vld [vmem:[%s2429 + $0x20] sm:$0xf]
      %v2693 = vld [vmem:[%s2429 + $0x24] sm:$0xf]
      %v2694 = vld [vmem:[%s2429 + $0x28] sm:$0xf]
      %v2695 = vld [vmem:[%s2429 + $0x2c] sm:$0x1]
      %v2696 = vld [vmem:[%s2429 + $0x30] sm:$0xf]
      %v2697 = vld [vmem:[%s2429 + $0x34] sm:$0xf]
      %v2698 = vld [vmem:[%s2429 + $0x38] sm:$0xf]
      %v2699 = vld [vmem:[%s2429 + $0x3c] sm:$0x1]
      %v2700 = vld [vmem:[%s2429 + $0x40] sm:$0xf]
      %v2701 = vld [vmem:[%s2429 + $0x44] sm:$0xf]
      %v2702 = vld [vmem:[%s2429 + $0x48] sm:$0xf]
      %v2703 = vld [vmem:[%s2429 + $0x4c] sm:$0x1]
      %v2704 = vld [vmem:[%s2429 + $0x50] sm:$0xf]
      %v2705 = vld [vmem:[%s2429 + $0x54] sm:$0xf]
      %v2706 = vld [vmem:[%s2429 + $0x58] sm:$0xf]
      %v2707 = vld [vmem:[%s2429 + $0x5c] sm:$0x1]
      %v2708 = vld [vmem:[%s2429 + $0x60] sm:$0xf]
      %v2709 = vld [vmem:[%s2429 + $0x64] sm:$0xf]
      %v2710 = vld [vmem:[%s2429 + $0x68] sm:$0xf]
      %v2711 = vld [vmem:[%s2429 + $0x6c] sm:$0x1]
      %v2712 = vld [vmem:[%s2429 + $0x70] sm:$0xf]
      %v2713 = vld [vmem:[%s2429 + $0x74] sm:$0xf]
      %v2714 = vld [vmem:[%s2429 + $0x78] sm:$0xf]
      %v2715 = vld [vmem:[%s2429 + $0x7c] sm:$0x1]
      %v2717 = vshrl.u32 %v2684, 16
      %v2719 = vrot.slane %v2717, 4
      %v2720 = vshll.u32 %v2684, 16
      %v2722 = vrot.slane %v2720, 5
      %v2723 = vor.u32 %v2719, %v2722
      %v2724 = vrot.slane %v2723, 4
      %v2726 = vshll.u32 %v2685, 16
      %v2728 = vrot.slane %v2726, 5
      %v2729 = vsel %vm375, %v2724, %v2728
      %v2730 = vshrl.u32 %v2685, 16
      %v2732 = vrot.slane %v2730, 4
      %v2733 = vor.u32 %v2732, %v2728
      %v2734 = vrot.slane %v2733, 4
      %v2736 = vshll.u32 %v2686, 16
      %v2738 = vrot.slane %v2736, 5
      %v2739 = vsel %vm375, %v2734, %v2738
      %v2740 = vshrl.u32 %v2686, 16
      %v2742 = vrot.slane %v2740, 4
      %v2743 = vor.u32 %v2742, %v2738
      %v2744 = vrot.slane %v2743, 4
      %v2746 = vshll.u32 %v2687, 16
      %v2748 = vrot.slane %v2746, 5
      %v2749 = vsel %vm375, %v2744, %v2748
      %v2751 = vshrl.u32 %v2688, 16
      %v2753 = vrot.slane %v2751, 4
      %v2754 = vshll.u32 %v2688, 16
      %v2756 = vrot.slane %v2754, 5
      %v2757 = vor.u32 %v2753, %v2756
      %v2758 = vrot.slane %v2757, 4
      %v2760 = vshll.u32 %v2689, 16
      %v2762 = vrot.slane %v2760, 5
      %v2763 = vsel %vm375, %v2758, %v2762
      %v2764 = vshrl.u32 %v2689, 16
      %v2766 = vrot.slane %v2764, 4
      %v2767 = vor.u32 %v2766, %v2762
      %v2768 = vrot.slane %v2767, 4
      %v2770 = vshll.u32 %v2690, 16
      %v2772 = vrot.slane %v2770, 5
      %v2773 = vsel %vm375, %v2768, %v2772
      %v2774 = vshrl.u32 %v2690, 16
      %v2776 = vrot.slane %v2774, 4
      %v2777 = vor.u32 %v2776, %v2772
      %v2778 = vrot.slane %v2777, 4
      %v2780 = vshll.u32 %v2691, 16
      %v2782 = vrot.slane %v2780, 5
      %v2783 = vsel %vm375, %v2778, %v2782
      %v2785 = vshrl.u32 %v2692, 16
      %v2787 = vrot.slane %v2785, 4
      %v2788 = vshll.u32 %v2692, 16
      %v2790 = vrot.slane %v2788, 5
      %v2791 = vor.u32 %v2787, %v2790
      %v2792 = vrot.slane %v2791, 4
      %v2794 = vshll.u32 %v2693, 16
      %v2796 = vrot.slane %v2794, 5
      %v2797 = vsel %vm375, %v2792, %v2796
      %v2798 = vshrl.u32 %v2693, 16
      %v2800 = vrot.slane %v2798, 4
      %v2801 = vor.u32 %v2800, %v2796
      %v2802 = vrot.slane %v2801, 4
      %v2804 = vshll.u32 %v2694, 16
      %v2806 = vrot.slane %v2804, 5
      %v2807 = vsel %vm375, %v2802, %v2806
      %v2808 = vshrl.u32 %v2694, 16
      %v2810 = vrot.slane %v2808, 4
      %v2811 = vor.u32 %v2810, %v2806
      %v2812 = vrot.slane %v2811, 4
      %v2814 = vshll.u32 %v2695, 16
      %v2816 = vrot.slane %v2814, 5
      %v2817 = vsel %vm375, %v2812, %v2816
      %v2819 = vshrl.u32 %v2696, 16
      %v2821 = vrot.slane %v2819, 4
      %v2822 = vshll.u32 %v2696, 16
      %v2824 = vrot.slane %v2822, 5
      %v2825 = vor.u32 %v2821, %v2824
      %v2826 = vrot.slane %v2825, 4
      %v2828 = vshll.u32 %v2697, 16
      %v2830 = vrot.slane %v2828, 5
      %v2831 = vsel %vm375, %v2826, %v2830
      %v2832 = vshrl.u32 %v2697, 16
      %v2834 = vrot.slane %v2832, 4
      %v2835 = vor.u32 %v2834, %v2830
      %v2836 = vrot.slane %v2835, 4
      %v2838 = vshll.u32 %v2698, 16
      %v2840 = vrot.slane %v2838, 5
      %v2841 = vsel %vm375, %v2836, %v2840
      %v2842 = vshrl.u32 %v2698, 16
      %v2844 = vrot.slane %v2842, 4
      %v2845 = vor.u32 %v2844, %v2840
      %v2846 = vrot.slane %v2845, 4
      %v2848 = vshll.u32 %v2699, 16
      %v2850 = vrot.slane %v2848, 5
      %v2851 = vsel %vm375, %v2846, %v2850
      %v2853 = vshrl.u32 %v2700, 16
      %v2855 = vrot.slane %v2853, 4
      %v2856 = vshll.u32 %v2700, 16
      %v2858 = vrot.slane %v2856, 5
      %v2859 = vor.u32 %v2855, %v2858
      %v2860 = vrot.slane %v2859, 4
      %v2862 = vshll.u32 %v2701, 16
      %v2864 = vrot.slane %v2862, 5
      %v2865 = vsel %vm375, %v2860, %v2864
      %v2866 = vshrl.u32 %v2701, 16
      %v2868 = vrot.slane %v2866, 4
      %v2869 = vor.u32 %v2868, %v2864
      %v2870 = vrot.slane %v2869, 4
      %v2872 = vshll.u32 %v2702, 16
      %v2874 = vrot.slane %v2872, 5
      %v2875 = vsel %vm375, %v2870, %v2874
      %v2876 = vshrl.u32 %v2702, 16
      %v2878 = vrot.slane %v2876, 4
      %v2879 = vor.u32 %v2878, %v2874
      %v2880 = vrot.slane %v2879, 4
      %v2882 = vshll.u32 %v2703, 16
      %v2884 = vrot.slane %v2882, 5
      %v2885 = vsel %vm375, %v2880, %v2884
      %v2887 = vshrl.u32 %v2704, 16
      %v2889 = vrot.slane %v2887, 4
      %v2890 = vshll.u32 %v2704, 16
      %v2892 = vrot.slane %v2890, 5
      %v2893 = vor.u32 %v2889, %v2892
      %v2894 = vrot.slane %v2893, 4
      %v2896 = vshll.u32 %v2705, 16
      %v2898 = vrot.slane %v2896, 5
      %v2899 = vsel %vm375, %v2894, %v2898
      %v2900 = vshrl.u32 %v2705, 16
      %v2902 = vrot.slane %v2900, 4
      %v2903 = vor.u32 %v2902, %v2898
      %v2904 = vrot.slane %v2903, 4
      %v2906 = vshll.u32 %v2706, 16
      %v2908 = vrot.slane %v2906, 5
      %v2909 = vsel %vm375, %v2904, %v2908
      %v2910 = vshrl.u32 %v2706, 16
      %v2912 = vrot.slane %v2910, 4
      %v2913 = vor.u32 %v2912, %v2908
      %v2914 = vrot.slane %v2913, 4
      %v2916 = vshll.u32 %v2707, 16
      %v2918 = vrot.slane %v2916, 5
      %v2919 = vsel %vm375, %v2914, %v2918
      %v2921 = vshrl.u32 %v2708, 16
      %v2923 = vrot.slane %v2921, 4
      %v2924 = vshll.u32 %v2708, 16
      %v2926 = vrot.slane %v2924, 5
      %v2927 = vor.u32 %v2923, %v2926
      %v2928 = vrot.slane %v2927, 4
      %v2930 = vshll.u32 %v2709, 16
      %v2932 = vrot.slane %v2930, 5
      %v2933 = vsel %vm375, %v2928, %v2932
      %v2934 = vshrl.u32 %v2709, 16
      %v2936 = vrot.slane %v2934, 4
      %v2937 = vor.u32 %v2936, %v2932
      %v2938 = vrot.slane %v2937, 4
      %v2940 = vshll.u32 %v2710, 16
      %v2942 = vrot.slane %v2940, 5
      %v2943 = vsel %vm375, %v2938, %v2942
      %v2944 = vshrl.u32 %v2710, 16
      %v2946 = vrot.slane %v2944, 4
      %v2947 = vor.u32 %v2946, %v2942
      %v2948 = vrot.slane %v2947, 4
      %v2950 = vshll.u32 %v2711, 16
      %v2952 = vrot.slane %v2950, 5
      %v2953 = vsel %vm375, %v2948, %v2952
      %v2955 = vshrl.u32 %v2712, 16
      %v2957 = vrot.slane %v2955, 4
      %v2958 = vshll.u32 %v2712, 16
      %v2960 = vrot.slane %v2958, 5
      %v2961 = vor.u32 %v2957, %v2960
      %v2962 = vrot.slane %v2961, 4
      %v2964 = vshll.u32 %v2713, 16
      %v2966 = vrot.slane %v2964, 5
      %v2967 = vsel %vm375, %v2962, %v2966
      %v2968 = vshrl.u32 %v2713, 16
      %v2970 = vrot.slane %v2968, 4
      %v2971 = vor.u32 %v2970, %v2966
      %v2972 = vrot.slane %v2971, 4
      %v2974 = vshll.u32 %v2714, 16
      %v2976 = vrot.slane %v2974, 5
      %v2977 = vsel %vm375, %v2972, %v2976
      %v2978 = vshrl.u32 %v2714, 16
      %v2980 = vrot.slane %v2978, 4
      %v2981 = vor.u32 %v2980, %v2976
      %v2982 = vrot.slane %v2981, 4
      %v2984 = vshll.u32 %v2715, 16
      %v2986 = vrot.slane %v2984, 5
      %v2987 = vsel %vm375, %v2982, %v2986
      %s2988 = scalar_lea.vmem %s1, 448
      %v2989 = vld [vmem:[%s2988] sm:$0xf]
      %v2990 = vld [vmem:[%s2988 + $0x4] sm:$0xf]
      %v2991 = vld [vmem:[%s2988 + $0x8] sm:$0xf]
      %v2992 = vld [vmem:[%s2988 + $0xc] sm:$0xf]
      %v2993 = vld [vmem:[%s2988 + $0x10] sm:$0xf]
      %v2994 = vld [vmem:[%s2988 + $0x14] sm:$0xf]
      %v2995 = vld [vmem:[%s2988 + $0x18] sm:$0xf]
      %v2996 = vld [vmem:[%s2988 + $0x1c] sm:$0xf]
      %v2997 = vld [vmem:[%s2988 + $0x20] sm:$0xf]
      %v2998 = vld [vmem:[%s2988 + $0x24] sm:$0xf]
      %v2999 = vld [vmem:[%s2988 + $0x28] sm:$0xf]
      %v3000 = vld [vmem:[%s2988 + $0x2c] sm:$0xf]
      %v3001 = vld [vmem:[%s2988 + $0x30] sm:$0xf]
      %v3002 = vld [vmem:[%s2988 + $0x34] sm:$0xf]
      %v3003 = vld [vmem:[%s2988 + $0x38] sm:$0xf]
      %v3004 = vld [vmem:[%s2988 + $0x3c] sm:$0xf]
      %v3005 = vunpack.c.l.b16 %v2729
      %v3006 = vunpack.c.l.b16 %v2739
      %v3007 = vunpack.c.l.b16 %v2749
      %v3008 = vunpack.c.l.b16 %v2763
      %v3009 = vunpack.c.l.b16 %v2773
      %v3010 = vunpack.c.l.b16 %v2783
      %v3011 = vunpack.c.l.b16 %v2797
      %v3012 = vunpack.c.l.b16 %v2807
      %v3013 = vunpack.c.l.b16 %v2817
      %v3014 = vunpack.c.l.b16 %v2831
      %v3015 = vunpack.c.l.b16 %v2841
      %v3016 = vunpack.c.l.b16 %v2851
      %v3017 = vunpack.c.l.b16 %v2865
      %v3018 = vunpack.c.l.b16 %v2875
      %v3019 = vunpack.c.l.b16 %v2885
      %v3020 = vunpack.c.l.b16 %v2899
      %v3021 = vunpack.c.l.b16 %v2909
      %v3022 = vunpack.c.l.b16 %v2919
      %v3023 = vunpack.c.l.b16 %v2933
      %v3024 = vunpack.c.l.b16 %v2943
      %v3025 = vunpack.c.l.b16 %v2953
      %v3026 = vunpack.c.l.b16 %v2967
      %v3027 = vunpack.c.l.b16 %v2977
      %v3028 = vunpack.c.l.b16 %v2987
      %v3029 = vpack.c.b16 %v3006, %v3005
      %v3030 = vpack.c.b16 %v3008, %v3007
      %v3031 = vpack.c.b16 %v3010, %v3009
      %v3032 = vpack.c.b16 %v3012, %v3011
      %v3033 = vpack.c.b16 %v3014, %v3013
      %v3034 = vpack.c.b16 %v3016, %v3015
      %v3035 = vpack.c.b16 %v3018, %v3017
      %v3036 = vpack.c.b16 %v3020, %v3019
      %v3037 = vpack.c.b16 %v3022, %v3021
      %v3038 = vpack.c.b16 %v3024, %v3023
      %v3039 = vpack.c.b16 %v3026, %v3025
      %v3040 = vpack.c.b16 %v3028, %v3027
      %v3069 = vunpack.c.l.b16 %v2989
      %v3070 = vunpack.c.l.b16 %v2990
      %v3071 = vunpack.c.l.b16 %v2991
      %v3072 = vunpack.c.l.b16 %v2992
      %v3073 = vunpack.c.l.b16 %v2993
      %v3074 = vunpack.c.l.b16 %v2994
      %v3075 = vunpack.c.l.b16 %v2995
      %v3076 = vunpack.c.l.b16 %v2996
      %v3077 = vunpack.c.l.b16 %v2997
      %v3078 = vunpack.c.l.b16 %v2998
      %v3079 = vunpack.c.l.b16 %v2999
      %v3080 = vunpack.c.l.b16 %v3000
      %v3081 = vunpack.c.l.b16 %v3001
      %v3082 = vunpack.c.l.b16 %v3002
      %v3083 = vunpack.c.l.b16 %v3003
      %v3084 = vunpack.c.l.b16 %v3004
      %v3085 = vpack.c.b16 %v3070, %v3069
      %v3086 = vpack.c.b16 %v3072, %v3071
      %v3087 = vpack.c.b16 %v3074, %v3073
      %v3088 = vpack.c.b16 %v3076, %v3075
      %v3089 = vpack.c.b16 %v3078, %v3077
      %v3090 = vpack.c.b16 %v3080, %v3079
      %v3091 = vpack.c.b16 %v3082, %v3081
      %v3092 = vpack.c.b16 %v3084, %v3083
      %3101 = vmatpush.bf16.msra.mxu0 %v3092
      %3102 = vmatpush.bf16.msra.mxu0 %v3091
      %3103 = vmatpush.bf16.msra.mxu0 %v3090
      %3104 = vmatpush.bf16.msra.mxu0 %v3089
      %3105 = vmatpush.bf16.msra.mxu0 %v3088
      %3106 = vmatpush.bf16.msra.mxu0 %v3087
      %3107 = vmatpush.bf16.msra.mxu0 %v3086
      %3108 = vmatpush.bf16.msra.mxu0 %v3085
      %3109 = vmatmul.bf16.gmra.mxu0 %v3029
      %v3110 = vpop.f32.mrf.mxu0
      %v3111 = vadd.f32 0.0, %v3110
      %v3112 = vpop.f32.mrf.mxu0
      %v3113 = vadd.f32 0.0, %v3112
      %3114 = vmatmul.bf16.gmra.mxu0 %v3030
      %v3115 = vpop.f32.mrf.mxu0
      %v3116 = vadd.f32 0.0, %v3115
      %v3117 = vpop.f32.mrf.mxu0
      %v3118 = vadd.f32 0.0, %v3117
      %3119 = vmatmul.bf16.gmra.mxu0 %v3031
      %v3120 = vpop.f32.mrf.mxu0
      %v3121 = vadd.f32 0.0, %v3120
      %v3122 = vpop.f32.mrf.mxu0
      %v3123 = vadd.f32 0.0, %v3122
      %3124 = vmatmul.bf16.gmra.mxu0 %v3032
      %v3125 = vpop.f32.mrf.mxu0
      %v3126 = vadd.f32 0.0, %v3125
      %v3127 = vpop.f32.mrf.mxu0
      %v3128 = vadd.f32 0.0, %v3127
      %3129 = vmatmul.bf16.gmra.mxu0 %v3033
      %v3130 = vpop.f32.mrf.mxu0
      %v3131 = vadd.f32 0.0, %v3130
      %v3132 = vpop.f32.mrf.mxu0
      %v3133 = vadd.f32 0.0, %v3132
      %3134 = vmatmul.bf16.gmra.mxu0 %v3034
      %v3135 = vpop.f32.mrf.mxu0
      %v3136 = vadd.f32 0.0, %v3135
      %v3137 = vpop.f32.mrf.mxu0
      %v3138 = vadd.f32 0.0, %v3137
      %3139 = vmatmul.bf16.gmra.mxu0 %v3035
      %v3140 = vpop.f32.mrf.mxu0
      %v3141 = vadd.f32 0.0, %v3140
      %v3142 = vpop.f32.mrf.mxu0
      %v3143 = vadd.f32 0.0, %v3142
      %3144 = vmatmul.bf16.gmra.mxu0 %v3036
      %v3145 = vpop.f32.mrf.mxu0
      %v3146 = vadd.f32 0.0, %v3145
      %v3147 = vpop.f32.mrf.mxu0
      %v3148 = vadd.f32 0.0, %v3147
      %3149 = vmatmul.bf16.gmra.mxu0 %v3037
      %v3150 = vpop.f32.mrf.mxu0
      %v3151 = vadd.f32 0.0, %v3150
      %v3152 = vpop.f32.mrf.mxu0
      %v3153 = vadd.f32 0.0, %v3152
      %3154 = vmatmul.bf16.gmra.mxu0 %v3038
      %v3155 = vpop.f32.mrf.mxu0
      %v3156 = vadd.f32 0.0, %v3155
      %v3157 = vpop.f32.mrf.mxu0
      %v3158 = vadd.f32 0.0, %v3157
      %3159 = vmatmul.bf16.gmra.mxu0 %v3039
      %v3160 = vpop.f32.mrf.mxu0
      %v3161 = vadd.f32 0.0, %v3160
      %v3162 = vpop.f32.mrf.mxu0
      %v3163 = vadd.f32 0.0, %v3162
      %3164 = vmatmul.bf16.gmra.mxu0 %v3040
      %v3165 = vpop.f32.mrf.mxu0
      %v3166 = vadd.f32 0.0, %v3165
      %v3167 = vpop.f32.mrf.mxu0
      %v3168 = vadd.f32 0.0, %v3167
      %3169 = vdwg.mxu0
      %v3170 = vadd.f32 %v2660, %v3111
      %v3171 = vadd.f32 %v2661, %v3113
      %v3172 = vadd.f32 %v2662, %v3116
      %v3173 = vadd.f32 %v2663, %v3118
      %v3174 = vadd.f32 %v2664, %v3121
      %v3175 = vadd.f32 %v2665, %v3123
      %v3176 = vadd.f32 %v2666, %v3126
      %v3177 = vadd.f32 %v2667, %v3128
      %v3178 = vadd.f32 %v2668, %v3131
      %v3179 = vadd.f32 %v2669, %v3133
      %v3180 = vadd.f32 %v2670, %v3136
      %v3181 = vadd.f32 %v2671, %v3138
      %v3182 = vadd.f32 %v2672, %v3141
      %v3183 = vadd.f32 %v2673, %v3143
      %v3184 = vadd.f32 %v2674, %v3146
      %v3185 = vadd.f32 %v2675, %v3148
      %v3186 = vadd.f32 %v2676, %v3151
      %v3187 = vadd.f32 %v2677, %v3153
      %v3188 = vadd.f32 %v2678, %v3156
      %v3189 = vadd.f32 %v2679, %v3158
      %v3190 = vadd.f32 %v2680, %v3161
      %v3191 = vadd.f32 %v2681, %v3163
      %v3192 = vadd.f32 %v2682, %v3166
      %v3193 = vadd.f32 %v2683, %v3168
      %v3194 = vld [vmem:[%s2429] sm:$0xe]
      %v3195 = vld [vmem:[%s2429 + $0x10] sm:$0xe]
      %v3196 = vld [vmem:[%s2429 + $0x20] sm:$0xe]
      %v3197 = vld [vmem:[%s2429 + $0x30] sm:$0xe]
      %v3198 = vld [vmem:[%s2429 + $0x40] sm:$0xe]
      %v3199 = vld [vmem:[%s2429 + $0x50] sm:$0xe]
      %v3200 = vld [vmem:[%s2429 + $0x60] sm:$0xe]
      %v3201 = vld [vmem:[%s2429 + $0x70] sm:$0xe]
      %v3234 = vrot.slane %v3194, 5
      %v3235 = vrot.slane %v3234, 4
      %v3236 = vrot.slane %v2685, 5
      %v3237 = vsel %vm1045, %v3235, %v3236
      %v3238 = vrot.slane %v3236, 4
      %v3239 = vrot.slane %v2686, 5
      %v3240 = vsel %vm1045, %v3238, %v3239
      %v3241 = vrot.slane %v3239, 4
      %v3242 = vrot.slane %v2687, 5
      %v3243 = vsel %vm1045, %v3241, %v3242
      %v3244 = vrot.slane %v3195, 5
      %v3245 = vrot.slane %v3244, 4
      %v3246 = vrot.slane %v2689, 5
      %v3247 = vsel %vm1045, %v3245, %v3246
      %v3248 = vrot.slane %v3246, 4
      %v3249 = vrot.slane %v2690, 5
      %v3250 = vsel %vm1045, %v3248, %v3249
      %v3251 = vrot.slane %v3249, 4
      %v3252 = vrot.slane %v2691, 5
      %v3253 = vsel %vm1045, %v3251, %v3252
      %v3254 = vrot.slane %v3196, 5
      %v3255 = vrot.slane %v3254, 4
      %v3256 = vrot.slane %v2693, 5
      %v3257 = vsel %vm1045, %v3255, %v3256
      %v3258 = vrot.slane %v3256, 4
      %v3259 = vrot.slane %v2694, 5
      %v3260 = vsel %vm1045, %v3258, %v3259
      %v3261 = vrot.slane %v3259, 4
      %v3262 = vrot.slane %v2695, 5
      %v3263 = vsel %vm1045, %v3261, %v3262
      %v3264 = vrot.slane %v3197, 5
      %v3265 = vrot.slane %v3264, 4
      %v3266 = vrot.slane %v2697, 5
      %v3267 = vsel %vm1045, %v3265, %v3266
      %v3268 = vrot.slane %v3266, 4
      %v3269 = vrot.slane %v2698, 5
      %v3270 = vsel %vm1045, %v3268, %v3269
      %v3271 = vrot.slane %v3269, 4
      %v3272 = vrot.slane %v2699, 5
      %v3273 = vsel %vm1045, %v3271, %v3272
      %v3274 = vrot.slane %v3198, 5
      %v3275 = vrot.slane %v3274, 4
      %v3276 = vrot.slane %v2701, 5
      %v3277 = vsel %vm1045, %v3275, %v3276
      %v3278 = vrot.slane %v3276, 4
      %v3279 = vrot.slane %v2702, 5
      %v3280 = vsel %vm1045, %v3278, %v3279
      %v3281 = vrot.slane %v3279, 4
      %v3282 = vrot.slane %v2703, 5
      %v3283 = vsel %vm1045, %v3281, %v3282
      %v3284 = vrot.slane %v3199, 5
      %v3285 = vrot.slane %v3284, 4
      %v3286 = vrot.slane %v2705, 5
      %v3287 = vsel %vm1045, %v3285, %v3286
      %v3288 = vrot.slane %v3286, 4
      %v3289 = vrot.slane %v2706, 5
      %v3290 = vsel %vm1045, %v3288, %v3289
      %v3291 = vrot.slane %v3289, 4
      %v3292 = vrot.slane %v2707, 5
      %v3293 = vsel %vm1045, %v3291, %v3292
      %v3294 = vrot.slane %v3200, 5
      %v3295 = vrot.slane %v3294, 4
      %v3296 = vrot.slane %v2709, 5
      %v3297 = vsel %vm1045, %v3295, %v3296
      %v3298 = vrot.slane %v3296, 4
      %v3299 = vrot.slane %v2710, 5
      %v3300 = vsel %vm1045, %v3298, %v3299
      %v3301 = vrot.slane %v3299, 4
      %v3302 = vrot.slane %v2711, 5
      %v3303 = vsel %vm1045, %v3301, %v3302
      %v3304 = vrot.slane %v3201, 5
      %v3305 = vrot.slane %v3304, 4
      %v3306 = vrot.slane %v2713, 5
      %v3307 = vsel %vm1045, %v3305, %v3306
      %v3308 = vrot.slane %v3306, 4
      %v3309 = vrot.slane %v2714, 5
      %v3310 = vsel %vm1045, %v3308, %v3309
      %v3311 = vrot.slane %v3309, 4
      %v3312 = vrot.slane %v2715, 5
      %v3313 = vsel %vm1045, %v3311, %v3312
      %s3314 = scalar_lea.vmem %s1, 512
      %v3315 = vld [vmem:[%s3314] sm:$0xf]
      %v3316 = vld [vmem:[%s3314 + $0x4] sm:$0xf]
      %v3317 = vld [vmem:[%s3314 + $0x8] sm:$0xf]
      %v3318 = vld [vmem:[%s3314 + $0xc] sm:$0xf]
      %v3319 = vld [vmem:[%s3314 + $0x10] sm:$0xf]
      %v3320 = vld [vmem:[%s3314 + $0x14] sm:$0xf]
      %v3321 = vld [vmem:[%s3314 + $0x18] sm:$0xf]
      %v3322 = vld [vmem:[%s3314 + $0x1c] sm:$0xf]
      %v3323 = vld [vmem:[%s3314 + $0x20] sm:$0xf]
      %v3324 = vld [vmem:[%s3314 + $0x24] sm:$0xf]
      %v3325 = vld [vmem:[%s3314 + $0x28] sm:$0xf]
      %v3326 = vld [vmem:[%s3314 + $0x2c] sm:$0xf]
      %v3327 = vld [vmem:[%s3314 + $0x30] sm:$0xf]
      %v3328 = vld [vmem:[%s3314 + $0x34] sm:$0xf]
      %v3329 = vld [vmem:[%s3314 + $0x38] sm:$0xf]
      %v3330 = vld [vmem:[%s3314 + $0x3c] sm:$0xf]
      %v3331 = vunpack.c.l.b16 %v3237
      %v3332 = vunpack.c.l.b16 %v3240
      %v3333 = vunpack.c.l.b16 %v3243
      %v3334 = vunpack.c.l.b16 %v3247
      %v3335 = vunpack.c.l.b16 %v3250
      %v3336 = vunpack.c.l.b16 %v3253
      %v3337 = vunpack.c.l.b16 %v3257
      %v3338 = vunpack.c.l.b16 %v3260
      %v3339 = vunpack.c.l.b16 %v3263
      %v3340 = vunpack.c.l.b16 %v3267
      %v3341 = vunpack.c.l.b16 %v3270
      %v3342 = vunpack.c.l.b16 %v3273
      %v3343 = vunpack.c.l.b16 %v3277
      %v3344 = vunpack.c.l.b16 %v3280
      %v3345 = vunpack.c.l.b16 %v3283
      %v3346 = vunpack.c.l.b16 %v3287
      %v3347 = vunpack.c.l.b16 %v3290
      %v3348 = vunpack.c.l.b16 %v3293
      %v3349 = vunpack.c.l.b16 %v3297
      %v3350 = vunpack.c.l.b16 %v3300
      %v3351 = vunpack.c.l.b16 %v3303
      %v3352 = vunpack.c.l.b16 %v3307
      %v3353 = vunpack.c.l.b16 %v3310
      %v3354 = vunpack.c.l.b16 %v3313
      %v3355 = vpack.c.b16 %v3332, %v3331
      %v3356 = vpack.c.b16 %v3334, %v3333
      %v3357 = vpack.c.b16 %v3336, %v3335
      %v3358 = vpack.c.b16 %v3338, %v3337
      %v3359 = vpack.c.b16 %v3340, %v3339
      %v3360 = vpack.c.b16 %v3342, %v3341
      %v3361 = vpack.c.b16 %v3344, %v3343
      %v3362 = vpack.c.b16 %v3346, %v3345
      %v3363 = vpack.c.b16 %v3348, %v3347
      %v3364 = vpack.c.b16 %v3350, %v3349
      %v3365 = vpack.c.b16 %v3352, %v3351
      %v3366 = vpack.c.b16 %v3354, %v3353
      %v3395 = vunpack.c.l.b16 %v3315
      %v3396 = vunpack.c.l.b16 %v3316
      %v3397 = vunpack.c.l.b16 %v3317
      %v3398 = vunpack.c.l.b16 %v3318
      %v3399 = vunpack.c.l.b16 %v3319
      %v3400 = vunpack.c.l.b16 %v3320
      %v3401 = vunpack.c.l.b16 %v3321
      %v3402 = vunpack.c.l.b16 %v3322
      %v3403 = vunpack.c.l.b16 %v3323
      %v3404 = vunpack.c.l.b16 %v3324
      %v3405 = vunpack.c.l.b16 %v3325
      %v3406 = vunpack.c.l.b16 %v3326
      %v3407 = vunpack.c.l.b16 %v3327
      %v3408 = vunpack.c.l.b16 %v3328
      %v3409 = vunpack.c.l.b16 %v3329
      %v3410 = vunpack.c.l.b16 %v3330
      %v3411 = vpack.c.b16 %v3396, %v3395
      %v3412 = vpack.c.b16 %v3398, %v3397
      %v3413 = vpack.c.b16 %v3400, %v3399
      %v3414 = vpack.c.b16 %v3402, %v3401
      %v3415 = vpack.c.b16 %v3404, %v3403
      %v3416 = vpack.c.b16 %v3406, %v3405
      %v3417 = vpack.c.b16 %v3408, %v3407
      %v3418 = vpack.c.b16 %v3410, %v3409
      %3427 = vmatpush.bf16.msra.mxu0 %v3418
      %3428 = vmatpush.bf16.msra.mxu0 %v3417
      %3429 = vmatpush.bf16.msra.mxu0 %v3416
      %3430 = vmatpush.bf16.msra.mxu0 %v3415
      %3431 = vmatpush.bf16.msra.mxu0 %v3414
      %3432 = vmatpush.bf16.msra.mxu0 %v3413
      %3433 = vmatpush.bf16.msra.mxu0 %v3412
      %3434 = vmatpush.bf16.msra.mxu0 %v3411
      %3435 = vmatmul.bf16.gmra.mxu0 %v3355
      %v3436 = vpop.f32.mrf.mxu0
      %v3437 = vadd.f32 0.0, %v3436
      %v3438 = vpop.f32.mrf.mxu0
      %v3439 = vadd.f32 0.0, %v3438
      %3440 = vmatmul.bf16.gmra.mxu0 %v3356
      %v3441 = vpop.f32.mrf.mxu0
      %v3442 = vadd.f32 0.0, %v3441
      %v3443 = vpop.f32.mrf.mxu0
      %v3444 = vadd.f32 0.0, %v3443
      %3445 = vmatmul.bf16.gmra.mxu0 %v3357
      %v3446 = vpop.f32.mrf.mxu0
      %v3447 = vadd.f32 0.0, %v3446
      %v3448 = vpop.f32.mrf.mxu0
      %v3449 = vadd.f32 0.0, %v3448
      %3450 = vmatmul.bf16.gmra.mxu0 %v3358
      %v3451 = vpop.f32.mrf.mxu0
      %v3452 = vadd.f32 0.0, %v3451
      %v3453 = vpop.f32.mrf.mxu0
      %v3454 = vadd.f32 0.0, %v3453
      %3455 = vmatmul.bf16.gmra.mxu0 %v3359
      %v3456 = vpop.f32.mrf.mxu0
      %v3457 = vadd.f32 0.0, %v3456
      %v3458 = vpop.f32.mrf.mxu0
      %v3459 = vadd.f32 0.0, %v3458
      %3460 = vmatmul.bf16.gmra.mxu0 %v3360
      %v3461 = vpop.f32.mrf.mxu0
      %v3462 = vadd.f32 0.0, %v3461
      %v3463 = vpop.f32.mrf.mxu0
      %v3464 = vadd.f32 0.0, %v3463
      %3465 = vmatmul.bf16.gmra.mxu0 %v3361
      %v3466 = vpop.f32.mrf.mxu0
      %v3467 = vadd.f32 0.0, %v3466
      %v3468 = vpop.f32.mrf.mxu0
      %v3469 = vadd.f32 0.0, %v3468
      %3470 = vmatmul.bf16.gmra.mxu0 %v3362
      %v3471 = vpop.f32.mrf.mxu0
      %v3472 = vadd.f32 0.0, %v3471
      %v3473 = vpop.f32.mrf.mxu0
      %v3474 = vadd.f32 0.0, %v3473
      %3475 = vmatmul.bf16.gmra.mxu0 %v3363
      %v3476 = vpop.f32.mrf.mxu0
      %v3477 = vadd.f32 0.0, %v3476
      %v3478 = vpop.f32.mrf.mxu0
      %v3479 = vadd.f32 0.0, %v3478
      %3480 = vmatmul.bf16.gmra.mxu0 %v3364
      %v3481 = vpop.f32.mrf.mxu0
      %v3482 = vadd.f32 0.0, %v3481
      %v3483 = vpop.f32.mrf.mxu0
      %v3484 = vadd.f32 0.0, %v3483
      %3485 = vmatmul.bf16.gmra.mxu0 %v3365
      %v3486 = vpop.f32.mrf.mxu0
      %v3487 = vadd.f32 0.0, %v3486
      %v3488 = vpop.f32.mrf.mxu0
      %v3489 = vadd.f32 0.0, %v3488
      %3490 = vmatmul.bf16.gmra.mxu0 %v3366
      %v3491 = vpop.f32.mrf.mxu0
      %v3492 = vadd.f32 0.0, %v3491
      %v3493 = vpop.f32.mrf.mxu0
      %v3494 = vadd.f32 0.0, %v3493
      %3495 = vdwg.mxu0
      %v3496 = vadd.f32 %v3170, %v3437
      %v3497 = vadd.f32 %v3171, %v3439
      %v3498 = vadd.f32 %v3172, %v3442
      %v3499 = vadd.f32 %v3173, %v3444
      %v3500 = vadd.f32 %v3174, %v3447
      %v3501 = vadd.f32 %v3175, %v3449
      %v3502 = vadd.f32 %v3176, %v3452
      %v3503 = vadd.f32 %v3177, %v3454
      %v3504 = vadd.f32 %v3178, %v3457
      %v3505 = vadd.f32 %v3179, %v3459
      %v3506 = vadd.f32 %v3180, %v3462
      %v3507 = vadd.f32 %v3181, %v3464
      %v3508 = vadd.f32 %v3182, %v3467
      %v3509 = vadd.f32 %v3183, %v3469
      %v3510 = vadd.f32 %v3184, %v3472
      %v3511 = vadd.f32 %v3185, %v3474
      %v3512 = vadd.f32 %v3186, %v3477
      %v3513 = vadd.f32 %v3187, %v3479
      %v3514 = vadd.f32 %v3188, %v3482
      %v3515 = vadd.f32 %v3189, %v3484
      %v3516 = vadd.f32 %v3190, %v3487
      %v3517 = vadd.f32 %v3191, %v3489
      %v3518 = vadd.f32 %v3192, %v3492
      %v3519 = vadd.f32 %v3193, %v3494
      %v3520 = vmul.f32 %v3496, %v310
      %v3521 = vmul.f32 %v3497, %v311
      %v3522 = vmul.f32 %v3498, %v312
      %v3523 = vmul.f32 %v3499, %v310
      %v3524 = vmul.f32 %v3500, %v311
      %v3525 = vmul.f32 %v3501, %v312
      %v3526 = vmul.f32 %v3502, %v310
      %v3527 = vmul.f32 %v3503, %v311
      %v3528 = vmul.f32 %v3504, %v312
      %v3529 = vmul.f32 %v3505, %v310
      %v3530 = vmul.f32 %v3506, %v311
      %v3531 = vmul.f32 %v3507, %v312
      %v3532 = vmul.f32 %v3508, %v310
      %v3533 = vmul.f32 %v3509, %v311
      %v3534 = vmul.f32 %v3510, %v312
      %v3535 = vmul.f32 %v3511, %v310
      %v3536 = vmul.f32 %v3512, %v311
      %v3537 = vmul.f32 %v3513, %v312
      %v3538 = vmul.f32 %v3514, %v310
      %v3539 = vmul.f32 %v3515, %v311
      %v3540 = vmul.f32 %v3516, %v312
      %v3541 = vmul.f32 %v3517, %v310
      %v3542 = vmul.f32 %v3518, %v311
      %v3543 = vmul.f32 %v3519, %v312
      %v3544 = vadd.f32 %v3520, %v317
      %v3545 = vadd.f32 %v3521, %v318
      %v3546 = vadd.f32 %v3522, %v319
      %v3547 = vadd.f32 %v3523, %v317
      %v3548 = vadd.f32 %v3524, %v318
      %v3549 = vadd.f32 %v3525, %v319
      %v3550 = vadd.f32 %v3526, %v317
      %v3551 = vadd.f32 %v3527, %v318
      %v3552 = vadd.f32 %v3528, %v319
      %v3553 = vadd.f32 %v3529, %v317
      %v3554 = vadd.f32 %v3530, %v318
      %v3555 = vadd.f32 %v3531, %v319
      %v3556 = vadd.f32 %v3532, %v317
      %v3557 = vadd.f32 %v3533, %v318
      %v3558 = vadd.f32 %v3534, %v319
      %v3559 = vadd.f32 %v3535, %v317
      %v3560 = vadd.f32 %v3536, %v318
      %v3561 = vadd.f32 %v3537, %v319
      %v3562 = vadd.f32 %v3538, %v317
      %v3563 = vadd.f32 %v3539, %v318
      %v3564 = vadd.f32 %v3540, %v319
      %v3565 = vadd.f32 %v3541, %v317
      %v3566 = vadd.f32 %v3542, %v318
      %v3567 = vadd.f32 %v3543, %v319
      %v3568 = vmax.f32 %v3544, 0.0
      %v3569 = vmax.f32 %v3545, 0.0
      %v3570 = vmax.f32 %v3546, 0.0
      %v3571 = vmax.f32 %v3547, 0.0
      %v3572 = vmax.f32 %v3548, 0.0
      %v3573 = vmax.f32 %v3549, 0.0
      %v3574 = vmax.f32 %v3550, 0.0
      %v3575 = vmax.f32 %v3551, 0.0
      %v3576 = vmax.f32 %v3552, 0.0
      %v3577 = vmax.f32 %v3553, 0.0
      %v3578 = vmax.f32 %v3554, 0.0
      %v3579 = vmax.f32 %v3555, 0.0
      %v3580 = vmax.f32 %v3556, 0.0
      %v3581 = vmax.f32 %v3557, 0.0
      %v3582 = vmax.f32 %v3558, 0.0
      %v3583 = vmax.f32 %v3559, 0.0
      %v3584 = vmax.f32 %v3560, 0.0
      %v3585 = vmax.f32 %v3561, 0.0
      %v3586 = vmax.f32 %v3562, 0.0
      %v3587 = vmax.f32 %v3563, 0.0
      %v3588 = vmax.f32 %v3564, 0.0
      %v3589 = vmax.f32 %v3565, 0.0
      %v3590 = vmax.f32 %v3566, 0.0
      %v3591 = vmax.f32 %v3567, 0.0
      %v3592 = vpack.c.bf16 %v3568, %v3568
      %v3593 = vpack.c.bf16 %v3569, %v3569
      %v3594 = vpack.c.bf16 %v3570, %v3570
      %v3595 = vpack.c.bf16 %v3571, %v3571
      %v3596 = vpack.c.bf16 %v3572, %v3572
      %v3597 = vpack.c.bf16 %v3573, %v3573
      %v3598 = vpack.c.bf16 %v3574, %v3574
      %v3599 = vpack.c.bf16 %v3575, %v3575
      %v3600 = vpack.c.bf16 %v3576, %v3576
      %v3601 = vpack.c.bf16 %v3577, %v3577
      %v3602 = vpack.c.bf16 %v3578, %v3578
      %v3603 = vpack.c.bf16 %v3579, %v3579
      %v3604 = vpack.c.bf16 %v3580, %v3580
      %v3605 = vpack.c.bf16 %v3581, %v3581
      %v3606 = vpack.c.bf16 %v3582, %v3582
      %v3607 = vpack.c.bf16 %v3583, %v3583
      %v3608 = vpack.c.bf16 %v3584, %v3584
      %v3609 = vpack.c.bf16 %v3585, %v3585
      %v3610 = vpack.c.bf16 %v3586, %v3586
      %v3611 = vpack.c.bf16 %v3587, %v3587
      %v3612 = vpack.c.bf16 %v3588, %v3588
      %v3613 = vpack.c.bf16 %v3589, %v3589
      %v3614 = vpack.c.bf16 %v3590, %v3590
      %v3615 = vpack.c.bf16 %v3591, %v3591
      %s3616 = smul.u32 %s1332, 3
      %s3617 = smul.addr %s3616, 4
      %s3618 = scalar_lea.vmem [#allocation2], %s3617
      %3619 = vst [vmem:[%s3618] sm:$0xf] %v3592
      %3620 = vst [vmem:[%s3618 + $0x4] sm:$0xf] %v3593
      %3621 = vst [vmem:[%s3618 + $0x8] sm:$0xf] %v3594
      %3622 = vst [vmem:[%s3618 + $0xc] sm:$0xf] %v3595
      %3623 = vst [vmem:[%s3618 + $0x10] sm:$0xf] %v3596
      %3624 = vst [vmem:[%s3618 + $0x14] sm:$0xf] %v3597
      %3625 = vst [vmem:[%s3618 + $0x18] sm:$0xf] %v3598
      %3626 = vst [vmem:[%s3618 + $0x1c] sm:$0xf] %v3599
      %3627 = vst [vmem:[%s3618 + $0x20] sm:$0xf] %v3600
      %3628 = vst [vmem:[%s3618 + $0x24] sm:$0xf] %v3601
      %3629 = vst [vmem:[%s3618 + $0x28] sm:$0xf] %v3602
      %3630 = vst [vmem:[%s3618 + $0x2c] sm:$0xf] %v3603
      %3631 = vst [vmem:[%s3618 + $0x30] sm:$0xf] %v3604
      %3632 = vst [vmem:[%s3618 + $0x34] sm:$0xf] %v3605
      %3633 = vst [vmem:[%s3618 + $0x38] sm:$0xf] %v3606
      %3634 = vst [vmem:[%s3618 + $0x3c] sm:$0xf] %v3607
      %3635 = vst [vmem:[%s3618 + $0x40] sm:$0xf] %v3608
      %3636 = vst [vmem:[%s3618 + $0x44] sm:$0xf] %v3609
      %3637 = vst [vmem:[%s3618 + $0x48] sm:$0xf] %v3610
      %3638 = vst [vmem:[%s3618 + $0x4c] sm:$0xf] %v3611
      %3639 = vst [vmem:[%s3618 + $0x50] sm:$0xf] %v3612
      %3640 = vst [vmem:[%s3618 + $0x54] sm:$0xf] %v3613
      %3641 = vst [vmem:[%s3618 + $0x58] sm:$0xf] %v3614
      %3642 = vst [vmem:[%s3618 + $0x5c] sm:$0xf] %v3615
      %s3643 = smul.u32 8, 4
      %s3644 = smul.addr %s3643, 4
      %s3645 = scalar_lea.vmem %s273, %s3644
      %v3646 = vld [vmem:[%s3645] sm:$0xf]
      %v3647 = vld [vmem:[%s3645 + $0x4] sm:$0xf]
      %v3648 = vld [vmem:[%s3645 + $0x8] sm:$0xf]
      %v3649 = vld [vmem:[%s3645 + $0x10] sm:$0xf]
      %v3650 = vld [vmem:[%s3645 + $0x14] sm:$0xf]
      %v3651 = vld [vmem:[%s3645 + $0x18] sm:$0xf]
      %v3652 = vld [vmem:[%s3645 + $0x20] sm:$0xf]
      %v3653 = vld [vmem:[%s3645 + $0x24] sm:$0xf]
      %v3654 = vld [vmem:[%s3645 + $0x28] sm:$0xf]
      %v3655 = vld [vmem:[%s3645 + $0x30] sm:$0xf]
      %v3656 = vld [vmem:[%s3645 + $0x34] sm:$0xf]
      %v3657 = vld [vmem:[%s3645 + $0x38] sm:$0xf]
      %v3658 = vld [vmem:[%s3645 + $0x40] sm:$0xf]
      %v3659 = vld [vmem:[%s3645 + $0x44] sm:$0xf]
      %v3660 = vld [vmem:[%s3645 + $0x48] sm:$0xf]
      %v3661 = vld [vmem:[%s3645 + $0x50] sm:$0xf]
      %v3662 = vld [vmem:[%s3645 + $0x54] sm:$0xf]
      %v3663 = vld [vmem:[%s3645 + $0x58] sm:$0xf]
      %v3664 = vld [vmem:[%s3645 + $0x60] sm:$0xf]
      %v3665 = vld [vmem:[%s3645 + $0x64] sm:$0xf]
      %v3666 = vld [vmem:[%s3645 + $0x68] sm:$0xf]
      %v3667 = vld [vmem:[%s3645 + $0x70] sm:$0xf]
      %v3668 = vld [vmem:[%s3645 + $0x74] sm:$0xf]
      %v3669 = vld [vmem:[%s3645 + $0x78] sm:$0xf]
      %v3670 = vld [vmem:[%s1] sm:$0xf]
      %v3671 = vld [vmem:[%s1 + $0x4] sm:$0xf]
      %v3672 = vld [vmem:[%s1 + $0x8] sm:$0xf]
      %v3673 = vld [vmem:[%s1 + $0xc] sm:$0xf]
      %v3674 = vld [vmem:[%s1 + $0x10] sm:$0xf]
      %v3675 = vld [vmem:[%s1 + $0x14] sm:$0xf]
      %v3676 = vld [vmem:[%s1 + $0x18] sm:$0xf]
      %v3677 = vld [vmem:[%s1 + $0x1c] sm:$0xf]
      %v3678 = vld [vmem:[%s1 + $0x20] sm:$0xf]
      %v3679 = vld [vmem:[%s1 + $0x24] sm:$0xf]
      %v3680 = vld [vmem:[%s1 + $0x28] sm:$0xf]
      %v3681 = vld [vmem:[%s1 + $0x2c] sm:$0xf]
      %v3682 = vld [vmem:[%s1 + $0x30] sm:$0xf]
      %v3683 = vld [vmem:[%s1 + $0x34] sm:$0xf]
      %v3684 = vld [vmem:[%s1 + $0x38] sm:$0xf]
      %v3685 = vld [vmem:[%s1 + $0x3c] sm:$0xf]
      %v3686 = vld [vmem:[%s3645 + $0xc] sm:$0x1]
      %v3687 = vld [vmem:[%s3645 + $0x1c] sm:$0x1]
      %v3688 = vld [vmem:[%s3645 + $0x2c] sm:$0x1]
      %v3689 = vld [vmem:[%s3645 + $0x3c] sm:$0x1]
      %v3690 = vld [vmem:[%s3645 + $0x4c] sm:$0x1]
      %v3691 = vld [vmem:[%s3645 + $0x5c] sm:$0x1]
      %v3692 = vld [vmem:[%s3645 + $0x6c] sm:$0x1]
      %v3693 = vld [vmem:[%s3645 + $0x7c] sm:$0x1]
      %v3695 = vshrl.u32 %v3646, 16
      %v3697 = vrot.slane %v3695, 4
      %v3698 = vshll.u32 %v3646, 16
      %v3700 = vrot.slane %v3698, 5
      %v3701 = vor.u32 %v3697, %v3700
      %v3702 = vrot.slane %v3701, 4
      %v3704 = vshll.u32 %v3647, 16
      %v3706 = vrot.slane %v3704, 5
      %v3707 = vsel %vm375, %v3702, %v3706
      %v3708 = vshrl.u32 %v3647, 16
      %v3710 = vrot.slane %v3708, 4
      %v3711 = vor.u32 %v3710, %v3706
      %v3712 = vrot.slane %v3711, 4
      %v3714 = vshll.u32 %v3648, 16
      %v3716 = vrot.slane %v3714, 5
      %v3717 = vsel %vm375, %v3712, %v3716
      %v3718 = vshrl.u32 %v3648, 16
      %v3720 = vrot.slane %v3718, 4
      %v3721 = vor.u32 %v3720, %v3716
      %v3722 = vrot.slane %v3721, 4
      %v3724 = vshll.u32 %v3686, 16
      %v3726 = vrot.slane %v3724, 5
      %v3727 = vsel %vm375, %v3722, %v3726
      %v3729 = vshrl.u32 %v3649, 16
      %v3731 = vrot.slane %v3729, 4
      %v3732 = vshll.u32 %v3649, 16
      %v3734 = vrot.slane %v3732, 5
      %v3735 = vor.u32 %v3731, %v3734
      %v3736 = vrot.slane %v3735, 4
      %v3738 = vshll.u32 %v3650, 16
      %v3740 = vrot.slane %v3738, 5
      %v3741 = vsel %vm375, %v3736, %v3740
      %v3742 = vshrl.u32 %v3650, 16
      %v3744 = vrot.slane %v3742, 4
      %v3745 = vor.u32 %v3744, %v3740
      %v3746 = vrot.slane %v3745, 4
      %v3748 = vshll.u32 %v3651, 16
      %v3750 = vrot.slane %v3748, 5
      %v3751 = vsel %vm375, %v3746, %v3750
      %v3752 = vshrl.u32 %v3651, 16
      %v3754 = vrot.slane %v3752, 4
      %v3755 = vor.u32 %v3754, %v3750
      %v3756 = vrot.slane %v3755, 4
      %v3758 = vshll.u32 %v3687, 16
      %v3760 = vrot.slane %v3758, 5
      %v3761 = vsel %vm375, %v3756, %v3760
      %v3763 = vshrl.u32 %v3652, 16
      %v3765 = vrot.slane %v3763, 4
      %v3766 = vshll.u32 %v3652, 16
      %v3768 = vrot.slane %v3766, 5
      %v3769 = vor.u32 %v3765, %v3768
      %v3770 = vrot.slane %v3769, 4
      %v3772 = vshll.u32 %v3653, 16
      %v3774 = vrot.slane %v3772, 5
      %v3775 = vsel %vm375, %v3770, %v3774
      %v3776 = vshrl.u32 %v3653, 16
      %v3778 = vrot.slane %v3776, 4
      %v3779 = vor.u32 %v3778, %v3774
      %v3780 = vrot.slane %v3779, 4
      %v3782 = vshll.u32 %v3654, 16
      %v3784 = vrot.slane %v3782, 5
      %v3785 = vsel %vm375, %v3780, %v3784
      %v3786 = vshrl.u32 %v3654, 16
      %v3788 = vrot.slane %v3786, 4
      %v3789 = vor.u32 %v3788, %v3784
      %v3790 = vrot.slane %v3789, 4
      %v3792 = vshll.u32 %v3688, 16
      %v3794 = vrot.slane %v3792, 5
      %v3795 = vsel %vm375, %v3790, %v3794
      %v3797 = vshrl.u32 %v3655, 16
      %v3799 = vrot.slane %v3797, 4
      %v3800 = vshll.u32 %v3655, 16
      %v3802 = vrot.slane %v3800, 5
      %v3803 = vor.u32 %v3799, %v3802
      %v3804 = vrot.slane %v3803, 4
      %v3806 = vshll.u32 %v3656, 16
      %v3808 = vrot.slane %v3806, 5
      %v3809 = vsel %vm375, %v3804, %v3808
      %v3810 = vshrl.u32 %v3656, 16
      %v3812 = vrot.slane %v3810, 4
      %v3813 = vor.u32 %v3812, %v3808
      %v3814 = vrot.slane %v3813, 4
      %v3816 = vshll.u32 %v3657, 16
      %v3818 = vrot.slane %v3816, 5
      %v3819 = vsel %vm375, %v3814, %v3818
      %v3820 = vshrl.u32 %v3657, 16
      %v3822 = vrot.slane %v3820, 4
      %v3823 = vor.u32 %v3822, %v3818
      %v3824 = vrot.slane %v3823, 4
      %v3826 = vshll.u32 %v3689, 16
      %v3828 = vrot.slane %v3826, 5
      %v3829 = vsel %vm375, %v3824, %v3828
      %v3831 = vshrl.u32 %v3658, 16
      %v3833 = vrot.slane %v3831, 4
      %v3834 = vshll.u32 %v3658, 16
      %v3836 = vrot.slane %v3834, 5
      %v3837 = vor.u32 %v3833, %v3836
      %v3838 = vrot.slane %v3837, 4
      %v3840 = vshll.u32 %v3659, 16
      %v3842 = vrot.slane %v3840, 5
      %v3843 = vsel %vm375, %v3838, %v3842
      %v3844 = vshrl.u32 %v3659, 16
      %v3846 = vrot.slane %v3844, 4
      %v3847 = vor.u32 %v3846, %v3842
      %v3848 = vrot.slane %v3847, 4
      %v3850 = vshll.u32 %v3660, 16
      %v3852 = vrot.slane %v3850, 5
      %v3853 = vsel %vm375, %v3848, %v3852
      %v3854 = vshrl.u32 %v3660, 16
      %v3856 = vrot.slane %v3854, 4
      %v3857 = vor.u32 %v3856, %v3852
      %v3858 = vrot.slane %v3857, 4
      %v3860 = vshll.u32 %v3690, 16
      %v3862 = vrot.slane %v3860, 5
      %v3863 = vsel %vm375, %v3858, %v3862
      %v3865 = vshrl.u32 %v3661, 16
      %v3867 = vrot.slane %v3865, 4
      %v3868 = vshll.u32 %v3661, 16
      %v3870 = vrot.slane %v3868, 5
      %v3871 = vor.u32 %v3867, %v3870
      %v3872 = vrot.slane %v3871, 4
      %v3874 = vshll.u32 %v3662, 16
      %v3876 = vrot.slane %v3874, 5
      %v3877 = vsel %vm375, %v3872, %v3876
      %v3878 = vshrl.u32 %v3662, 16
      %v3880 = vrot.slane %v3878, 4
      %v3881 = vor.u32 %v3880, %v3876
      %v3882 = vrot.slane %v3881, 4
      %v3884 = vshll.u32 %v3663, 16
      %v3886 = vrot.slane %v3884, 5
      %v3887 = vsel %vm375, %v3882, %v3886
      %v3888 = vshrl.u32 %v3663, 16
      %v3890 = vrot.slane %v3888, 4
      %v3891 = vor.u32 %v3890, %v3886
      %v3892 = vrot.slane %v3891, 4
      %v3894 = vshll.u32 %v3691, 16
      %v3896 = vrot.slane %v3894, 5
      %v3897 = vsel %vm375, %v3892, %v3896
      %v3899 = vshrl.u32 %v3664, 16
      %v3901 = vrot.slane %v3899, 4
      %v3902 = vshll.u32 %v3664, 16
      %v3904 = vrot.slane %v3902, 5
      %v3905 = vor.u32 %v3901, %v3904
      %v3906 = vrot.slane %v3905, 4
      %v3908 = vshll.u32 %v3665, 16
      %v3910 = vrot.slane %v3908, 5
      %v3911 = vsel %vm375, %v3906, %v3910
      %v3912 = vshrl.u32 %v3665, 16
      %v3914 = vrot.slane %v3912, 4
      %v3915 = vor.u32 %v3914, %v3910
      %v3916 = vrot.slane %v3915, 4
      %v3918 = vshll.u32 %v3666, 16
      %v3920 = vrot.slane %v3918, 5
      %v3921 = vsel %vm375, %v3916, %v3920
      %v3922 = vshrl.u32 %v3666, 16
      %v3924 = vrot.slane %v3922, 4
      %v3925 = vor.u32 %v3924, %v3920
      %v3926 = vrot.slane %v3925, 4
      %v3928 = vshll.u32 %v3692, 16
      %v3930 = vrot.slane %v3928, 5
      %v3931 = vsel %vm375, %v3926, %v3930
      %v3933 = vshrl.u32 %v3667, 16
      %v3935 = vrot.slane %v3933, 4
      %v3936 = vshll.u32 %v3667, 16
      %v3938 = vrot.slane %v3936, 5
      %v3939 = vor.u32 %v3935, %v3938
      %v3940 = vrot.slane %v3939, 4
      %v3942 = vshll.u32 %v3668, 16
      %v3944 = vrot.slane %v3942, 5
      %v3945 = vsel %vm375, %v3940, %v3944
      %v3946 = vshrl.u32 %v3668, 16
      %v3948 = vrot.slane %v3946, 4
      %v3949 = vor.u32 %v3948, %v3944
      %v3950 = vrot.slane %v3949, 4
      %v3952 = vshll.u32 %v3669, 16
      %v3954 = vrot.slane %v3952, 5
      %v3955 = vsel %vm375, %v3950, %v3954
      %v3956 = vshrl.u32 %v3669, 16
      %v3958 = vrot.slane %v3956, 4
      %v3959 = vor.u32 %v3958, %v3954
      %v3960 = vrot.slane %v3959, 4
      %v3962 = vshll.u32 %v3693, 16
      %v3964 = vrot.slane %v3962, 5
      %v3965 = vsel %vm375, %v3960, %v3964
      %v3966 = vld [vmem:[%s648] sm:$0xf]
      %v3967 = vld [vmem:[%s648 + $0x4] sm:$0xf]
      %v3968 = vld [vmem:[%s648 + $0x8] sm:$0xf]
      %v3969 = vld [vmem:[%s648 + $0xc] sm:$0xf]
      %v3970 = vld [vmem:[%s648 + $0x10] sm:$0xf]
      %v3971 = vld [vmem:[%s648 + $0x14] sm:$0xf]
      %v3972 = vld [vmem:[%s648 + $0x18] sm:$0xf]
      %v3973 = vld [vmem:[%s648 + $0x1c] sm:$0xf]
      %v3974 = vld [vmem:[%s648 + $0x20] sm:$0xf]
      %v3975 = vld [vmem:[%s648 + $0x24] sm:$0xf]
      %v3976 = vld [vmem:[%s648 + $0x28] sm:$0xf]
      %v3977 = vld [vmem:[%s648 + $0x2c] sm:$0xf]
      %v3978 = vld [vmem:[%s648 + $0x30] sm:$0xf]
      %v3979 = vld [vmem:[%s648 + $0x34] sm:$0xf]
      %v3980 = vld [vmem:[%s648 + $0x38] sm:$0xf]
      %v3981 = vld [vmem:[%s648 + $0x3c] sm:$0xf]
      %v3982 = vunpack.c.l.b16 %v3707
      %v3983 = vunpack.c.l.b16 %v3717
      %v3984 = vunpack.c.l.b16 %v3727
      %v3985 = vunpack.c.l.b16 %v3741
      %v3986 = vunpack.c.l.b16 %v3751
      %v3987 = vunpack.c.l.b16 %v3761
      %v3988 = vunpack.c.l.b16 %v3775
      %v3989 = vunpack.c.l.b16 %v3785
      %v3990 = vunpack.c.l.b16 %v3795
      %v3991 = vunpack.c.l.b16 %v3809
      %v3992 = vunpack.c.l.b16 %v3819
      %v3993 = vunpack.c.l.b16 %v3829
      %v3994 = vunpack.c.l.b16 %v3843
      %v3995 = vunpack.c.l.b16 %v3853
      %v3996 = vunpack.c.l.b16 %v3863
      %v3997 = vunpack.c.l.b16 %v3877
      %v3998 = vunpack.c.l.b16 %v3887
      %v3999 = vunpack.c.l.b16 %v3897
      %v4000 = vunpack.c.l.b16 %v3911
      %v4001 = vunpack.c.l.b16 %v3921
      %v4002 = vunpack.c.l.b16 %v3931
      %v4003 = vunpack.c.l.b16 %v3945
      %v4004 = vunpack.c.l.b16 %v3955
      %v4005 = vunpack.c.l.b16 %v3965
      %v4006 = vpack.c.b16 %v3983, %v3982
      %v4007 = vpack.c.b16 %v3985, %v3984
      %v4008 = vpack.c.b16 %v3987, %v3986
      %v4009 = vpack.c.b16 %v3989, %v3988
      %v4010 = vpack.c.b16 %v3991, %v3990
      %v4011 = vpack.c.b16 %v3993, %v3992
      %v4012 = vpack.c.b16 %v3995, %v3994
      %v4013 = vpack.c.b16 %v3997, %v3996
      %v4014 = vpack.c.b16 %v3999, %v3998
      %v4015 = vpack.c.b16 %v4001, %v4000
      %v4016 = vpack.c.b16 %v4003, %v4002
      %v4017 = vpack.c.b16 %v4005, %v4004
      %v4046 = vunpack.c.l.b16 %v3966
      %v4047 = vunpack.c.l.b16 %v3967
      %v4048 = vunpack.c.l.b16 %v3968
      %v4049 = vunpack.c.l.b16 %v3969
      %v4050 = vunpack.c.l.b16 %v3970
      %v4051 = vunpack.c.l.b16 %v3971
      %v4052 = vunpack.c.l.b16 %v3972
      %v4053 = vunpack.c.l.b16 %v3973
      %v4054 = vunpack.c.l.b16 %v3974
      %v4055 = vunpack.c.l.b16 %v3975
      %v4056 = vunpack.c.l.b16 %v3976
      %v4057 = vunpack.c.l.b16 %v3977
      %v4058 = vunpack.c.l.b16 %v3978
      %v4059 = vunpack.c.l.b16 %v3979
      %v4060 = vunpack.c.l.b16 %v3980
      %v4061 = vunpack.c.l.b16 %v3981
      %v4062 = vpack.c.b16 %v4047, %v4046
      %v4063 = vpack.c.b16 %v4049, %v4048
      %v4064 = vpack.c.b16 %v4051, %v4050
      %v4065 = vpack.c.b16 %v4053, %v4052
      %v4066 = vpack.c.b16 %v4055, %v4054
      %v4067 = vpack.c.b16 %v4057, %v4056
      %v4068 = vpack.c.b16 %v4059, %v4058
      %v4069 = vpack.c.b16 %v4061, %v4060
      %4078 = vmatpush.bf16.msra.mxu0 %v4069
      %4079 = vmatpush.bf16.msra.mxu0 %v4068
      %4080 = vmatpush.bf16.msra.mxu0 %v4067
      %4081 = vmatpush.bf16.msra.mxu0 %v4066
      %4082 = vmatpush.bf16.msra.mxu0 %v4065
      %4083 = vmatpush.bf16.msra.mxu0 %v4064
      %4084 = vmatpush.bf16.msra.mxu0 %v4063
      %4085 = vmatpush.bf16.msra.mxu0 %v4062
      %4086 = vmatmul.bf16.gmra.mxu0 %v4006
      %v4087 = vpop.f32.mrf.mxu0
      %v4088 = vadd.f32 0.0, %v4087
      %v4089 = vpop.f32.mrf.mxu0
      %v4090 = vadd.f32 0.0, %v4089
      %4091 = vmatmul.bf16.gmra.mxu0 %v4007
      %v4092 = vpop.f32.mrf.mxu0
      %v4093 = vadd.f32 0.0, %v4092
      %v4094 = vpop.f32.mrf.mxu0
      %v4095 = vadd.f32 0.0, %v4094
      %4096 = vmatmul.bf16.gmra.mxu0 %v4008
      %v4097 = vpop.f32.mrf.mxu0
      %v4098 = vadd.f32 0.0, %v4097
      %v4099 = vpop.f32.mrf.mxu0
      %v4100 = vadd.f32 0.0, %v4099
      %4101 = vmatmul.bf16.gmra.mxu0 %v4009
      %v4102 = vpop.f32.mrf.mxu0
      %v4103 = vadd.f32 0.0, %v4102
      %v4104 = vpop.f32.mrf.mxu0
      %v4105 = vadd.f32 0.0, %v4104
      %4106 = vmatmul.bf16.gmra.mxu0 %v4010
      %v4107 = vpop.f32.mrf.mxu0
      %v4108 = vadd.f32 0.0, %v4107
      %v4109 = vpop.f32.mrf.mxu0
      %v4110 = vadd.f32 0.0, %v4109
      %4111 = vmatmul.bf16.gmra.mxu0 %v4011
      %v4112 = vpop.f32.mrf.mxu0
      %v4113 = vadd.f32 0.0, %v4112
      %v4114 = vpop.f32.mrf.mxu0
      %v4115 = vadd.f32 0.0, %v4114
      %4116 = vmatmul.bf16.gmra.mxu0 %v4012
      %v4117 = vpop.f32.mrf.mxu0
      %v4118 = vadd.f32 0.0, %v4117
      %v4119 = vpop.f32.mrf.mxu0
      %v4120 = vadd.f32 0.0, %v4119
      %4121 = vmatmul.bf16.gmra.mxu0 %v4013
      %v4122 = vpop.f32.mrf.mxu0
      %v4123 = vadd.f32 0.0, %v4122
      %v4124 = vpop.f32.mrf.mxu0
      %v4125 = vadd.f32 0.0, %v4124
      %4126 = vmatmul.bf16.gmra.mxu0 %v4014
      %v4127 = vpop.f32.mrf.mxu0
      %v4128 = vadd.f32 0.0, %v4127
      %v4129 = vpop.f32.mrf.mxu0
      %v4130 = vadd.f32 0.0, %v4129
      %4131 = vmatmul.bf16.gmra.mxu0 %v4015
      %v4132 = vpop.f32.mrf.mxu0
      %v4133 = vadd.f32 0.0, %v4132
      %v4134 = vpop.f32.mrf.mxu0
      %v4135 = vadd.f32 0.0, %v4134
      %4136 = vmatmul.bf16.gmra.mxu0 %v4016
      %v4137 = vpop.f32.mrf.mxu0
      %v4138 = vadd.f32 0.0, %v4137
      %v4139 = vpop.f32.mrf.mxu0
      %v4140 = vadd.f32 0.0, %v4139
      %4141 = vmatmul.bf16.gmra.mxu0 %v4017
      %v4142 = vpop.f32.mrf.mxu0
      %v4143 = vadd.f32 0.0, %v4142
      %v4144 = vpop.f32.mrf.mxu0
      %v4145 = vadd.f32 0.0, %v4144
      %4146 = vdwg.mxu0
      %v4171 = vunpack.c.l.b16 %v3646
      %v4172 = vunpack.c.l.b16 %v3647
      %v4173 = vunpack.c.l.b16 %v3648
      %v4174 = vunpack.c.l.b16 %v3649
      %v4175 = vunpack.c.l.b16 %v3650
      %v4176 = vunpack.c.l.b16 %v3651
      %v4177 = vunpack.c.l.b16 %v3652
      %v4178 = vunpack.c.l.b16 %v3653
      %v4179 = vunpack.c.l.b16 %v3654
      %v4180 = vunpack.c.l.b16 %v3655
      %v4181 = vunpack.c.l.b16 %v3656
      %v4182 = vunpack.c.l.b16 %v3657
      %v4183 = vunpack.c.l.b16 %v3658
      %v4184 = vunpack.c.l.b16 %v3659
      %v4185 = vunpack.c.l.b16 %v3660
      %v4186 = vunpack.c.l.b16 %v3661
      %v4187 = vunpack.c.l.b16 %v3662
      %v4188 = vunpack.c.l.b16 %v3663
      %v4189 = vunpack.c.l.b16 %v3664
      %v4190 = vunpack.c.l.b16 %v3665
      %v4191 = vunpack.c.l.b16 %v3666
      %v4192 = vunpack.c.l.b16 %v3667
      %v4193 = vunpack.c.l.b16 %v3668
      %v4194 = vunpack.c.l.b16 %v3669
      %v4195 = vpack.c.b16 %v4172, %v4171
      %v4196 = vpack.c.b16 %v4174, %v4173
      %v4197 = vpack.c.b16 %v4176, %v4175
      %v4198 = vpack.c.b16 %v4178, %v4177
      %v4199 = vpack.c.b16 %v4180, %v4179
      %v4200 = vpack.c.b16 %v4182, %v4181
      %v4201 = vpack.c.b16 %v4184, %v4183
      %v4202 = vpack.c.b16 %v4186, %v4185
      %v4203 = vpack.c.b16 %v4188, %v4187
      %v4204 = vpack.c.b16 %v4190, %v4189
      %v4205 = vpack.c.b16 %v4192, %v4191
      %v4206 = vpack.c.b16 %v4194, %v4193
      %v4235 = vunpack.c.l.b16 %v3670
      %v4236 = vunpack.c.l.b16 %v3671
      %v4237 = vunpack.c.l.b16 %v3672
      %v4238 = vunpack.c.l.b16 %v3673
      %v4239 = vunpack.c.l.b16 %v3674
      %v4240 = vunpack.c.l.b16 %v3675
      %v4241 = vunpack.c.l.b16 %v3676
      %v4242 = vunpack.c.l.b16 %v3677
      %v4243 = vunpack.c.l.b16 %v3678
      %v4244 = vunpack.c.l.b16 %v3679
      %v4245 = vunpack.c.l.b16 %v3680
      %v4246 = vunpack.c.l.b16 %v3681
      %v4247 = vunpack.c.l.b16 %v3682
      %v4248 = vunpack.c.l.b16 %v3683
      %v4249 = vunpack.c.l.b16 %v3684
      %v4250 = vunpack.c.l.b16 %v3685
      %v4251 = vpack.c.b16 %v4236, %v4235
      %v4252 = vpack.c.b16 %v4238, %v4237
      %v4253 = vpack.c.b16 %v4240, %v4239
      %v4254 = vpack.c.b16 %v4242, %v4241
      %v4255 = vpack.c.b16 %v4244, %v4243
      %v4256 = vpack.c.b16 %v4246, %v4245
      %v4257 = vpack.c.b16 %v4248, %v4247
      %v4258 = vpack.c.b16 %v4250, %v4249
      %4267 = vmatpush.bf16.msra.mxu0 %v4258
      %4268 = vmatpush.bf16.msra.mxu0 %v4257
      %4269 = vmatpush.bf16.msra.mxu0 %v4256
      %4270 = vmatpush.bf16.msra.mxu0 %v4255
      %4271 = vmatpush.bf16.msra.mxu0 %v4254
      %4272 = vmatpush.bf16.msra.mxu0 %v4253
      %4273 = vmatpush.bf16.msra.mxu0 %v4252
      %4274 = vmatpush.bf16.msra.mxu0 %v4251
      %4275 = vmatmul.bf16.gmra.mxu0 %v4195
      %v4276 = vpop.f32.mrf.mxu0
      %v4277 = vadd.f32 %v4088, %v4276
      %v4278 = vpop.f32.mrf.mxu0
      %v4279 = vadd.f32 %v4090, %v4278
      %4280 = vmatmul.bf16.gmra.mxu0 %v4196
      %v4281 = vpop.f32.mrf.mxu0
      %v4282 = vadd.f32 %v4093, %v4281
      %v4283 = vpop.f32.mrf.mxu0
      %v4284 = vadd.f32 %v4095, %v4283
      %4285 = vmatmul.bf16.gmra.mxu0 %v4197
      %v4286 = vpop.f32.mrf.mxu0
      %v4287 = vadd.f32 %v4098, %v4286
      %v4288 = vpop.f32.mrf.mxu0
      %v4289 = vadd.f32 %v4100, %v4288
      %4290 = vmatmul.bf16.gmra.mxu0 %v4198
      %v4291 = vpop.f32.mrf.mxu0
      %v4292 = vadd.f32 %v4103, %v4291
      %v4293 = vpop.f32.mrf.mxu0
      %v4294 = vadd.f32 %v4105, %v4293
      %4295 = vmatmul.bf16.gmra.mxu0 %v4199
      %v4296 = vpop.f32.mrf.mxu0
      %v4297 = vadd.f32 %v4108, %v4296
      %v4298 = vpop.f32.mrf.mxu0
      %v4299 = vadd.f32 %v4110, %v4298
      %4300 = vmatmul.bf16.gmra.mxu0 %v4200
      %v4301 = vpop.f32.mrf.mxu0
      %v4302 = vadd.f32 %v4113, %v4301
      %v4303 = vpop.f32.mrf.mxu0
      %v4304 = vadd.f32 %v4115, %v4303
      %4305 = vmatmul.bf16.gmra.mxu0 %v4201
      %v4306 = vpop.f32.mrf.mxu0
      %v4307 = vadd.f32 %v4118, %v4306
      %v4308 = vpop.f32.mrf.mxu0
      %v4309 = vadd.f32 %v4120, %v4308
      %4310 = vmatmul.bf16.gmra.mxu0 %v4202
      %v4311 = vpop.f32.mrf.mxu0
      %v4312 = vadd.f32 %v4123, %v4311
      %v4313 = vpop.f32.mrf.mxu0
      %v4314 = vadd.f32 %v4125, %v4313
      %4315 = vmatmul.bf16.gmra.mxu0 %v4203
      %v4316 = vpop.f32.mrf.mxu0
      %v4317 = vadd.f32 %v4128, %v4316
      %v4318 = vpop.f32.mrf.mxu0
      %v4319 = vadd.f32 %v4130, %v4318
      %4320 = vmatmul.bf16.gmra.mxu0 %v4204
      %v4321 = vpop.f32.mrf.mxu0
      %v4322 = vadd.f32 %v4133, %v4321
      %v4323 = vpop.f32.mrf.mxu0
      %v4324 = vadd.f32 %v4135, %v4323
      %4325 = vmatmul.bf16.gmra.mxu0 %v4205
      %v4326 = vpop.f32.mrf.mxu0
      %v4327 = vadd.f32 %v4138, %v4326
      %v4328 = vpop.f32.mrf.mxu0
      %v4329 = vadd.f32 %v4140, %v4328
      %4330 = vmatmul.bf16.gmra.mxu0 %v4206
      %v4331 = vpop.f32.mrf.mxu0
      %v4332 = vadd.f32 %v4143, %v4331
      %v4333 = vpop.f32.mrf.mxu0
      %v4334 = vadd.f32 %v4145, %v4333
      %4335 = vdwg.mxu0
      %v4336 = vld [vmem:[%s3645] sm:$0xe]
      %v4337 = vld [vmem:[%s3645 + $0x10] sm:$0xe]
      %v4338 = vld [vmem:[%s3645 + $0x20] sm:$0xe]
      %v4339 = vld [vmem:[%s3645 + $0x30] sm:$0xe]
      %v4340 = vld [vmem:[%s3645 + $0x40] sm:$0xe]
      %v4341 = vld [vmem:[%s3645 + $0x50] sm:$0xe]
      %v4342 = vld [vmem:[%s3645 + $0x60] sm:$0xe]
      %v4343 = vld [vmem:[%s3645 + $0x70] sm:$0xe]
      %v4360 = vrot.slane %v4336, 5
      %v4361 = vrot.slane %v4360, 4
      %v4362 = vrot.slane %v3647, 5
      %v4363 = vsel %vm1045, %v4361, %v4362
      %v4364 = vrot.slane %v4362, 4
      %v4365 = vrot.slane %v3648, 5
      %v4366 = vsel %vm1045, %v4364, %v4365
      %v4367 = vrot.slane %v4365, 4
      %v4368 = vrot.slane %v3686, 5
      %v4369 = vsel %vm1045, %v4367, %v4368
      %v4370 = vrot.slane %v4337, 5
      %v4371 = vrot.slane %v4370, 4
      %v4372 = vrot.slane %v3650, 5
      %v4373 = vsel %vm1045, %v4371, %v4372
      %v4374 = vrot.slane %v4372, 4
      %v4375 = vrot.slane %v3651, 5
      %v4376 = vsel %vm1045, %v4374, %v4375
      %v4377 = vrot.slane %v4375, 4
      %v4378 = vrot.slane %v3687, 5
      %v4379 = vsel %vm1045, %v4377, %v4378
      %v4380 = vrot.slane %v4338, 5
      %v4381 = vrot.slane %v4380, 4
      %v4382 = vrot.slane %v3653, 5
      %v4383 = vsel %vm1045, %v4381, %v4382
      %v4384 = vrot.slane %v4382, 4
      %v4385 = vrot.slane %v3654, 5
      %v4386 = vsel %vm1045, %v4384, %v4385
      %v4387 = vrot.slane %v4385, 4
      %v4388 = vrot.slane %v3688, 5
      %v4389 = vsel %vm1045, %v4387, %v4388
      %v4390 = vrot.slane %v4339, 5
      %v4391 = vrot.slane %v4390, 4
      %v4392 = vrot.slane %v3656, 5
      %v4393 = vsel %vm1045, %v4391, %v4392
      %v4394 = vrot.slane %v4392, 4
      %v4395 = vrot.slane %v3657, 5
      %v4396 = vsel %vm1045, %v4394, %v4395
      %v4397 = vrot.slane %v4395, 4
      %v4398 = vrot.slane %v3689, 5
      %v4399 = vsel %vm1045, %v4397, %v4398
      %v4400 = vrot.slane %v4340, 5
      %v4401 = vrot.slane %v4400, 4
      %v4402 = vrot.slane %v3659, 5
      %v4403 = vsel %vm1045, %v4401, %v4402
      %v4404 = vrot.slane %v4402, 4
      %v4405 = vrot.slane %v3660, 5
      %v4406 = vsel %vm1045, %v4404, %v4405
      %v4407 = vrot.slane %v4405, 4
      %v4408 = vrot.slane %v3690, 5
      %v4409 = vsel %vm1045, %v4407, %v4408
      %v4410 = vrot.slane %v4341, 5
      %v4411 = vrot.slane %v4410, 4
      %v4412 = vrot.slane %v3662, 5
      %v4413 = vsel %vm1045, %v4411, %v4412
      %v4414 = vrot.slane %v4412, 4
      %v4415 = vrot.slane %v3663, 5
      %v4416 = vsel %vm1045, %v4414, %v4415
      %v4417 = vrot.slane %v4415, 4
      %v4418 = vrot.slane %v3691, 5
      %v4419 = vsel %vm1045, %v4417, %v4418
      %v4420 = vrot.slane %v4342, 5
      %v4421 = vrot.slane %v4420, 4
      %v4422 = vrot.slane %v3665, 5
      %v4423 = vsel %vm1045, %v4421, %v4422
      %v4424 = vrot.slane %v4422, 4
      %v4425 = vrot.slane %v3666, 5
      %v4426 = vsel %vm1045, %v4424, %v4425
      %v4427 = vrot.slane %v4425, 4
      %v4428 = vrot.slane %v3692, 5
      %v4429 = vsel %vm1045, %v4427, %v4428
      %v4430 = vrot.slane %v4343, 5
      %v4431 = vrot.slane %v4430, 4
      %v4432 = vrot.slane %v3668, 5
      %v4433 = vsel %vm1045, %v4431, %v4432
      %v4434 = vrot.slane %v4432, 4
      %v4435 = vrot.slane %v3669, 5
      %v4436 = vsel %vm1045, %v4434, %v4435
      %v4437 = vrot.slane %v4435, 4
      %v4438 = vrot.slane %v3693, 5
      %v4439 = vsel %vm1045, %v4437, %v4438
      %v4440 = vld [vmem:[%s1126] sm:$0xf]
      %v4441 = vld [vmem:[%s1126 + $0x4] sm:$0xf]
      %v4442 = vld [vmem:[%s1126 + $0x8] sm:$0xf]
      %v4443 = vld [vmem:[%s1126 + $0xc] sm:$0xf]
      %v4444 = vld [vmem:[%s1126 + $0x10] sm:$0xf]
      %v4445 = vld [vmem:[%s1126 + $0x14] sm:$0xf]
      %v4446 = vld [vmem:[%s1126 + $0x18] sm:$0xf]
      %v4447 = vld [vmem:[%s1126 + $0x1c] sm:$0xf]
      %v4448 = vld [vmem:[%s1126 + $0x20] sm:$0xf]
      %v4449 = vld [vmem:[%s1126 + $0x24] sm:$0xf]
      %v4450 = vld [vmem:[%s1126 + $0x28] sm:$0xf]
      %v4451 = vld [vmem:[%s1126 + $0x2c] sm:$0xf]
      %v4452 = vld [vmem:[%s1126 + $0x30] sm:$0xf]
      %v4453 = vld [vmem:[%s1126 + $0x34] sm:$0xf]
      %v4454 = vld [vmem:[%s1126 + $0x38] sm:$0xf]
      %v4455 = vld [vmem:[%s1126 + $0x3c] sm:$0xf]
      %v4456 = vunpack.c.l.b16 %v4363
      %v4457 = vunpack.c.l.b16 %v4366
      %v4458 = vunpack.c.l.b16 %v4369
      %v4459 = vunpack.c.l.b16 %v4373
      %v4460 = vunpack.c.l.b16 %v4376
      %v4461 = vunpack.c.l.b16 %v4379
      %v4462 = vunpack.c.l.b16 %v4383
      %v4463 = vunpack.c.l.b16 %v4386
      %v4464 = vunpack.c.l.b16 %v4389
      %v4465 = vunpack.c.l.b16 %v4393
      %v4466 = vunpack.c.l.b16 %v4396
      %v4467 = vunpack.c.l.b16 %v4399
      %v4468 = vunpack.c.l.b16 %v4403
      %v4469 = vunpack.c.l.b16 %v4406
      %v4470 = vunpack.c.l.b16 %v4409
      %v4471 = vunpack.c.l.b16 %v4413
      %v4472 = vunpack.c.l.b16 %v4416
      %v4473 = vunpack.c.l.b16 %v4419
      %v4474 = vunpack.c.l.b16 %v4423
      %v4475 = vunpack.c.l.b16 %v4426
      %v4476 = vunpack.c.l.b16 %v4429
      %v4477 = vunpack.c.l.b16 %v4433
      %v4478 = vunpack.c.l.b16 %v4436
      %v4479 = vunpack.c.l.b16 %v4439
      %v4480 = vpack.c.b16 %v4457, %v4456
      %v4481 = vpack.c.b16 %v4459, %v4458
      %v4482 = vpack.c.b16 %v4461, %v4460
      %v4483 = vpack.c.b16 %v4463, %v4462
      %v4484 = vpack.c.b16 %v4465, %v4464
      %v4485 = vpack.c.b16 %v4467, %v4466
      %v4486 = vpack.c.b16 %v4469, %v4468
      %v4487 = vpack.c.b16 %v4471, %v4470
      %v4488 = vpack.c.b16 %v4473, %v4472
      %v4489 = vpack.c.b16 %v4475, %v4474
      %v4490 = vpack.c.b16 %v4477, %v4476
      %v4491 = vpack.c.b16 %v4479, %v4478
      %v4520 = vunpack.c.l.b16 %v4440
      %v4521 = vunpack.c.l.b16 %v4441
      %v4522 = vunpack.c.l.b16 %v4442
      %v4523 = vunpack.c.l.b16 %v4443
      %v4524 = vunpack.c.l.b16 %v4444
      %v4525 = vunpack.c.l.b16 %v4445
      %v4526 = vunpack.c.l.b16 %v4446
      %v4527 = vunpack.c.l.b16 %v4447
      %v4528 = vunpack.c.l.b16 %v4448
      %v4529 = vunpack.c.l.b16 %v4449
      %v4530 = vunpack.c.l.b16 %v4450
      %v4531 = vunpack.c.l.b16 %v4451
      %v4532 = vunpack.c.l.b16 %v4452
      %v4533 = vunpack.c.l.b16 %v4453
      %v4534 = vunpack.c.l.b16 %v4454
      %v4535 = vunpack.c.l.b16 %v4455
      %v4536 = vpack.c.b16 %v4521, %v4520
      %v4537 = vpack.c.b16 %v4523, %v4522
      %v4538 = vpack.c.b16 %v4525, %v4524
      %v4539 = vpack.c.b16 %v4527, %v4526
      %v4540 = vpack.c.b16 %v4529, %v4528
      %v4541 = vpack.c.b16 %v4531, %v4530
      %v4542 = vpack.c.b16 %v4533, %v4532
      %v4543 = vpack.c.b16 %v4535, %v4534
      %4552 = vmatpush.bf16.msra.mxu0 %v4543
      %4553 = vmatpush.bf16.msra.mxu0 %v4542
      %4554 = vmatpush.bf16.msra.mxu0 %v4541
      %4555 = vmatpush.bf16.msra.mxu0 %v4540
      %4556 = vmatpush.bf16.msra.mxu0 %v4539
      %4557 = vmatpush.bf16.msra.mxu0 %v4538
      %4558 = vmatpush.bf16.msra.mxu0 %v4537
      %4559 = vmatpush.bf16.msra.mxu0 %v4536
      %4560 = vmatmul.bf16.gmra.mxu0 %v4480
      %v4561 = vpop.f32.mrf.mxu0
      %v4562 = vadd.f32 0.0, %v4561
      %v4563 = vpop.f32.mrf.mxu0
      %v4564 = vadd.f32 0.0, %v4563
      %4565 = vmatmul.bf16.gmra.mxu0 %v4481
      %v4566 = vpop.f32.mrf.mxu0
      %v4567 = vadd.f32 0.0, %v4566
      %v4568 = vpop.f32.mrf.mxu0
      %v4569 = vadd.f32 0.0, %v4568
      %4570 = vmatmul.bf16.gmra.mxu0 %v4482
      %v4571 = vpop.f32.mrf.mxu0
      %v4572 = vadd.f32 0.0, %v4571
      %v4573 = vpop.f32.mrf.mxu0
      %v4574 = vadd.f32 0.0, %v4573
      %4575 = vmatmul.bf16.gmra.mxu0 %v4483
      %v4576 = vpop.f32.mrf.mxu0
      %v4577 = vadd.f32 0.0, %v4576
      %v4578 = vpop.f32.mrf.mxu0
      %v4579 = vadd.f32 0.0, %v4578
      %4580 = vmatmul.bf16.gmra.mxu0 %v4484
      %v4581 = vpop.f32.mrf.mxu0
      %v4582 = vadd.f32 0.0, %v4581
      %v4583 = vpop.f32.mrf.mxu0
      %v4584 = vadd.f32 0.0, %v4583
      %4585 = vmatmul.bf16.gmra.mxu0 %v4485
      %v4586 = vpop.f32.mrf.mxu0
      %v4587 = vadd.f32 0.0, %v4586
      %v4588 = vpop.f32.mrf.mxu0
      %v4589 = vadd.f32 0.0, %v4588
      %4590 = vmatmul.bf16.gmra.mxu0 %v4486
      %v4591 = vpop.f32.mrf.mxu0
      %v4592 = vadd.f32 0.0, %v4591
      %v4593 = vpop.f32.mrf.mxu0
      %v4594 = vadd.f32 0.0, %v4593
      %4595 = vmatmul.bf16.gmra.mxu0 %v4487
      %v4596 = vpop.f32.mrf.mxu0
      %v4597 = vadd.f32 0.0, %v4596
      %v4598 = vpop.f32.mrf.mxu0
      %v4599 = vadd.f32 0.0, %v4598
      %4600 = vmatmul.bf16.gmra.mxu0 %v4488
      %v4601 = vpop.f32.mrf.mxu0
      %v4602 = vadd.f32 0.0, %v4601
      %v4603 = vpop.f32.mrf.mxu0
      %v4604 = vadd.f32 0.0, %v4603
      %4605 = vmatmul.bf16.gmra.mxu0 %v4489
      %v4606 = vpop.f32.mrf.mxu0
      %v4607 = vadd.f32 0.0, %v4606
      %v4608 = vpop.f32.mrf.mxu0
      %v4609 = vadd.f32 0.0, %v4608
      %4610 = vmatmul.bf16.gmra.mxu0 %v4490
      %v4611 = vpop.f32.mrf.mxu0
      %v4612 = vadd.f32 0.0, %v4611
      %v4613 = vpop.f32.mrf.mxu0
      %v4614 = vadd.f32 0.0, %v4613
      %4615 = vmatmul.bf16.gmra.mxu0 %v4491
      %v4616 = vpop.f32.mrf.mxu0
      %v4617 = vadd.f32 0.0, %v4616
      %v4618 = vpop.f32.mrf.mxu0
      %v4619 = vadd.f32 0.0, %v4618
      %4620 = vdwg.mxu0
      %v4621 = vadd.f32 %v4277, %v4562
      %v4622 = vadd.f32 %v4279, %v4564
      %v4623 = vadd.f32 %v4282, %v4567
      %v4624 = vadd.f32 %v4284, %v4569
      %v4625 = vadd.f32 %v4287, %v4572
      %v4626 = vadd.f32 %v4289, %v4574
      %v4627 = vadd.f32 %v4292, %v4577
      %v4628 = vadd.f32 %v4294, %v4579
      %v4629 = vadd.f32 %v4297, %v4582
      %v4630 = vadd.f32 %v4299, %v4584
      %v4631 = vadd.f32 %v4302, %v4587
      %v4632 = vadd.f32 %v4304, %v4589
      %v4633 = vadd.f32 %v4307, %v4592
      %v4634 = vadd.f32 %v4309, %v4594
      %v4635 = vadd.f32 %v4312, %v4597
      %v4636 = vadd.f32 %v4314, %v4599
      %v4637 = vadd.f32 %v4317, %v4602
      %v4638 = vadd.f32 %v4319, %v4604
      %v4639 = vadd.f32 %v4322, %v4607
      %v4640 = vadd.f32 %v4324, %v4609
      %v4641 = vadd.f32 %v4327, %v4612
      %v4642 = vadd.f32 %v4329, %v4614
      %v4643 = vadd.f32 %v4332, %v4617
      %v4644 = vadd.f32 %v4334, %v4619
      %s4645 = sadd.s32 8, 1
      %s4646 = smul.u32 %s4645, 4
      %s4647 = smul.addr %s4646, 4
      %s4648 = scalar_lea.vmem %s273, %s4647
      %v4649 = vld [vmem:[%s4648] sm:$0xf]
      %v4650 = vld [vmem:[%s4648 + $0x4] sm:$0xf]
      %v4651 = vld [vmem:[%s4648 + $0x8] sm:$0xf]
      %v4652 = vld [vmem:[%s4648 + $0x10] sm:$0xf]
      %v4653 = vld [vmem:[%s4648 + $0x14] sm:$0xf]
      %v4654 = vld [vmem:[%s4648 + $0x18] sm:$0xf]
      %v4655 = vld [vmem:[%s4648 + $0x20] sm:$0xf]
      %v4656 = vld [vmem:[%s4648 + $0x24] sm:$0xf]
      %v4657 = vld [vmem:[%s4648 + $0x28] sm:$0xf]
      %v4658 = vld [vmem:[%s4648 + $0x30] sm:$0xf]
      %v4659 = vld [vmem:[%s4648 + $0x34] sm:$0xf]
      %v4660 = vld [vmem:[%s4648 + $0x38] sm:$0xf]
      %v4661 = vld [vmem:[%s4648 + $0x40] sm:$0xf]
      %v4662 = vld [vmem:[%s4648 + $0x44] sm:$0xf]
      %v4663 = vld [vmem:[%s4648 + $0x48] sm:$0xf]
      %v4664 = vld [vmem:[%s4648 + $0x50] sm:$0xf]
      %v4665 = vld [vmem:[%s4648 + $0x54] sm:$0xf]
      %v4666 = vld [vmem:[%s4648 + $0x58] sm:$0xf]
      %v4667 = vld [vmem:[%s4648 + $0x60] sm:$0xf]
      %v4668 = vld [vmem:[%s4648 + $0x64] sm:$0xf]
      %v4669 = vld [vmem:[%s4648 + $0x68] sm:$0xf]
      %v4670 = vld [vmem:[%s4648 + $0x70] sm:$0xf]
      %v4671 = vld [vmem:[%s4648 + $0x74] sm:$0xf]
      %v4672 = vld [vmem:[%s4648 + $0x78] sm:$0xf]
      %v4673 = vld [vmem:[%s1360] sm:$0xf]
      %v4674 = vld [vmem:[%s1360 + $0x4] sm:$0xf]
      %v4675 = vld [vmem:[%s1360 + $0x8] sm:$0xf]
      %v4676 = vld [vmem:[%s1360 + $0xc] sm:$0xf]
      %v4677 = vld [vmem:[%s1360 + $0x10] sm:$0xf]
      %v4678 = vld [vmem:[%s1360 + $0x14] sm:$0xf]
      %v4679 = vld [vmem:[%s1360 + $0x18] sm:$0xf]
      %v4680 = vld [vmem:[%s1360 + $0x1c] sm:$0xf]
      %v4681 = vld [vmem:[%s1360 + $0x20] sm:$0xf]
      %v4682 = vld [vmem:[%s1360 + $0x24] sm:$0xf]
      %v4683 = vld [vmem:[%s1360 + $0x28] sm:$0xf]
      %v4684 = vld [vmem:[%s1360 + $0x2c] sm:$0xf]
      %v4685 = vld [vmem:[%s1360 + $0x30] sm:$0xf]
      %v4686 = vld [vmem:[%s1360 + $0x34] sm:$0xf]
      %v4687 = vld [vmem:[%s1360 + $0x38] sm:$0xf]
      %v4688 = vld [vmem:[%s1360 + $0x3c] sm:$0xf]
      %v4713 = vunpack.c.l.b16 %v4649
      %v4714 = vunpack.c.l.b16 %v4650
      %v4715 = vunpack.c.l.b16 %v4651
      %v4716 = vunpack.c.l.b16 %v4652
      %v4717 = vunpack.c.l.b16 %v4653
      %v4718 = vunpack.c.l.b16 %v4654
      %v4719 = vunpack.c.l.b16 %v4655
      %v4720 = vunpack.c.l.b16 %v4656
      %v4721 = vunpack.c.l.b16 %v4657
      %v4722 = vunpack.c.l.b16 %v4658
      %v4723 = vunpack.c.l.b16 %v4659
      %v4724 = vunpack.c.l.b16 %v4660
      %v4725 = vunpack.c.l.b16 %v4661
      %v4726 = vunpack.c.l.b16 %v4662
      %v4727 = vunpack.c.l.b16 %v4663
      %v4728 = vunpack.c.l.b16 %v4664
      %v4729 = vunpack.c.l.b16 %v4665
      %v4730 = vunpack.c.l.b16 %v4666
      %v4731 = vunpack.c.l.b16 %v4667
      %v4732 = vunpack.c.l.b16 %v4668
      %v4733 = vunpack.c.l.b16 %v4669
      %v4734 = vunpack.c.l.b16 %v4670
      %v4735 = vunpack.c.l.b16 %v4671
      %v4736 = vunpack.c.l.b16 %v4672
      %v4737 = vpack.c.b16 %v4714, %v4713
      %v4738 = vpack.c.b16 %v4716, %v4715
      %v4739 = vpack.c.b16 %v4718, %v4717
      %v4740 = vpack.c.b16 %v4720, %v4719
      %v4741 = vpack.c.b16 %v4722, %v4721
      %v4742 = vpack.c.b16 %v4724, %v4723
      %v4743 = vpack.c.b16 %v4726, %v4725
      %v4744 = vpack.c.b16 %v4728, %v4727
      %v4745 = vpack.c.b16 %v4730, %v4729
      %v4746 = vpack.c.b16 %v4732, %v4731
      %v4747 = vpack.c.b16 %v4734, %v4733
      %v4748 = vpack.c.b16 %v4736, %v4735
      %v4777 = vunpack.c.l.b16 %v4673
      %v4778 = vunpack.c.l.b16 %v4674
      %v4779 = vunpack.c.l.b16 %v4675
      %v4780 = vunpack.c.l.b16 %v4676
      %v4781 = vunpack.c.l.b16 %v4677
      %v4782 = vunpack.c.l.b16 %v4678
      %v4783 = vunpack.c.l.b16 %v4679
      %v4784 = vunpack.c.l.b16 %v4680
      %v4785 = vunpack.c.l.b16 %v4681
      %v4786 = vunpack.c.l.b16 %v4682
      %v4787 = vunpack.c.l.b16 %v4683
      %v4788 = vunpack.c.l.b16 %v4684
      %v4789 = vunpack.c.l.b16 %v4685
      %v4790 = vunpack.c.l.b16 %v4686
      %v4791 = vunpack.c.l.b16 %v4687
      %v4792 = vunpack.c.l.b16 %v4688
      %v4793 = vpack.c.b16 %v4778, %v4777
      %v4794 = vpack.c.b16 %v4780, %v4779
      %v4795 = vpack.c.b16 %v4782, %v4781
      %v4796 = vpack.c.b16 %v4784, %v4783
      %v4797 = vpack.c.b16 %v4786, %v4785
      %v4798 = vpack.c.b16 %v4788, %v4787
      %v4799 = vpack.c.b16 %v4790, %v4789
      %v4800 = vpack.c.b16 %v4792, %v4791
      %4809 = vmatpush.bf16.msra.mxu0 %v4800
      %4810 = vmatpush.bf16.msra.mxu0 %v4799
      %4811 = vmatpush.bf16.msra.mxu0 %v4798
      %4812 = vmatpush.bf16.msra.mxu0 %v4797
      %4813 = vmatpush.bf16.msra.mxu0 %v4796
      %4814 = vmatpush.bf16.msra.mxu0 %v4795
      %4815 = vmatpush.bf16.msra.mxu0 %v4794
      %4816 = vmatpush.bf16.msra.mxu0 %v4793
      %4817 = vmatmul.bf16.gmra.mxu0 %v4737
      %v4818 = vpop.f32.mrf.mxu0
      %v4819 = vadd.f32 0.0, %v4818
      %v4820 = vpop.f32.mrf.mxu0
      %v4821 = vadd.f32 0.0, %v4820
      %4822 = vmatmul.bf16.gmra.mxu0 %v4738
      %v4823 = vpop.f32.mrf.mxu0
      %v4824 = vadd.f32 0.0, %v4823
      %v4825 = vpop.f32.mrf.mxu0
      %v4826 = vadd.f32 0.0, %v4825
      %4827 = vmatmul.bf16.gmra.mxu0 %v4739
      %v4828 = vpop.f32.mrf.mxu0
      %v4829 = vadd.f32 0.0, %v4828
      %v4830 = vpop.f32.mrf.mxu0
      %v4831 = vadd.f32 0.0, %v4830
      %4832 = vmatmul.bf16.gmra.mxu0 %v4740
      %v4833 = vpop.f32.mrf.mxu0
      %v4834 = vadd.f32 0.0, %v4833
      %v4835 = vpop.f32.mrf.mxu0
      %v4836 = vadd.f32 0.0, %v4835
      %4837 = vmatmul.bf16.gmra.mxu0 %v4741
      %v4838 = vpop.f32.mrf.mxu0
      %v4839 = vadd.f32 0.0, %v4838
      %v4840 = vpop.f32.mrf.mxu0
      %v4841 = vadd.f32 0.0, %v4840
      %4842 = vmatmul.bf16.gmra.mxu0 %v4742
      %v4843 = vpop.f32.mrf.mxu0
      %v4844 = vadd.f32 0.0, %v4843
      %v4845 = vpop.f32.mrf.mxu0
      %v4846 = vadd.f32 0.0, %v4845
      %4847 = vmatmul.bf16.gmra.mxu0 %v4743
      %v4848 = vpop.f32.mrf.mxu0
      %v4849 = vadd.f32 0.0, %v4848
      %v4850 = vpop.f32.mrf.mxu0
      %v4851 = vadd.f32 0.0, %v4850
      %4852 = vmatmul.bf16.gmra.mxu0 %v4744
      %v4853 = vpop.f32.mrf.mxu0
      %v4854 = vadd.f32 0.0, %v4853
      %v4855 = vpop.f32.mrf.mxu0
      %v4856 = vadd.f32 0.0, %v4855
      %4857 = vmatmul.bf16.gmra.mxu0 %v4745
      %v4858 = vpop.f32.mrf.mxu0
      %v4859 = vadd.f32 0.0, %v4858
      %v4860 = vpop.f32.mrf.mxu0
      %v4861 = vadd.f32 0.0, %v4860
      %4862 = vmatmul.bf16.gmra.mxu0 %v4746
      %v4863 = vpop.f32.mrf.mxu0
      %v4864 = vadd.f32 0.0, %v4863
      %v4865 = vpop.f32.mrf.mxu0
      %v4866 = vadd.f32 0.0, %v4865
      %4867 = vmatmul.bf16.gmra.mxu0 %v4747
      %v4868 = vpop.f32.mrf.mxu0
      %v4869 = vadd.f32 0.0, %v4868
      %v4870 = vpop.f32.mrf.mxu0
      %v4871 = vadd.f32 0.0, %v4870
      %4872 = vmatmul.bf16.gmra.mxu0 %v4748
      %v4873 = vpop.f32.mrf.mxu0
      %v4874 = vadd.f32 0.0, %v4873
      %v4875 = vpop.f32.mrf.mxu0
      %v4876 = vadd.f32 0.0, %v4875
      %4877 = vdwg.mxu0
      %v4878 = vadd.f32 %v4621, %v4819
      %v4879 = vadd.f32 %v4622, %v4821
      %v4880 = vadd.f32 %v4623, %v4824
      %v4881 = vadd.f32 %v4624, %v4826
      %v4882 = vadd.f32 %v4625, %v4829
      %v4883 = vadd.f32 %v4626, %v4831
      %v4884 = vadd.f32 %v4627, %v4834
      %v4885 = vadd.f32 %v4628, %v4836
      %v4886 = vadd.f32 %v4629, %v4839
      %v4887 = vadd.f32 %v4630, %v4841
      %v4888 = vadd.f32 %v4631, %v4844
      %v4889 = vadd.f32 %v4632, %v4846
      %v4890 = vadd.f32 %v4633, %v4849
      %v4891 = vadd.f32 %v4634, %v4851
      %v4892 = vadd.f32 %v4635, %v4854
      %v4893 = vadd.f32 %v4636, %v4856
      %v4894 = vadd.f32 %v4637, %v4859
      %v4895 = vadd.f32 %v4638, %v4861
      %v4896 = vadd.f32 %v4639, %v4864
      %v4897 = vadd.f32 %v4640, %v4866
      %v4898 = vadd.f32 %v4641, %v4869
      %v4899 = vadd.f32 %v4642, %v4871
      %v4900 = vadd.f32 %v4643, %v4874
      %v4901 = vadd.f32 %v4644, %v4876
      %v4902 = vld [vmem:[%s4648] sm:$0xf]
      %v4903 = vld [vmem:[%s4648 + $0x4] sm:$0xf]
      %v4904 = vld [vmem:[%s4648 + $0x8] sm:$0xf]
      %v4905 = vld [vmem:[%s4648 + $0xc] sm:$0x1]
      %v4906 = vld [vmem:[%s4648 + $0x10] sm:$0xf]
      %v4907 = vld [vmem:[%s4648 + $0x14] sm:$0xf]
      %v4908 = vld [vmem:[%s4648 + $0x18] sm:$0xf]
      %v4909 = vld [vmem:[%s4648 + $0x1c] sm:$0x1]
      %v4910 = vld [vmem:[%s4648 + $0x20] sm:$0xf]
      %v4911 = vld [vmem:[%s4648 + $0x24] sm:$0xf]
      %v4912 = vld [vmem:[%s4648 + $0x28] sm:$0xf]
      %v4913 = vld [vmem:[%s4648 + $0x2c] sm:$0x1]
      %v4914 = vld [vmem:[%s4648 + $0x30] sm:$0xf]
      %v4915 = vld [vmem:[%s4648 + $0x34] sm:$0xf]
      %v4916 = vld [vmem:[%s4648 + $0x38] sm:$0xf]
      %v4917 = vld [vmem:[%s4648 + $0x3c] sm:$0x1]
      %v4918 = vld [vmem:[%s4648 + $0x40] sm:$0xf]
      %v4919 = vld [vmem:[%s4648 + $0x44] sm:$0xf]
      %v4920 = vld [vmem:[%s4648 + $0x48] sm:$0xf]
      %v4921 = vld [vmem:[%s4648 + $0x4c] sm:$0x1]
      %v4922 = vld [vmem:[%s4648 + $0x50] sm:$0xf]
      %v4923 = vld [vmem:[%s4648 + $0x54] sm:$0xf]
      %v4924 = vld [vmem:[%s4648 + $0x58] sm:$0xf]
      %v4925 = vld [vmem:[%s4648 + $0x5c] sm:$0x1]
      %v4926 = vld [vmem:[%s4648 + $0x60] sm:$0xf]
      %v4927 = vld [vmem:[%s4648 + $0x64] sm:$0xf]
      %v4928 = vld [vmem:[%s4648 + $0x68] sm:$0xf]
      %v4929 = vld [vmem:[%s4648 + $0x6c] sm:$0x1]
      %v4930 = vld [vmem:[%s4648 + $0x70] sm:$0xf]
      %v4931 = vld [vmem:[%s4648 + $0x74] sm:$0xf]
      %v4932 = vld [vmem:[%s4648 + $0x78] sm:$0xf]
      %v4933 = vld [vmem:[%s4648 + $0x7c] sm:$0x1]
      %v4935 = vshrl.u32 %v4902, 16
      %v4937 = vrot.slane %v4935, 4
      %v4938 = vshll.u32 %v4902, 16
      %v4940 = vrot.slane %v4938, 5
      %v4941 = vor.u32 %v4937, %v4940
      %v4942 = vrot.slane %v4941, 4
      %v4944 = vshll.u32 %v4903, 16
      %v4946 = vrot.slane %v4944, 5
      %v4947 = vsel %vm375, %v4942, %v4946
      %v4948 = vshrl.u32 %v4903, 16
      %v4950 = vrot.slane %v4948, 4
      %v4951 = vor.u32 %v4950, %v4946
      %v4952 = vrot.slane %v4951, 4
      %v4954 = vshll.u32 %v4904, 16
      %v4956 = vrot.slane %v4954, 5
      %v4957 = vsel %vm375, %v4952, %v4956
      %v4958 = vshrl.u32 %v4904, 16
      %v4960 = vrot.slane %v4958, 4
      %v4961 = vor.u32 %v4960, %v4956
      %v4962 = vrot.slane %v4961, 4
      %v4964 = vshll.u32 %v4905, 16
      %v4966 = vrot.slane %v4964, 5
      %v4967 = vsel %vm375, %v4962, %v4966
      %v4969 = vshrl.u32 %v4906, 16
      %v4971 = vrot.slane %v4969, 4
      %v4972 = vshll.u32 %v4906, 16
      %v4974 = vrot.slane %v4972, 5
      %v4975 = vor.u32 %v4971, %v4974
      %v4976 = vrot.slane %v4975, 4
      %v4978 = vshll.u32 %v4907, 16
      %v4980 = vrot.slane %v4978, 5
      %v4981 = vsel %vm375, %v4976, %v4980
      %v4982 = vshrl.u32 %v4907, 16
      %v4984 = vrot.slane %v4982, 4
      %v4985 = vor.u32 %v4984, %v4980
      %v4986 = vrot.slane %v4985, 4
      %v4988 = vshll.u32 %v4908, 16
      %v4990 = vrot.slane %v4988, 5
      %v4991 = vsel %vm375, %v4986, %v4990
      %v4992 = vshrl.u32 %v4908, 16
      %v4994 = vrot.slane %v4992, 4
      %v4995 = vor.u32 %v4994, %v4990
      %v4996 = vrot.slane %v4995, 4
      %v4998 = vshll.u32 %v4909, 16
      %v5000 = vrot.slane %v4998, 5
      %v5001 = vsel %vm375, %v4996, %v5000
      %v5003 = vshrl.u32 %v4910, 16
      %v5005 = vrot.slane %v5003, 4
      %v5006 = vshll.u32 %v4910, 16
      %v5008 = vrot.slane %v5006, 5
      %v5009 = vor.u32 %v5005, %v5008
      %v5010 = vrot.slane %v5009, 4
      %v5012 = vshll.u32 %v4911, 16
      %v5014 = vrot.slane %v5012, 5
      %v5015 = vsel %vm375, %v5010, %v5014
      %v5016 = vshrl.u32 %v4911, 16
      %v5018 = vrot.slane %v5016, 4
      %v5019 = vor.u32 %v5018, %v5014
      %v5020 = vrot.slane %v5019, 4
      %v5022 = vshll.u32 %v4912, 16
      %v5024 = vrot.slane %v5022, 5
      %v5025 = vsel %vm375, %v5020, %v5024
      %v5026 = vshrl.u32 %v4912, 16
      %v5028 = vrot.slane %v5026, 4
      %v5029 = vor.u32 %v5028, %v5024
      %v5030 = vrot.slane %v5029, 4
      %v5032 = vshll.u32 %v4913, 16
      %v5034 = vrot.slane %v5032, 5
      %v5035 = vsel %vm375, %v5030, %v5034
      %v5037 = vshrl.u32 %v4914, 16
      %v5039 = vrot.slane %v5037, 4
      %v5040 = vshll.u32 %v4914, 16
      %v5042 = vrot.slane %v5040, 5
      %v5043 = vor.u32 %v5039, %v5042
      %v5044 = vrot.slane %v5043, 4
      %v5046 = vshll.u32 %v4915, 16
      %v5048 = vrot.slane %v5046, 5
      %v5049 = vsel %vm375, %v5044, %v5048
      %v5050 = vshrl.u32 %v4915, 16
      %v5052 = vrot.slane %v5050, 4
      %v5053 = vor.u32 %v5052, %v5048
      %v5054 = vrot.slane %v5053, 4
      %v5056 = vshll.u32 %v4916, 16
      %v5058 = vrot.slane %v5056, 5
      %v5059 = vsel %vm375, %v5054, %v5058
      %v5060 = vshrl.u32 %v4916, 16
      %v5062 = vrot.slane %v5060, 4
      %v5063 = vor.u32 %v5062, %v5058
      %v5064 = vrot.slane %v5063, 4
      %v5066 = vshll.u32 %v4917, 16
      %v5068 = vrot.slane %v5066, 5
      %v5069 = vsel %vm375, %v5064, %v5068
      %v5071 = vshrl.u32 %v4918, 16
      %v5073 = vrot.slane %v5071, 4
      %v5074 = vshll.u32 %v4918, 16
      %v5076 = vrot.slane %v5074, 5
      %v5077 = vor.u32 %v5073, %v5076
      %v5078 = vrot.slane %v5077, 4
      %v5080 = vshll.u32 %v4919, 16
      %v5082 = vrot.slane %v5080, 5
      %v5083 = vsel %vm375, %v5078, %v5082
      %v5084 = vshrl.u32 %v4919, 16
      %v5086 = vrot.slane %v5084, 4
      %v5087 = vor.u32 %v5086, %v5082
      %v5088 = vrot.slane %v5087, 4
      %v5090 = vshll.u32 %v4920, 16
      %v5092 = vrot.slane %v5090, 5
      %v5093 = vsel %vm375, %v5088, %v5092
      %v5094 = vshrl.u32 %v4920, 16
      %v5096 = vrot.slane %v5094, 4
      %v5097 = vor.u32 %v5096, %v5092
      %v5098 = vrot.slane %v5097, 4
      %v5100 = vshll.u32 %v4921, 16
      %v5102 = vrot.slane %v5100, 5
      %v5103 = vsel %vm375, %v5098, %v5102
      %v5105 = vshrl.u32 %v4922, 16
      %v5107 = vrot.slane %v5105, 4
      %v5108 = vshll.u32 %v4922, 16
      %v5110 = vrot.slane %v5108, 5
      %v5111 = vor.u32 %v5107, %v5110
      %v5112 = vrot.slane %v5111, 4
      %v5114 = vshll.u32 %v4923, 16
      %v5116 = vrot.slane %v5114, 5
      %v5117 = vsel %vm375, %v5112, %v5116
      %v5118 = vshrl.u32 %v4923, 16
      %v5120 = vrot.slane %v5118, 4
      %v5121 = vor.u32 %v5120, %v5116
      %v5122 = vrot.slane %v5121, 4
      %v5124 = vshll.u32 %v4924, 16
      %v5126 = vrot.slane %v5124, 5
      %v5127 = vsel %vm375, %v5122, %v5126
      %v5128 = vshrl.u32 %v4924, 16
      %v5130 = vrot.slane %v5128, 4
      %v5131 = vor.u32 %v5130, %v5126
      %v5132 = vrot.slane %v5131, 4
      %v5134 = vshll.u32 %v4925, 16
      %v5136 = vrot.slane %v5134, 5
      %v5137 = vsel %vm375, %v5132, %v5136
      %v5139 = vshrl.u32 %v4926, 16
      %v5141 = vrot.slane %v5139, 4
      %v5142 = vshll.u32 %v4926, 16
      %v5144 = vrot.slane %v5142, 5
      %v5145 = vor.u32 %v5141, %v5144
      %v5146 = vrot.slane %v5145, 4
      %v5148 = vshll.u32 %v4927, 16
      %v5150 = vrot.slane %v5148, 5
      %v5151 = vsel %vm375, %v5146, %v5150
      %v5152 = vshrl.u32 %v4927, 16
      %v5154 = vrot.slane %v5152, 4
      %v5155 = vor.u32 %v5154, %v5150
      %v5156 = vrot.slane %v5155, 4
      %v5158 = vshll.u32 %v4928, 16
      %v5160 = vrot.slane %v5158, 5
      %v5161 = vsel %vm375, %v5156, %v5160
      %v5162 = vshrl.u32 %v4928, 16
      %v5164 = vrot.slane %v5162, 4
      %v5165 = vor.u32 %v5164, %v5160
      %v5166 = vrot.slane %v5165, 4
      %v5168 = vshll.u32 %v4929, 16
      %v5170 = vrot.slane %v5168, 5
      %v5171 = vsel %vm375, %v5166, %v5170
      %v5173 = vshrl.u32 %v4930, 16
      %v5175 = vrot.slane %v5173, 4
      %v5176 = vshll.u32 %v4930, 16
      %v5178 = vrot.slane %v5176, 5
      %v5179 = vor.u32 %v5175, %v5178
      %v5180 = vrot.slane %v5179, 4
      %v5182 = vshll.u32 %v4931, 16
      %v5184 = vrot.slane %v5182, 5
      %v5185 = vsel %vm375, %v5180, %v5184
      %v5186 = vshrl.u32 %v4931, 16
      %v5188 = vrot.slane %v5186, 4
      %v5189 = vor.u32 %v5188, %v5184
      %v5190 = vrot.slane %v5189, 4
      %v5192 = vshll.u32 %v4932, 16
      %v5194 = vrot.slane %v5192, 5
      %v5195 = vsel %vm375, %v5190, %v5194
      %v5196 = vshrl.u32 %v4932, 16
      %v5198 = vrot.slane %v5196, 4
      %v5199 = vor.u32 %v5198, %v5194
      %v5200 = vrot.slane %v5199, 4
      %v5202 = vshll.u32 %v4933, 16
      %v5204 = vrot.slane %v5202, 5
      %v5205 = vsel %vm375, %v5200, %v5204
      %v5206 = vld [vmem:[%s1894] sm:$0xf]
      %v5207 = vld [vmem:[%s1894 + $0x4] sm:$0xf]
      %v5208 = vld [vmem:[%s1894 + $0x8] sm:$0xf]
      %v5209 = vld [vmem:[%s1894 + $0xc] sm:$0xf]
      %v5210 = vld [vmem:[%s1894 + $0x10] sm:$0xf]
      %v5211 = vld [vmem:[%s1894 + $0x14] sm:$0xf]
      %v5212 = vld [vmem:[%s1894 + $0x18] sm:$0xf]
      %v5213 = vld [vmem:[%s1894 + $0x1c] sm:$0xf]
      %v5214 = vld [vmem:[%s1894 + $0x20] sm:$0xf]
      %v5215 = vld [vmem:[%s1894 + $0x24] sm:$0xf]
      %v5216 = vld [vmem:[%s1894 + $0x28] sm:$0xf]
      %v5217 = vld [vmem:[%s1894 + $0x2c] sm:$0xf]
      %v5218 = vld [vmem:[%s1894 + $0x30] sm:$0xf]
      %v5219 = vld [vmem:[%s1894 + $0x34] sm:$0xf]
      %v5220 = vld [vmem:[%s1894 + $0x38] sm:$0xf]
      %v5221 = vld [vmem:[%s1894 + $0x3c] sm:$0xf]
      %v5222 = vunpack.c.l.b16 %v4947
      %v5223 = vunpack.c.l.b16 %v4957
      %v5224 = vunpack.c.l.b16 %v4967
      %v5225 = vunpack.c.l.b16 %v4981
      %v5226 = vunpack.c.l.b16 %v4991
      %v5227 = vunpack.c.l.b16 %v5001
      %v5228 = vunpack.c.l.b16 %v5015
      %v5229 = vunpack.c.l.b16 %v5025
      %v5230 = vunpack.c.l.b16 %v5035
      %v5231 = vunpack.c.l.b16 %v5049
      %v5232 = vunpack.c.l.b16 %v5059
      %v5233 = vunpack.c.l.b16 %v5069
      %v5234 = vunpack.c.l.b16 %v5083
      %v5235 = vunpack.c.l.b16 %v5093
      %v5236 = vunpack.c.l.b16 %v5103
      %v5237 = vunpack.c.l.b16 %v5117
      %v5238 = vunpack.c.l.b16 %v5127
      %v5239 = vunpack.c.l.b16 %v5137
      %v5240 = vunpack.c.l.b16 %v5151
      %v5241 = vunpack.c.l.b16 %v5161
      %v5242 = vunpack.c.l.b16 %v5171
      %v5243 = vunpack.c.l.b16 %v5185
      %v5244 = vunpack.c.l.b16 %v5195
      %v5245 = vunpack.c.l.b16 %v5205
      %v5246 = vpack.c.b16 %v5223, %v5222
      %v5247 = vpack.c.b16 %v5225, %v5224
      %v5248 = vpack.c.b16 %v5227, %v5226
      %v5249 = vpack.c.b16 %v5229, %v5228
      %v5250 = vpack.c.b16 %v5231, %v5230
      %v5251 = vpack.c.b16 %v5233, %v5232
      %v5252 = vpack.c.b16 %v5235, %v5234
      %v5253 = vpack.c.b16 %v5237, %v5236
      %v5254 = vpack.c.b16 %v5239, %v5238
      %v5255 = vpack.c.b16 %v5241, %v5240
      %v5256 = vpack.c.b16 %v5243, %v5242
      %v5257 = vpack.c.b16 %v5245, %v5244
      %v5286 = vunpack.c.l.b16 %v5206
      %v5287 = vunpack.c.l.b16 %v5207
      %v5288 = vunpack.c.l.b16 %v5208
      %v5289 = vunpack.c.l.b16 %v5209
      %v5290 = vunpack.c.l.b16 %v5210
      %v5291 = vunpack.c.l.b16 %v5211
      %v5292 = vunpack.c.l.b16 %v5212
      %v5293 = vunpack.c.l.b16 %v5213
      %v5294 = vunpack.c.l.b16 %v5214
      %v5295 = vunpack.c.l.b16 %v5215
      %v5296 = vunpack.c.l.b16 %v5216
      %v5297 = vunpack.c.l.b16 %v5217
      %v5298 = vunpack.c.l.b16 %v5218
      %v5299 = vunpack.c.l.b16 %v5219
      %v5300 = vunpack.c.l.b16 %v5220
      %v5301 = vunpack.c.l.b16 %v5221
      %v5302 = vpack.c.b16 %v5287, %v5286
      %v5303 = vpack.c.b16 %v5289, %v5288
      %v5304 = vpack.c.b16 %v5291, %v5290
      %v5305 = vpack.c.b16 %v5293, %v5292
      %v5306 = vpack.c.b16 %v5295, %v5294
      %v5307 = vpack.c.b16 %v5297, %v5296
      %v5308 = vpack.c.b16 %v5299, %v5298
      %v5309 = vpack.c.b16 %v5301, %v5300
      %5318 = vmatpush.bf16.msra.mxu0 %v5309
      %5319 = vmatpush.bf16.msra.mxu0 %v5308
      %5320 = vmatpush.bf16.msra.mxu0 %v5307
      %5321 = vmatpush.bf16.msra.mxu0 %v5306
      %5322 = vmatpush.bf16.msra.mxu0 %v5305
      %5323 = vmatpush.bf16.msra.mxu0 %v5304
      %5324 = vmatpush.bf16.msra.mxu0 %v5303
      %5325 = vmatpush.bf16.msra.mxu0 %v5302
      %5326 = vmatmul.bf16.gmra.mxu0 %v5246
      %v5327 = vpop.f32.mrf.mxu0
      %v5328 = vadd.f32 0.0, %v5327
      %v5329 = vpop.f32.mrf.mxu0
      %v5330 = vadd.f32 0.0, %v5329
      %5331 = vmatmul.bf16.gmra.mxu0 %v5247
      %v5332 = vpop.f32.mrf.mxu0
      %v5333 = vadd.f32 0.0, %v5332
      %v5334 = vpop.f32.mrf.mxu0
      %v5335 = vadd.f32 0.0, %v5334
      %5336 = vmatmul.bf16.gmra.mxu0 %v5248
      %v5337 = vpop.f32.mrf.mxu0
      %v5338 = vadd.f32 0.0, %v5337
      %v5339 = vpop.f32.mrf.mxu0
      %v5340 = vadd.f32 0.0, %v5339
      %5341 = vmatmul.bf16.gmra.mxu0 %v5249
      %v5342 = vpop.f32.mrf.mxu0
      %v5343 = vadd.f32 0.0, %v5342
      %v5344 = vpop.f32.mrf.mxu0
      %v5345 = vadd.f32 0.0, %v5344
      %5346 = vmatmul.bf16.gmra.mxu0 %v5250
      %v5347 = vpop.f32.mrf.mxu0
      %v5348 = vadd.f32 0.0, %v5347
      %v5349 = vpop.f32.mrf.mxu0
      %v5350 = vadd.f32 0.0, %v5349
      %5351 = vmatmul.bf16.gmra.mxu0 %v5251
      %v5352 = vpop.f32.mrf.mxu0
      %v5353 = vadd.f32 0.0, %v5352
      %v5354 = vpop.f32.mrf.mxu0
      %v5355 = vadd.f32 0.0, %v5354
      %5356 = vmatmul.bf16.gmra.mxu0 %v5252
      %v5357 = vpop.f32.mrf.mxu0
      %v5358 = vadd.f32 0.0, %v5357
      %v5359 = vpop.f32.mrf.mxu0
      %v5360 = vadd.f32 0.0, %v5359
      %5361 = vmatmul.bf16.gmra.mxu0 %v5253
      %v5362 = vpop.f32.mrf.mxu0
      %v5363 = vadd.f32 0.0, %v5362
      %v5364 = vpop.f32.mrf.mxu0
      %v5365 = vadd.f32 0.0, %v5364
      %5366 = vmatmul.bf16.gmra.mxu0 %v5254
      %v5367 = vpop.f32.mrf.mxu0
      %v5368 = vadd.f32 0.0, %v5367
      %v5369 = vpop.f32.mrf.mxu0
      %v5370 = vadd.f32 0.0, %v5369
      %5371 = vmatmul.bf16.gmra.mxu0 %v5255
      %v5372 = vpop.f32.mrf.mxu0
      %v5373 = vadd.f32 0.0, %v5372
      %v5374 = vpop.f32.mrf.mxu0
      %v5375 = vadd.f32 0.0, %v5374
      %5376 = vmatmul.bf16.gmra.mxu0 %v5256
      %v5377 = vpop.f32.mrf.mxu0
      %v5378 = vadd.f32 0.0, %v5377
      %v5379 = vpop.f32.mrf.mxu0
      %v5380 = vadd.f32 0.0, %v5379
      %5381 = vmatmul.bf16.gmra.mxu0 %v5257
      %v5382 = vpop.f32.mrf.mxu0
      %v5383 = vadd.f32 0.0, %v5382
      %v5384 = vpop.f32.mrf.mxu0
      %v5385 = vadd.f32 0.0, %v5384
      %5386 = vdwg.mxu0
      %v5387 = vadd.f32 %v4878, %v5328
      %v5388 = vadd.f32 %v4879, %v5330
      %v5389 = vadd.f32 %v4880, %v5333
      %v5390 = vadd.f32 %v4881, %v5335
      %v5391 = vadd.f32 %v4882, %v5338
      %v5392 = vadd.f32 %v4883, %v5340
      %v5393 = vadd.f32 %v4884, %v5343
      %v5394 = vadd.f32 %v4885, %v5345
      %v5395 = vadd.f32 %v4886, %v5348
      %v5396 = vadd.f32 %v4887, %v5350
      %v5397 = vadd.f32 %v4888, %v5353
      %v5398 = vadd.f32 %v4889, %v5355
      %v5399 = vadd.f32 %v4890, %v5358
      %v5400 = vadd.f32 %v4891, %v5360
      %v5401 = vadd.f32 %v4892, %v5363
      %v5402 = vadd.f32 %v4893, %v5365
      %v5403 = vadd.f32 %v4894, %v5368
      %v5404 = vadd.f32 %v4895, %v5370
      %v5405 = vadd.f32 %v4896, %v5373
      %v5406 = vadd.f32 %v4897, %v5375
      %v5407 = vadd.f32 %v4898, %v5378
      %v5408 = vadd.f32 %v4899, %v5380
      %v5409 = vadd.f32 %v4900, %v5383
      %v5410 = vadd.f32 %v4901, %v5385
      %v5411 = vld [vmem:[%s4648] sm:$0xe]
      %v5412 = vld [vmem:[%s4648 + $0x10] sm:$0xe]
      %v5413 = vld [vmem:[%s4648 + $0x20] sm:$0xe]
      %v5414 = vld [vmem:[%s4648 + $0x30] sm:$0xe]
      %v5415 = vld [vmem:[%s4648 + $0x40] sm:$0xe]
      %v5416 = vld [vmem:[%s4648 + $0x50] sm:$0xe]
      %v5417 = vld [vmem:[%s4648 + $0x60] sm:$0xe]
      %v5418 = vld [vmem:[%s4648 + $0x70] sm:$0xe]
      %v5451 = vrot.slane %v5411, 5
      %v5452 = vrot.slane %v5451, 4
      %v5453 = vrot.slane %v4903, 5
      %v5454 = vsel %vm1045, %v5452, %v5453
      %v5455 = vrot.slane %v5453, 4
      %v5456 = vrot.slane %v4904, 5
      %v5457 = vsel %vm1045, %v5455, %v5456
      %v5458 = vrot.slane %v5456, 4
      %v5459 = vrot.slane %v4905, 5
      %v5460 = vsel %vm1045, %v5458, %v5459
      %v5461 = vrot.slane %v5412, 5
      %v5462 = vrot.slane %v5461, 4
      %v5463 = vrot.slane %v4907, 5
      %v5464 = vsel %vm1045, %v5462, %v5463
      %v5465 = vrot.slane %v5463, 4
      %v5466 = vrot.slane %v4908, 5
      %v5467 = vsel %vm1045, %v5465, %v5466
      %v5468 = vrot.slane %v5466, 4
      %v5469 = vrot.slane %v4909, 5
      %v5470 = vsel %vm1045, %v5468, %v5469
      %v5471 = vrot.slane %v5413, 5
      %v5472 = vrot.slane %v5471, 4
      %v5473 = vrot.slane %v4911, 5
      %v5474 = vsel %vm1045, %v5472, %v5473
      %v5475 = vrot.slane %v5473, 4
      %v5476 = vrot.slane %v4912, 5
      %v5477 = vsel %vm1045, %v5475, %v5476
      %v5478 = vrot.slane %v5476, 4
      %v5479 = vrot.slane %v4913, 5
      %v5480 = vsel %vm1045, %v5478, %v5479
      %v5481 = vrot.slane %v5414, 5
      %v5482 = vrot.slane %v5481, 4
      %v5483 = vrot.slane %v4915, 5
      %v5484 = vsel %vm1045, %v5482, %v5483
      %v5485 = vrot.slane %v5483, 4
      %v5486 = vrot.slane %v4916, 5
      %v5487 = vsel %vm1045, %v5485, %v5486
      %v5488 = vrot.slane %v5486, 4
      %v5489 = vrot.slane %v4917, 5
      %v5490 = vsel %vm1045, %v5488, %v5489
      %v5491 = vrot.slane %v5415, 5
      %v5492 = vrot.slane %v5491, 4
      %v5493 = vrot.slane %v4919, 5
      %v5494 = vsel %vm1045, %v5492, %v5493
      %v5495 = vrot.slane %v5493, 4
      %v5496 = vrot.slane %v4920, 5
      %v5497 = vsel %vm1045, %v5495, %v5496
      %v5498 = vrot.slane %v5496, 4
      %v5499 = vrot.slane %v4921, 5
      %v5500 = vsel %vm1045, %v5498, %v5499
      %v5501 = vrot.slane %v5416, 5
      %v5502 = vrot.slane %v5501, 4
      %v5503 = vrot.slane %v4923, 5
      %v5504 = vsel %vm1045, %v5502, %v5503
      %v5505 = vrot.slane %v5503, 4
      %v5506 = vrot.slane %v4924, 5
      %v5507 = vsel %vm1045, %v5505, %v5506
      %v5508 = vrot.slane %v5506, 4
      %v5509 = vrot.slane %v4925, 5
      %v5510 = vsel %vm1045, %v5508, %v5509
      %v5511 = vrot.slane %v5417, 5
      %v5512 = vrot.slane %v5511, 4
      %v5513 = vrot.slane %v4927, 5
      %v5514 = vsel %vm1045, %v5512, %v5513
      %v5515 = vrot.slane %v5513, 4
      %v5516 = vrot.slane %v4928, 5
      %v5517 = vsel %vm1045, %v5515, %v5516
      %v5518 = vrot.slane %v5516, 4
      %v5519 = vrot.slane %v4929, 5
      %v5520 = vsel %vm1045, %v5518, %v5519
      %v5521 = vrot.slane %v5418, 5
      %v5522 = vrot.slane %v5521, 4
      %v5523 = vrot.slane %v4931, 5
      %v5524 = vsel %vm1045, %v5522, %v5523
      %v5525 = vrot.slane %v5523, 4
      %v5526 = vrot.slane %v4932, 5
      %v5527 = vsel %vm1045, %v5525, %v5526
      %v5528 = vrot.slane %v5526, 4
      %v5529 = vrot.slane %v4933, 5
      %v5530 = vsel %vm1045, %v5528, %v5529
      %v5531 = vld [vmem:[%s2220] sm:$0xf]
      %v5532 = vld [vmem:[%s2220 + $0x4] sm:$0xf]
      %v5533 = vld [vmem:[%s2220 + $0x8] sm:$0xf]
      %v5534 = vld [vmem:[%s2220 + $0xc] sm:$0xf]
      %v5535 = vld [vmem:[%s2220 + $0x10] sm:$0xf]
      %v5536 = vld [vmem:[%s2220 + $0x14] sm:$0xf]
      %v5537 = vld [vmem:[%s2220 + $0x18] sm:$0xf]
      %v5538 = vld [vmem:[%s2220 + $0x1c] sm:$0xf]
      %v5539 = vld [vmem:[%s2220 + $0x20] sm:$0xf]
      %v5540 = vld [vmem:[%s2220 + $0x24] sm:$0xf]
      %v5541 = vld [vmem:[%s2220 + $0x28] sm:$0xf]
      %v5542 = vld [vmem:[%s2220 + $0x2c] sm:$0xf]
      %v5543 = vld [vmem:[%s2220 + $0x30] sm:$0xf]
      %v5544 = vld [vmem:[%s2220 + $0x34] sm:$0xf]
      %v5545 = vld [vmem:[%s2220 + $0x38] sm:$0xf]
      %v5546 = vld [vmem:[%s2220 + $0x3c] sm:$0xf]
      %v5547 = vunpack.c.l.b16 %v5454
      %v5548 = vunpack.c.l.b16 %v5457
      %v5549 = vunpack.c.l.b16 %v5460
      %v5550 = vunpack.c.l.b16 %v5464
      %v5551 = vunpack.c.l.b16 %v5467
      %v5552 = vunpack.c.l.b16 %v5470
      %v5553 = vunpack.c.l.b16 %v5474
      %v5554 = vunpack.c.l.b16 %v5477
      %v5555 = vunpack.c.l.b16 %v5480
      %v5556 = vunpack.c.l.b16 %v5484
      %v5557 = vunpack.c.l.b16 %v5487
      %v5558 = vunpack.c.l.b16 %v5490
      %v5559 = vunpack.c.l.b16 %v5494
      %v5560 = vunpack.c.l.b16 %v5497
      %v5561 = vunpack.c.l.b16 %v5500
      %v5562 = vunpack.c.l.b16 %v5504
      %v5563 = vunpack.c.l.b16 %v5507
      %v5564 = vunpack.c.l.b16 %v5510
      %v5565 = vunpack.c.l.b16 %v5514
      %v5566 = vunpack.c.l.b16 %v5517
      %v5567 = vunpack.c.l.b16 %v5520
      %v5568 = vunpack.c.l.b16 %v5524
      %v5569 = vunpack.c.l.b16 %v5527
      %v5570 = vunpack.c.l.b16 %v5530
      %v5571 = vpack.c.b16 %v5548, %v5547
      %v5572 = vpack.c.b16 %v5550, %v5549
      %v5573 = vpack.c.b16 %v5552, %v5551
      %v5574 = vpack.c.b16 %v5554, %v5553
      %v5575 = vpack.c.b16 %v5556, %v5555
      %v5576 = vpack.c.b16 %v5558, %v5557
      %v5577 = vpack.c.b16 %v5560, %v5559
      %v5578 = vpack.c.b16 %v5562, %v5561
      %v5579 = vpack.c.b16 %v5564, %v5563
      %v5580 = vpack.c.b16 %v5566, %v5565
      %v5581 = vpack.c.b16 %v5568, %v5567
      %v5582 = vpack.c.b16 %v5570, %v5569
      %v5611 = vunpack.c.l.b16 %v5531
      %v5612 = vunpack.c.l.b16 %v5532
      %v5613 = vunpack.c.l.b16 %v5533
      %v5614 = vunpack.c.l.b16 %v5534
      %v5615 = vunpack.c.l.b16 %v5535
      %v5616 = vunpack.c.l.b16 %v5536
      %v5617 = vunpack.c.l.b16 %v5537
      %v5618 = vunpack.c.l.b16 %v5538
      %v5619 = vunpack.c.l.b16 %v5539
      %v5620 = vunpack.c.l.b16 %v5540
      %v5621 = vunpack.c.l.b16 %v5541
      %v5622 = vunpack.c.l.b16 %v5542
      %v5623 = vunpack.c.l.b16 %v5543
      %v5624 = vunpack.c.l.b16 %v5544
      %v5625 = vunpack.c.l.b16 %v5545
      %v5626 = vunpack.c.l.b16 %v5546
      %v5627 = vpack.c.b16 %v5612, %v5611
      %v5628 = vpack.c.b16 %v5614, %v5613
      %v5629 = vpack.c.b16 %v5616, %v5615
      %v5630 = vpack.c.b16 %v5618, %v5617
      %v5631 = vpack.c.b16 %v5620, %v5619
      %v5632 = vpack.c.b16 %v5622, %v5621
      %v5633 = vpack.c.b16 %v5624, %v5623
      %v5634 = vpack.c.b16 %v5626, %v5625
      %5643 = vmatpush.bf16.msra.mxu0 %v5634
      %5644 = vmatpush.bf16.msra.mxu0 %v5633
      %5645 = vmatpush.bf16.msra.mxu0 %v5632
      %5646 = vmatpush.bf16.msra.mxu0 %v5631
      %5647 = vmatpush.bf16.msra.mxu0 %v5630
      %5648 = vmatpush.bf16.msra.mxu0 %v5629
      %5649 = vmatpush.bf16.msra.mxu0 %v5628
      %5650 = vmatpush.bf16.msra.mxu0 %v5627
      %5651 = vmatmul.bf16.gmra.mxu0 %v5571
      %v5652 = vpop.f32.mrf.mxu0
      %v5653 = vadd.f32 0.0, %v5652
      %v5654 = vpop.f32.mrf.mxu0
      %v5655 = vadd.f32 0.0, %v5654
      %5656 = vmatmul.bf16.gmra.mxu0 %v5572
      %v5657 = vpop.f32.mrf.mxu0
      %v5658 = vadd.f32 0.0, %v5657
      %v5659 = vpop.f32.mrf.mxu0
      %v5660 = vadd.f32 0.0, %v5659
      %5661 = vmatmul.bf16.gmra.mxu0 %v5573
      %v5662 = vpop.f32.mrf.mxu0
      %v5663 = vadd.f32 0.0, %v5662
      %v5664 = vpop.f32.mrf.mxu0
      %v5665 = vadd.f32 0.0, %v5664
      %5666 = vmatmul.bf16.gmra.mxu0 %v5574
      %v5667 = vpop.f32.mrf.mxu0
      %v5668 = vadd.f32 0.0, %v5667
      %v5669 = vpop.f32.mrf.mxu0
      %v5670 = vadd.f32 0.0, %v5669
      %5671 = vmatmul.bf16.gmra.mxu0 %v5575
      %v5672 = vpop.f32.mrf.mxu0
      %v5673 = vadd.f32 0.0, %v5672
      %v5674 = vpop.f32.mrf.mxu0
      %v5675 = vadd.f32 0.0, %v5674
      %5676 = vmatmul.bf16.gmra.mxu0 %v5576
      %v5677 = vpop.f32.mrf.mxu0
      %v5678 = vadd.f32 0.0, %v5677
      %v5679 = vpop.f32.mrf.mxu0
      %v5680 = vadd.f32 0.0, %v5679
      %5681 = vmatmul.bf16.gmra.mxu0 %v5577
      %v5682 = vpop.f32.mrf.mxu0
      %v5683 = vadd.f32 0.0, %v5682
      %v5684 = vpop.f32.mrf.mxu0
      %v5685 = vadd.f32 0.0, %v5684
      %5686 = vmatmul.bf16.gmra.mxu0 %v5578
      %v5687 = vpop.f32.mrf.mxu0
      %v5688 = vadd.f32 0.0, %v5687
      %v5689 = vpop.f32.mrf.mxu0
      %v5690 = vadd.f32 0.0, %v5689
      %5691 = vmatmul.bf16.gmra.mxu0 %v5579
      %v5692 = vpop.f32.mrf.mxu0
      %v5693 = vadd.f32 0.0, %v5692
      %v5694 = vpop.f32.mrf.mxu0
      %v5695 = vadd.f32 0.0, %v5694
      %5696 = vmatmul.bf16.gmra.mxu0 %v5580
      %v5697 = vpop.f32.mrf.mxu0
      %v5698 = vadd.f32 0.0, %v5697
      %v5699 = vpop.f32.mrf.mxu0
      %v5700 = vadd.f32 0.0, %v5699
      %5701 = vmatmul.bf16.gmra.mxu0 %v5581
      %v5702 = vpop.f32.mrf.mxu0
      %v5703 = vadd.f32 0.0, %v5702
      %v5704 = vpop.f32.mrf.mxu0
      %v5705 = vadd.f32 0.0, %v5704
      %5706 = vmatmul.bf16.gmra.mxu0 %v5582
      %v5707 = vpop.f32.mrf.mxu0
      %v5708 = vadd.f32 0.0, %v5707
      %v5709 = vpop.f32.mrf.mxu0
      %v5710 = vadd.f32 0.0, %v5709
      %5711 = vdwg.mxu0
      %v5712 = vadd.f32 %v5387, %v5653
      %v5713 = vadd.f32 %v5388, %v5655
      %v5714 = vadd.f32 %v5389, %v5658
      %v5715 = vadd.f32 %v5390, %v5660
      %v5716 = vadd.f32 %v5391, %v5663
      %v5717 = vadd.f32 %v5392, %v5665
      %v5718 = vadd.f32 %v5393, %v5668
      %v5719 = vadd.f32 %v5394, %v5670
      %v5720 = vadd.f32 %v5395, %v5673
      %v5721 = vadd.f32 %v5396, %v5675
      %v5722 = vadd.f32 %v5397, %v5678
      %v5723 = vadd.f32 %v5398, %v5680
      %v5724 = vadd.f32 %v5399, %v5683
      %v5725 = vadd.f32 %v5400, %v5685
      %v5726 = vadd.f32 %v5401, %v5688
      %v5727 = vadd.f32 %v5402, %v5690
      %v5728 = vadd.f32 %v5403, %v5693
      %v5729 = vadd.f32 %v5404, %v5695
      %v5730 = vadd.f32 %v5405, %v5698
      %v5731 = vadd.f32 %v5406, %v5700
      %v5732 = vadd.f32 %v5407, %v5703
      %v5733 = vadd.f32 %v5408, %v5705
      %v5734 = vadd.f32 %v5409, %v5708
      %v5735 = vadd.f32 %v5410, %v5710
      %s5736 = sadd.s32 8, 2
      %s5737 = smul.u32 %s5736, 4
      %s5738 = smul.addr %s5737, 4
      %s5739 = scalar_lea.vmem %s273, %s5738
      %v5740 = vld [vmem:[%s5739] sm:$0xf]
      %v5741 = vld [vmem:[%s5739 + $0x4] sm:$0xf]
      %v5742 = vld [vmem:[%s5739 + $0x8] sm:$0xf]
      %v5743 = vld [vmem:[%s5739 + $0x10] sm:$0xf]
      %v5744 = vld [vmem:[%s5739 + $0x14] sm:$0xf]
      %v5745 = vld [vmem:[%s5739 + $0x18] sm:$0xf]
      %v5746 = vld [vmem:[%s5739 + $0x20] sm:$0xf]
      %v5747 = vld [vmem:[%s5739 + $0x24] sm:$0xf]
      %v5748 = vld [vmem:[%s5739 + $0x28] sm:$0xf]
      %v5749 = vld [vmem:[%s5739 + $0x30] sm:$0xf]
      %v5750 = vld [vmem:[%s5739 + $0x34] sm:$0xf]
      %v5751 = vld [vmem:[%s5739 + $0x38] sm:$0xf]
      %v5752 = vld [vmem:[%s5739 + $0x40] sm:$0xf]
      %v5753 = vld [vmem:[%s5739 + $0x44] sm:$0xf]
      %v5754 = vld [vmem:[%s5739 + $0x48] sm:$0xf]
      %v5755 = vld [vmem:[%s5739 + $0x50] sm:$0xf]
      %v5756 = vld [vmem:[%s5739 + $0x54] sm:$0xf]
      %v5757 = vld [vmem:[%s5739 + $0x58] sm:$0xf]
      %v5758 = vld [vmem:[%s5739 + $0x60] sm:$0xf]
      %v5759 = vld [vmem:[%s5739 + $0x64] sm:$0xf]
      %v5760 = vld [vmem:[%s5739 + $0x68] sm:$0xf]
      %v5761 = vld [vmem:[%s5739 + $0x70] sm:$0xf]
      %v5762 = vld [vmem:[%s5739 + $0x74] sm:$0xf]
      %v5763 = vld [vmem:[%s5739 + $0x78] sm:$0xf]
      %v5764 = vld [vmem:[%s2454] sm:$0xf]
      %v5765 = vld [vmem:[%s2454 + $0x4] sm:$0xf]
      %v5766 = vld [vmem:[%s2454 + $0x8] sm:$0xf]
      %v5767 = vld [vmem:[%s2454 + $0xc] sm:$0xf]
      %v5768 = vld [vmem:[%s2454 + $0x10] sm:$0xf]
      %v5769 = vld [vmem:[%s2454 + $0x14] sm:$0xf]
      %v5770 = vld [vmem:[%s2454 + $0x18] sm:$0xf]
      %v5771 = vld [vmem:[%s2454 + $0x1c] sm:$0xf]
      %v5772 = vld [vmem:[%s2454 + $0x20] sm:$0xf]
      %v5773 = vld [vmem:[%s2454 + $0x24] sm:$0xf]
      %v5774 = vld [vmem:[%s2454 + $0x28] sm:$0xf]
      %v5775 = vld [vmem:[%s2454 + $0x2c] sm:$0xf]
      %v5776 = vld [vmem:[%s2454 + $0x30] sm:$0xf]
      %v5777 = vld [vmem:[%s2454 + $0x34] sm:$0xf]
      %v5778 = vld [vmem:[%s2454 + $0x38] sm:$0xf]
      %v5779 = vld [vmem:[%s2454 + $0x3c] sm:$0xf]
      %v5804 = vunpack.c.l.b16 %v5740
      %v5805 = vunpack.c.l.b16 %v5741
      %v5806 = vunpack.c.l.b16 %v5742
      %v5807 = vunpack.c.l.b16 %v5743
      %v5808 = vunpack.c.l.b16 %v5744
      %v5809 = vunpack.c.l.b16 %v5745
      %v5810 = vunpack.c.l.b16 %v5746
      %v5811 = vunpack.c.l.b16 %v5747
      %v5812 = vunpack.c.l.b16 %v5748
      %v5813 = vunpack.c.l.b16 %v5749
      %v5814 = vunpack.c.l.b16 %v5750
      %v5815 = vunpack.c.l.b16 %v5751
      %v5816 = vunpack.c.l.b16 %v5752
      %v5817 = vunpack.c.l.b16 %v5753
      %v5818 = vunpack.c.l.b16 %v5754
      %v5819 = vunpack.c.l.b16 %v5755
      %v5820 = vunpack.c.l.b16 %v5756
      %v5821 = vunpack.c.l.b16 %v5757
      %v5822 = vunpack.c.l.b16 %v5758
      %v5823 = vunpack.c.l.b16 %v5759
      %v5824 = vunpack.c.l.b16 %v5760
      %v5825 = vunpack.c.l.b16 %v5761
      %v5826 = vunpack.c.l.b16 %v5762
      %v5827 = vunpack.c.l.b16 %v5763
      %v5828 = vpack.c.b16 %v5805, %v5804
      %v5829 = vpack.c.b16 %v5807, %v5806
      %v5830 = vpack.c.b16 %v5809, %v5808
      %v5831 = vpack.c.b16 %v5811, %v5810
      %v5832 = vpack.c.b16 %v5813, %v5812
      %v5833 = vpack.c.b16 %v5815, %v5814
      %v5834 = vpack.c.b16 %v5817, %v5816
      %v5835 = vpack.c.b16 %v5819, %v5818
      %v5836 = vpack.c.b16 %v5821, %v5820
      %v5837 = vpack.c.b16 %v5823, %v5822
      %v5838 = vpack.c.b16 %v5825, %v5824
      %v5839 = vpack.c.b16 %v5827, %v5826
      %v5868 = vunpack.c.l.b16 %v5764
      %v5869 = vunpack.c.l.b16 %v5765
      %v5870 = vunpack.c.l.b16 %v5766
      %v5871 = vunpack.c.l.b16 %v5767
      %v5872 = vunpack.c.l.b16 %v5768
      %v5873 = vunpack.c.l.b16 %v5769
      %v5874 = vunpack.c.l.b16 %v5770
      %v5875 = vunpack.c.l.b16 %v5771
      %v5876 = vunpack.c.l.b16 %v5772
      %v5877 = vunpack.c.l.b16 %v5773
      %v5878 = vunpack.c.l.b16 %v5774
      %v5879 = vunpack.c.l.b16 %v5775
      %v5880 = vunpack.c.l.b16 %v5776
      %v5881 = vunpack.c.l.b16 %v5777
      %v5882 = vunpack.c.l.b16 %v5778
      %v5883 = vunpack.c.l.b16 %v5779
      %v5884 = vpack.c.b16 %v5869, %v5868
      %v5885 = vpack.c.b16 %v5871, %v5870
      %v5886 = vpack.c.b16 %v5873, %v5872
      %v5887 = vpack.c.b16 %v5875, %v5874
      %v5888 = vpack.c.b16 %v5877, %v5876
      %v5889 = vpack.c.b16 %v5879, %v5878
      %v5890 = vpack.c.b16 %v5881, %v5880
      %v5891 = vpack.c.b16 %v5883, %v5882
      %5900 = vmatpush.bf16.msra.mxu0 %v5891
      %5901 = vmatpush.bf16.msra.mxu0 %v5890
      %5902 = vmatpush.bf16.msra.mxu0 %v5889
      %5903 = vmatpush.bf16.msra.mxu0 %v5888
      %5904 = vmatpush.bf16.msra.mxu0 %v5887
      %5905 = vmatpush.bf16.msra.mxu0 %v5886
      %5906 = vmatpush.bf16.msra.mxu0 %v5885
      %5907 = vmatpush.bf16.msra.mxu0 %v5884
      %5908 = vmatmul.bf16.gmra.mxu0 %v5828
      %v5909 = vpop.f32.mrf.mxu0
      %v5910 = vadd.f32 0.0, %v5909
      %v5911 = vpop.f32.mrf.mxu0
      %v5912 = vadd.f32 0.0, %v5911
      %5913 = vmatmul.bf16.gmra.mxu0 %v5829
      %v5914 = vpop.f32.mrf.mxu0
      %v5915 = vadd.f32 0.0, %v5914
      %v5916 = vpop.f32.mrf.mxu0
      %v5917 = vadd.f32 0.0, %v5916
      %5918 = vmatmul.bf16.gmra.mxu0 %v5830
      %v5919 = vpop.f32.mrf.mxu0
      %v5920 = vadd.f32 0.0, %v5919
      %v5921 = vpop.f32.mrf.mxu0
      %v5922 = vadd.f32 0.0, %v5921
      %5923 = vmatmul.bf16.gmra.mxu0 %v5831
      %v5924 = vpop.f32.mrf.mxu0
      %v5925 = vadd.f32 0.0, %v5924
      %v5926 = vpop.f32.mrf.mxu0
      %v5927 = vadd.f32 0.0, %v5926
      %5928 = vmatmul.bf16.gmra.mxu0 %v5832
      %v5929 = vpop.f32.mrf.mxu0
      %v5930 = vadd.f32 0.0, %v5929
      %v5931 = vpop.f32.mrf.mxu0
      %v5932 = vadd.f32 0.0, %v5931
      %5933 = vmatmul.bf16.gmra.mxu0 %v5833
      %v5934 = vpop.f32.mrf.mxu0
      %v5935 = vadd.f32 0.0, %v5934
      %v5936 = vpop.f32.mrf.mxu0
      %v5937 = vadd.f32 0.0, %v5936
      %5938 = vmatmul.bf16.gmra.mxu0 %v5834
      %v5939 = vpop.f32.mrf.mxu0
      %v5940 = vadd.f32 0.0, %v5939
      %v5941 = vpop.f32.mrf.mxu0
      %v5942 = vadd.f32 0.0, %v5941
      %5943 = vmatmul.bf16.gmra.mxu0 %v5835
      %v5944 = vpop.f32.mrf.mxu0
      %v5945 = vadd.f32 0.0, %v5944
      %v5946 = vpop.f32.mrf.mxu0
      %v5947 = vadd.f32 0.0, %v5946
      %5948 = vmatmul.bf16.gmra.mxu0 %v5836
      %v5949 = vpop.f32.mrf.mxu0
      %v5950 = vadd.f32 0.0, %v5949
      %v5951 = vpop.f32.mrf.mxu0
      %v5952 = vadd.f32 0.0, %v5951
      %5953 = vmatmul.bf16.gmra.mxu0 %v5837
      %v5954 = vpop.f32.mrf.mxu0
      %v5955 = vadd.f32 0.0, %v5954
      %v5956 = vpop.f32.mrf.mxu0
      %v5957 = vadd.f32 0.0, %v5956
      %5958 = vmatmul.bf16.gmra.mxu0 %v5838
      %v5959 = vpop.f32.mrf.mxu0
      %v5960 = vadd.f32 0.0, %v5959
      %v5961 = vpop.f32.mrf.mxu0
      %v5962 = vadd.f32 0.0, %v5961
      %5963 = vmatmul.bf16.gmra.mxu0 %v5839
      %v5964 = vpop.f32.mrf.mxu0
      %v5965 = vadd.f32 0.0, %v5964
      %v5966 = vpop.f32.mrf.mxu0
      %v5967 = vadd.f32 0.0, %v5966
      %5968 = vdwg.mxu0
      %v5969 = vadd.f32 %v5712, %v5910
      %v5970 = vadd.f32 %v5713, %v5912
      %v5971 = vadd.f32 %v5714, %v5915
      %v5972 = vadd.f32 %v5715, %v5917
      %v5973 = vadd.f32 %v5716, %v5920
      %v5974 = vadd.f32 %v5717, %v5922
      %v5975 = vadd.f32 %v5718, %v5925
      %v5976 = vadd.f32 %v5719, %v5927
      %v5977 = vadd.f32 %v5720, %v5930
      %v5978 = vadd.f32 %v5721, %v5932
      %v5979 = vadd.f32 %v5722, %v5935
      %v5980 = vadd.f32 %v5723, %v5937
      %v5981 = vadd.f32 %v5724, %v5940
      %v5982 = vadd.f32 %v5725, %v5942
      %v5983 = vadd.f32 %v5726, %v5945
      %v5984 = vadd.f32 %v5727, %v5947
      %v5985 = vadd.f32 %v5728, %v5950
      %v5986 = vadd.f32 %v5729, %v5952
      %v5987 = vadd.f32 %v5730, %v5955
      %v5988 = vadd.f32 %v5731, %v5957
      %v5989 = vadd.f32 %v5732, %v5960
      %v5990 = vadd.f32 %v5733, %v5962
      %v5991 = vadd.f32 %v5734, %v5965
      %v5992 = vadd.f32 %v5735, %v5967
      %v5993 = vld [vmem:[%s5739] sm:$0xf]
      %v5994 = vld [vmem:[%s5739 + $0x4] sm:$0xf]
      %v5995 = vld [vmem:[%s5739 + $0x8] sm:$0xf]
      %v5996 = vld [vmem:[%s5739 + $0xc] sm:$0x1]
      %v5997 = vld [vmem:[%s5739 + $0x10] sm:$0xf]
      %v5998 = vld [vmem:[%s5739 + $0x14] sm:$0xf]
      %v5999 = vld [vmem:[%s5739 + $0x18] sm:$0xf]
      %v6000 = vld [vmem:[%s5739 + $0x1c] sm:$0x1]
      %v6001 = vld [vmem:[%s5739 + $0x20] sm:$0xf]
      %v6002 = vld [vmem:[%s5739 + $0x24] sm:$0xf]
      %v6003 = vld [vmem:[%s5739 + $0x28] sm:$0xf]
      %v6004 = vld [vmem:[%s5739 + $0x2c] sm:$0x1]
      %v6005 = vld [vmem:[%s5739 + $0x30] sm:$0xf]
      %v6006 = vld [vmem:[%s5739 + $0x34] sm:$0xf]
      %v6007 = vld [vmem:[%s5739 + $0x38] sm:$0xf]
      %v6008 = vld [vmem:[%s5739 + $0x3c] sm:$0x1]
      %v6009 = vld [vmem:[%s5739 + $0x40] sm:$0xf]
      %v6010 = vld [vmem:[%s5739 + $0x44] sm:$0xf]
      %v6011 = vld [vmem:[%s5739 + $0x48] sm:$0xf]
      %v6012 = vld [vmem:[%s5739 + $0x4c] sm:$0x1]
      %v6013 = vld [vmem:[%s5739 + $0x50] sm:$0xf]
      %v6014 = vld [vmem:[%s5739 + $0x54] sm:$0xf]
      %v6015 = vld [vmem:[%s5739 + $0x58] sm:$0xf]
      %v6016 = vld [vmem:[%s5739 + $0x5c] sm:$0x1]
      %v6017 = vld [vmem:[%s5739 + $0x60] sm:$0xf]
      %v6018 = vld [vmem:[%s5739 + $0x64] sm:$0xf]
      %v6019 = vld [vmem:[%s5739 + $0x68] sm:$0xf]
      %v6020 = vld [vmem:[%s5739 + $0x6c] sm:$0x1]
      %v6021 = vld [vmem:[%s5739 + $0x70] sm:$0xf]
      %v6022 = vld [vmem:[%s5739 + $0x74] sm:$0xf]
      %v6023 = vld [vmem:[%s5739 + $0x78] sm:$0xf]
      %v6024 = vld [vmem:[%s5739 + $0x7c] sm:$0x1]
      %v6026 = vshrl.u32 %v5993, 16
      %v6028 = vrot.slane %v6026, 4
      %v6029 = vshll.u32 %v5993, 16
      %v6031 = vrot.slane %v6029, 5
      %v6032 = vor.u32 %v6028, %v6031
      %v6033 = vrot.slane %v6032, 4
      %v6035 = vshll.u32 %v5994, 16
      %v6037 = vrot.slane %v6035, 5
      %v6038 = vsel %vm375, %v6033, %v6037
      %v6039 = vshrl.u32 %v5994, 16
      %v6041 = vrot.slane %v6039, 4
      %v6042 = vor.u32 %v6041, %v6037
      %v6043 = vrot.slane %v6042, 4
      %v6045 = vshll.u32 %v5995, 16
      %v6047 = vrot.slane %v6045, 5
      %v6048 = vsel %vm375, %v6043, %v6047
      %v6049 = vshrl.u32 %v5995, 16
      %v6051 = vrot.slane %v6049, 4
      %v6052 = vor.u32 %v6051, %v6047
      %v6053 = vrot.slane %v6052, 4
      %v6055 = vshll.u32 %v5996, 16
      %v6057 = vrot.slane %v6055, 5
      %v6058 = vsel %vm375, %v6053, %v6057
      %v6060 = vshrl.u32 %v5997, 16
      %v6062 = vrot.slane %v6060, 4
      %v6063 = vshll.u32 %v5997, 16
      %v6065 = vrot.slane %v6063, 5
      %v6066 = vor.u32 %v6062, %v6065
      %v6067 = vrot.slane %v6066, 4
      %v6069 = vshll.u32 %v5998, 16
      %v6071 = vrot.slane %v6069, 5
      %v6072 = vsel %vm375, %v6067, %v6071
      %v6073 = vshrl.u32 %v5998, 16
      %v6075 = vrot.slane %v6073, 4
      %v6076 = vor.u32 %v6075, %v6071
      %v6077 = vrot.slane %v6076, 4
      %v6079 = vshll.u32 %v5999, 16
      %v6081 = vrot.slane %v6079, 5
      %v6082 = vsel %vm375, %v6077, %v6081
      %v6083 = vshrl.u32 %v5999, 16
      %v6085 = vrot.slane %v6083, 4
      %v6086 = vor.u32 %v6085, %v6081
      %v6087 = vrot.slane %v6086, 4
      %v6089 = vshll.u32 %v6000, 16
      %v6091 = vrot.slane %v6089, 5
      %v6092 = vsel %vm375, %v6087, %v6091
      %v6094 = vshrl.u32 %v6001, 16
      %v6096 = vrot.slane %v6094, 4
      %v6097 = vshll.u32 %v6001, 16
      %v6099 = vrot.slane %v6097, 5
      %v6100 = vor.u32 %v6096, %v6099
      %v6101 = vrot.slane %v6100, 4
      %v6103 = vshll.u32 %v6002, 16
      %v6105 = vrot.slane %v6103, 5
      %v6106 = vsel %vm375, %v6101, %v6105
      %v6107 = vshrl.u32 %v6002, 16
      %v6109 = vrot.slane %v6107, 4
      %v6110 = vor.u32 %v6109, %v6105
      %v6111 = vrot.slane %v6110, 4
      %v6113 = vshll.u32 %v6003, 16
      %v6115 = vrot.slane %v6113, 5
      %v6116 = vsel %vm375, %v6111, %v6115
      %v6117 = vshrl.u32 %v6003, 16
      %v6119 = vrot.slane %v6117, 4
      %v6120 = vor.u32 %v6119, %v6115
      %v6121 = vrot.slane %v6120, 4
      %v6123 = vshll.u32 %v6004, 16
      %v6125 = vrot.slane %v6123, 5
      %v6126 = vsel %vm375, %v6121, %v6125
      %v6128 = vshrl.u32 %v6005, 16
      %v6130 = vrot.slane %v6128, 4
      %v6131 = vshll.u32 %v6005, 16
      %v6133 = vrot.slane %v6131, 5
      %v6134 = vor.u32 %v6130, %v6133
      %v6135 = vrot.slane %v6134, 4
      %v6137 = vshll.u32 %v6006, 16
      %v6139 = vrot.slane %v6137, 5
      %v6140 = vsel %vm375, %v6135, %v6139
      %v6141 = vshrl.u32 %v6006, 16
      %v6143 = vrot.slane %v6141, 4
      %v6144 = vor.u32 %v6143, %v6139
      %v6145 = vrot.slane %v6144, 4
      %v6147 = vshll.u32 %v6007, 16
      %v6149 = vrot.slane %v6147, 5
      %v6150 = vsel %vm375, %v6145, %v6149
      %v6151 = vshrl.u32 %v6007, 16
      %v6153 = vrot.slane %v6151, 4
      %v6154 = vor.u32 %v6153, %v6149
      %v6155 = vrot.slane %v6154, 4
      %v6157 = vshll.u32 %v6008, 16
      %v6159 = vrot.slane %v6157, 5
      %v6160 = vsel %vm375, %v6155, %v6159
      %v6162 = vshrl.u32 %v6009, 16
      %v6164 = vrot.slane %v6162, 4
      %v6165 = vshll.u32 %v6009, 16
      %v6167 = vrot.slane %v6165, 5
      %v6168 = vor.u32 %v6164, %v6167
      %v6169 = vrot.slane %v6168, 4
      %v6171 = vshll.u32 %v6010, 16
      %v6173 = vrot.slane %v6171, 5
      %v6174 = vsel %vm375, %v6169, %v6173
      %v6175 = vshrl.u32 %v6010, 16
      %v6177 = vrot.slane %v6175, 4
      %v6178 = vor.u32 %v6177, %v6173
      %v6179 = vrot.slane %v6178, 4
      %v6181 = vshll.u32 %v6011, 16
      %v6183 = vrot.slane %v6181, 5
      %v6184 = vsel %vm375, %v6179, %v6183
      %v6185 = vshrl.u32 %v6011, 16
      %v6187 = vrot.slane %v6185, 4
      %v6188 = vor.u32 %v6187, %v6183
      %v6189 = vrot.slane %v6188, 4
      %v6191 = vshll.u32 %v6012, 16
      %v6193 = vrot.slane %v6191, 5
      %v6194 = vsel %vm375, %v6189, %v6193
      %v6196 = vshrl.u32 %v6013, 16
      %v6198 = vrot.slane %v6196, 4
      %v6199 = vshll.u32 %v6013, 16
      %v6201 = vrot.slane %v6199, 5
      %v6202 = vor.u32 %v6198, %v6201
      %v6203 = vrot.slane %v6202, 4
      %v6205 = vshll.u32 %v6014, 16
      %v6207 = vrot.slane %v6205, 5
      %v6208 = vsel %vm375, %v6203, %v6207
      %v6209 = vshrl.u32 %v6014, 16
      %v6211 = vrot.slane %v6209, 4
      %v6212 = vor.u32 %v6211, %v6207
      %v6213 = vrot.slane %v6212, 4
      %v6215 = vshll.u32 %v6015, 16
      %v6217 = vrot.slane %v6215, 5
      %v6218 = vsel %vm375, %v6213, %v6217
      %v6219 = vshrl.u32 %v6015, 16
      %v6221 = vrot.slane %v6219, 4
      %v6222 = vor.u32 %v6221, %v6217
      %v6223 = vrot.slane %v6222, 4
      %v6225 = vshll.u32 %v6016, 16
      %v6227 = vrot.slane %v6225, 5
      %v6228 = vsel %vm375, %v6223, %v6227
      %v6230 = vshrl.u32 %v6017, 16
      %v6232 = vrot.slane %v6230, 4
      %v6233 = vshll.u32 %v6017, 16
      %v6235 = vrot.slane %v6233, 5
      %v6236 = vor.u32 %v6232, %v6235
      %v6237 = vrot.slane %v6236, 4
      %v6239 = vshll.u32 %v6018, 16
      %v6241 = vrot.slane %v6239, 5
      %v6242 = vsel %vm375, %v6237, %v6241
      %v6243 = vshrl.u32 %v6018, 16
      %v6245 = vrot.slane %v6243, 4
      %v6246 = vor.u32 %v6245, %v6241
      %v6247 = vrot.slane %v6246, 4
      %v6249 = vshll.u32 %v6019, 16
      %v6251 = vrot.slane %v6249, 5
      %v6252 = vsel %vm375, %v6247, %v6251
      %v6253 = vshrl.u32 %v6019, 16
      %v6255 = vrot.slane %v6253, 4
      %v6256 = vor.u32 %v6255, %v6251
      %v6257 = vrot.slane %v6256, 4
      %v6259 = vshll.u32 %v6020, 16
      %v6261 = vrot.slane %v6259, 5
      %v6262 = vsel %vm375, %v6257, %v6261
      %v6264 = vshrl.u32 %v6021, 16
      %v6266 = vrot.slane %v6264, 4
      %v6267 = vshll.u32 %v6021, 16
      %v6269 = vrot.slane %v6267, 5
      %v6270 = vor.u32 %v6266, %v6269
      %v6271 = vrot.slane %v6270, 4
      %v6273 = vshll.u32 %v6022, 16
      %v6275 = vrot.slane %v6273, 5
      %v6276 = vsel %vm375, %v6271, %v6275
      %v6277 = vshrl.u32 %v6022, 16
      %v6279 = vrot.slane %v6277, 4
      %v6280 = vor.u32 %v6279, %v6275
      %v6281 = vrot.slane %v6280, 4
      %v6283 = vshll.u32 %v6023, 16
      %v6285 = vrot.slane %v6283, 5
      %v6286 = vsel %vm375, %v6281, %v6285
      %v6287 = vshrl.u32 %v6023, 16
      %v6289 = vrot.slane %v6287, 4
      %v6290 = vor.u32 %v6289, %v6285
      %v6291 = vrot.slane %v6290, 4
      %v6293 = vshll.u32 %v6024, 16
      %v6295 = vrot.slane %v6293, 5
      %v6296 = vsel %vm375, %v6291, %v6295
      %v6297 = vld [vmem:[%s2988] sm:$0xf]
      %v6298 = vld [vmem:[%s2988 + $0x4] sm:$0xf]
      %v6299 = vld [vmem:[%s2988 + $0x8] sm:$0xf]
      %v6300 = vld [vmem:[%s2988 + $0xc] sm:$0xf]
      %v6301 = vld [vmem:[%s2988 + $0x10] sm:$0xf]
      %v6302 = vld [vmem:[%s2988 + $0x14] sm:$0xf]
      %v6303 = vld [vmem:[%s2988 + $0x18] sm:$0xf]
      %v6304 = vld [vmem:[%s2988 + $0x1c] sm:$0xf]
      %v6305 = vld [vmem:[%s2988 + $0x20] sm:$0xf]
      %v6306 = vld [vmem:[%s2988 + $0x24] sm:$0xf]
      %v6307 = vld [vmem:[%s2988 + $0x28] sm:$0xf]
      %v6308 = vld [vmem:[%s2988 + $0x2c] sm:$0xf]
      %v6309 = vld [vmem:[%s2988 + $0x30] sm:$0xf]
      %v6310 = vld [vmem:[%s2988 + $0x34] sm:$0xf]
      %v6311 = vld [vmem:[%s2988 + $0x38] sm:$0xf]
      %v6312 = vld [vmem:[%s2988 + $0x3c] sm:$0xf]
      %v6313 = vunpack.c.l.b16 %v6038
      %v6314 = vunpack.c.l.b16 %v6048
      %v6315 = vunpack.c.l.b16 %v6058
      %v6316 = vunpack.c.l.b16 %v6072
      %v6317 = vunpack.c.l.b16 %v6082
      %v6318 = vunpack.c.l.b16 %v6092
      %v6319 = vunpack.c.l.b16 %v6106
      %v6320 = vunpack.c.l.b16 %v6116
      %v6321 = vunpack.c.l.b16 %v6126
      %v6322 = vunpack.c.l.b16 %v6140
      %v6323 = vunpack.c.l.b16 %v6150
      %v6324 = vunpack.c.l.b16 %v6160
      %v6325 = vunpack.c.l.b16 %v6174
      %v6326 = vunpack.c.l.b16 %v6184
      %v6327 = vunpack.c.l.b16 %v6194
      %v6328 = vunpack.c.l.b16 %v6208
      %v6329 = vunpack.c.l.b16 %v6218
      %v6330 = vunpack.c.l.b16 %v6228
      %v6331 = vunpack.c.l.b16 %v6242
      %v6332 = vunpack.c.l.b16 %v6252
      %v6333 = vunpack.c.l.b16 %v6262
      %v6334 = vunpack.c.l.b16 %v6276
      %v6335 = vunpack.c.l.b16 %v6286
      %v6336 = vunpack.c.l.b16 %v6296
      %v6337 = vpack.c.b16 %v6314, %v6313
      %v6338 = vpack.c.b16 %v6316, %v6315
      %v6339 = vpack.c.b16 %v6318, %v6317
      %v6340 = vpack.c.b16 %v6320, %v6319
      %v6341 = vpack.c.b16 %v6322, %v6321
      %v6342 = vpack.c.b16 %v6324, %v6323
      %v6343 = vpack.c.b16 %v6326, %v6325
      %v6344 = vpack.c.b16 %v6328, %v6327
      %v6345 = vpack.c.b16 %v6330, %v6329
      %v6346 = vpack.c.b16 %v6332, %v6331
      %v6347 = vpack.c.b16 %v6334, %v6333
      %v6348 = vpack.c.b16 %v6336, %v6335
      %v6377 = vunpack.c.l.b16 %v6297
      %v6378 = vunpack.c.l.b16 %v6298
      %v6379 = vunpack.c.l.b16 %v6299
      %v6380 = vunpack.c.l.b16 %v6300
      %v6381 = vunpack.c.l.b16 %v6301
      %v6382 = vunpack.c.l.b16 %v6302
      %v6383 = vunpack.c.l.b16 %v6303
      %v6384 = vunpack.c.l.b16 %v6304
      %v6385 = vunpack.c.l.b16 %v6305
      %v6386 = vunpack.c.l.b16 %v6306
      %v6387 = vunpack.c.l.b16 %v6307
      %v6388 = vunpack.c.l.b16 %v6308
      %v6389 = vunpack.c.l.b16 %v6309
      %v6390 = vunpack.c.l.b16 %v6310
      %v6391 = vunpack.c.l.b16 %v6311
      %v6392 = vunpack.c.l.b16 %v6312
      %v6393 = vpack.c.b16 %v6378, %v6377
      %v6394 = vpack.c.b16 %v6380, %v6379
      %v6395 = vpack.c.b16 %v6382, %v6381
      %v6396 = vpack.c.b16 %v6384, %v6383
      %v6397 = vpack.c.b16 %v6386, %v6385
      %v6398 = vpack.c.b16 %v6388, %v6387
      %v6399 = vpack.c.b16 %v6390, %v6389
      %v6400 = vpack.c.b16 %v6392, %v6391
      %6409 = vmatpush.bf16.msra.mxu0 %v6400
      %6410 = vmatpush.bf16.msra.mxu0 %v6399
      %6411 = vmatpush.bf16.msra.mxu0 %v6398
      %6412 = vmatpush.bf16.msra.mxu0 %v6397
      %6413 = vmatpush.bf16.msra.mxu0 %v6396
      %6414 = vmatpush.bf16.msra.mxu0 %v6395
      %6415 = vmatpush.bf16.msra.mxu0 %v6394
      %6416 = vmatpush.bf16.msra.mxu0 %v6393
      %6417 = vmatmul.bf16.gmra.mxu0 %v6337
      %v6418 = vpop.f32.mrf.mxu0
      %v6419 = vadd.f32 0.0, %v6418
      %v6420 = vpop.f32.mrf.mxu0
      %v6421 = vadd.f32 0.0, %v6420
      %6422 = vmatmul.bf16.gmra.mxu0 %v6338
      %v6423 = vpop.f32.mrf.mxu0
      %v6424 = vadd.f32 0.0, %v6423
      %v6425 = vpop.f32.mrf.mxu0
      %v6426 = vadd.f32 0.0, %v6425
      %6427 = vmatmul.bf16.gmra.mxu0 %v6339
      %v6428 = vpop.f32.mrf.mxu0
      %v6429 = vadd.f32 0.0, %v6428
      %v6430 = vpop.f32.mrf.mxu0
      %v6431 = vadd.f32 0.0, %v6430
      %6432 = vmatmul.bf16.gmra.mxu0 %v6340
      %v6433 = vpop.f32.mrf.mxu0
      %v6434 = vadd.f32 0.0, %v6433
      %v6435 = vpop.f32.mrf.mxu0
      %v6436 = vadd.f32 0.0, %v6435
      %6437 = vmatmul.bf16.gmra.mxu0 %v6341
      %v6438 = vpop.f32.mrf.mxu0
      %v6439 = vadd.f32 0.0, %v6438
      %v6440 = vpop.f32.mrf.mxu0
      %v6441 = vadd.f32 0.0, %v6440
      %6442 = vmatmul.bf16.gmra.mxu0 %v6342
      %v6443 = vpop.f32.mrf.mxu0
      %v6444 = vadd.f32 0.0, %v6443
      %v6445 = vpop.f32.mrf.mxu0
      %v6446 = vadd.f32 0.0, %v6445
      %6447 = vmatmul.bf16.gmra.mxu0 %v6343
      %v6448 = vpop.f32.mrf.mxu0
      %v6449 = vadd.f32 0.0, %v6448
      %v6450 = vpop.f32.mrf.mxu0
      %v6451 = vadd.f32 0.0, %v6450
      %6452 = vmatmul.bf16.gmra.mxu0 %v6344
      %v6453 = vpop.f32.mrf.mxu0
      %v6454 = vadd.f32 0.0, %v6453
      %v6455 = vpop.f32.mrf.mxu0
      %v6456 = vadd.f32 0.0, %v6455
      %6457 = vmatmul.bf16.gmra.mxu0 %v6345
      %v6458 = vpop.f32.mrf.mxu0
      %v6459 = vadd.f32 0.0, %v6458
      %v6460 = vpop.f32.mrf.mxu0
      %v6461 = vadd.f32 0.0, %v6460
      %6462 = vmatmul.bf16.gmra.mxu0 %v6346
      %v6463 = vpop.f32.mrf.mxu0
      %v6464 = vadd.f32 0.0, %v6463
      %v6465 = vpop.f32.mrf.mxu0
      %v6466 = vadd.f32 0.0, %v6465
      %6467 = vmatmul.bf16.gmra.mxu0 %v6347
      %v6468 = vpop.f32.mrf.mxu0
      %v6469 = vadd.f32 0.0, %v6468
      %v6470 = vpop.f32.mrf.mxu0
      %v6471 = vadd.f32 0.0, %v6470
      %6472 = vmatmul.bf16.gmra.mxu0 %v6348
      %v6473 = vpop.f32.mrf.mxu0
      %v6474 = vadd.f32 0.0, %v6473
      %v6475 = vpop.f32.mrf.mxu0
      %v6476 = vadd.f32 0.0, %v6475
      %6477 = vdwg.mxu0
      %v6478 = vadd.f32 %v5969, %v6419
      %v6479 = vadd.f32 %v5970, %v6421
      %v6480 = vadd.f32 %v5971, %v6424
      %v6481 = vadd.f32 %v5972, %v6426
      %v6482 = vadd.f32 %v5973, %v6429
      %v6483 = vadd.f32 %v5974, %v6431
      %v6484 = vadd.f32 %v5975, %v6434
      %v6485 = vadd.f32 %v5976, %v6436
      %v6486 = vadd.f32 %v5977, %v6439
      %v6487 = vadd.f32 %v5978, %v6441
      %v6488 = vadd.f32 %v5979, %v6444
      %v6489 = vadd.f32 %v5980, %v6446
      %v6490 = vadd.f32 %v5981, %v6449
      %v6491 = vadd.f32 %v5982, %v6451
      %v6492 = vadd.f32 %v5983, %v6454
      %v6493 = vadd.f32 %v5984, %v6456
      %v6494 = vadd.f32 %v5985, %v6459
      %v6495 = vadd.f32 %v5986, %v6461
      %v6496 = vadd.f32 %v5987, %v6464
      %v6497 = vadd.f32 %v5988, %v6466
      %v6498 = vadd.f32 %v5989, %v6469
      %v6499 = vadd.f32 %v5990, %v6471
      %v6500 = vadd.f32 %v5991, %v6474
      %v6501 = vadd.f32 %v5992, %v6476
      %v6502 = vld [vmem:[%s5739] sm:$0xe]
      %v6503 = vld [vmem:[%s5739 + $0x10] sm:$0xe]
      %v6504 = vld [vmem:[%s5739 + $0x20] sm:$0xe]
      %v6505 = vld [vmem:[%s5739 + $0x30] sm:$0xe]
      %v6506 = vld [vmem:[%s5739 + $0x40] sm:$0xe]
      %v6507 = vld [vmem:[%s5739 + $0x50] sm:$0xe]
      %v6508 = vld [vmem:[%s5739 + $0x60] sm:$0xe]
      %v6509 = vld [vmem:[%s5739 + $0x70] sm:$0xe]
      %v6542 = vrot.slane %v6502, 5
      %v6543 = vrot.slane %v6542, 4
      %v6544 = vrot.slane %v5994, 5
      %v6545 = vsel %vm1045, %v6543, %v6544
      %v6546 = vrot.slane %v6544, 4
      %v6547 = vrot.slane %v5995, 5
      %v6548 = vsel %vm1045, %v6546, %v6547
      %v6549 = vrot.slane %v6547, 4
      %v6550 = vrot.slane %v5996, 5
      %v6551 = vsel %vm1045, %v6549, %v6550
      %v6552 = vrot.slane %v6503, 5
      %v6553 = vrot.slane %v6552, 4
      %v6554 = vrot.slane %v5998, 5
      %v6555 = vsel %vm1045, %v6553, %v6554
      %v6556 = vrot.slane %v6554, 4
      %v6557 = vrot.slane %v5999, 5
      %v6558 = vsel %vm1045, %v6556, %v6557
      %v6559 = vrot.slane %v6557, 4
      %v6560 = vrot.slane %v6000, 5
      %v6561 = vsel %vm1045, %v6559, %v6560
      %v6562 = vrot.slane %v6504, 5
      %v6563 = vrot.slane %v6562, 4
      %v6564 = vrot.slane %v6002, 5
      %v6565 = vsel %vm1045, %v6563, %v6564
      %v6566 = vrot.slane %v6564, 4
      %v6567 = vrot.slane %v6003, 5
      %v6568 = vsel %vm1045, %v6566, %v6567
      %v6569 = vrot.slane %v6567, 4
      %v6570 = vrot.slane %v6004, 5
      %v6571 = vsel %vm1045, %v6569, %v6570
      %v6572 = vrot.slane %v6505, 5
      %v6573 = vrot.slane %v6572, 4
      %v6574 = vrot.slane %v6006, 5
      %v6575 = vsel %vm1045, %v6573, %v6574
      %v6576 = vrot.slane %v6574, 4
      %v6577 = vrot.slane %v6007, 5
      %v6578 = vsel %vm1045, %v6576, %v6577
      %v6579 = vrot.slane %v6577, 4
      %v6580 = vrot.slane %v6008, 5
      %v6581 = vsel %vm1045, %v6579, %v6580
      %v6582 = vrot.slane %v6506, 5
      %v6583 = vrot.slane %v6582, 4
      %v6584 = vrot.slane %v6010, 5
      %v6585 = vsel %vm1045, %v6583, %v6584
      %v6586 = vrot.slane %v6584, 4
      %v6587 = vrot.slane %v6011, 5
      %v6588 = vsel %vm1045, %v6586, %v6587
      %v6589 = vrot.slane %v6587, 4
      %v6590 = vrot.slane %v6012, 5
      %v6591 = vsel %vm1045, %v6589, %v6590
      %v6592 = vrot.slane %v6507, 5
      %v6593 = vrot.slane %v6592, 4
      %v6594 = vrot.slane %v6014, 5
      %v6595 = vsel %vm1045, %v6593, %v6594
      %v6596 = vrot.slane %v6594, 4
      %v6597 = vrot.slane %v6015, 5
      %v6598 = vsel %vm1045, %v6596, %v6597
      %v6599 = vrot.slane %v6597, 4
      %v6600 = vrot.slane %v6016, 5
      %v6601 = vsel %vm1045, %v6599, %v6600
      %v6602 = vrot.slane %v6508, 5
      %v6603 = vrot.slane %v6602, 4
      %v6604 = vrot.slane %v6018, 5
      %v6605 = vsel %vm1045, %v6603, %v6604
      %v6606 = vrot.slane %v6604, 4
      %v6607 = vrot.slane %v6019, 5
      %v6608 = vsel %vm1045, %v6606, %v6607
      %v6609 = vrot.slane %v6607, 4
      %v6610 = vrot.slane %v6020, 5
      %v6611 = vsel %vm1045, %v6609, %v6610
      %v6612 = vrot.slane %v6509, 5
      %v6613 = vrot.slane %v6612, 4
      %v6614 = vrot.slane %v6022, 5
      %v6615 = vsel %vm1045, %v6613, %v6614
      %v6616 = vrot.slane %v6614, 4
      %v6617 = vrot.slane %v6023, 5
      %v6618 = vsel %vm1045, %v6616, %v6617
      %v6619 = vrot.slane %v6617, 4
      %v6620 = vrot.slane %v6024, 5
      %v6621 = vsel %vm1045, %v6619, %v6620
      %v6622 = vld [vmem:[%s3314] sm:$0xf]
      %v6623 = vld [vmem:[%s3314 + $0x4] sm:$0xf]
      %v6624 = vld [vmem:[%s3314 + $0x8] sm:$0xf]
      %v6625 = vld [vmem:[%s3314 + $0xc] sm:$0xf]
      %v6626 = vld [vmem:[%s3314 + $0x10] sm:$0xf]
      %v6627 = vld [vmem:[%s3314 + $0x14] sm:$0xf]
      %v6628 = vld [vmem:[%s3314 + $0x18] sm:$0xf]
      %v6629 = vld [vmem:[%s3314 + $0x1c] sm:$0xf]
      %v6630 = vld [vmem:[%s3314 + $0x20] sm:$0xf]
      %v6631 = vld [vmem:[%s3314 + $0x24] sm:$0xf]
      %v6632 = vld [vmem:[%s3314 + $0x28] sm:$0xf]
      %v6633 = vld [vmem:[%s3314 + $0x2c] sm:$0xf]
      %v6634 = vld [vmem:[%s3314 + $0x30] sm:$0xf]
      %v6635 = vld [vmem:[%s3314 + $0x34] sm:$0xf]
      %v6636 = vld [vmem:[%s3314 + $0x38] sm:$0xf]
      %v6637 = vld [vmem:[%s3314 + $0x3c] sm:$0xf]
      %v6638 = vunpack.c.l.b16 %v6545
      %v6639 = vunpack.c.l.b16 %v6548
      %v6640 = vunpack.c.l.b16 %v6551
      %v6641 = vunpack.c.l.b16 %v6555
      %v6642 = vunpack.c.l.b16 %v6558
      %v6643 = vunpack.c.l.b16 %v6561
      %v6644 = vunpack.c.l.b16 %v6565
      %v6645 = vunpack.c.l.b16 %v6568
      %v6646 = vunpack.c.l.b16 %v6571
      %v6647 = vunpack.c.l.b16 %v6575
      %v6648 = vunpack.c.l.b16 %v6578
      %v6649 = vunpack.c.l.b16 %v6581
      %v6650 = vunpack.c.l.b16 %v6585
      %v6651 = vunpack.c.l.b16 %v6588
      %v6652 = vunpack.c.l.b16 %v6591
      %v6653 = vunpack.c.l.b16 %v6595
      %v6654 = vunpack.c.l.b16 %v6598
      %v6655 = vunpack.c.l.b16 %v6601
      %v6656 = vunpack.c.l.b16 %v6605
      %v6657 = vunpack.c.l.b16 %v6608
      %v6658 = vunpack.c.l.b16 %v6611
      %v6659 = vunpack.c.l.b16 %v6615
      %v6660 = vunpack.c.l.b16 %v6618
      %v6661 = vunpack.c.l.b16 %v6621
      %v6662 = vpack.c.b16 %v6639, %v6638
      %v6663 = vpack.c.b16 %v6641, %v6640
      %v6664 = vpack.c.b16 %v6643, %v6642
      %v6665 = vpack.c.b16 %v6645, %v6644
      %v6666 = vpack.c.b16 %v6647, %v6646
      %v6667 = vpack.c.b16 %v6649, %v6648
      %v6668 = vpack.c.b16 %v6651, %v6650
      %v6669 = vpack.c.b16 %v6653, %v6652
      %v6670 = vpack.c.b16 %v6655, %v6654
      %v6671 = vpack.c.b16 %v6657, %v6656
      %v6672 = vpack.c.b16 %v6659, %v6658
      %v6673 = vpack.c.b16 %v6661, %v6660
      %v6702 = vunpack.c.l.b16 %v6622
      %v6703 = vunpack.c.l.b16 %v6623
      %v6704 = vunpack.c.l.b16 %v6624
      %v6705 = vunpack.c.l.b16 %v6625
      %v6706 = vunpack.c.l.b16 %v6626
      %v6707 = vunpack.c.l.b16 %v6627
      %v6708 = vunpack.c.l.b16 %v6628
      %v6709 = vunpack.c.l.b16 %v6629
      %v6710 = vunpack.c.l.b16 %v6630
      %v6711 = vunpack.c.l.b16 %v6631
      %v6712 = vunpack.c.l.b16 %v6632
      %v6713 = vunpack.c.l.b16 %v6633
      %v6714 = vunpack.c.l.b16 %v6634
      %v6715 = vunpack.c.l.b16 %v6635
      %v6716 = vunpack.c.l.b16 %v6636
      %v6717 = vunpack.c.l.b16 %v6637
      %v6718 = vpack.c.b16 %v6703, %v6702
      %v6719 = vpack.c.b16 %v6705, %v6704
      %v6720 = vpack.c.b16 %v6707, %v6706
      %v6721 = vpack.c.b16 %v6709, %v6708
      %v6722 = vpack.c.b16 %v6711, %v6710
      %v6723 = vpack.c.b16 %v6713, %v6712
      %v6724 = vpack.c.b16 %v6715, %v6714
      %v6725 = vpack.c.b16 %v6717, %v6716
      %6734 = vmatpush.bf16.msra.mxu0 %v6725
      %6735 = vmatpush.bf16.msra.mxu0 %v6724
      %6736 = vmatpush.bf16.msra.mxu0 %v6723
      %6737 = vmatpush.bf16.msra.mxu0 %v6722
      %6738 = vmatpush.bf16.msra.mxu0 %v6721
      %6739 = vmatpush.bf16.msra.mxu0 %v6720
      %6740 = vmatpush.bf16.msra.mxu0 %v6719
      %6741 = vmatpush.bf16.msra.mxu0 %v6718
      %6742 = vmatmul.bf16.gmra.mxu0 %v6662
      %v6743 = vpop.f32.mrf.mxu0
      %v6744 = vadd.f32 0.0, %v6743
      %v6745 = vpop.f32.mrf.mxu0
      %v6746 = vadd.f32 0.0, %v6745
      %6747 = vmatmul.bf16.gmra.mxu0 %v6663
      %v6748 = vpop.f32.mrf.mxu0
      %v6749 = vadd.f32 0.0, %v6748
      %v6750 = vpop.f32.mrf.mxu0
      %v6751 = vadd.f32 0.0, %v6750
      %6752 = vmatmul.bf16.gmra.mxu0 %v6664
      %v6753 = vpop.f32.mrf.mxu0
      %v6754 = vadd.f32 0.0, %v6753
      %v6755 = vpop.f32.mrf.mxu0
      %v6756 = vadd.f32 0.0, %v6755
      %6757 = vmatmul.bf16.gmra.mxu0 %v6665
      %v6758 = vpop.f32.mrf.mxu0
      %v6759 = vadd.f32 0.0, %v6758
      %v6760 = vpop.f32.mrf.mxu0
      %v6761 = vadd.f32 0.0, %v6760
      %6762 = vmatmul.bf16.gmra.mxu0 %v6666
      %v6763 = vpop.f32.mrf.mxu0
      %v6764 = vadd.f32 0.0, %v6763
      %v6765 = vpop.f32.mrf.mxu0
      %v6766 = vadd.f32 0.0, %v6765
      %6767 = vmatmul.bf16.gmra.mxu0 %v6667
      %v6768 = vpop.f32.mrf.mxu0
      %v6769 = vadd.f32 0.0, %v6768
      %v6770 = vpop.f32.mrf.mxu0
      %v6771 = vadd.f32 0.0, %v6770
      %6772 = vmatmul.bf16.gmra.mxu0 %v6668
      %v6773 = vpop.f32.mrf.mxu0
      %v6774 = vadd.f32 0.0, %v6773
      %v6775 = vpop.f32.mrf.mxu0
      %v6776 = vadd.f32 0.0, %v6775
      %6777 = vmatmul.bf16.gmra.mxu0 %v6669
      %v6778 = vpop.f32.mrf.mxu0
      %v6779 = vadd.f32 0.0, %v6778
      %v6780 = vpop.f32.mrf.mxu0
      %v6781 = vadd.f32 0.0, %v6780
      %6782 = vmatmul.bf16.gmra.mxu0 %v6670
      %v6783 = vpop.f32.mrf.mxu0
      %v6784 = vadd.f32 0.0, %v6783
      %v6785 = vpop.f32.mrf.mxu0
      %v6786 = vadd.f32 0.0, %v6785
      %6787 = vmatmul.bf16.gmra.mxu0 %v6671
      %v6788 = vpop.f32.mrf.mxu0
      %v6789 = vadd.f32 0.0, %v6788
      %v6790 = vpop.f32.mrf.mxu0
      %v6791 = vadd.f32 0.0, %v6790
      %6792 = vmatmul.bf16.gmra.mxu0 %v6672
      %v6793 = vpop.f32.mrf.mxu0
      %v6794 = vadd.f32 0.0, %v6793
      %v6795 = vpop.f32.mrf.mxu0
      %v6796 = vadd.f32 0.0, %v6795
      %6797 = vmatmul.bf16.gmra.mxu0 %v6673
      %v6798 = vpop.f32.mrf.mxu0
      %v6799 = vadd.f32 0.0, %v6798
      %v6800 = vpop.f32.mrf.mxu0
      %v6801 = vadd.f32 0.0, %v6800
      %6802 = vdwg.mxu0
      %v6803 = vadd.f32 %v6478, %v6744
      %v6804 = vadd.f32 %v6479, %v6746
      %v6805 = vadd.f32 %v6480, %v6749
      %v6806 = vadd.f32 %v6481, %v6751
      %v6807 = vadd.f32 %v6482, %v6754
      %v6808 = vadd.f32 %v6483, %v6756
      %v6809 = vadd.f32 %v6484, %v6759
      %v6810 = vadd.f32 %v6485, %v6761
      %v6811 = vadd.f32 %v6486, %v6764
      %v6812 = vadd.f32 %v6487, %v6766
      %v6813 = vadd.f32 %v6488, %v6769
      %v6814 = vadd.f32 %v6489, %v6771
      %v6815 = vadd.f32 %v6490, %v6774
      %v6816 = vadd.f32 %v6491, %v6776
      %v6817 = vadd.f32 %v6492, %v6779
      %v6818 = vadd.f32 %v6493, %v6781
      %v6819 = vadd.f32 %v6494, %v6784
      %v6820 = vadd.f32 %v6495, %v6786
      %v6821 = vadd.f32 %v6496, %v6789
      %v6822 = vadd.f32 %v6497, %v6791
      %v6823 = vadd.f32 %v6498, %v6794
      %v6824 = vadd.f32 %v6499, %v6796
      %v6825 = vadd.f32 %v6500, %v6799
      %v6826 = vadd.f32 %v6501, %v6801
      %v6827 = vmul.f32 %v6803, %v310
      %v6828 = vmul.f32 %v6804, %v311
      %v6829 = vmul.f32 %v6805, %v312
      %v6830 = vmul.f32 %v6806, %v310
      %v6831 = vmul.f32 %v6807, %v311
      %v6832 = vmul.f32 %v6808, %v312
      %v6833 = vmul.f32 %v6809, %v310
      %v6834 = vmul.f32 %v6810, %v311
      %v6835 = vmul.f32 %v6811, %v312
      %v6836 = vmul.f32 %v6812, %v310
      %v6837 = vmul.f32 %v6813, %v311
      %v6838 = vmul.f32 %v6814, %v312
      %v6839 = vmul.f32 %v6815, %v310
      %v6840 = vmul.f32 %v6816, %v311
      %v6841 = vmul.f32 %v6817, %v312
      %v6842 = vmul.f32 %v6818, %v310
      %v6843 = vmul.f32 %v6819, %v311
      %v6844 = vmul.f32 %v6820, %v312
      %v6845 = vmul.f32 %v6821, %v310
      %v6846 = vmul.f32 %v6822, %v311
      %v6847 = vmul.f32 %v6823, %v312
      %v6848 = vmul.f32 %v6824, %v310
      %v6849 = vmul.f32 %v6825, %v311
      %v6850 = vmul.f32 %v6826, %v312
      %v6851 = vadd.f32 %v6827, %v317
      %v6852 = vadd.f32 %v6828, %v318
      %v6853 = vadd.f32 %v6829, %v319
      %v6854 = vadd.f32 %v6830, %v317
      %v6855 = vadd.f32 %v6831, %v318
      %v6856 = vadd.f32 %v6832, %v319
      %v6857 = vadd.f32 %v6833, %v317
      %v6858 = vadd.f32 %v6834, %v318
      %v6859 = vadd.f32 %v6835, %v319
      %v6860 = vadd.f32 %v6836, %v317
      %v6861 = vadd.f32 %v6837, %v318
      %v6862 = vadd.f32 %v6838, %v319
      %v6863 = vadd.f32 %v6839, %v317
      %v6864 = vadd.f32 %v6840, %v318
      %v6865 = vadd.f32 %v6841, %v319
      %v6866 = vadd.f32 %v6842, %v317
      %v6867 = vadd.f32 %v6843, %v318
      %v6868 = vadd.f32 %v6844, %v319
      %v6869 = vadd.f32 %v6845, %v317
      %v6870 = vadd.f32 %v6846, %v318
      %v6871 = vadd.f32 %v6847, %v319
      %v6872 = vadd.f32 %v6848, %v317
      %v6873 = vadd.f32 %v6849, %v318
      %v6874 = vadd.f32 %v6850, %v319
      %v6875 = vmax.f32 %v6851, 0.0
      %v6876 = vmax.f32 %v6852, 0.0
      %v6877 = vmax.f32 %v6853, 0.0
      %v6878 = vmax.f32 %v6854, 0.0
      %v6879 = vmax.f32 %v6855, 0.0
      %v6880 = vmax.f32 %v6856, 0.0
      %v6881 = vmax.f32 %v6857, 0.0
      %v6882 = vmax.f32 %v6858, 0.0
      %v6883 = vmax.f32 %v6859, 0.0
      %v6884 = vmax.f32 %v6860, 0.0
      %v6885 = vmax.f32 %v6861, 0.0
      %v6886 = vmax.f32 %v6862, 0.0
      %v6887 = vmax.f32 %v6863, 0.0
      %v6888 = vmax.f32 %v6864, 0.0
      %v6889 = vmax.f32 %v6865, 0.0
      %v6890 = vmax.f32 %v6866, 0.0
      %v6891 = vmax.f32 %v6867, 0.0
      %v6892 = vmax.f32 %v6868, 0.0
      %v6893 = vmax.f32 %v6869, 0.0
      %v6894 = vmax.f32 %v6870, 0.0
      %v6895 = vmax.f32 %v6871, 0.0
      %v6896 = vmax.f32 %v6872, 0.0
      %v6897 = vmax.f32 %v6873, 0.0
      %v6898 = vmax.f32 %v6874, 0.0
      %v6899 = vpack.c.bf16 %v6875, %v6875
      %v6900 = vpack.c.bf16 %v6876, %v6876
      %v6901 = vpack.c.bf16 %v6877, %v6877
      %v6902 = vpack.c.bf16 %v6878, %v6878
      %v6903 = vpack.c.bf16 %v6879, %v6879
      %v6904 = vpack.c.bf16 %v6880, %v6880
      %v6905 = vpack.c.bf16 %v6881, %v6881
      %v6906 = vpack.c.bf16 %v6882, %v6882
      %v6907 = vpack.c.bf16 %v6883, %v6883
      %v6908 = vpack.c.bf16 %v6884, %v6884
      %v6909 = vpack.c.bf16 %v6885, %v6885
      %v6910 = vpack.c.bf16 %v6886, %v6886
      %v6911 = vpack.c.bf16 %v6887, %v6887
      %v6912 = vpack.c.bf16 %v6888, %v6888
      %v6913 = vpack.c.bf16 %v6889, %v6889
      %v6914 = vpack.c.bf16 %v6890, %v6890
      %v6915 = vpack.c.bf16 %v6891, %v6891
      %v6916 = vpack.c.bf16 %v6892, %v6892
      %v6917 = vpack.c.bf16 %v6893, %v6893
      %v6918 = vpack.c.bf16 %v6894, %v6894
      %v6919 = vpack.c.bf16 %v6895, %v6895
      %v6920 = vpack.c.bf16 %v6896, %v6896
      %v6921 = vpack.c.bf16 %v6897, %v6897
      %v6922 = vpack.c.bf16 %v6898, %v6898
      %s6923 = smul.u32 %s4645, 3
      %s6924 = smul.addr %s6923, 4
      %s6925 = scalar_lea.vmem [#allocation2], %s6924
      %6926 = vst [vmem:[%s6925] sm:$0xf] %v6899
      %6927 = vst [vmem:[%s6925 + $0x4] sm:$0xf] %v6900
      %6928 = vst [vmem:[%s6925 + $0x8] sm:$0xf] %v6901
      %6929 = vst [vmem:[%s6925 + $0xc] sm:$0xf] %v6902
      %6930 = vst [vmem:[%s6925 + $0x10] sm:$0xf] %v6903
      %6931 = vst [vmem:[%s6925 + $0x14] sm:$0xf] %v6904
      %6932 = vst [vmem:[%s6925 + $0x18] sm:$0xf] %v6905
      %6933 = vst [vmem:[%s6925 + $0x1c] sm:$0xf] %v6906
      %6934 = vst [vmem:[%s6925 + $0x20] sm:$0xf] %v6907
      %6935 = vst [vmem:[%s6925 + $0x24] sm:$0xf] %v6908
      %6936 = vst [vmem:[%s6925 + $0x28] sm:$0xf] %v6909
      %6937 = vst [vmem:[%s6925 + $0x2c] sm:$0xf] %v6910
      %6938 = vst [vmem:[%s6925 + $0x30] sm:$0xf] %v6911
      %6939 = vst [vmem:[%s6925 + $0x34] sm:$0xf] %v6912
      %6940 = vst [vmem:[%s6925 + $0x38] sm:$0xf] %v6913
      %6941 = vst [vmem:[%s6925 + $0x3c] sm:$0xf] %v6914
      %6942 = vst [vmem:[%s6925 + $0x40] sm:$0xf] %v6915
      %6943 = vst [vmem:[%s6925 + $0x44] sm:$0xf] %v6916
      %6944 = vst [vmem:[%s6925 + $0x48] sm:$0xf] %v6917
      %6945 = vst [vmem:[%s6925 + $0x4c] sm:$0xf] %v6918
      %6946 = vst [vmem:[%s6925 + $0x50] sm:$0xf] %v6919
      %6947 = vst [vmem:[%s6925 + $0x54] sm:$0xf] %v6920
      %6948 = vst [vmem:[%s6925 + $0x58] sm:$0xf] %v6921
      %6949 = vst [vmem:[%s6925 + $0x5c] sm:$0xf] %v6922
      %s6950 = smul.u32 0, 3
      %s6951 = smul.addr %s6950, 4
      %s6952 = scalar_lea.vmem [#allocation2], %s6951
      %v6953 = vld [vmem:[%s6952] sm:$0xf]
      %v6954 = vld [vmem:[%s6952 + $0x4] sm:$0xf]
      %v6955 = vld [vmem:[%s6952 + $0xc] sm:$0xf]
      %v6956 = vld [vmem:[%s6952 + $0x10] sm:$0xf]
      %v6957 = vld [vmem:[%s6952 + $0x18] sm:$0xf]
      %v6958 = vld [vmem:[%s6952 + $0x1c] sm:$0xf]
      %v6959 = vld [vmem:[%s6952 + $0x24] sm:$0xf]
      %v6960 = vld [vmem:[%s6952 + $0x28] sm:$0xf]
      %v6961 = vld [vmem:[%s6952 + $0x30] sm:$0xf]
      %v6962 = vld [vmem:[%s6952 + $0x34] sm:$0xf]
      %v6963 = vld [vmem:[%s6952 + $0x3c] sm:$0xf]
      %v6964 = vld [vmem:[%s6952 + $0x40] sm:$0xf]
      %v6965 = vld [vmem:[%s6952 + $0x48] sm:$0xf]
      %v6966 = vld [vmem:[%s6952 + $0x4c] sm:$0xf]
      %v6967 = vld [vmem:[%s6952 + $0x54] sm:$0xf]
      %v6968 = vld [vmem:[%s6952 + $0x58] sm:$0xf]
      %v6969 = vld [vmem:[%s4] sm:$0xf]
      %v6970 = vld [vmem:[%s4 + $0x4] sm:$0xf]
      %v6971 = vld [vmem:[%s4 + $0x8] sm:$0xf]
      %v6972 = vld [vmem:[%s4 + $0xc] sm:$0xf]
      %v6973 = vld [vmem:[%s4 + $0x10] sm:$0xf]
      %v6974 = vld [vmem:[%s4 + $0x14] sm:$0xf]
      %v6975 = vld [vmem:[%s4 + $0x18] sm:$0xf]
      %v6976 = vld [vmem:[%s4 + $0x1c] sm:$0xf]
      %v6977 = vld [vmem:[%s4 + $0x20] sm:$0xf]
      %v6978 = vld [vmem:[%s4 + $0x24] sm:$0xf]
      %v6979 = vld [vmem:[%s4 + $0x28] sm:$0xf]
      %v6980 = vld [vmem:[%s4 + $0x2c] sm:$0xf]
      %v6981 = vld [vmem:[%s4 + $0x30] sm:$0xf]
      %v6982 = vld [vmem:[%s4 + $0x34] sm:$0xf]
      %v6983 = vld [vmem:[%s4 + $0x38] sm:$0xf]
      %v6984 = vld [vmem:[%s4 + $0x3c] sm:$0xf]
      %v6985 = vld [vmem:[%s6952 + $0x8] sm:$0x1]
      %v6986 = vld [vmem:[%s6952 + $0x14] sm:$0x1]
      %v6987 = vld [vmem:[%s6952 + $0x20] sm:$0x1]
      %v6988 = vld [vmem:[%s6952 + $0x2c] sm:$0x1]
      %v6989 = vld [vmem:[%s6952 + $0x38] sm:$0x1]
      %v6990 = vld [vmem:[%s6952 + $0x44] sm:$0x1]
      %v6991 = vld [vmem:[%s6952 + $0x50] sm:$0x1]
      %v6992 = vld [vmem:[%s6952 + $0x5c] sm:$0x1]
      %v6994 = vshrl.u32 %v6953, 16
      %v6996 = vrot.slane %v6994, 4
      %v6997 = vshll.u32 %v6953, 16
      %v6999 = vrot.slane %v6997, 5
      %v7000 = vor.u32 %v6996, %v6999
      %v7001 = vrot.slane %v7000, 4
      %v7003 = vshll.u32 %v6954, 16
      %v7005 = vrot.slane %v7003, 5
      %v7006 = vsel %vm375, %v7001, %v7005
      %v7007 = vshrl.u32 %v6954, 16
      %v7009 = vrot.slane %v7007, 4
      %v7010 = vor.u32 %v7009, %v7005
      %v7011 = vrot.slane %v7010, 4
      %v7013 = vshll.u32 %v6985, 16
      %v7015 = vrot.slane %v7013, 5
      %v7016 = vsel %vm375, %v7011, %v7015
      %v7018 = vshrl.u32 %v6955, 16
      %v7020 = vrot.slane %v7018, 4
      %v7021 = vshll.u32 %v6955, 16
      %v7023 = vrot.slane %v7021, 5
      %v7024 = vor.u32 %v7020, %v7023
      %v7025 = vrot.slane %v7024, 4
      %v7027 = vshll.u32 %v6956, 16
      %v7029 = vrot.slane %v7027, 5
      %v7030 = vsel %vm375, %v7025, %v7029
      %v7031 = vshrl.u32 %v6956, 16
      %v7033 = vrot.slane %v7031, 4
      %v7034 = vor.u32 %v7033, %v7029
      %v7035 = vrot.slane %v7034, 4
      %v7037 = vshll.u32 %v6986, 16
      %v7039 = vrot.slane %v7037, 5
      %v7040 = vsel %vm375, %v7035, %v7039
      %v7042 = vshrl.u32 %v6957, 16
      %v7044 = vrot.slane %v7042, 4
      %v7045 = vshll.u32 %v6957, 16
      %v7047 = vrot.slane %v7045, 5
      %v7048 = vor.u32 %v7044, %v7047
      %v7049 = vrot.slane %v7048, 4
      %v7051 = vshll.u32 %v6958, 16
      %v7053 = vrot.slane %v7051, 5
      %v7054 = vsel %vm375, %v7049, %v7053
      %v7055 = vshrl.u32 %v6958, 16
      %v7057 = vrot.slane %v7055, 4
      %v7058 = vor.u32 %v7057, %v7053
      %v7059 = vrot.slane %v7058, 4
      %v7061 = vshll.u32 %v6987, 16
      %v7063 = vrot.slane %v7061, 5
      %v7064 = vsel %vm375, %v7059, %v7063
      %v7066 = vshrl.u32 %v6959, 16
      %v7068 = vrot.slane %v7066, 4
      %v7069 = vshll.u32 %v6959, 16
      %v7071 = vrot.slane %v7069, 5
      %v7072 = vor.u32 %v7068, %v7071
      %v7073 = vrot.slane %v7072, 4
      %v7075 = vshll.u32 %v6960, 16
      %v7077 = vrot.slane %v7075, 5
      %v7078 = vsel %vm375, %v7073, %v7077
      %v7079 = vshrl.u32 %v6960, 16
      %v7081 = vrot.slane %v7079, 4
      %v7082 = vor.u32 %v7081, %v7077
      %v7083 = vrot.slane %v7082, 4
      %v7085 = vshll.u32 %v6988, 16
      %v7087 = vrot.slane %v7085, 5
      %v7088 = vsel %vm375, %v7083, %v7087
      %v7090 = vshrl.u32 %v6961, 16
      %v7092 = vrot.slane %v7090, 4
      %v7093 = vshll.u32 %v6961, 16
      %v7095 = vrot.slane %v7093, 5
      %v7096 = vor.u32 %v7092, %v7095
      %v7097 = vrot.slane %v7096, 4
      %v7099 = vshll.u32 %v6962, 16
      %v7101 = vrot.slane %v7099, 5
      %v7102 = vsel %vm375, %v7097, %v7101
      %v7103 = vshrl.u32 %v6962, 16
      %v7105 = vrot.slane %v7103, 4
      %v7106 = vor.u32 %v7105, %v7101
      %v7107 = vrot.slane %v7106, 4
      %v7109 = vshll.u32 %v6989, 16
      %v7111 = vrot.slane %v7109, 5
      %v7112 = vsel %vm375, %v7107, %v7111
      %v7114 = vshrl.u32 %v6963, 16
      %v7116 = vrot.slane %v7114, 4
      %v7117 = vshll.u32 %v6963, 16
      %v7119 = vrot.slane %v7117, 5
      %v7120 = vor.u32 %v7116, %v7119
      %v7121 = vrot.slane %v7120, 4
      %v7123 = vshll.u32 %v6964, 16
      %v7125 = vrot.slane %v7123, 5
      %v7126 = vsel %vm375, %v7121, %v7125
      %v7127 = vshrl.u32 %v6964, 16
      %v7129 = vrot.slane %v7127, 4
      %v7130 = vor.u32 %v7129, %v7125
      %v7131 = vrot.slane %v7130, 4
      %v7133 = vshll.u32 %v6990, 16
      %v7135 = vrot.slane %v7133, 5
      %v7136 = vsel %vm375, %v7131, %v7135
      %v7138 = vshrl.u32 %v6965, 16
      %v7140 = vrot.slane %v7138, 4
      %v7141 = vshll.u32 %v6965, 16
      %v7143 = vrot.slane %v7141, 5
      %v7144 = vor.u32 %v7140, %v7143
      %v7145 = vrot.slane %v7144, 4
      %v7147 = vshll.u32 %v6966, 16
      %v7149 = vrot.slane %v7147, 5
      %v7150 = vsel %vm375, %v7145, %v7149
      %v7151 = vshrl.u32 %v6966, 16
      %v7153 = vrot.slane %v7151, 4
      %v7154 = vor.u32 %v7153, %v7149
      %v7155 = vrot.slane %v7154, 4
      %v7157 = vshll.u32 %v6991, 16
      %v7159 = vrot.slane %v7157, 5
      %v7160 = vsel %vm375, %v7155, %v7159
      %v7162 = vshrl.u32 %v6967, 16
      %v7164 = vrot.slane %v7162, 4
      %v7165 = vshll.u32 %v6967, 16
      %v7167 = vrot.slane %v7165, 5
      %v7168 = vor.u32 %v7164, %v7167
      %v7169 = vrot.slane %v7168, 4
      %v7171 = vshll.u32 %v6968, 16
      %v7173 = vrot.slane %v7171, 5
      %v7174 = vsel %vm375, %v7169, %v7173
      %v7175 = vshrl.u32 %v6968, 16
      %v7177 = vrot.slane %v7175, 4
      %v7178 = vor.u32 %v7177, %v7173
      %v7179 = vrot.slane %v7178, 4
      %v7181 = vshll.u32 %v6992, 16
      %v7183 = vrot.slane %v7181, 5
      %v7184 = vsel %vm375, %v7179, %v7183
      %s7185 = scalar_lea.vmem %s4, 64
      %v7186 = vld [vmem:[%s7185] sm:$0xf]
      %v7187 = vld [vmem:[%s7185 + $0x4] sm:$0xf]
      %v7188 = vld [vmem:[%s7185 + $0x8] sm:$0xf]
      %v7189 = vld [vmem:[%s7185 + $0xc] sm:$0xf]
      %v7190 = vld [vmem:[%s7185 + $0x10] sm:$0xf]
      %v7191 = vld [vmem:[%s7185 + $0x14] sm:$0xf]
      %v7192 = vld [vmem:[%s7185 + $0x18] sm:$0xf]
      %v7193 = vld [vmem:[%s7185 + $0x1c] sm:$0xf]
      %v7194 = vld [vmem:[%s7185 + $0x20] sm:$0xf]
      %v7195 = vld [vmem:[%s7185 + $0x24] sm:$0xf]
      %v7196 = vld [vmem:[%s7185 + $0x28] sm:$0xf]
      %v7197 = vld [vmem:[%s7185 + $0x2c] sm:$0xf]
      %v7198 = vld [vmem:[%s7185 + $0x30] sm:$0xf]
      %v7199 = vld [vmem:[%s7185 + $0x34] sm:$0xf]
      %v7200 = vld [vmem:[%s7185 + $0x38] sm:$0xf]
      %v7201 = vld [vmem:[%s7185 + $0x3c] sm:$0xf]
      %v7202 = vunpack.c.l.b16 %v7006
      %v7203 = vunpack.c.l.b16 %v7016
      %v7204 = vunpack.c.l.b16 %v7030
      %v7205 = vunpack.c.l.b16 %v7040
      %v7206 = vunpack.c.l.b16 %v7054
      %v7207 = vunpack.c.l.b16 %v7064
      %v7208 = vunpack.c.l.b16 %v7078
      %v7209 = vunpack.c.l.b16 %v7088
      %v7210 = vunpack.c.l.b16 %v7102
      %v7211 = vunpack.c.l.b16 %v7112
      %v7212 = vunpack.c.l.b16 %v7126
      %v7213 = vunpack.c.l.b16 %v7136
      %v7214 = vunpack.c.l.b16 %v7150
      %v7215 = vunpack.c.l.b16 %v7160
      %v7216 = vunpack.c.l.b16 %v7174
      %v7217 = vunpack.c.l.b16 %v7184
      %v7218 = vpack.c.b16 %v7203, %v7202
      %v7219 = vpack.c.b16 %v7205, %v7204
      %v7220 = vpack.c.b16 %v7207, %v7206
      %v7221 = vpack.c.b16 %v7209, %v7208
      %v7222 = vpack.c.b16 %v7211, %v7210
      %v7223 = vpack.c.b16 %v7213, %v7212
      %v7224 = vpack.c.b16 %v7215, %v7214
      %v7225 = vpack.c.b16 %v7217, %v7216
      %v7250 = vunpack.c.l.b16 %v7186
      %v7251 = vunpack.c.l.b16 %v7187
      %v7252 = vunpack.c.l.b16 %v7188
      %v7253 = vunpack.c.l.b16 %v7189
      %v7254 = vunpack.c.l.b16 %v7190
      %v7255 = vunpack.c.l.b16 %v7191
      %v7256 = vunpack.c.l.b16 %v7192
      %v7257 = vunpack.c.l.b16 %v7193
      %v7258 = vunpack.c.l.b16 %v7194
      %v7259 = vunpack.c.l.b16 %v7195
      %v7260 = vunpack.c.l.b16 %v7196
      %v7261 = vunpack.c.l.b16 %v7197
      %v7262 = vunpack.c.l.b16 %v7198
      %v7263 = vunpack.c.l.b16 %v7199
      %v7264 = vunpack.c.l.b16 %v7200
      %v7265 = vunpack.c.l.b16 %v7201
      %v7266 = vpack.c.b16 %v7251, %v7250
      %v7267 = vpack.c.b16 %v7253, %v7252
      %v7268 = vpack.c.b16 %v7255, %v7254
      %v7269 = vpack.c.b16 %v7257, %v7256
      %v7270 = vpack.c.b16 %v7259, %v7258
      %v7271 = vpack.c.b16 %v7261, %v7260
      %v7272 = vpack.c.b16 %v7263, %v7262
      %v7273 = vpack.c.b16 %v7265, %v7264
      %7282 = vmatpush.bf16.msra.mxu0 %v7273
      %7283 = vmatpush.bf16.msra.mxu0 %v7272
      %7284 = vmatpush.bf16.msra.mxu0 %v7271
      %7285 = vmatpush.bf16.msra.mxu0 %v7270
      %7286 = vmatpush.bf16.msra.mxu0 %v7269
      %7287 = vmatpush.bf16.msra.mxu0 %v7268
      %7288 = vmatpush.bf16.msra.mxu0 %v7267
      %7289 = vmatpush.bf16.msra.mxu0 %v7266
      %7290 = vmatmul.bf16.gmra.mxu0 %v7218
      %v7291 = vpop.f32.mrf.mxu0
      %v7292 = vadd.f32 0.0, %v7291
      %v7293 = vpop.f32.mrf.mxu0
      %v7294 = vadd.f32 0.0, %v7293
      %7295 = vmatmul.bf16.gmra.mxu0 %v7219
      %v7296 = vpop.f32.mrf.mxu0
      %v7297 = vadd.f32 0.0, %v7296
      %v7298 = vpop.f32.mrf.mxu0
      %v7299 = vadd.f32 0.0, %v7298
      %7300 = vmatmul.bf16.gmra.mxu0 %v7220
      %v7301 = vpop.f32.mrf.mxu0
      %v7302 = vadd.f32 0.0, %v7301
      %v7303 = vpop.f32.mrf.mxu0
      %v7304 = vadd.f32 0.0, %v7303
      %7305 = vmatmul.bf16.gmra.mxu0 %v7221
      %v7306 = vpop.f32.mrf.mxu0
      %v7307 = vadd.f32 0.0, %v7306
      %v7308 = vpop.f32.mrf.mxu0
      %v7309 = vadd.f32 0.0, %v7308
      %7310 = vmatmul.bf16.gmra.mxu0 %v7222
      %v7311 = vpop.f32.mrf.mxu0
      %v7312 = vadd.f32 0.0, %v7311
      %v7313 = vpop.f32.mrf.mxu0
      %v7314 = vadd.f32 0.0, %v7313
      %7315 = vmatmul.bf16.gmra.mxu0 %v7223
      %v7316 = vpop.f32.mrf.mxu0
      %v7317 = vadd.f32 0.0, %v7316
      %v7318 = vpop.f32.mrf.mxu0
      %v7319 = vadd.f32 0.0, %v7318
      %7320 = vmatmul.bf16.gmra.mxu0 %v7224
      %v7321 = vpop.f32.mrf.mxu0
      %v7322 = vadd.f32 0.0, %v7321
      %v7323 = vpop.f32.mrf.mxu0
      %v7324 = vadd.f32 0.0, %v7323
      %7325 = vmatmul.bf16.gmra.mxu0 %v7225
      %v7326 = vpop.f32.mrf.mxu0
      %v7327 = vadd.f32 0.0, %v7326
      %v7328 = vpop.f32.mrf.mxu0
      %v7329 = vadd.f32 0.0, %v7328
      %7330 = vdwg.mxu0
      %v7347 = vunpack.c.l.b16 %v6953
      %v7348 = vunpack.c.l.b16 %v6954
      %v7349 = vunpack.c.l.b16 %v6955
      %v7350 = vunpack.c.l.b16 %v6956
      %v7351 = vunpack.c.l.b16 %v6957
      %v7352 = vunpack.c.l.b16 %v6958
      %v7353 = vunpack.c.l.b16 %v6959
      %v7354 = vunpack.c.l.b16 %v6960
      %v7355 = vunpack.c.l.b16 %v6961
      %v7356 = vunpack.c.l.b16 %v6962
      %v7357 = vunpack.c.l.b16 %v6963
      %v7358 = vunpack.c.l.b16 %v6964
      %v7359 = vunpack.c.l.b16 %v6965
      %v7360 = vunpack.c.l.b16 %v6966
      %v7361 = vunpack.c.l.b16 %v6967
      %v7362 = vunpack.c.l.b16 %v6968
      %v7363 = vpack.c.b16 %v7348, %v7347
      %v7364 = vpack.c.b16 %v7350, %v7349
      %v7365 = vpack.c.b16 %v7352, %v7351
      %v7366 = vpack.c.b16 %v7354, %v7353
      %v7367 = vpack.c.b16 %v7356, %v7355
      %v7368 = vpack.c.b16 %v7358, %v7357
      %v7369 = vpack.c.b16 %v7360, %v7359
      %v7370 = vpack.c.b16 %v7362, %v7361
      %v7395 = vunpack.c.l.b16 %v6969
      %v7396 = vunpack.c.l.b16 %v6970
      %v7397 = vunpack.c.l.b16 %v6971
      %v7398 = vunpack.c.l.b16 %v6972
      %v7399 = vunpack.c.l.b16 %v6973
      %v7400 = vunpack.c.l.b16 %v6974
      %v7401 = vunpack.c.l.b16 %v6975
      %v7402 = vunpack.c.l.b16 %v6976
      %v7403 = vunpack.c.l.b16 %v6977
      %v7404 = vunpack.c.l.b16 %v6978
      %v7405 = vunpack.c.l.b16 %v6979
      %v7406 = vunpack.c.l.b16 %v6980
      %v7407 = vunpack.c.l.b16 %v6981
      %v7408 = vunpack.c.l.b16 %v6982
      %v7409 = vunpack.c.l.b16 %v6983
      %v7410 = vunpack.c.l.b16 %v6984
      %v7411 = vpack.c.b16 %v7396, %v7395
      %v7412 = vpack.c.b16 %v7398, %v7397
      %v7413 = vpack.c.b16 %v7400, %v7399
      %v7414 = vpack.c.b16 %v7402, %v7401
      %v7415 = vpack.c.b16 %v7404, %v7403
      %v7416 = vpack.c.b16 %v7406, %v7405
      %v7417 = vpack.c.b16 %v7408, %v7407
      %v7418 = vpack.c.b16 %v7410, %v7409
      %7427 = vmatpush.bf16.msra.mxu0 %v7418
      %7428 = vmatpush.bf16.msra.mxu0 %v7417
      %7429 = vmatpush.bf16.msra.mxu0 %v7416
      %7430 = vmatpush.bf16.msra.mxu0 %v7415
      %7431 = vmatpush.bf16.msra.mxu0 %v7414
      %7432 = vmatpush.bf16.msra.mxu0 %v7413
      %7433 = vmatpush.bf16.msra.mxu0 %v7412
      %7434 = vmatpush.bf16.msra.mxu0 %v7411
      %7435 = vmatmul.bf16.gmra.mxu0 %v7363
      %v7436 = vpop.f32.mrf.mxu0
      %v7437 = vadd.f32 %v7292, %v7436
      %v7438 = vpop.f32.mrf.mxu0
      %v7439 = vadd.f32 %v7294, %v7438
      %7440 = vmatmul.bf16.gmra.mxu0 %v7364
      %v7441 = vpop.f32.mrf.mxu0
      %v7442 = vadd.f32 %v7297, %v7441
      %v7443 = vpop.f32.mrf.mxu0
      %v7444 = vadd.f32 %v7299, %v7443
      %7445 = vmatmul.bf16.gmra.mxu0 %v7365
      %v7446 = vpop.f32.mrf.mxu0
      %v7447 = vadd.f32 %v7302, %v7446
      %v7448 = vpop.f32.mrf.mxu0
      %v7449 = vadd.f32 %v7304, %v7448
      %7450 = vmatmul.bf16.gmra.mxu0 %v7366
      %v7451 = vpop.f32.mrf.mxu0
      %v7452 = vadd.f32 %v7307, %v7451
      %v7453 = vpop.f32.mrf.mxu0
      %v7454 = vadd.f32 %v7309, %v7453
      %7455 = vmatmul.bf16.gmra.mxu0 %v7367
      %v7456 = vpop.f32.mrf.mxu0
      %v7457 = vadd.f32 %v7312, %v7456
      %v7458 = vpop.f32.mrf.mxu0
      %v7459 = vadd.f32 %v7314, %v7458
      %7460 = vmatmul.bf16.gmra.mxu0 %v7368
      %v7461 = vpop.f32.mrf.mxu0
      %v7462 = vadd.f32 %v7317, %v7461
      %v7463 = vpop.f32.mrf.mxu0
      %v7464 = vadd.f32 %v7319, %v7463
      %7465 = vmatmul.bf16.gmra.mxu0 %v7369
      %v7466 = vpop.f32.mrf.mxu0
      %v7467 = vadd.f32 %v7322, %v7466
      %v7468 = vpop.f32.mrf.mxu0
      %v7469 = vadd.f32 %v7324, %v7468
      %7470 = vmatmul.bf16.gmra.mxu0 %v7370
      %v7471 = vpop.f32.mrf.mxu0
      %v7472 = vadd.f32 %v7327, %v7471
      %v7473 = vpop.f32.mrf.mxu0
      %v7474 = vadd.f32 %v7329, %v7473
      %7475 = vdwg.mxu0
      %v7476 = vld [vmem:[%s6952] sm:$0xe]
      %v7477 = vld [vmem:[%s6952 + $0xc] sm:$0xe]
      %v7478 = vld [vmem:[%s6952 + $0x18] sm:$0xe]
      %v7479 = vld [vmem:[%s6952 + $0x24] sm:$0xe]
      %v7480 = vld [vmem:[%s6952 + $0x30] sm:$0xe]
      %v7481 = vld [vmem:[%s6952 + $0x3c] sm:$0xe]
      %v7482 = vld [vmem:[%s6952 + $0x48] sm:$0xe]
      %v7483 = vld [vmem:[%s6952 + $0x54] sm:$0xe]
      %v7500 = vrot.slane %v7476, 5
      %v7501 = vrot.slane %v7500, 4
      %v7502 = vrot.slane %v6954, 5
      %v7503 = vsel %vm1045, %v7501, %v7502
      %v7504 = vrot.slane %v7502, 4
      %v7505 = vrot.slane %v6985, 5
      %v7506 = vsel %vm1045, %v7504, %v7505
      %v7507 = vrot.slane %v7477, 5
      %v7508 = vrot.slane %v7507, 4
      %v7509 = vrot.slane %v6956, 5
      %v7510 = vsel %vm1045, %v7508, %v7509
      %v7511 = vrot.slane %v7509, 4
      %v7512 = vrot.slane %v6986, 5
      %v7513 = vsel %vm1045, %v7511, %v7512
      %v7514 = vrot.slane %v7478, 5
      %v7515 = vrot.slane %v7514, 4
      %v7516 = vrot.slane %v6958, 5
      %v7517 = vsel %vm1045, %v7515, %v7516
      %v7518 = vrot.slane %v7516, 4
      %v7519 = vrot.slane %v6987, 5
      %v7520 = vsel %vm1045, %v7518, %v7519
      %v7521 = vrot.slane %v7479, 5
      %v7522 = vrot.slane %v7521, 4
      %v7523 = vrot.slane %v6960, 5
      %v7524 = vsel %vm1045, %v7522, %v7523
      %v7525 = vrot.slane %v7523, 4
      %v7526 = vrot.slane %v6988, 5
      %v7527 = vsel %vm1045, %v7525, %v7526
      %v7528 = vrot.slane %v7480, 5
      %v7529 = vrot.slane %v7528, 4
      %v7530 = vrot.slane %v6962, 5
      %v7531 = vsel %vm1045, %v7529, %v7530
      %v7532 = vrot.slane %v7530, 4
      %v7533 = vrot.slane %v6989, 5
      %v7534 = vsel %vm1045, %v7532, %v7533
      %v7535 = vrot.slane %v7481, 5
      %v7536 = vrot.slane %v7535, 4
      %v7537 = vrot.slane %v6964, 5
      %v7538 = vsel %vm1045, %v7536, %v7537
      %v7539 = vrot.slane %v7537, 4
      %v7540 = vrot.slane %v6990, 5
      %v7541 = vsel %vm1045, %v7539, %v7540
      %v7542 = vrot.slane %v7482, 5
      %v7543 = vrot.slane %v7542, 4
      %v7544 = vrot.slane %v6966, 5
      %v7545 = vsel %vm1045, %v7543, %v7544
      %v7546 = vrot.slane %v7544, 4
      %v7547 = vrot.slane %v6991, 5
      %v7548 = vsel %vm1045, %v7546, %v7547
      %v7549 = vrot.slane %v7483, 5
      %v7550 = vrot.slane %v7549, 4
      %v7551 = vrot.slane %v6968, 5
      %v7552 = vsel %vm1045, %v7550, %v7551
      %v7553 = vrot.slane %v7551, 4
      %v7554 = vrot.slane %v6992, 5
      %v7555 = vsel %vm1045, %v7553, %v7554
      %s7556 = scalar_lea.vmem %s4, 128
      %v7557 = vld [vmem:[%s7556] sm:$0xf]
      %v7558 = vld [vmem:[%s7556 + $0x4] sm:$0xf]
      %v7559 = vld [vmem:[%s7556 + $0x8] sm:$0xf]
      %v7560 = vld [vmem:[%s7556 + $0xc] sm:$0xf]
      %v7561 = vld [vmem:[%s7556 + $0x10] sm:$0xf]
      %v7562 = vld [vmem:[%s7556 + $0x14] sm:$0xf]
      %v7563 = vld [vmem:[%s7556 + $0x18] sm:$0xf]
      %v7564 = vld [vmem:[%s7556 + $0x1c] sm:$0xf]
      %v7565 = vld [vmem:[%s7556 + $0x20] sm:$0xf]
      %v7566 = vld [vmem:[%s7556 + $0x24] sm:$0xf]
      %v7567 = vld [vmem:[%s7556 + $0x28] sm:$0xf]
      %v7568 = vld [vmem:[%s7556 + $0x2c] sm:$0xf]
      %v7569 = vld [vmem:[%s7556 + $0x30] sm:$0xf]
      %v7570 = vld [vmem:[%s7556 + $0x34] sm:$0xf]
      %v7571 = vld [vmem:[%s7556 + $0x38] sm:$0xf]
      %v7572 = vld [vmem:[%s7556 + $0x3c] sm:$0xf]
      %v7573 = vunpack.c.l.b16 %v7503
      %v7574 = vunpack.c.l.b16 %v7506
      %v7575 = vunpack.c.l.b16 %v7510
      %v7576 = vunpack.c.l.b16 %v7513
      %v7577 = vunpack.c.l.b16 %v7517
      %v7578 = vunpack.c.l.b16 %v7520
      %v7579 = vunpack.c.l.b16 %v7524
      %v7580 = vunpack.c.l.b16 %v7527
      %v7581 = vunpack.c.l.b16 %v7531
      %v7582 = vunpack.c.l.b16 %v7534
      %v7583 = vunpack.c.l.b16 %v7538
      %v7584 = vunpack.c.l.b16 %v7541
      %v7585 = vunpack.c.l.b16 %v7545
      %v7586 = vunpack.c.l.b16 %v7548
      %v7587 = vunpack.c.l.b16 %v7552
      %v7588 = vunpack.c.l.b16 %v7555
      %v7589 = vpack.c.b16 %v7574, %v7573
      %v7590 = vpack.c.b16 %v7576, %v7575
      %v7591 = vpack.c.b16 %v7578, %v7577
      %v7592 = vpack.c.b16 %v7580, %v7579
      %v7593 = vpack.c.b16 %v7582, %v7581
      %v7594 = vpack.c.b16 %v7584, %v7583
      %v7595 = vpack.c.b16 %v7586, %v7585
      %v7596 = vpack.c.b16 %v7588, %v7587
      %v7621 = vunpack.c.l.b16 %v7557
      %v7622 = vunpack.c.l.b16 %v7558
      %v7623 = vunpack.c.l.b16 %v7559
      %v7624 = vunpack.c.l.b16 %v7560
      %v7625 = vunpack.c.l.b16 %v7561
      %v7626 = vunpack.c.l.b16 %v7562
      %v7627 = vunpack.c.l.b16 %v7563
      %v7628 = vunpack.c.l.b16 %v7564
      %v7629 = vunpack.c.l.b16 %v7565
      %v7630 = vunpack.c.l.b16 %v7566
      %v7631 = vunpack.c.l.b16 %v7567
      %v7632 = vunpack.c.l.b16 %v7568
      %v7633 = vunpack.c.l.b16 %v7569
      %v7634 = vunpack.c.l.b16 %v7570
      %v7635 = vunpack.c.l.b16 %v7571
      %v7636 = vunpack.c.l.b16 %v7572
      %v7637 = vpack.c.b16 %v7622, %v7621
      %v7638 = vpack.c.b16 %v7624, %v7623
      %v7639 = vpack.c.b16 %v7626, %v7625
      %v7640 = vpack.c.b16 %v7628, %v7627
      %v7641 = vpack.c.b16 %v7630, %v7629
      %v7642 = vpack.c.b16 %v7632, %v7631
      %v7643 = vpack.c.b16 %v7634, %v7633
      %v7644 = vpack.c.b16 %v7636, %v7635
      %7653 = vmatpush.bf16.msra.mxu0 %v7644
      %7654 = vmatpush.bf16.msra.mxu0 %v7643
      %7655 = vmatpush.bf16.msra.mxu0 %v7642
      %7656 = vmatpush.bf16.msra.mxu0 %v7641
      %7657 = vmatpush.bf16.msra.mxu0 %v7640
      %7658 = vmatpush.bf16.msra.mxu0 %v7639
      %7659 = vmatpush.bf16.msra.mxu0 %v7638
      %7660 = vmatpush.bf16.msra.mxu0 %v7637
      %7661 = vmatmul.bf16.gmra.mxu0 %v7589
      %v7662 = vpop.f32.mrf.mxu0
      %v7663 = vadd.f32 0.0, %v7662
      %v7664 = vpop.f32.mrf.mxu0
      %v7665 = vadd.f32 0.0, %v7664
      %7666 = vmatmul.bf16.gmra.mxu0 %v7590
      %v7667 = vpop.f32.mrf.mxu0
      %v7668 = vadd.f32 0.0, %v7667
      %v7669 = vpop.f32.mrf.mxu0
      %v7670 = vadd.f32 0.0, %v7669
      %7671 = vmatmul.bf16.gmra.mxu0 %v7591
      %v7672 = vpop.f32.mrf.mxu0
      %v7673 = vadd.f32 0.0, %v7672
      %v7674 = vpop.f32.mrf.mxu0
      %v7675 = vadd.f32 0.0, %v7674
      %7676 = vmatmul.bf16.gmra.mxu0 %v7592
      %v7677 = vpop.f32.mrf.mxu0
      %v7678 = vadd.f32 0.0, %v7677
      %v7679 = vpop.f32.mrf.mxu0
      %v7680 = vadd.f32 0.0, %v7679
      %7681 = vmatmul.bf16.gmra.mxu0 %v7593
      %v7682 = vpop.f32.mrf.mxu0
      %v7683 = vadd.f32 0.0, %v7682
      %v7684 = vpop.f32.mrf.mxu0
      %v7685 = vadd.f32 0.0, %v7684
      %7686 = vmatmul.bf16.gmra.mxu0 %v7594
      %v7687 = vpop.f32.mrf.mxu0
      %v7688 = vadd.f32 0.0, %v7687
      %v7689 = vpop.f32.mrf.mxu0
      %v7690 = vadd.f32 0.0, %v7689
      %7691 = vmatmul.bf16.gmra.mxu0 %v7595
      %v7692 = vpop.f32.mrf.mxu0
      %v7693 = vadd.f32 0.0, %v7692
      %v7694 = vpop.f32.mrf.mxu0
      %v7695 = vadd.f32 0.0, %v7694
      %7696 = vmatmul.bf16.gmra.mxu0 %v7596
      %v7697 = vpop.f32.mrf.mxu0
      %v7698 = vadd.f32 0.0, %v7697
      %v7699 = vpop.f32.mrf.mxu0
      %v7700 = vadd.f32 0.0, %v7699
      %7701 = vdwg.mxu0
      %v7702 = vadd.f32 %v7437, %v7663
      %v7703 = vadd.f32 %v7439, %v7665
      %v7704 = vadd.f32 %v7442, %v7668
      %v7705 = vadd.f32 %v7444, %v7670
      %v7706 = vadd.f32 %v7447, %v7673
      %v7707 = vadd.f32 %v7449, %v7675
      %v7708 = vadd.f32 %v7452, %v7678
      %v7709 = vadd.f32 %v7454, %v7680
      %v7710 = vadd.f32 %v7457, %v7683
      %v7711 = vadd.f32 %v7459, %v7685
      %v7712 = vadd.f32 %v7462, %v7688
      %v7713 = vadd.f32 %v7464, %v7690
      %v7714 = vadd.f32 %v7467, %v7693
      %v7715 = vadd.f32 %v7469, %v7695
      %v7716 = vadd.f32 %v7472, %v7698
      %v7717 = vadd.f32 %v7474, %v7700
      %v7718 = vld [vmem:[%s3618] sm:$0xf]
      %v7719 = vld [vmem:[%s3618 + $0x4] sm:$0xf]
      %v7720 = vld [vmem:[%s3618 + $0xc] sm:$0xf]
      %v7721 = vld [vmem:[%s3618 + $0x10] sm:$0xf]
      %v7722 = vld [vmem:[%s3618 + $0x18] sm:$0xf]
      %v7723 = vld [vmem:[%s3618 + $0x1c] sm:$0xf]
      %v7724 = vld [vmem:[%s3618 + $0x24] sm:$0xf]
      %v7725 = vld [vmem:[%s3618 + $0x28] sm:$0xf]
      %v7726 = vld [vmem:[%s3618 + $0x30] sm:$0xf]
      %v7727 = vld [vmem:[%s3618 + $0x34] sm:$0xf]
      %v7728 = vld [vmem:[%s3618 + $0x3c] sm:$0xf]
      %v7729 = vld [vmem:[%s3618 + $0x40] sm:$0xf]
      %v7730 = vld [vmem:[%s3618 + $0x48] sm:$0xf]
      %v7731 = vld [vmem:[%s3618 + $0x4c] sm:$0xf]
      %v7732 = vld [vmem:[%s3618 + $0x54] sm:$0xf]
      %v7733 = vld [vmem:[%s3618 + $0x58] sm:$0xf]
      %s7734 = scalar_lea.vmem %s4, 192
      %v7735 = vld [vmem:[%s7734] sm:$0xf]
      %v7736 = vld [vmem:[%s7734 + $0x4] sm:$0xf]
      %v7737 = vld [vmem:[%s7734 + $0x8] sm:$0xf]
      %v7738 = vld [vmem:[%s7734 + $0xc] sm:$0xf]
      %v7739 = vld [vmem:[%s7734 + $0x10] sm:$0xf]
      %v7740 = vld [vmem:[%s7734 + $0x14] sm:$0xf]
      %v7741 = vld [vmem:[%s7734 + $0x18] sm:$0xf]
      %v7742 = vld [vmem:[%s7734 + $0x1c] sm:$0xf]
      %v7743 = vld [vmem:[%s7734 + $0x20] sm:$0xf]
      %v7744 = vld [vmem:[%s7734 + $0x24] sm:$0xf]
      %v7745 = vld [vmem:[%s7734 + $0x28] sm:$0xf]
      %v7746 = vld [vmem:[%s7734 + $0x2c] sm:$0xf]
      %v7747 = vld [vmem:[%s7734 + $0x30] sm:$0xf]
      %v7748 = vld [vmem:[%s7734 + $0x34] sm:$0xf]
      %v7749 = vld [vmem:[%s7734 + $0x38] sm:$0xf]
      %v7750 = vld [vmem:[%s7734 + $0x3c] sm:$0xf]
      %v7767 = vunpack.c.l.b16 %v7718
      %v7768 = vunpack.c.l.b16 %v7719
      %v7769 = vunpack.c.l.b16 %v7720
      %v7770 = vunpack.c.l.b16 %v7721
      %v7771 = vunpack.c.l.b16 %v7722
      %v7772 = vunpack.c.l.b16 %v7723
      %v7773 = vunpack.c.l.b16 %v7724
      %v7774 = vunpack.c.l.b16 %v7725
      %v7775 = vunpack.c.l.b16 %v7726
      %v7776 = vunpack.c.l.b16 %v7727
      %v7777 = vunpack.c.l.b16 %v7728
      %v7778 = vunpack.c.l.b16 %v7729
      %v7779 = vunpack.c.l.b16 %v7730
      %v7780 = vunpack.c.l.b16 %v7731
      %v7781 = vunpack.c.l.b16 %v7732
      %v7782 = vunpack.c.l.b16 %v7733
      %v7783 = vpack.c.b16 %v7768, %v7767
      %v7784 = vpack.c.b16 %v7770, %v7769
      %v7785 = vpack.c.b16 %v7772, %v7771
      %v7786 = vpack.c.b16 %v7774, %v7773
      %v7787 = vpack.c.b16 %v7776, %v7775
      %v7788 = vpack.c.b16 %v7778, %v7777
      %v7789 = vpack.c.b16 %v7780, %v7779
      %v7790 = vpack.c.b16 %v7782, %v7781
      %v7815 = vunpack.c.l.b16 %v7735
      %v7816 = vunpack.c.l.b16 %v7736
      %v7817 = vunpack.c.l.b16 %v7737
      %v7818 = vunpack.c.l.b16 %v7738
      %v7819 = vunpack.c.l.b16 %v7739
      %v7820 = vunpack.c.l.b16 %v7740
      %v7821 = vunpack.c.l.b16 %v7741
      %v7822 = vunpack.c.l.b16 %v7742
      %v7823 = vunpack.c.l.b16 %v7743
      %v7824 = vunpack.c.l.b16 %v7744
      %v7825 = vunpack.c.l.b16 %v7745
      %v7826 = vunpack.c.l.b16 %v7746
      %v7827 = vunpack.c.l.b16 %v7747
      %v7828 = vunpack.c.l.b16 %v7748
      %v7829 = vunpack.c.l.b16 %v7749
      %v7830 = vunpack.c.l.b16 %v7750
      %v7831 = vpack.c.b16 %v7816, %v7815
      %v7832 = vpack.c.b16 %v7818, %v7817
      %v7833 = vpack.c.b16 %v7820, %v7819
      %v7834 = vpack.c.b16 %v7822, %v7821
      %v7835 = vpack.c.b16 %v7824, %v7823
      %v7836 = vpack.c.b16 %v7826, %v7825
      %v7837 = vpack.c.b16 %v7828, %v7827
      %v7838 = vpack.c.b16 %v7830, %v7829
      %7847 = vmatpush.bf16.msra.mxu0 %v7838
      %7848 = vmatpush.bf16.msra.mxu0 %v7837
      %7849 = vmatpush.bf16.msra.mxu0 %v7836
      %7850 = vmatpush.bf16.msra.mxu0 %v7835
      %7851 = vmatpush.bf16.msra.mxu0 %v7834
      %7852 = vmatpush.bf16.msra.mxu0 %v7833
      %7853 = vmatpush.bf16.msra.mxu0 %v7832
      %7854 = vmatpush.bf16.msra.mxu0 %v7831
      %7855 = vmatmul.bf16.gmra.mxu0 %v7783
      %v7856 = vpop.f32.mrf.mxu0
      %v7857 = vadd.f32 0.0, %v7856
      %v7858 = vpop.f32.mrf.mxu0
      %v7859 = vadd.f32 0.0, %v7858
      %7860 = vmatmul.bf16.gmra.mxu0 %v7784
      %v7861 = vpop.f32.mrf.mxu0
      %v7862 = vadd.f32 0.0, %v7861
      %v7863 = vpop.f32.mrf.mxu0
      %v7864 = vadd.f32 0.0, %v7863
      %7865 = vmatmul.bf16.gmra.mxu0 %v7785
      %v7866 = vpop.f32.mrf.mxu0
      %v7867 = vadd.f32 0.0, %v7866
      %v7868 = vpop.f32.mrf.mxu0
      %v7869 = vadd.f32 0.0, %v7868
      %7870 = vmatmul.bf16.gmra.mxu0 %v7786
      %v7871 = vpop.f32.mrf.mxu0
      %v7872 = vadd.f32 0.0, %v7871
      %v7873 = vpop.f32.mrf.mxu0
      %v7874 = vadd.f32 0.0, %v7873
      %7875 = vmatmul.bf16.gmra.mxu0 %v7787
      %v7876 = vpop.f32.mrf.mxu0
      %v7877 = vadd.f32 0.0, %v7876
      %v7878 = vpop.f32.mrf.mxu0
      %v7879 = vadd.f32 0.0, %v7878
      %7880 = vmatmul.bf16.gmra.mxu0 %v7788
      %v7881 = vpop.f32.mrf.mxu0
      %v7882 = vadd.f32 0.0, %v7881
      %v7883 = vpop.f32.mrf.mxu0
      %v7884 = vadd.f32 0.0, %v7883
      %7885 = vmatmul.bf16.gmra.mxu0 %v7789
      %v7886 = vpop.f32.mrf.mxu0
      %v7887 = vadd.f32 0.0, %v7886
      %v7888 = vpop.f32.mrf.mxu0
      %v7889 = vadd.f32 0.0, %v7888
      %7890 = vmatmul.bf16.gmra.mxu0 %v7790
      %v7891 = vpop.f32.mrf.mxu0
      %v7892 = vadd.f32 0.0, %v7891
      %v7893 = vpop.f32.mrf.mxu0
      %v7894 = vadd.f32 0.0, %v7893
      %7895 = vdwg.mxu0
      %v7896 = vadd.f32 %v7702, %v7857
      %v7897 = vadd.f32 %v7703, %v7859
      %v7898 = vadd.f32 %v7704, %v7862
      %v7899 = vadd.f32 %v7705, %v7864
      %v7900 = vadd.f32 %v7706, %v7867
      %v7901 = vadd.f32 %v7707, %v7869
      %v7902 = vadd.f32 %v7708, %v7872
      %v7903 = vadd.f32 %v7709, %v7874
      %v7904 = vadd.f32 %v7710, %v7877
      %v7905 = vadd.f32 %v7711, %v7879
      %v7906 = vadd.f32 %v7712, %v7882
      %v7907 = vadd.f32 %v7713, %v7884
      %v7908 = vadd.f32 %v7714, %v7887
      %v7909 = vadd.f32 %v7715, %v7889
      %v7910 = vadd.f32 %v7716, %v7892
      %v7911 = vadd.f32 %v7717, %v7894
      %v7912 = vld [vmem:[%s3618] sm:$0xf]
      %v7913 = vld [vmem:[%s3618 + $0x4] sm:$0xf]
      %v7914 = vld [vmem:[%s3618 + $0x8] sm:$0x1]
      %v7915 = vld [vmem:[%s3618 + $0xc] sm:$0xf]
      %v7916 = vld [vmem:[%s3618 + $0x10] sm:$0xf]
      %v7917 = vld [vmem:[%s3618 + $0x14] sm:$0x1]
      %v7918 = vld [vmem:[%s3618 + $0x18] sm:$0xf]
      %v7919 = vld [vmem:[%s3618 + $0x1c] sm:$0xf]
      %v7920 = vld [vmem:[%s3618 + $0x20] sm:$0x1]
      %v7921 = vld [vmem:[%s3618 + $0x24] sm:$0xf]
      %v7922 = vld [vmem:[%s3618 + $0x28] sm:$0xf]
      %v7923 = vld [vmem:[%s3618 + $0x2c] sm:$0x1]
      %v7924 = vld [vmem:[%s3618 + $0x30] sm:$0xf]
      %v7925 = vld [vmem:[%s3618 + $0x34] sm:$0xf]
      %v7926 = vld [vmem:[%s3618 + $0x38] sm:$0x1]
      %v7927 = vld [vmem:[%s3618 + $0x3c] sm:$0xf]
      %v7928 = vld [vmem:[%s3618 + $0x40] sm:$0xf]
      %v7929 = vld [vmem:[%s3618 + $0x44] sm:$0x1]
      %v7930 = vld [vmem:[%s3618 + $0x48] sm:$0xf]
      %v7931 = vld [vmem:[%s3618 + $0x4c] sm:$0xf]
      %v7932 = vld [vmem:[%s3618 + $0x50] sm:$0x1]
      %v7933 = vld [vmem:[%s3618 + $0x54] sm:$0xf]
      %v7934 = vld [vmem:[%s3618 + $0x58] sm:$0xf]
      %v7935 = vld [vmem:[%s3618 + $0x5c] sm:$0x1]
      %v7937 = vshrl.u32 %v7912, 16
      %v7939 = vrot.slane %v7937, 4
      %v7940 = vshll.u32 %v7912, 16
      %v7942 = vrot.slane %v7940, 5
      %v7943 = vor.u32 %v7939, %v7942
      %v7944 = vrot.slane %v7943, 4
      %v7946 = vshll.u32 %v7913, 16
      %v7948 = vrot.slane %v7946, 5
      %v7949 = vsel %vm375, %v7944, %v7948
      %v7950 = vshrl.u32 %v7913, 16
      %v7952 = vrot.slane %v7950, 4
      %v7953 = vor.u32 %v7952, %v7948
      %v7954 = vrot.slane %v7953, 4
      %v7956 = vshll.u32 %v7914, 16
      %v7958 = vrot.slane %v7956, 5
      %v7959 = vsel %vm375, %v7954, %v7958
      %v7961 = vshrl.u32 %v7915, 16
      %v7963 = vrot.slane %v7961, 4
      %v7964 = vshll.u32 %v7915, 16
      %v7966 = vrot.slane %v7964, 5
      %v7967 = vor.u32 %v7963, %v7966
      %v7968 = vrot.slane %v7967, 4
      %v7970 = vshll.u32 %v7916, 16
      %v7972 = vrot.slane %v7970, 5
      %v7973 = vsel %vm375, %v7968, %v7972
      %v7974 = vshrl.u32 %v7916, 16
      %v7976 = vrot.slane %v7974, 4
      %v7977 = vor.u32 %v7976, %v7972
      %v7978 = vrot.slane %v7977, 4
      %v7980 = vshll.u32 %v7917, 16
      %v7982 = vrot.slane %v7980, 5
      %v7983 = vsel %vm375, %v7978, %v7982
      %v7985 = vshrl.u32 %v7918, 16
      %v7987 = vrot.slane %v7985, 4
      %v7988 = vshll.u32 %v7918, 16
      %v7990 = vrot.slane %v7988, 5
      %v7991 = vor.u32 %v7987, %v7990
      %v7992 = vrot.slane %v7991, 4
      %v7994 = vshll.u32 %v7919, 16
      %v7996 = vrot.slane %v7994, 5
      %v7997 = vsel %vm375, %v7992, %v7996
      %v7998 = vshrl.u32 %v7919, 16
      %v8000 = vrot.slane %v7998, 4
      %v8001 = vor.u32 %v8000, %v7996
      %v8002 = vrot.slane %v8001, 4
      %v8004 = vshll.u32 %v7920, 16
      %v8006 = vrot.slane %v8004, 5
      %v8007 = vsel %vm375, %v8002, %v8006
      %v8009 = vshrl.u32 %v7921, 16
      %v8011 = vrot.slane %v8009, 4
      %v8012 = vshll.u32 %v7921, 16
      %v8014 = vrot.slane %v8012, 5
      %v8015 = vor.u32 %v8011, %v8014
      %v8016 = vrot.slane %v8015, 4
      %v8018 = vshll.u32 %v7922, 16
      %v8020 = vrot.slane %v8018, 5
      %v8021 = vsel %vm375, %v8016, %v8020
      %v8022 = vshrl.u32 %v7922, 16
      %v8024 = vrot.slane %v8022, 4
      %v8025 = vor.u32 %v8024, %v8020
      %v8026 = vrot.slane %v8025, 4
      %v8028 = vshll.u32 %v7923, 16
      %v8030 = vrot.slane %v8028, 5
      %v8031 = vsel %vm375, %v8026, %v8030
      %v8033 = vshrl.u32 %v7924, 16
      %v8035 = vrot.slane %v8033, 4
      %v8036 = vshll.u32 %v7924, 16
      %v8038 = vrot.slane %v8036, 5
      %v8039 = vor.u32 %v8035, %v8038
      %v8040 = vrot.slane %v8039, 4
      %v8042 = vshll.u32 %v7925, 16
      %v8044 = vrot.slane %v8042, 5
      %v8045 = vsel %vm375, %v8040, %v8044
      %v8046 = vshrl.u32 %v7925, 16
      %v8048 = vrot.slane %v8046, 4
      %v8049 = vor.u32 %v8048, %v8044
      %v8050 = vrot.slane %v8049, 4
      %v8052 = vshll.u32 %v7926, 16
      %v8054 = vrot.slane %v8052, 5
      %v8055 = vsel %vm375, %v8050, %v8054
      %v8057 = vshrl.u32 %v7927, 16
      %v8059 = vrot.slane %v8057, 4
      %v8060 = vshll.u32 %v7927, 16
      %v8062 = vrot.slane %v8060, 5
      %v8063 = vor.u32 %v8059, %v8062
      %v8064 = vrot.slane %v8063, 4
      %v8066 = vshll.u32 %v7928, 16
      %v8068 = vrot.slane %v8066, 5
      %v8069 = vsel %vm375, %v8064, %v8068
      %v8070 = vshrl.u32 %v7928, 16
      %v8072 = vrot.slane %v8070, 4
      %v8073 = vor.u32 %v8072, %v8068
      %v8074 = vrot.slane %v8073, 4
      %v8076 = vshll.u32 %v7929, 16
      %v8078 = vrot.slane %v8076, 5
      %v8079 = vsel %vm375, %v8074, %v8078
      %v8081 = vshrl.u32 %v7930, 16
      %v8083 = vrot.slane %v8081, 4
      %v8084 = vshll.u32 %v7930, 16
      %v8086 = vrot.slane %v8084, 5
      %v8087 = vor.u32 %v8083, %v8086
      %v8088 = vrot.slane %v8087, 4
      %v8090 = vshll.u32 %v7931, 16
      %v8092 = vrot.slane %v8090, 5
      %v8093 = vsel %vm375, %v8088, %v8092
      %v8094 = vshrl.u32 %v7931, 16
      %v8096 = vrot.slane %v8094, 4
      %v8097 = vor.u32 %v8096, %v8092
      %v8098 = vrot.slane %v8097, 4
      %v8100 = vshll.u32 %v7932, 16
      %v8102 = vrot.slane %v8100, 5
      %v8103 = vsel %vm375, %v8098, %v8102
      %v8105 = vshrl.u32 %v7933, 16
      %v8107 = vrot.slane %v8105, 4
      %v8108 = vshll.u32 %v7933, 16
      %v8110 = vrot.slane %v8108, 5
      %v8111 = vor.u32 %v8107, %v8110
      %v8112 = vrot.slane %v8111, 4
      %v8114 = vshll.u32 %v7934, 16
      %v8116 = vrot.slane %v8114, 5
      %v8117 = vsel %vm375, %v8112, %v8116
      %v8118 = vshrl.u32 %v7934, 16
      %v8120 = vrot.slane %v8118, 4
      %v8121 = vor.u32 %v8120, %v8116
      %v8122 = vrot.slane %v8121, 4
      %v8124 = vshll.u32 %v7935, 16
      %v8126 = vrot.slane %v8124, 5
      %v8127 = vsel %vm375, %v8122, %v8126
      %s8128 = scalar_lea.vmem %s4, 256
      %v8129 = vld [vmem:[%s8128] sm:$0xf]
      %v8130 = vld [vmem:[%s8128 + $0x4] sm:$0xf]
      %v8131 = vld [vmem:[%s8128 + $0x8] sm:$0xf]
      %v8132 = vld [vmem:[%s8128 + $0xc] sm:$0xf]
      %v8133 = vld [vmem:[%s8128 + $0x10] sm:$0xf]
      %v8134 = vld [vmem:[%s8128 + $0x14] sm:$0xf]
      %v8135 = vld [vmem:[%s8128 + $0x18] sm:$0xf]
      %v8136 = vld [vmem:[%s8128 + $0x1c] sm:$0xf]
      %v8137 = vld [vmem:[%s8128 + $0x20] sm:$0xf]
      %v8138 = vld [vmem:[%s8128 + $0x24] sm:$0xf]
      %v8139 = vld [vmem:[%s8128 + $0x28] sm:$0xf]
      %v8140 = vld [vmem:[%s8128 + $0x2c] sm:$0xf]
      %v8141 = vld [vmem:[%s8128 + $0x30] sm:$0xf]
      %v8142 = vld [vmem:[%s8128 + $0x34] sm:$0xf]
      %v8143 = vld [vmem:[%s8128 + $0x38] sm:$0xf]
      %v8144 = vld [vmem:[%s8128 + $0x3c] sm:$0xf]
      %v8145 = vunpack.c.l.b16 %v7949
      %v8146 = vunpack.c.l.b16 %v7959
      %v8147 = vunpack.c.l.b16 %v7973
      %v8148 = vunpack.c.l.b16 %v7983
      %v8149 = vunpack.c.l.b16 %v7997
      %v8150 = vunpack.c.l.b16 %v8007
      %v8151 = vunpack.c.l.b16 %v8021
      %v8152 = vunpack.c.l.b16 %v8031
      %v8153 = vunpack.c.l.b16 %v8045
      %v8154 = vunpack.c.l.b16 %v8055
      %v8155 = vunpack.c.l.b16 %v8069
      %v8156 = vunpack.c.l.b16 %v8079
      %v8157 = vunpack.c.l.b16 %v8093
      %v8158 = vunpack.c.l.b16 %v8103
      %v8159 = vunpack.c.l.b16 %v8117
      %v8160 = vunpack.c.l.b16 %v8127
      %v8161 = vpack.c.b16 %v8146, %v8145
      %v8162 = vpack.c.b16 %v8148, %v8147
      %v8163 = vpack.c.b16 %v8150, %v8149
      %v8164 = vpack.c.b16 %v8152, %v8151
      %v8165 = vpack.c.b16 %v8154, %v8153
      %v8166 = vpack.c.b16 %v8156, %v8155
      %v8167 = vpack.c.b16 %v8158, %v8157
      %v8168 = vpack.c.b16 %v8160, %v8159
      %v8193 = vunpack.c.l.b16 %v8129
      %v8194 = vunpack.c.l.b16 %v8130
      %v8195 = vunpack.c.l.b16 %v8131
      %v8196 = vunpack.c.l.b16 %v8132
      %v8197 = vunpack.c.l.b16 %v8133
      %v8198 = vunpack.c.l.b16 %v8134
      %v8199 = vunpack.c.l.b16 %v8135
      %v8200 = vunpack.c.l.b16 %v8136
      %v8201 = vunpack.c.l.b16 %v8137
      %v8202 = vunpack.c.l.b16 %v8138
      %v8203 = vunpack.c.l.b16 %v8139
      %v8204 = vunpack.c.l.b16 %v8140
      %v8205 = vunpack.c.l.b16 %v8141
      %v8206 = vunpack.c.l.b16 %v8142
      %v8207 = vunpack.c.l.b16 %v8143
      %v8208 = vunpack.c.l.b16 %v8144
      %v8209 = vpack.c.b16 %v8194, %v8193
      %v8210 = vpack.c.b16 %v8196, %v8195
      %v8211 = vpack.c.b16 %v8198, %v8197
      %v8212 = vpack.c.b16 %v8200, %v8199
      %v8213 = vpack.c.b16 %v8202, %v8201
      %v8214 = vpack.c.b16 %v8204, %v8203
      %v8215 = vpack.c.b16 %v8206, %v8205
      %v8216 = vpack.c.b16 %v8208, %v8207
      %8225 = vmatpush.bf16.msra.mxu0 %v8216
      %8226 = vmatpush.bf16.msra.mxu0 %v8215
      %8227 = vmatpush.bf16.msra.mxu0 %v8214
      %8228 = vmatpush.bf16.msra.mxu0 %v8213
      %8229 = vmatpush.bf16.msra.mxu0 %v8212
      %8230 = vmatpush.bf16.msra.mxu0 %v8211
      %8231 = vmatpush.bf16.msra.mxu0 %v8210
      %8232 = vmatpush.bf16.msra.mxu0 %v8209
      %8233 = vmatmul.bf16.gmra.mxu0 %v8161
      %v8234 = vpop.f32.mrf.mxu0
      %v8235 = vadd.f32 0.0, %v8234
      %v8236 = vpop.f32.mrf.mxu0
      %v8237 = vadd.f32 0.0, %v8236
      %8238 = vmatmul.bf16.gmra.mxu0 %v8162
      %v8239 = vpop.f32.mrf.mxu0
      %v8240 = vadd.f32 0.0, %v8239
      %v8241 = vpop.f32.mrf.mxu0
      %v8242 = vadd.f32 0.0, %v8241
      %8243 = vmatmul.bf16.gmra.mxu0 %v8163
      %v8244 = vpop.f32.mrf.mxu0
      %v8245 = vadd.f32 0.0, %v8244
      %v8246 = vpop.f32.mrf.mxu0
      %v8247 = vadd.f32 0.0, %v8246
      %8248 = vmatmul.bf16.gmra.mxu0 %v8164
      %v8249 = vpop.f32.mrf.mxu0
      %v8250 = vadd.f32 0.0, %v8249
      %v8251 = vpop.f32.mrf.mxu0
      %v8252 = vadd.f32 0.0, %v8251
      %8253 = vmatmul.bf16.gmra.mxu0 %v8165
      %v8254 = vpop.f32.mrf.mxu0
      %v8255 = vadd.f32 0.0, %v8254
      %v8256 = vpop.f32.mrf.mxu0
      %v8257 = vadd.f32 0.0, %v8256
      %8258 = vmatmul.bf16.gmra.mxu0 %v8166
      %v8259 = vpop.f32.mrf.mxu0
      %v8260 = vadd.f32 0.0, %v8259
      %v8261 = vpop.f32.mrf.mxu0
      %v8262 = vadd.f32 0.0, %v8261
      %8263 = vmatmul.bf16.gmra.mxu0 %v8167
      %v8264 = vpop.f32.mrf.mxu0
      %v8265 = vadd.f32 0.0, %v8264
      %v8266 = vpop.f32.mrf.mxu0
      %v8267 = vadd.f32 0.0, %v8266
      %8268 = vmatmul.bf16.gmra.mxu0 %v8168
      %v8269 = vpop.f32.mrf.mxu0
      %v8270 = vadd.f32 0.0, %v8269
      %v8271 = vpop.f32.mrf.mxu0
      %v8272 = vadd.f32 0.0, %v8271
      %8273 = vdwg.mxu0
      %v8274 = vadd.f32 %v7896, %v8235
      %v8275 = vadd.f32 %v7897, %v8237
      %v8276 = vadd.f32 %v7898, %v8240
      %v8277 = vadd.f32 %v7899, %v8242
      %v8278 = vadd.f32 %v7900, %v8245
      %v8279 = vadd.f32 %v7901, %v8247
      %v8280 = vadd.f32 %v7902, %v8250
      %v8281 = vadd.f32 %v7903, %v8252
      %v8282 = vadd.f32 %v7904, %v8255
      %v8283 = vadd.f32 %v7905, %v8257
      %v8284 = vadd.f32 %v7906, %v8260
      %v8285 = vadd.f32 %v7907, %v8262
      %v8286 = vadd.f32 %v7908, %v8265
      %v8287 = vadd.f32 %v7909, %v8267
      %v8288 = vadd.f32 %v7910, %v8270
      %v8289 = vadd.f32 %v7911, %v8272
      %v8290 = vld [vmem:[%s3618] sm:$0xe]
      %v8291 = vld [vmem:[%s3618 + $0xc] sm:$0xe]
      %v8292 = vld [vmem:[%s3618 + $0x18] sm:$0xe]
      %v8293 = vld [vmem:[%s3618 + $0x24] sm:$0xe]
      %v8294 = vld [vmem:[%s3618 + $0x30] sm:$0xe]
      %v8295 = vld [vmem:[%s3618 + $0x3c] sm:$0xe]
      %v8296 = vld [vmem:[%s3618 + $0x48] sm:$0xe]
      %v8297 = vld [vmem:[%s3618 + $0x54] sm:$0xe]
      %v8322 = vrot.slane %v8290, 5
      %v8323 = vrot.slane %v8322, 4
      %v8324 = vrot.slane %v7913, 5
      %v8325 = vsel %vm1045, %v8323, %v8324
      %v8326 = vrot.slane %v8324, 4
      %v8327 = vrot.slane %v7914, 5
      %v8328 = vsel %vm1045, %v8326, %v8327
      %v8329 = vrot.slane %v8291, 5
      %v8330 = vrot.slane %v8329, 4
      %v8331 = vrot.slane %v7916, 5
      %v8332 = vsel %vm1045, %v8330, %v8331
      %v8333 = vrot.slane %v8331, 4
      %v8334 = vrot.slane %v7917, 5
      %v8335 = vsel %vm1045, %v8333, %v8334
      %v8336 = vrot.slane %v8292, 5
      %v8337 = vrot.slane %v8336, 4
      %v8338 = vrot.slane %v7919, 5
      %v8339 = vsel %vm1045, %v8337, %v8338
      %v8340 = vrot.slane %v8338, 4
      %v8341 = vrot.slane %v7920, 5
      %v8342 = vsel %vm1045, %v8340, %v8341
      %v8343 = vrot.slane %v8293, 5
      %v8344 = vrot.slane %v8343, 4
      %v8345 = vrot.slane %v7922, 5
      %v8346 = vsel %vm1045, %v8344, %v8345
      %v8347 = vrot.slane %v8345, 4
      %v8348 = vrot.slane %v7923, 5
      %v8349 = vsel %vm1045, %v8347, %v8348
      %v8350 = vrot.slane %v8294, 5
      %v8351 = vrot.slane %v8350, 4
      %v8352 = vrot.slane %v7925, 5
      %v8353 = vsel %vm1045, %v8351, %v8352
      %v8354 = vrot.slane %v8352, 4
      %v8355 = vrot.slane %v7926, 5
      %v8356 = vsel %vm1045, %v8354, %v8355
      %v8357 = vrot.slane %v8295, 5
      %v8358 = vrot.slane %v8357, 4
      %v8359 = vrot.slane %v7928, 5
      %v8360 = vsel %vm1045, %v8358, %v8359
      %v8361 = vrot.slane %v8359, 4
      %v8362 = vrot.slane %v7929, 5
      %v8363 = vsel %vm1045, %v8361, %v8362
      %v8364 = vrot.slane %v8296, 5
      %v8365 = vrot.slane %v8364, 4
      %v8366 = vrot.slane %v7931, 5
      %v8367 = vsel %vm1045, %v8365, %v8366
      %v8368 = vrot.slane %v8366, 4
      %v8369 = vrot.slane %v7932, 5
      %v8370 = vsel %vm1045, %v8368, %v8369
      %v8371 = vrot.slane %v8297, 5
      %v8372 = vrot.slane %v8371, 4
      %v8373 = vrot.slane %v7934, 5
      %v8374 = vsel %vm1045, %v8372, %v8373
      %v8375 = vrot.slane %v8373, 4
      %v8376 = vrot.slane %v7935, 5
      %v8377 = vsel %vm1045, %v8375, %v8376
      %s8378 = scalar_lea.vmem %s4, 320
      %v8379 = vld [vmem:[%s8378] sm:$0xf]
      %v8380 = vld [vmem:[%s8378 + $0x4] sm:$0xf]
      %v8381 = vld [vmem:[%s8378 + $0x8] sm:$0xf]
      %v8382 = vld [vmem:[%s8378 + $0xc] sm:$0xf]
      %v8383 = vld [vmem:[%s8378 + $0x10] sm:$0xf]
      %v8384 = vld [vmem:[%s8378 + $0x14] sm:$0xf]
      %v8385 = vld [vmem:[%s8378 + $0x18] sm:$0xf]
      %v8386 = vld [vmem:[%s8378 + $0x1c] sm:$0xf]
      %v8387 = vld [vmem:[%s8378 + $0x20] sm:$0xf]
      %v8388 = vld [vmem:[%s8378 + $0x24] sm:$0xf]
      %v8389 = vld [vmem:[%s8378 + $0x28] sm:$0xf]
      %v8390 = vld [vmem:[%s8378 + $0x2c] sm:$0xf]
      %v8391 = vld [vmem:[%s8378 + $0x30] sm:$0xf]
      %v8392 = vld [vmem:[%s8378 + $0x34] sm:$0xf]
      %v8393 = vld [vmem:[%s8378 + $0x38] sm:$0xf]
      %v8394 = vld [vmem:[%s8378 + $0x3c] sm:$0xf]
      %v8395 = vunpack.c.l.b16 %v8325
      %v8396 = vunpack.c.l.b16 %v8328
      %v8397 = vunpack.c.l.b16 %v8332
      %v8398 = vunpack.c.l.b16 %v8335
      %v8399 = vunpack.c.l.b16 %v8339
      %v8400 = vunpack.c.l.b16 %v8342
      %v8401 = vunpack.c.l.b16 %v8346
      %v8402 = vunpack.c.l.b16 %v8349
      %v8403 = vunpack.c.l.b16 %v8353
      %v8404 = vunpack.c.l.b16 %v8356
      %v8405 = vunpack.c.l.b16 %v8360
      %v8406 = vunpack.c.l.b16 %v8363
      %v8407 = vunpack.c.l.b16 %v8367
      %v8408 = vunpack.c.l.b16 %v8370
      %v8409 = vunpack.c.l.b16 %v8374
      %v8410 = vunpack.c.l.b16 %v8377
      %v8411 = vpack.c.b16 %v8396, %v8395
      %v8412 = vpack.c.b16 %v8398, %v8397
      %v8413 = vpack.c.b16 %v8400, %v8399
      %v8414 = vpack.c.b16 %v8402, %v8401
      %v8415 = vpack.c.b16 %v8404, %v8403
      %v8416 = vpack.c.b16 %v8406, %v8405
      %v8417 = vpack.c.b16 %v8408, %v8407
      %v8418 = vpack.c.b16 %v8410, %v8409
      %v8443 = vunpack.c.l.b16 %v8379
      %v8444 = vunpack.c.l.b16 %v8380
      %v8445 = vunpack.c.l.b16 %v8381
      %v8446 = vunpack.c.l.b16 %v8382
      %v8447 = vunpack.c.l.b16 %v8383
      %v8448 = vunpack.c.l.b16 %v8384
      %v8449 = vunpack.c.l.b16 %v8385
      %v8450 = vunpack.c.l.b16 %v8386
      %v8451 = vunpack.c.l.b16 %v8387
      %v8452 = vunpack.c.l.b16 %v8388
      %v8453 = vunpack.c.l.b16 %v8389
      %v8454 = vunpack.c.l.b16 %v8390
      %v8455 = vunpack.c.l.b16 %v8391
      %v8456 = vunpack.c.l.b16 %v8392
      %v8457 = vunpack.c.l.b16 %v8393
      %v8458 = vunpack.c.l.b16 %v8394
      %v8459 = vpack.c.b16 %v8444, %v8443
      %v8460 = vpack.c.b16 %v8446, %v8445
      %v8461 = vpack.c.b16 %v8448, %v8447
      %v8462 = vpack.c.b16 %v8450, %v8449
      %v8463 = vpack.c.b16 %v8452, %v8451
      %v8464 = vpack.c.b16 %v8454, %v8453
      %v8465 = vpack.c.b16 %v8456, %v8455
      %v8466 = vpack.c.b16 %v8458, %v8457
      %8475 = vmatpush.bf16.msra.mxu0 %v8466
      %8476 = vmatpush.bf16.msra.mxu0 %v8465
      %8477 = vmatpush.bf16.msra.mxu0 %v8464
      %8478 = vmatpush.bf16.msra.mxu0 %v8463
      %8479 = vmatpush.bf16.msra.mxu0 %v8462
      %8480 = vmatpush.bf16.msra.mxu0 %v8461
      %8481 = vmatpush.bf16.msra.mxu0 %v8460
      %8482 = vmatpush.bf16.msra.mxu0 %v8459
      %8483 = vmatmul.bf16.gmra.mxu0 %v8411
      %v8484 = vpop.f32.mrf.mxu0
      %v8485 = vadd.f32 0.0, %v8484
      %v8486 = vpop.f32.mrf.mxu0
      %v8487 = vadd.f32 0.0, %v8486
      %8488 = vmatmul.bf16.gmra.mxu0 %v8412
      %v8489 = vpop.f32.mrf.mxu0
      %v8490 = vadd.f32 0.0, %v8489
      %v8491 = vpop.f32.mrf.mxu0
      %v8492 = vadd.f32 0.0, %v8491
      %8493 = vmatmul.bf16.gmra.mxu0 %v8413
      %v8494 = vpop.f32.mrf.mxu0
      %v8495 = vadd.f32 0.0, %v8494
      %v8496 = vpop.f32.mrf.mxu0
      %v8497 = vadd.f32 0.0, %v8496
      %8498 = vmatmul.bf16.gmra.mxu0 %v8414
      %v8499 = vpop.f32.mrf.mxu0
      %v8500 = vadd.f32 0.0, %v8499
      %v8501 = vpop.f32.mrf.mxu0
      %v8502 = vadd.f32 0.0, %v8501
      %8503 = vmatmul.bf16.gmra.mxu0 %v8415
      %v8504 = vpop.f32.mrf.mxu0
      %v8505 = vadd.f32 0.0, %v8504
      %v8506 = vpop.f32.mrf.mxu0
      %v8507 = vadd.f32 0.0, %v8506
      %8508 = vmatmul.bf16.gmra.mxu0 %v8416
      %v8509 = vpop.f32.mrf.mxu0
      %v8510 = vadd.f32 0.0, %v8509
      %v8511 = vpop.f32.mrf.mxu0
      %v8512 = vadd.f32 0.0, %v8511
      %8513 = vmatmul.bf16.gmra.mxu0 %v8417
      %v8514 = vpop.f32.mrf.mxu0
      %v8515 = vadd.f32 0.0, %v8514
      %v8516 = vpop.f32.mrf.mxu0
      %v8517 = vadd.f32 0.0, %v8516
      %8518 = vmatmul.bf16.gmra.mxu0 %v8418
      %v8519 = vpop.f32.mrf.mxu0
      %v8520 = vadd.f32 0.0, %v8519
      %v8521 = vpop.f32.mrf.mxu0
      %v8522 = vadd.f32 0.0, %v8521
      %8523 = vdwg.mxu0
      %v8524 = vadd.f32 %v8274, %v8485
      %v8525 = vadd.f32 %v8275, %v8487
      %v8526 = vadd.f32 %v8276, %v8490
      %v8527 = vadd.f32 %v8277, %v8492
      %v8528 = vadd.f32 %v8278, %v8495
      %v8529 = vadd.f32 %v8279, %v8497
      %v8530 = vadd.f32 %v8280, %v8500
      %v8531 = vadd.f32 %v8281, %v8502
      %v8532 = vadd.f32 %v8282, %v8505
      %v8533 = vadd.f32 %v8283, %v8507
      %v8534 = vadd.f32 %v8284, %v8510
      %v8535 = vadd.f32 %v8285, %v8512
      %v8536 = vadd.f32 %v8286, %v8515
      %v8537 = vadd.f32 %v8287, %v8517
      %v8538 = vadd.f32 %v8288, %v8520
      %v8539 = vadd.f32 %v8289, %v8522
      %s8540 = smul.u32 %s2426, 3
      %s8541 = smul.addr %s8540, 4
      %s8542 = scalar_lea.vmem [#allocation2], %s8541
      %v8543 = vld [vmem:[%s8542] sm:$0xf]
      %v8544 = vld [vmem:[%s8542 + $0x4] sm:$0xf]
      %v8545 = vld [vmem:[%s8542 + $0xc] sm:$0xf]
      %v8546 = vld [vmem:[%s8542 + $0x10] sm:$0xf]
      %v8547 = vld [vmem:[%s8542 + $0x18] sm:$0xf]
      %v8548 = vld [vmem:[%s8542 + $0x1c] sm:$0xf]
      %v8549 = vld [vmem:[%s8542 + $0x24] sm:$0xf]
      %v8550 = vld [vmem:[%s8542 + $0x28] sm:$0xf]
      %v8551 = vld [vmem:[%s8542 + $0x30] sm:$0xf]
      %v8552 = vld [vmem:[%s8542 + $0x34] sm:$0xf]
      %v8553 = vld [vmem:[%s8542 + $0x3c] sm:$0xf]
      %v8554 = vld [vmem:[%s8542 + $0x40] sm:$0xf]
      %v8555 = vld [vmem:[%s8542 + $0x48] sm:$0xf]
      %v8556 = vld [vmem:[%s8542 + $0x4c] sm:$0xf]
      %v8557 = vld [vmem:[%s8542 + $0x54] sm:$0xf]
      %v8558 = vld [vmem:[%s8542 + $0x58] sm:$0xf]
      %s8559 = scalar_lea.vmem %s4, 384
      %v8560 = vld [vmem:[%s8559] sm:$0xf]
      %v8561 = vld [vmem:[%s8559 + $0x4] sm:$0xf]
      %v8562 = vld [vmem:[%s8559 + $0x8] sm:$0xf]
      %v8563 = vld [vmem:[%s8559 + $0xc] sm:$0xf]
      %v8564 = vld [vmem:[%s8559 + $0x10] sm:$0xf]
      %v8565 = vld [vmem:[%s8559 + $0x14] sm:$0xf]
      %v8566 = vld [vmem:[%s8559 + $0x18] sm:$0xf]
      %v8567 = vld [vmem:[%s8559 + $0x1c] sm:$0xf]
      %v8568 = vld [vmem:[%s8559 + $0x20] sm:$0xf]
      %v8569 = vld [vmem:[%s8559 + $0x24] sm:$0xf]
      %v8570 = vld [vmem:[%s8559 + $0x28] sm:$0xf]
      %v8571 = vld [vmem:[%s8559 + $0x2c] sm:$0xf]
      %v8572 = vld [vmem:[%s8559 + $0x30] sm:$0xf]
      %v8573 = vld [vmem:[%s8559 + $0x34] sm:$0xf]
      %v8574 = vld [vmem:[%s8559 + $0x38] sm:$0xf]
      %v8575 = vld [vmem:[%s8559 + $0x3c] sm:$0xf]
      %v8592 = vunpack.c.l.b16 %v8543
      %v8593 = vunpack.c.l.b16 %v8544
      %v8594 = vunpack.c.l.b16 %v8545
      %v8595 = vunpack.c.l.b16 %v8546
      %v8596 = vunpack.c.l.b16 %v8547
      %v8597 = vunpack.c.l.b16 %v8548
      %v8598 = vunpack.c.l.b16 %v8549
      %v8599 = vunpack.c.l.b16 %v8550
      %v8600 = vunpack.c.l.b16 %v8551
      %v8601 = vunpack.c.l.b16 %v8552
      %v8602 = vunpack.c.l.b16 %v8553
      %v8603 = vunpack.c.l.b16 %v8554
      %v8604 = vunpack.c.l.b16 %v8555
      %v8605 = vunpack.c.l.b16 %v8556
      %v8606 = vunpack.c.l.b16 %v8557
      %v8607 = vunpack.c.l.b16 %v8558
      %v8608 = vpack.c.b16 %v8593, %v8592
      %v8609 = vpack.c.b16 %v8595, %v8594
      %v8610 = vpack.c.b16 %v8597, %v8596
      %v8611 = vpack.c.b16 %v8599, %v8598
      %v8612 = vpack.c.b16 %v8601, %v8600
      %v8613 = vpack.c.b16 %v8603, %v8602
      %v8614 = vpack.c.b16 %v8605, %v8604
      %v8615 = vpack.c.b16 %v8607, %v8606
      %v8640 = vunpack.c.l.b16 %v8560
      %v8641 = vunpack.c.l.b16 %v8561
      %v8642 = vunpack.c.l.b16 %v8562
      %v8643 = vunpack.c.l.b16 %v8563
      %v8644 = vunpack.c.l.b16 %v8564
      %v8645 = vunpack.c.l.b16 %v8565
      %v8646 = vunpack.c.l.b16 %v8566
      %v8647 = vunpack.c.l.b16 %v8567
      %v8648 = vunpack.c.l.b16 %v8568
      %v8649 = vunpack.c.l.b16 %v8569
      %v8650 = vunpack.c.l.b16 %v8570
      %v8651 = vunpack.c.l.b16 %v8571
      %v8652 = vunpack.c.l.b16 %v8572
      %v8653 = vunpack.c.l.b16 %v8573
      %v8654 = vunpack.c.l.b16 %v8574
      %v8655 = vunpack.c.l.b16 %v8575
      %v8656 = vpack.c.b16 %v8641, %v8640
      %v8657 = vpack.c.b16 %v8643, %v8642
      %v8658 = vpack.c.b16 %v8645, %v8644
      %v8659 = vpack.c.b16 %v8647, %v8646
      %v8660 = vpack.c.b16 %v8649, %v8648
      %v8661 = vpack.c.b16 %v8651, %v8650
      %v8662 = vpack.c.b16 %v8653, %v8652
      %v8663 = vpack.c.b16 %v8655, %v8654
      %8672 = vmatpush.bf16.msra.mxu0 %v8663
      %8673 = vmatpush.bf16.msra.mxu0 %v8662
      %8674 = vmatpush.bf16.msra.mxu0 %v8661
      %8675 = vmatpush.bf16.msra.mxu0 %v8660
      %8676 = vmatpush.bf16.msra.mxu0 %v8659
      %8677 = vmatpush.bf16.msra.mxu0 %v8658
      %8678 = vmatpush.bf16.msra.mxu0 %v8657
      %8679 = vmatpush.bf16.msra.mxu0 %v8656
      %8680 = vmatmul.bf16.gmra.mxu0 %v8608
      %v8681 = vpop.f32.mrf.mxu0
      %v8682 = vadd.f32 0.0, %v8681
      %v8683 = vpop.f32.mrf.mxu0
      %v8684 = vadd.f32 0.0, %v8683
      %8685 = vmatmul.bf16.gmra.mxu0 %v8609
      %v8686 = vpop.f32.mrf.mxu0
      %v8687 = vadd.f32 0.0, %v8686
      %v8688 = vpop.f32.mrf.mxu0
      %v8689 = vadd.f32 0.0, %v8688
      %8690 = vmatmul.bf16.gmra.mxu0 %v8610
      %v8691 = vpop.f32.mrf.mxu0
      %v8692 = vadd.f32 0.0, %v8691
      %v8693 = vpop.f32.mrf.mxu0
      %v8694 = vadd.f32 0.0, %v8693
      %8695 = vmatmul.bf16.gmra.mxu0 %v8611
      %v8696 = vpop.f32.mrf.mxu0
      %v8697 = vadd.f32 0.0, %v8696
      %v8698 = vpop.f32.mrf.mxu0
      %v8699 = vadd.f32 0.0, %v8698
      %8700 = vmatmul.bf16.gmra.mxu0 %v8612
      %v8701 = vpop.f32.mrf.mxu0
      %v8702 = vadd.f32 0.0, %v8701
      %v8703 = vpop.f32.mrf.mxu0
      %v8704 = vadd.f32 0.0, %v8703
      %8705 = vmatmul.bf16.gmra.mxu0 %v8613
      %v8706 = vpop.f32.mrf.mxu0
      %v8707 = vadd.f32 0.0, %v8706
      %v8708 = vpop.f32.mrf.mxu0
      %v8709 = vadd.f32 0.0, %v8708
      %8710 = vmatmul.bf16.gmra.mxu0 %v8614
      %v8711 = vpop.f32.mrf.mxu0
      %v8712 = vadd.f32 0.0, %v8711
      %v8713 = vpop.f32.mrf.mxu0
      %v8714 = vadd.f32 0.0, %v8713
      %8715 = vmatmul.bf16.gmra.mxu0 %v8615
      %v8716 = vpop.f32.mrf.mxu0
      %v8717 = vadd.f32 0.0, %v8716
      %v8718 = vpop.f32.mrf.mxu0
      %v8719 = vadd.f32 0.0, %v8718
      %8720 = vdwg.mxu0
      %v8721 = vadd.f32 %v8524, %v8682
      %v8722 = vadd.f32 %v8525, %v8684
      %v8723 = vadd.f32 %v8526, %v8687
      %v8724 = vadd.f32 %v8527, %v8689
      %v8725 = vadd.f32 %v8528, %v8692
      %v8726 = vadd.f32 %v8529, %v8694
      %v8727 = vadd.f32 %v8530, %v8697
      %v8728 = vadd.f32 %v8531, %v8699
      %v8729 = vadd.f32 %v8532, %v8702
      %v8730 = vadd.f32 %v8533, %v8704
      %v8731 = vadd.f32 %v8534, %v8707
      %v8732 = vadd.f32 %v8535, %v8709
      %v8733 = vadd.f32 %v8536, %v8712
      %v8734 = vadd.f32 %v8537, %v8714
      %v8735 = vadd.f32 %v8538, %v8717
      %v8736 = vadd.f32 %v8539, %v8719
      %v8737 = vld [vmem:[%s8542] sm:$0xf]
      %v8738 = vld [vmem:[%s8542 + $0x4] sm:$0xf]
      %v8739 = vld [vmem:[%s8542 + $0x8] sm:$0x1]
      %v8740 = vld [vmem:[%s8542 + $0xc] sm:$0xf]
      %v8741 = vld [vmem:[%s8542 + $0x10] sm:$0xf]
      %v8742 = vld [vmem:[%s8542 + $0x14] sm:$0x1]
      %v8743 = vld [vmem:[%s8542 + $0x18] sm:$0xf]
      %v8744 = vld [vmem:[%s8542 + $0x1c] sm:$0xf]
      %v8745 = vld [vmem:[%s8542 + $0x20] sm:$0x1]
      %v8746 = vld [vmem:[%s8542 + $0x24] sm:$0xf]
      %v8747 = vld [vmem:[%s8542 + $0x28] sm:$0xf]
      %v8748 = vld [vmem:[%s8542 + $0x2c] sm:$0x1]
      %v8749 = vld [vmem:[%s8542 + $0x30] sm:$0xf]
      %v8750 = vld [vmem:[%s8542 + $0x34] sm:$0xf]
      %v8751 = vld [vmem:[%s8542 + $0x38] sm:$0x1]
      %v8752 = vld [vmem:[%s8542 + $0x3c] sm:$0xf]
      %v8753 = vld [vmem:[%s8542 + $0x40] sm:$0xf]
      %v8754 = vld [vmem:[%s8542 + $0x44] sm:$0x1]
      %v8755 = vld [vmem:[%s8542 + $0x48] sm:$0xf]
      %v8756 = vld [vmem:[%s8542 + $0x4c] sm:$0xf]
      %v8757 = vld [vmem:[%s8542 + $0x50] sm:$0x1]
      %v8758 = vld [vmem:[%s8542 + $0x54] sm:$0xf]
      %v8759 = vld [vmem:[%s8542 + $0x58] sm:$0xf]
      %v8760 = vld [vmem:[%s8542 + $0x5c] sm:$0x1]
      %v8762 = vshrl.u32 %v8737, 16
      %v8764 = vrot.slane %v8762, 4
      %v8765 = vshll.u32 %v8737, 16
      %v8767 = vrot.slane %v8765, 5
      %v8768 = vor.u32 %v8764, %v8767
      %v8769 = vrot.slane %v8768, 4
      %v8771 = vshll.u32 %v8738, 16
      %v8773 = vrot.slane %v8771, 5
      %v8774 = vsel %vm375, %v8769, %v8773
      %v8775 = vshrl.u32 %v8738, 16
      %v8777 = vrot.slane %v8775, 4
      %v8778 = vor.u32 %v8777, %v8773
      %v8779 = vrot.slane %v8778, 4
      %v8781 = vshll.u32 %v8739, 16
      %v8783 = vrot.slane %v8781, 5
      %v8784 = vsel %vm375, %v8779, %v8783
      %v8786 = vshrl.u32 %v8740, 16
      %v8788 = vrot.slane %v8786, 4
      %v8789 = vshll.u32 %v8740, 16
      %v8791 = vrot.slane %v8789, 5
      %v8792 = vor.u32 %v8788, %v8791
      %v8793 = vrot.slane %v8792, 4
      %v8795 = vshll.u32 %v8741, 16
      %v8797 = vrot.slane %v8795, 5
      %v8798 = vsel %vm375, %v8793, %v8797
      %v8799 = vshrl.u32 %v8741, 16
      %v8801 = vrot.slane %v8799, 4
      %v8802 = vor.u32 %v8801, %v8797
      %v8803 = vrot.slane %v8802, 4
      %v8805 = vshll.u32 %v8742, 16
      %v8807 = vrot.slane %v8805, 5
      %v8808 = vsel %vm375, %v8803, %v8807
      %v8810 = vshrl.u32 %v8743, 16
      %v8812 = vrot.slane %v8810, 4
      %v8813 = vshll.u32 %v8743, 16
      %v8815 = vrot.slane %v8813, 5
      %v8816 = vor.u32 %v8812, %v8815
      %v8817 = vrot.slane %v8816, 4
      %v8819 = vshll.u32 %v8744, 16
      %v8821 = vrot.slane %v8819, 5
      %v8822 = vsel %vm375, %v8817, %v8821
      %v8823 = vshrl.u32 %v8744, 16
      %v8825 = vrot.slane %v8823, 4
      %v8826 = vor.u32 %v8825, %v8821
      %v8827 = vrot.slane %v8826, 4
      %v8829 = vshll.u32 %v8745, 16
      %v8831 = vrot.slane %v8829, 5
      %v8832 = vsel %vm375, %v8827, %v8831
      %v8834 = vshrl.u32 %v8746, 16
      %v8836 = vrot.slane %v8834, 4
      %v8837 = vshll.u32 %v8746, 16
      %v8839 = vrot.slane %v8837, 5
      %v8840 = vor.u32 %v8836, %v8839
      %v8841 = vrot.slane %v8840, 4
      %v8843 = vshll.u32 %v8747, 16
      %v8845 = vrot.slane %v8843, 5
      %v8846 = vsel %vm375, %v8841, %v8845
      %v8847 = vshrl.u32 %v8747, 16
      %v8849 = vrot.slane %v8847, 4
      %v8850 = vor.u32 %v8849, %v8845
      %v8851 = vrot.slane %v8850, 4
      %v8853 = vshll.u32 %v8748, 16
      %v8855 = vrot.slane %v8853, 5
      %v8856 = vsel %vm375, %v8851, %v8855
      %v8858 = vshrl.u32 %v8749, 16
      %v8860 = vrot.slane %v8858, 4
      %v8861 = vshll.u32 %v8749, 16
      %v8863 = vrot.slane %v8861, 5
      %v8864 = vor.u32 %v8860, %v8863
      %v8865 = vrot.slane %v8864, 4
      %v8867 = vshll.u32 %v8750, 16
      %v8869 = vrot.slane %v8867, 5
      %v8870 = vsel %vm375, %v8865, %v8869
      %v8871 = vshrl.u32 %v8750, 16
      %v8873 = vrot.slane %v8871, 4
      %v8874 = vor.u32 %v8873, %v8869
      %v8875 = vrot.slane %v8874, 4
      %v8877 = vshll.u32 %v8751, 16
      %v8879 = vrot.slane %v8877, 5
      %v8880 = vsel %vm375, %v8875, %v8879
      %v8882 = vshrl.u32 %v8752, 16
      %v8884 = vrot.slane %v8882, 4
      %v8885 = vshll.u32 %v8752, 16
      %v8887 = vrot.slane %v8885, 5
      %v8888 = vor.u32 %v8884, %v8887
      %v8889 = vrot.slane %v8888, 4
      %v8891 = vshll.u32 %v8753, 16
      %v8893 = vrot.slane %v8891, 5
      %v8894 = vsel %vm375, %v8889, %v8893
      %v8895 = vshrl.u32 %v8753, 16
      %v8897 = vrot.slane %v8895, 4
      %v8898 = vor.u32 %v8897, %v8893
      %v8899 = vrot.slane %v8898, 4
      %v8901 = vshll.u32 %v8754, 16
      %v8903 = vrot.slane %v8901, 5
      %v8904 = vsel %vm375, %v8899, %v8903
      %v8906 = vshrl.u32 %v8755, 16
      %v8908 = vrot.slane %v8906, 4
      %v8909 = vshll.u32 %v8755, 16
      %v8911 = vrot.slane %v8909, 5
      %v8912 = vor.u32 %v8908, %v8911
      %v8913 = vrot.slane %v8912, 4
      %v8915 = vshll.u32 %v8756, 16
      %v8917 = vrot.slane %v8915, 5
      %v8918 = vsel %vm375, %v8913, %v8917
      %v8919 = vshrl.u32 %v8756, 16
      %v8921 = vrot.slane %v8919, 4
      %v8922 = vor.u32 %v8921, %v8917
      %v8923 = vrot.slane %v8922, 4
      %v8925 = vshll.u32 %v8757, 16
      %v8927 = vrot.slane %v8925, 5
      %v8928 = vsel %vm375, %v8923, %v8927
      %v8930 = vshrl.u32 %v8758, 16
      %v8932 = vrot.slane %v8930, 4
      %v8933 = vshll.u32 %v8758, 16
      %v8935 = vrot.slane %v8933, 5
      %v8936 = vor.u32 %v8932, %v8935
      %v8937 = vrot.slane %v8936, 4
      %v8939 = vshll.u32 %v8759, 16
      %v8941 = vrot.slane %v8939, 5
      %v8942 = vsel %vm375, %v8937, %v8941
      %v8943 = vshrl.u32 %v8759, 16
      %v8945 = vrot.slane %v8943, 4
      %v8946 = vor.u32 %v8945, %v8941
      %v8947 = vrot.slane %v8946, 4
      %v8949 = vshll.u32 %v8760, 16
      %v8951 = vrot.slane %v8949, 5
      %v8952 = vsel %vm375, %v8947, %v8951
      %s8953 = scalar_lea.vmem %s4, 448
      %v8954 = vld [vmem:[%s8953] sm:$0xf]
      %v8955 = vld [vmem:[%s8953 + $0x4] sm:$0xf]
      %v8956 = vld [vmem:[%s8953 + $0x8] sm:$0xf]
      %v8957 = vld [vmem:[%s8953 + $0xc] sm:$0xf]
      %v8958 = vld [vmem:[%s8953 + $0x10] sm:$0xf]
      %v8959 = vld [vmem:[%s8953 + $0x14] sm:$0xf]
      %v8960 = vld [vmem:[%s8953 + $0x18] sm:$0xf]
      %v8961 = vld [vmem:[%s8953 + $0x1c] sm:$0xf]
      %v8962 = vld [vmem:[%s8953 + $0x20] sm:$0xf]
      %v8963 = vld [vmem:[%s8953 + $0x24] sm:$0xf]
      %v8964 = vld [vmem:[%s8953 + $0x28] sm:$0xf]
      %v8965 = vld [vmem:[%s8953 + $0x2c] sm:$0xf]
      %v8966 = vld [vmem:[%s8953 + $0x30] sm:$0xf]
      %v8967 = vld [vmem:[%s8953 + $0x34] sm:$0xf]
      %v8968 = vld [vmem:[%s8953 + $0x38] sm:$0xf]
      %v8969 = vld [vmem:[%s8953 + $0x3c] sm:$0xf]
      %v8970 = vunpack.c.l.b16 %v8774
      %v8971 = vunpack.c.l.b16 %v8784
      %v8972 = vunpack.c.l.b16 %v8798
      %v8973 = vunpack.c.l.b16 %v8808
      %v8974 = vunpack.c.l.b16 %v8822
      %v8975 = vunpack.c.l.b16 %v8832
      %v8976 = vunpack.c.l.b16 %v8846
      %v8977 = vunpack.c.l.b16 %v8856
      %v8978 = vunpack.c.l.b16 %v8870
      %v8979 = vunpack.c.l.b16 %v8880
      %v8980 = vunpack.c.l.b16 %v8894
      %v8981 = vunpack.c.l.b16 %v8904
      %v8982 = vunpack.c.l.b16 %v8918
      %v8983 = vunpack.c.l.b16 %v8928
      %v8984 = vunpack.c.l.b16 %v8942
      %v8985 = vunpack.c.l.b16 %v8952
      %v8986 = vpack.c.b16 %v8971, %v8970
      %v8987 = vpack.c.b16 %v8973, %v8972
      %v8988 = vpack.c.b16 %v8975, %v8974
      %v8989 = vpack.c.b16 %v8977, %v8976
      %v8990 = vpack.c.b16 %v8979, %v8978
      %v8991 = vpack.c.b16 %v8981, %v8980
      %v8992 = vpack.c.b16 %v8983, %v8982
      %v8993 = vpack.c.b16 %v8985, %v8984
      %v9018 = vunpack.c.l.b16 %v8954
      %v9019 = vunpack.c.l.b16 %v8955
      %v9020 = vunpack.c.l.b16 %v8956
      %v9021 = vunpack.c.l.b16 %v8957
      %v9022 = vunpack.c.l.b16 %v8958
      %v9023 = vunpack.c.l.b16 %v8959
      %v9024 = vunpack.c.l.b16 %v8960
      %v9025 = vunpack.c.l.b16 %v8961
      %v9026 = vunpack.c.l.b16 %v8962
      %v9027 = vunpack.c.l.b16 %v8963
      %v9028 = vunpack.c.l.b16 %v8964
      %v9029 = vunpack.c.l.b16 %v8965
      %v9030 = vunpack.c.l.b16 %v8966
      %v9031 = vunpack.c.l.b16 %v8967
      %v9032 = vunpack.c.l.b16 %v8968
      %v9033 = vunpack.c.l.b16 %v8969
      %v9034 = vpack.c.b16 %v9019, %v9018
      %v9035 = vpack.c.b16 %v9021, %v9020
      %v9036 = vpack.c.b16 %v9023, %v9022
      %v9037 = vpack.c.b16 %v9025, %v9024
      %v9038 = vpack.c.b16 %v9027, %v9026
      %v9039 = vpack.c.b16 %v9029, %v9028
      %v9040 = vpack.c.b16 %v9031, %v9030
      %v9041 = vpack.c.b16 %v9033, %v9032
      %9050 = vmatpush.bf16.msra.mxu0 %v9041
      %9051 = vmatpush.bf16.msra.mxu0 %v9040
      %9052 = vmatpush.bf16.msra.mxu0 %v9039
      %9053 = vmatpush.bf16.msra.mxu0 %v9038
      %9054 = vmatpush.bf16.msra.mxu0 %v9037
      %9055 = vmatpush.bf16.msra.mxu0 %v9036
      %9056 = vmatpush.bf16.msra.mxu0 %v9035
      %9057 = vmatpush.bf16.msra.mxu0 %v9034
      %9058 = vmatmul.bf16.gmra.mxu0 %v8986
      %v9059 = vpop.f32.mrf.mxu0
      %v9060 = vadd.f32 0.0, %v9059
      %v9061 = vpop.f32.mrf.mxu0
      %v9062 = vadd.f32 0.0, %v9061
      %9063 = vmatmul.bf16.gmra.mxu0 %v8987
      %v9064 = vpop.f32.mrf.mxu0
      %v9065 = vadd.f32 0.0, %v9064
      %v9066 = vpop.f32.mrf.mxu0
      %v9067 = vadd.f32 0.0, %v9066
      %9068 = vmatmul.bf16.gmra.mxu0 %v8988
      %v9069 = vpop.f32.mrf.mxu0
      %v9070 = vadd.f32 0.0, %v9069
      %v9071 = vpop.f32.mrf.mxu0
      %v9072 = vadd.f32 0.0, %v9071
      %9073 = vmatmul.bf16.gmra.mxu0 %v8989
      %v9074 = vpop.f32.mrf.mxu0
      %v9075 = vadd.f32 0.0, %v9074
      %v9076 = vpop.f32.mrf.mxu0
      %v9077 = vadd.f32 0.0, %v9076
      %9078 = vmatmul.bf16.gmra.mxu0 %v8990
      %v9079 = vpop.f32.mrf.mxu0
      %v9080 = vadd.f32 0.0, %v9079
      %v9081 = vpop.f32.mrf.mxu0
      %v9082 = vadd.f32 0.0, %v9081
      %9083 = vmatmul.bf16.gmra.mxu0 %v8991
      %v9084 = vpop.f32.mrf.mxu0
      %v9085 = vadd.f32 0.0, %v9084
      %v9086 = vpop.f32.mrf.mxu0
      %v9087 = vadd.f32 0.0, %v9086
      %9088 = vmatmul.bf16.gmra.mxu0 %v8992
      %v9089 = vpop.f32.mrf.mxu0
      %v9090 = vadd.f32 0.0, %v9089
      %v9091 = vpop.f32.mrf.mxu0
      %v9092 = vadd.f32 0.0, %v9091
      %9093 = vmatmul.bf16.gmra.mxu0 %v8993
      %v9094 = vpop.f32.mrf.mxu0
      %v9095 = vadd.f32 0.0, %v9094
      %v9096 = vpop.f32.mrf.mxu0
      %v9097 = vadd.f32 0.0, %v9096
      %9098 = vdwg.mxu0
      %v9099 = vadd.f32 %v8721, %v9060
      %v9100 = vadd.f32 %v8722, %v9062
      %v9101 = vadd.f32 %v8723, %v9065
      %v9102 = vadd.f32 %v8724, %v9067
      %v9103 = vadd.f32 %v8725, %v9070
      %v9104 = vadd.f32 %v8726, %v9072
      %v9105 = vadd.f32 %v8727, %v9075
      %v9106 = vadd.f32 %v8728, %v9077
      %v9107 = vadd.f32 %v8729, %v9080
      %v9108 = vadd.f32 %v8730, %v9082
      %v9109 = vadd.f32 %v8731, %v9085
      %v9110 = vadd.f32 %v8732, %v9087
      %v9111 = vadd.f32 %v8733, %v9090
      %v9112 = vadd.f32 %v8734, %v9092
      %v9113 = vadd.f32 %v8735, %v9095
      %v9114 = vadd.f32 %v8736, %v9097
      %v9115 = vld [vmem:[%s8542] sm:$0xe]
      %v9116 = vld [vmem:[%s8542 + $0xc] sm:$0xe]
      %v9117 = vld [vmem:[%s8542 + $0x18] sm:$0xe]
      %v9118 = vld [vmem:[%s8542 + $0x24] sm:$0xe]
      %v9119 = vld [vmem:[%s8542 + $0x30] sm:$0xe]
      %v9120 = vld [vmem:[%s8542 + $0x3c] sm:$0xe]
      %v9121 = vld [vmem:[%s8542 + $0x48] sm:$0xe]
      %v9122 = vld [vmem:[%s8542 + $0x54] sm:$0xe]
      %v9147 = vrot.slane %v9115, 5
      %v9148 = vrot.slane %v9147, 4
      %v9149 = vrot.slane %v8738, 5
      %v9150 = vsel %vm1045, %v9148, %v9149
      %v9151 = vrot.slane %v9149, 4
      %v9152 = vrot.slane %v8739, 5
      %v9153 = vsel %vm1045, %v9151, %v9152
      %v9154 = vrot.slane %v9116, 5
      %v9155 = vrot.slane %v9154, 4
      %v9156 = vrot.slane %v8741, 5
      %v9157 = vsel %vm1045, %v9155, %v9156
      %v9158 = vrot.slane %v9156, 4
      %v9159 = vrot.slane %v8742, 5
      %v9160 = vsel %vm1045, %v9158, %v9159
      %v9161 = vrot.slane %v9117, 5
      %v9162 = vrot.slane %v9161, 4
      %v9163 = vrot.slane %v8744, 5
      %v9164 = vsel %vm1045, %v9162, %v9163
      %v9165 = vrot.slane %v9163, 4
      %v9166 = vrot.slane %v8745, 5
      %v9167 = vsel %vm1045, %v9165, %v9166
      %v9168 = vrot.slane %v9118, 5
      %v9169 = vrot.slane %v9168, 4
      %v9170 = vrot.slane %v8747, 5
      %v9171 = vsel %vm1045, %v9169, %v9170
      %v9172 = vrot.slane %v9170, 4
      %v9173 = vrot.slane %v8748, 5
      %v9174 = vsel %vm1045, %v9172, %v9173
      %v9175 = vrot.slane %v9119, 5
      %v9176 = vrot.slane %v9175, 4
      %v9177 = vrot.slane %v8750, 5
      %v9178 = vsel %vm1045, %v9176, %v9177
      %v9179 = vrot.slane %v9177, 4
      %v9180 = vrot.slane %v8751, 5
      %v9181 = vsel %vm1045, %v9179, %v9180
      %v9182 = vrot.slane %v9120, 5
      %v9183 = vrot.slane %v9182, 4
      %v9184 = vrot.slane %v8753, 5
      %v9185 = vsel %vm1045, %v9183, %v9184
      %v9186 = vrot.slane %v9184, 4
      %v9187 = vrot.slane %v8754, 5
      %v9188 = vsel %vm1045, %v9186, %v9187
      %v9189 = vrot.slane %v9121, 5
      %v9190 = vrot.slane %v9189, 4
      %v9191 = vrot.slane %v8756, 5
      %v9192 = vsel %vm1045, %v9190, %v9191
      %v9193 = vrot.slane %v9191, 4
      %v9194 = vrot.slane %v8757, 5
      %v9195 = vsel %vm1045, %v9193, %v9194
      %v9196 = vrot.slane %v9122, 5
      %v9197 = vrot.slane %v9196, 4
      %v9198 = vrot.slane %v8759, 5
      %v9199 = vsel %vm1045, %v9197, %v9198
      %v9200 = vrot.slane %v9198, 4
      %v9201 = vrot.slane %v8760, 5
      %v9202 = vsel %vm1045, %v9200, %v9201
      %s9203 = scalar_lea.vmem %s4, 512
      %v9204 = vld [vmem:[%s9203] sm:$0xf]
      %v9205 = vld [vmem:[%s9203 + $0x4] sm:$0xf]
      %v9206 = vld [vmem:[%s9203 + $0x8] sm:$0xf]
      %v9207 = vld [vmem:[%s9203 + $0xc] sm:$0xf]
      %v9208 = vld [vmem:[%s9203 + $0x10] sm:$0xf]
      %v9209 = vld [vmem:[%s9203 + $0x14] sm:$0xf]
      %v9210 = vld [vmem:[%s9203 + $0x18] sm:$0xf]
      %v9211 = vld [vmem:[%s9203 + $0x1c] sm:$0xf]
      %v9212 = vld [vmem:[%s9203 + $0x20] sm:$0xf]
      %v9213 = vld [vmem:[%s9203 + $0x24] sm:$0xf]
      %v9214 = vld [vmem:[%s9203 + $0x28] sm:$0xf]
      %v9215 = vld [vmem:[%s9203 + $0x2c] sm:$0xf]
      %v9216 = vld [vmem:[%s9203 + $0x30] sm:$0xf]
      %v9217 = vld [vmem:[%s9203 + $0x34] sm:$0xf]
      %v9218 = vld [vmem:[%s9203 + $0x38] sm:$0xf]
      %v9219 = vld [vmem:[%s9203 + $0x3c] sm:$0xf]
      %v9220 = vunpack.c.l.b16 %v9150
      %v9221 = vunpack.c.l.b16 %v9153
      %v9222 = vunpack.c.l.b16 %v9157
      %v9223 = vunpack.c.l.b16 %v9160
      %v9224 = vunpack.c.l.b16 %v9164
      %v9225 = vunpack.c.l.b16 %v9167
      %v9226 = vunpack.c.l.b16 %v9171
      %v9227 = vunpack.c.l.b16 %v9174
      %v9228 = vunpack.c.l.b16 %v9178
      %v9229 = vunpack.c.l.b16 %v9181
      %v9230 = vunpack.c.l.b16 %v9185
      %v9231 = vunpack.c.l.b16 %v9188
      %v9232 = vunpack.c.l.b16 %v9192
      %v9233 = vunpack.c.l.b16 %v9195
      %v9234 = vunpack.c.l.b16 %v9199
      %v9235 = vunpack.c.l.b16 %v9202
      %v9236 = vpack.c.b16 %v9221, %v9220
      %v9237 = vpack.c.b16 %v9223, %v9222
      %v9238 = vpack.c.b16 %v9225, %v9224
      %v9239 = vpack.c.b16 %v9227, %v9226
      %v9240 = vpack.c.b16 %v9229, %v9228
      %v9241 = vpack.c.b16 %v9231, %v9230
      %v9242 = vpack.c.b16 %v9233, %v9232
      %v9243 = vpack.c.b16 %v9235, %v9234
      %v9268 = vunpack.c.l.b16 %v9204
      %v9269 = vunpack.c.l.b16 %v9205
      %v9270 = vunpack.c.l.b16 %v9206
      %v9271 = vunpack.c.l.b16 %v9207
      %v9272 = vunpack.c.l.b16 %v9208
      %v9273 = vunpack.c.l.b16 %v9209
      %v9274 = vunpack.c.l.b16 %v9210
      %v9275 = vunpack.c.l.b16 %v9211
      %v9276 = vunpack.c.l.b16 %v9212
      %v9277 = vunpack.c.l.b16 %v9213
      %v9278 = vunpack.c.l.b16 %v9214
      %v9279 = vunpack.c.l.b16 %v9215
      %v9280 = vunpack.c.l.b16 %v9216
      %v9281 = vunpack.c.l.b16 %v9217
      %v9282 = vunpack.c.l.b16 %v9218
      %v9283 = vunpack.c.l.b16 %v9219
      %v9284 = vpack.c.b16 %v9269, %v9268
      %v9285 = vpack.c.b16 %v9271, %v9270
      %v9286 = vpack.c.b16 %v9273, %v9272
      %v9287 = vpack.c.b16 %v9275, %v9274
      %v9288 = vpack.c.b16 %v9277, %v9276
      %v9289 = vpack.c.b16 %v9279, %v9278
      %v9290 = vpack.c.b16 %v9281, %v9280
      %v9291 = vpack.c.b16 %v9283, %v9282
      %9300 = vmatpush.bf16.msra.mxu0 %v9291
      %9301 = vmatpush.bf16.msra.mxu0 %v9290
      %9302 = vmatpush.bf16.msra.mxu0 %v9289
      %9303 = vmatpush.bf16.msra.mxu0 %v9288
      %9304 = vmatpush.bf16.msra.mxu0 %v9287
      %9305 = vmatpush.bf16.msra.mxu0 %v9286
      %9306 = vmatpush.bf16.msra.mxu0 %v9285
      %9307 = vmatpush.bf16.msra.mxu0 %v9284
      %9308 = vmatmul.bf16.gmra.mxu0 %v9236
      %v9309 = vpop.f32.mrf.mxu0
      %v9310 = vadd.f32 0.0, %v9309
      %v9311 = vpop.f32.mrf.mxu0
      %v9312 = vadd.f32 0.0, %v9311
      %9313 = vmatmul.bf16.gmra.mxu0 %v9237
      %v9314 = vpop.f32.mrf.mxu0
      %v9315 = vadd.f32 0.0, %v9314
      %v9316 = vpop.f32.mrf.mxu0
      %v9317 = vadd.f32 0.0, %v9316
      %9318 = vmatmul.bf16.gmra.mxu0 %v9238
      %v9319 = vpop.f32.mrf.mxu0
      %v9320 = vadd.f32 0.0, %v9319
      %v9321 = vpop.f32.mrf.mxu0
      %v9322 = vadd.f32 0.0, %v9321
      %9323 = vmatmul.bf16.gmra.mxu0 %v9239
      %v9324 = vpop.f32.mrf.mxu0
      %v9325 = vadd.f32 0.0, %v9324
      %v9326 = vpop.f32.mrf.mxu0
      %v9327 = vadd.f32 0.0, %v9326
      %9328 = vmatmul.bf16.gmra.mxu0 %v9240
      %v9329 = vpop.f32.mrf.mxu0
      %v9330 = vadd.f32 0.0, %v9329
      %v9331 = vpop.f32.mrf.mxu0
      %v9332 = vadd.f32 0.0, %v9331
      %9333 = vmatmul.bf16.gmra.mxu0 %v9241
      %v9334 = vpop.f32.mrf.mxu0
      %v9335 = vadd.f32 0.0, %v9334
      %v9336 = vpop.f32.mrf.mxu0
      %v9337 = vadd.f32 0.0, %v9336
      %9338 = vmatmul.bf16.gmra.mxu0 %v9242
      %v9339 = vpop.f32.mrf.mxu0
      %v9340 = vadd.f32 0.0, %v9339
      %v9341 = vpop.f32.mrf.mxu0
      %v9342 = vadd.f32 0.0, %v9341
      %9343 = vmatmul.bf16.gmra.mxu0 %v9243
      %v9344 = vpop.f32.mrf.mxu0
      %v9345 = vadd.f32 0.0, %v9344
      %v9346 = vpop.f32.mrf.mxu0
      %v9347 = vadd.f32 0.0, %v9346
      %9348 = vdwg.mxu0
      %v9349 = vadd.f32 %v9099, %v9310
      %v9350 = vadd.f32 %v9100, %v9312
      %v9351 = vadd.f32 %v9101, %v9315
      %v9352 = vadd.f32 %v9102, %v9317
      %v9353 = vadd.f32 %v9103, %v9320
      %v9354 = vadd.f32 %v9104, %v9322
      %v9355 = vadd.f32 %v9105, %v9325
      %v9356 = vadd.f32 %v9106, %v9327
      %v9357 = vadd.f32 %v9107, %v9330
      %v9358 = vadd.f32 %v9108, %v9332
      %v9359 = vadd.f32 %v9109, %v9335
      %v9360 = vadd.f32 %v9110, %v9337
      %v9361 = vadd.f32 %v9111, %v9340
      %v9362 = vadd.f32 %v9112, %v9342
      %v9363 = vadd.f32 %v9113, %v9345
      %v9364 = vadd.f32 %v9114, %v9347
      %v9365 = vld [vmem:[%s1335] sm:$0xe]
      %v9366 = vld [vmem:[%s1335 + $0x4] sm:$0xf]
      %v9367 = vld [vmem:[%s1335 + $0x8] sm:$0x1]
      %v9368 = vld [vmem:[%s1335 + $0x10] sm:$0xe]
      %v9369 = vld [vmem:[%s1335 + $0x14] sm:$0xf]
      %v9370 = vld [vmem:[%s1335 + $0x18] sm:$0x1]
      %v9371 = vld [vmem:[%s1335 + $0x20] sm:$0xe]
      %v9372 = vld [vmem:[%s1335 + $0x24] sm:$0xf]
      %v9373 = vld [vmem:[%s1335 + $0x28] sm:$0x1]
      %v9374 = vld [vmem:[%s1335 + $0x30] sm:$0xe]
      %v9375 = vld [vmem:[%s1335 + $0x34] sm:$0xf]
      %v9376 = vld [vmem:[%s1335 + $0x38] sm:$0x1]
      %v9377 = vld [vmem:[%s1335 + $0x40] sm:$0xe]
      %v9378 = vld [vmem:[%s1335 + $0x44] sm:$0xf]
      %v9379 = vld [vmem:[%s1335 + $0x48] sm:$0x1]
      %v9380 = vld [vmem:[%s1335 + $0x50] sm:$0xe]
      %v9381 = vld [vmem:[%s1335 + $0x54] sm:$0xf]
      %v9382 = vld [vmem:[%s1335 + $0x58] sm:$0x1]
      %v9383 = vld [vmem:[%s1335 + $0x60] sm:$0xe]
      %v9384 = vld [vmem:[%s1335 + $0x64] sm:$0xf]
      %v9385 = vld [vmem:[%s1335 + $0x68] sm:$0x1]
      %v9386 = vld [vmem:[%s1335 + $0x70] sm:$0xe]
      %v9387 = vld [vmem:[%s1335 + $0x74] sm:$0xf]
      %v9388 = vld [vmem:[%s1335 + $0x78] sm:$0x1]
      %v9389 = vunpack.c.l.bf16 %v9365
      %v9390 = vunpack.c.l.bf16 %v9366
      %v9391 = vunpack.c.l.bf16 %v9367
      %v9392 = vunpack.c.l.bf16 %v9368
      %v9393 = vunpack.c.l.bf16 %v9369
      %v9394 = vunpack.c.l.bf16 %v9370
      %v9395 = vunpack.c.l.bf16 %v9371
      %v9396 = vunpack.c.l.bf16 %v9372
      %v9397 = vunpack.c.l.bf16 %v9373
      %v9398 = vunpack.c.l.bf16 %v9374
      %v9399 = vunpack.c.l.bf16 %v9375
      %v9400 = vunpack.c.l.bf16 %v9376
      %v9401 = vunpack.c.l.bf16 %v9377
      %v9402 = vunpack.c.l.bf16 %v9378
      %v9403 = vunpack.c.l.bf16 %v9379
      %v9404 = vunpack.c.l.bf16 %v9380
      %v9405 = vunpack.c.l.bf16 %v9381
      %v9406 = vunpack.c.l.bf16 %v9382
      %v9407 = vunpack.c.l.bf16 %v9383
      %v9408 = vunpack.c.l.bf16 %v9384
      %v9409 = vunpack.c.l.bf16 %v9385
      %v9410 = vunpack.c.l.bf16 %v9386
      %v9411 = vunpack.c.l.bf16 %v9387
      %v9412 = vunpack.c.l.bf16 %v9388
      %v9414 = vperm.slane %v320, 0
      %v9416 = vmul.f32 %v9349, %v9414
      %v9417 = vmul.f32 %v9350, %v9414
      %v9418 = vmul.f32 %v9351, %v9414
      %v9419 = vmul.f32 %v9352, %v9414
      %v9420 = vmul.f32 %v9353, %v9414
      %v9421 = vmul.f32 %v9354, %v9414
      %v9422 = vmul.f32 %v9355, %v9414
      %v9423 = vmul.f32 %v9356, %v9414
      %v9424 = vmul.f32 %v9357, %v9414
      %v9425 = vmul.f32 %v9358, %v9414
      %v9426 = vmul.f32 %v9359, %v9414
      %v9427 = vmul.f32 %v9360, %v9414
      %v9428 = vmul.f32 %v9361, %v9414
      %v9429 = vmul.f32 %v9362, %v9414
      %v9430 = vmul.f32 %v9363, %v9414
      %v9431 = vmul.f32 %v9364, %v9414
      %v9433 = vperm.slane %v321, 0
      %v9435 = vadd.f32 %v9416, %v9433
      %v9436 = vadd.f32 %v9417, %v9433
      %v9437 = vadd.f32 %v9418, %v9433
      %v9438 = vadd.f32 %v9419, %v9433
      %v9439 = vadd.f32 %v9420, %v9433
      %v9440 = vadd.f32 %v9421, %v9433
      %v9441 = vadd.f32 %v9422, %v9433
      %v9442 = vadd.f32 %v9423, %v9433
      %v9443 = vadd.f32 %v9424, %v9433
      %v9444 = vadd.f32 %v9425, %v9433
      %v9445 = vadd.f32 %v9426, %v9433
      %v9446 = vadd.f32 %v9427, %v9433
      %v9447 = vadd.f32 %v9428, %v9433
      %v9448 = vadd.f32 %v9429, %v9433
      %v9449 = vadd.f32 %v9430, %v9433
      %v9450 = vadd.f32 %v9431, %v9433
      %vm9475 = vcmask 1045504
      %v9476 = vrot.slane %v9389, 2
      %v9477 = vrot.slane %v9390, 2
      %v9478 = vsel %vm9475, %v9476, %v9477
      %v9479 = vrot.slane %v9391, 2
      %v9480 = vsel %vm9475, %v9477, %v9479
      %v9481 = vrot.slane %v9392, 2
      %v9482 = vrot.slane %v9393, 2
      %v9483 = vsel %vm9475, %v9481, %v9482
      %v9484 = vrot.slane %v9394, 2
      %v9485 = vsel %vm9475, %v9482, %v9484
      %v9486 = vrot.slane %v9395, 2
      %v9487 = vrot.slane %v9396, 2
      %v9488 = vsel %vm9475, %v9486, %v9487
      %v9489 = vrot.slane %v9397, 2
      %v9490 = vsel %vm9475, %v9487, %v9489
      %v9491 = vrot.slane %v9398, 2
      %v9492 = vrot.slane %v9399, 2
      %v9493 = vsel %vm9475, %v9491, %v9492
      %v9494 = vrot.slane %v9400, 2
      %v9495 = vsel %vm9475, %v9492, %v9494
      %v9496 = vrot.slane %v9401, 2
      %v9497 = vrot.slane %v9402, 2
      %v9498 = vsel %vm9475, %v9496, %v9497
      %v9499 = vrot.slane %v9403, 2
      %v9500 = vsel %vm9475, %v9497, %v9499
      %v9501 = vrot.slane %v9404, 2
      %v9502 = vrot.slane %v9405, 2
      %v9503 = vsel %vm9475, %v9501, %v9502
      %v9504 = vrot.slane %v9406, 2
      %v9505 = vsel %vm9475, %v9502, %v9504
      %v9506 = vrot.slane %v9407, 2
      %v9507 = vrot.slane %v9408, 2
      %v9508 = vsel %vm9475, %v9506, %v9507
      %v9509 = vrot.slane %v9409, 2
      %v9510 = vsel %vm9475, %v9507, %v9509
      %v9511 = vrot.slane %v9410, 2
      %v9512 = vrot.slane %v9411, 2
      %v9513 = vsel %vm9475, %v9511, %v9512
      %v9514 = vrot.slane %v9412, 2
      %v9515 = vsel %vm9475, %v9512, %v9514
      %v9532 = vadd.f32 %v9435, %v9478
      %v9533 = vadd.f32 %v9436, %v9480
      %v9534 = vadd.f32 %v9437, %v9483
      %v9535 = vadd.f32 %v9438, %v9485
      %v9536 = vadd.f32 %v9439, %v9488
      %v9537 = vadd.f32 %v9440, %v9490
      %v9538 = vadd.f32 %v9441, %v9493
      %v9539 = vadd.f32 %v9442, %v9495
      %v9540 = vadd.f32 %v9443, %v9498
      %v9541 = vadd.f32 %v9444, %v9500
      %v9542 = vadd.f32 %v9445, %v9503
      %v9543 = vadd.f32 %v9446, %v9505
      %v9544 = vadd.f32 %v9447, %v9508
      %v9545 = vadd.f32 %v9448, %v9510
      %v9546 = vadd.f32 %v9449, %v9513
      %v9547 = vadd.f32 %v9450, %v9515
      %v9548 = vmax.f32 %v9532, 0.0
      %v9549 = vmax.f32 %v9533, 0.0
      %v9550 = vmax.f32 %v9534, 0.0
      %v9551 = vmax.f32 %v9535, 0.0
      %v9552 = vmax.f32 %v9536, 0.0
      %v9553 = vmax.f32 %v9537, 0.0
      %v9554 = vmax.f32 %v9538, 0.0
      %v9555 = vmax.f32 %v9539, 0.0
      %v9556 = vmax.f32 %v9540, 0.0
      %v9557 = vmax.f32 %v9541, 0.0
      %v9558 = vmax.f32 %v9542, 0.0
      %v9559 = vmax.f32 %v9543, 0.0
      %v9560 = vmax.f32 %v9544, 0.0
      %v9561 = vmax.f32 %v9545, 0.0
      %v9562 = vmax.f32 %v9546, 0.0
      %v9563 = vmax.f32 %v9547, 0.0
      %s9564 = smul.u32 0, 16
      %s9565 = scalar_lea.vmem %s278, %s9564
      %9566 = vst [vmem:[%s9565] sm:$0xff] %v9548
      %9567 = vst [vmem:[%s9565 + $0x8] sm:$0xff] %v9549
      %9568 = vst [vmem:[%s9565 + $0x10] sm:$0xff] %v9550
      %9569 = vst [vmem:[%s9565 + $0x18] sm:$0xff] %v9551
      %9570 = vst [vmem:[%s9565 + $0x20] sm:$0xff] %v9552
      %9571 = vst [vmem:[%s9565 + $0x28] sm:$0xff] %v9553
      %9572 = vst [vmem:[%s9565 + $0x30] sm:$0xff] %v9554
      %9573 = vst [vmem:[%s9565 + $0x38] sm:$0xff] %v9555
      %9574 = vst [vmem:[%s9565 + $0x40] sm:$0xff] %v9556
      %9575 = vst [vmem:[%s9565 + $0x48] sm:$0xff] %v9557
      %9576 = vst [vmem:[%s9565 + $0x50] sm:$0xff] %v9558
      %9577 = vst [vmem:[%s9565 + $0x58] sm:$0xff] %v9559
      %9578 = vst [vmem:[%s9565 + $0x60] sm:$0xff] %v9560
      %9579 = vst [vmem:[%s9565 + $0x68] sm:$0xff] %v9561
      %9580 = vst [vmem:[%s9565 + $0x70] sm:$0xff] %v9562
      %9581 = vst [vmem:[%s9565 + $0x78] sm:$0xff] %v9563
      %s9582 = smul.u32 8, 3
      %s9583 = smul.addr %s9582, 4
      %s9584 = scalar_lea.vmem [#allocation2], %s9583
      %v9585 = vld [vmem:[%s9584] sm:$0xf]
      %v9586 = vld [vmem:[%s9584 + $0x4] sm:$0xf]
      %v9587 = vld [vmem:[%s9584 + $0xc] sm:$0xf]
      %v9588 = vld [vmem:[%s9584 + $0x10] sm:$0xf]
      %v9589 = vld [vmem:[%s9584 + $0x18] sm:$0xf]
      %v9590 = vld [vmem:[%s9584 + $0x1c] sm:$0xf]
      %v9591 = vld [vmem:[%s9584 + $0x24] sm:$0xf]
      %v9592 = vld [vmem:[%s9584 + $0x28] sm:$0xf]
      %v9593 = vld [vmem:[%s9584 + $0x30] sm:$0xf]
      %v9594 = vld [vmem:[%s9584 + $0x34] sm:$0xf]
      %v9595 = vld [vmem:[%s9584 + $0x3c] sm:$0xf]
      %v9596 = vld [vmem:[%s9584 + $0x40] sm:$0xf]
      %v9597 = vld [vmem:[%s9584 + $0x48] sm:$0xf]
      %v9598 = vld [vmem:[%s9584 + $0x4c] sm:$0xf]
      %v9599 = vld [vmem:[%s9584 + $0x54] sm:$0xf]
      %v9600 = vld [vmem:[%s9584 + $0x58] sm:$0xf]
      %v9601 = vld [vmem:[%s4] sm:$0xf]
      %v9602 = vld [vmem:[%s4 + $0x4] sm:$0xf]
      %v9603 = vld [vmem:[%s4 + $0x8] sm:$0xf]
      %v9604 = vld [vmem:[%s4 + $0xc] sm:$0xf]
      %v9605 = vld [vmem:[%s4 + $0x10] sm:$0xf]
      %v9606 = vld [vmem:[%s4 + $0x14] sm:$0xf]
      %v9607 = vld [vmem:[%s4 + $0x18] sm:$0xf]
      %v9608 = vld [vmem:[%s4 + $0x1c] sm:$0xf]
      %v9609 = vld [vmem:[%s4 + $0x20] sm:$0xf]
      %v9610 = vld [vmem:[%s4 + $0x24] sm:$0xf]
      %v9611 = vld [vmem:[%s4 + $0x28] sm:$0xf]
      %v9612 = vld [vmem:[%s4 + $0x2c] sm:$0xf]
      %v9613 = vld [vmem:[%s4 + $0x30] sm:$0xf]
      %v9614 = vld [vmem:[%s4 + $0x34] sm:$0xf]
      %v9615 = vld [vmem:[%s4 + $0x38] sm:$0xf]
      %v9616 = vld [vmem:[%s4 + $0x3c] sm:$0xf]
      %v9617 = vld [vmem:[%s9584 + $0x8] sm:$0x1]
      %v9618 = vld [vmem:[%s9584 + $0x14] sm:$0x1]
      %v9619 = vld [vmem:[%s9584 + $0x20] sm:$0x1]
      %v9620 = vld [vmem:[%s9584 + $0x2c] sm:$0x1]
      %v9621 = vld [vmem:[%s9584 + $0x38] sm:$0x1]
      %v9622 = vld [vmem:[%s9584 + $0x44] sm:$0x1]
      %v9623 = vld [vmem:[%s9584 + $0x50] sm:$0x1]
      %v9624 = vld [vmem:[%s9584 + $0x5c] sm:$0x1]
      %v9626 = vshrl.u32 %v9585, 16
      %v9628 = vrot.slane %v9626, 4
      %v9629 = vshll.u32 %v9585, 16
      %v9631 = vrot.slane %v9629, 5
      %v9632 = vor.u32 %v9628, %v9631
      %v9633 = vrot.slane %v9632, 4
      %v9635 = vshll.u32 %v9586, 16
      %v9637 = vrot.slane %v9635, 5
      %v9638 = vsel %vm375, %v9633, %v9637
      %v9639 = vshrl.u32 %v9586, 16
      %v9641 = vrot.slane %v9639, 4
      %v9642 = vor.u32 %v9641, %v9637
      %v9643 = vrot.slane %v9642, 4
      %v9645 = vshll.u32 %v9617, 16
      %v9647 = vrot.slane %v9645, 5
      %v9648 = vsel %vm375, %v9643, %v9647
      %v9650 = vshrl.u32 %v9587, 16
      %v9652 = vrot.slane %v9650, 4
      %v9653 = vshll.u32 %v9587, 16
      %v9655 = vrot.slane %v9653, 5
      %v9656 = vor.u32 %v9652, %v9655
      %v9657 = vrot.slane %v9656, 4
      %v9659 = vshll.u32 %v9588, 16
      %v9661 = vrot.slane %v9659, 5
      %v9662 = vsel %vm375, %v9657, %v9661
      %v9663 = vshrl.u32 %v9588, 16
      %v9665 = vrot.slane %v9663, 4
      %v9666 = vor.u32 %v9665, %v9661
      %v9667 = vrot.slane %v9666, 4
      %v9669 = vshll.u32 %v9618, 16
      %v9671 = vrot.slane %v9669, 5
      %v9672 = vsel %vm375, %v9667, %v9671
      %v9674 = vshrl.u32 %v9589, 16
      %v9676 = vrot.slane %v9674, 4
      %v9677 = vshll.u32 %v9589, 16
      %v9679 = vrot.slane %v9677, 5
      %v9680 = vor.u32 %v9676, %v9679
      %v9681 = vrot.slane %v9680, 4
      %v9683 = vshll.u32 %v9590, 16
      %v9685 = vrot.slane %v9683, 5
      %v9686 = vsel %vm375, %v9681, %v9685
      %v9687 = vshrl.u32 %v9590, 16
      %v9689 = vrot.slane %v9687, 4
      %v9690 = vor.u32 %v9689, %v9685
      %v9691 = vrot.slane %v9690, 4
      %v9693 = vshll.u32 %v9619, 16
      %v9695 = vrot.slane %v9693, 5
      %v9696 = vsel %vm375, %v9691, %v9695
      %v9698 = vshrl.u32 %v9591, 16
      %v9700 = vrot.slane %v9698, 4
      %v9701 = vshll.u32 %v9591, 16
      %v9703 = vrot.slane %v9701, 5
      %v9704 = vor.u32 %v9700, %v9703
      %v9705 = vrot.slane %v9704, 4
      %v9707 = vshll.u32 %v9592, 16
      %v9709 = vrot.slane %v9707, 5
      %v9710 = vsel %vm375, %v9705, %v9709
      %v9711 = vshrl.u32 %v9592, 16
      %v9713 = vrot.slane %v9711, 4
      %v9714 = vor.u32 %v9713, %v9709
      %v9715 = vrot.slane %v9714, 4
      %v9717 = vshll.u32 %v9620, 16
      %v9719 = vrot.slane %v9717, 5
      %v9720 = vsel %vm375, %v9715, %v9719
      %v9722 = vshrl.u32 %v9593, 16
      %v9724 = vrot.slane %v9722, 4
      %v9725 = vshll.u32 %v9593, 16
      %v9727 = vrot.slane %v9725, 5
      %v9728 = vor.u32 %v9724, %v9727
      %v9729 = vrot.slane %v9728, 4
      %v9731 = vshll.u32 %v9594, 16
      %v9733 = vrot.slane %v9731, 5
      %v9734 = vsel %vm375, %v9729, %v9733
      %v9735 = vshrl.u32 %v9594, 16
      %v9737 = vrot.slane %v9735, 4
      %v9738 = vor.u32 %v9737, %v9733
      %v9739 = vrot.slane %v9738, 4
      %v9741 = vshll.u32 %v9621, 16
      %v9743 = vrot.slane %v9741, 5
      %v9744 = vsel %vm375, %v9739, %v9743
      %v9746 = vshrl.u32 %v9595, 16
      %v9748 = vrot.slane %v9746, 4
      %v9749 = vshll.u32 %v9595, 16
      %v9751 = vrot.slane %v9749, 5
      %v9752 = vor.u32 %v9748, %v9751
      %v9753 = vrot.slane %v9752, 4
      %v9755 = vshll.u32 %v9596, 16
      %v9757 = vrot.slane %v9755, 5
      %v9758 = vsel %vm375, %v9753, %v9757
      %v9759 = vshrl.u32 %v9596, 16
      %v9761 = vrot.slane %v9759, 4
      %v9762 = vor.u32 %v9761, %v9757
      %v9763 = vrot.slane %v9762, 4
      %v9765 = vshll.u32 %v9622, 16
      %v9767 = vrot.slane %v9765, 5
      %v9768 = vsel %vm375, %v9763, %v9767
      %v9770 = vshrl.u32 %v9597, 16
      %v9772 = vrot.slane %v9770, 4
      %v9773 = vshll.u32 %v9597, 16
      %v9775 = vrot.slane %v9773, 5
      %v9776 = vor.u32 %v9772, %v9775
      %v9777 = vrot.slane %v9776, 4
      %v9779 = vshll.u32 %v9598, 16
      %v9781 = vrot.slane %v9779, 5
      %v9782 = vsel %vm375, %v9777, %v9781
      %v9783 = vshrl.u32 %v9598, 16
      %v9785 = vrot.slane %v9783, 4
      %v9786 = vor.u32 %v9785, %v9781
      %v9787 = vrot.slane %v9786, 4
      %v9789 = vshll.u32 %v9623, 16
      %v9791 = vrot.slane %v9789, 5
      %v9792 = vsel %vm375, %v9787, %v9791
      %v9794 = vshrl.u32 %v9599, 16
      %v9796 = vrot.slane %v9794, 4
      %v9797 = vshll.u32 %v9599, 16
      %v9799 = vrot.slane %v9797, 5
      %v9800 = vor.u32 %v9796, %v9799
      %v9801 = vrot.slane %v9800, 4
      %v9803 = vshll.u32 %v9600, 16
      %v9805 = vrot.slane %v9803, 5
      %v9806 = vsel %vm375, %v9801, %v9805
      %v9807 = vshrl.u32 %v9600, 16
      %v9809 = vrot.slane %v9807, 4
      %v9810 = vor.u32 %v9809, %v9805
      %v9811 = vrot.slane %v9810, 4
      %v9813 = vshll.u32 %v9624, 16
      %v9815 = vrot.slane %v9813, 5
      %v9816 = vsel %vm375, %v9811, %v9815
      %v9817 = vld [vmem:[%s7185] sm:$0xf]
      %v9818 = vld [vmem:[%s7185 + $0x4] sm:$0xf]
      %v9819 = vld [vmem:[%s7185 + $0x8] sm:$0xf]
      %v9820 = vld [vmem:[%s7185 + $0xc] sm:$0xf]
      %v9821 = vld [vmem:[%s7185 + $0x10] sm:$0xf]
      %v9822 = vld [vmem:[%s7185 + $0x14] sm:$0xf]
      %v9823 = vld [vmem:[%s7185 + $0x18] sm:$0xf]
      %v9824 = vld [vmem:[%s7185 + $0x1c] sm:$0xf]
      %v9825 = vld [vmem:[%s7185 + $0x20] sm:$0xf]
      %v9826 = vld [vmem:[%s7185 + $0x24] sm:$0xf]
      %v9827 = vld [vmem:[%s7185 + $0x28] sm:$0xf]
      %v9828 = vld [vmem:[%s7185 + $0x2c] sm:$0xf]
      %v9829 = vld [vmem:[%s7185 + $0x30] sm:$0xf]
      %v9830 = vld [vmem:[%s7185 + $0x34] sm:$0xf]
      %v9831 = vld [vmem:[%s7185 + $0x38] sm:$0xf]
      %v9832 = vld [vmem:[%s7185 + $0x3c] sm:$0xf]
      %v9833 = vunpack.c.l.b16 %v9638
      %v9834 = vunpack.c.l.b16 %v9648
      %v9835 = vunpack.c.l.b16 %v9662
      %v9836 = vunpack.c.l.b16 %v9672
      %v9837 = vunpack.c.l.b16 %v9686
      %v9838 = vunpack.c.l.b16 %v9696
      %v9839 = vunpack.c.l.b16 %v9710
      %v9840 = vunpack.c.l.b16 %v9720
      %v9841 = vunpack.c.l.b16 %v9734
      %v9842 = vunpack.c.l.b16 %v9744
      %v9843 = vunpack.c.l.b16 %v9758
      %v9844 = vunpack.c.l.b16 %v9768
      %v9845 = vunpack.c.l.b16 %v9782
      %v9846 = vunpack.c.l.b16 %v9792
      %v9847 = vunpack.c.l.b16 %v9806
      %v9848 = vunpack.c.l.b16 %v9816
      %v9849 = vpack.c.b16 %v9834, %v9833
      %v9850 = vpack.c.b16 %v9836, %v9835
      %v9851 = vpack.c.b16 %v9838, %v9837
      %v9852 = vpack.c.b16 %v9840, %v9839
      %v9853 = vpack.c.b16 %v9842, %v9841
      %v9854 = vpack.c.b16 %v9844, %v9843
      %v9855 = vpack.c.b16 %v9846, %v9845
      %v9856 = vpack.c.b16 %v9848, %v9847
      %v9881 = vunpack.c.l.b16 %v9817
      %v9882 = vunpack.c.l.b16 %v9818
      %v9883 = vunpack.c.l.b16 %v9819
      %v9884 = vunpack.c.l.b16 %v9820
      %v9885 = vunpack.c.l.b16 %v9821
      %v9886 = vunpack.c.l.b16 %v9822
      %v9887 = vunpack.c.l.b16 %v9823
      %v9888 = vunpack.c.l.b16 %v9824
      %v9889 = vunpack.c.l.b16 %v9825
      %v9890 = vunpack.c.l.b16 %v9826
      %v9891 = vunpack.c.l.b16 %v9827
      %v9892 = vunpack.c.l.b16 %v9828
      %v9893 = vunpack.c.l.b16 %v9829
      %v9894 = vunpack.c.l.b16 %v9830
      %v9895 = vunpack.c.l.b16 %v9831
      %v9896 = vunpack.c.l.b16 %v9832
      %v9897 = vpack.c.b16 %v9882, %v9881
      %v9898 = vpack.c.b16 %v9884, %v9883
      %v9899 = vpack.c.b16 %v9886, %v9885
      %v9900 = vpack.c.b16 %v9888, %v9887
      %v9901 = vpack.c.b16 %v9890, %v9889
      %v9902 = vpack.c.b16 %v9892, %v9891
      %v9903 = vpack.c.b16 %v9894, %v9893
      %v9904 = vpack.c.b16 %v9896, %v9895
      %9913 = vmatpush.bf16.msra.mxu0 %v9904
      %9914 = vmatpush.bf16.msra.mxu0 %v9903
      %9915 = vmatpush.bf16.msra.mxu0 %v9902
      %9916 = vmatpush.bf16.msra.mxu0 %v9901
      %9917 = vmatpush.bf16.msra.mxu0 %v9900
      %9918 = vmatpush.bf16.msra.mxu0 %v9899
      %9919 = vmatpush.bf16.msra.mxu0 %v9898
      %9920 = vmatpush.bf16.msra.mxu0 %v9897
      %9921 = vmatmul.bf16.gmra.mxu0 %v9849
      %v9922 = vpop.f32.mrf.mxu0
      %v9923 = vadd.f32 0.0, %v9922
      %v9924 = vpop.f32.mrf.mxu0
      %v9925 = vadd.f32 0.0, %v9924
      %9926 = vmatmul.bf16.gmra.mxu0 %v9850
      %v9927 = vpop.f32.mrf.mxu0
      %v9928 = vadd.f32 0.0, %v9927
      %v9929 = vpop.f32.mrf.mxu0
      %v9930 = vadd.f32 0.0, %v9929
      %9931 = vmatmul.bf16.gmra.mxu0 %v9851
      %v9932 = vpop.f32.mrf.mxu0
      %v9933 = vadd.f32 0.0, %v9932
      %v9934 = vpop.f32.mrf.mxu0
      %v9935 = vadd.f32 0.0, %v9934
      %9936 = vmatmul.bf16.gmra.mxu0 %v9852
      %v9937 = vpop.f32.mrf.mxu0
      %v9938 = vadd.f32 0.0, %v9937
      %v9939 = vpop.f32.mrf.mxu0
      %v9940 = vadd.f32 0.0, %v9939
      %9941 = vmatmul.bf16.gmra.mxu0 %v9853
      %v9942 = vpop.f32.mrf.mxu0
      %v9943 = vadd.f32 0.0, %v9942
      %v9944 = vpop.f32.mrf.mxu0
      %v9945 = vadd.f32 0.0, %v9944
      %9946 = vmatmul.bf16.gmra.mxu0 %v9854
      %v9947 = vpop.f32.mrf.mxu0
      %v9948 = vadd.f32 0.0, %v9947
      %v9949 = vpop.f32.mrf.mxu0
      %v9950 = vadd.f32 0.0, %v9949
      %9951 = vmatmul.bf16.gmra.mxu0 %v9855
      %v9952 = vpop.f32.mrf.mxu0
      %v9953 = vadd.f32 0.0, %v9952
      %v9954 = vpop.f32.mrf.mxu0
      %v9955 = vadd.f32 0.0, %v9954
      %9956 = vmatmul.bf16.gmra.mxu0 %v9856
      %v9957 = vpop.f32.mrf.mxu0
      %v9958 = vadd.f32 0.0, %v9957
      %v9959 = vpop.f32.mrf.mxu0
      %v9960 = vadd.f32 0.0, %v9959
      %9961 = vdwg.mxu0
      %v9978 = vunpack.c.l.b16 %v9585
      %v9979 = vunpack.c.l.b16 %v9586
      %v9980 = vunpack.c.l.b16 %v9587
      %v9981 = vunpack.c.l.b16 %v9588
      %v9982 = vunpack.c.l.b16 %v9589
      %v9983 = vunpack.c.l.b16 %v9590
      %v9984 = vunpack.c.l.b16 %v9591
      %v9985 = vunpack.c.l.b16 %v9592
      %v9986 = vunpack.c.l.b16 %v9593
      %v9987 = vunpack.c.l.b16 %v9594
      %v9988 = vunpack.c.l.b16 %v9595
      %v9989 = vunpack.c.l.b16 %v9596
      %v9990 = vunpack.c.l.b16 %v9597
      %v9991 = vunpack.c.l.b16 %v9598
      %v9992 = vunpack.c.l.b16 %v9599
      %v9993 = vunpack.c.l.b16 %v9600
      %v9994 = vpack.c.b16 %v9979, %v9978
      %v9995 = vpack.c.b16 %v9981, %v9980
      %v9996 = vpack.c.b16 %v9983, %v9982
      %v9997 = vpack.c.b16 %v9985, %v9984
      %v9998 = vpack.c.b16 %v9987, %v9986
      %v9999 = vpack.c.b16 %v9989, %v9988
      %v10000 = vpack.c.b16 %v9991, %v9990
      %v10001 = vpack.c.b16 %v9993, %v9992
      %v10026 = vunpack.c.l.b16 %v9601
      %v10027 = vunpack.c.l.b16 %v9602
      %v10028 = vunpack.c.l.b16 %v9603
      %v10029 = vunpack.c.l.b16 %v9604
      %v10030 = vunpack.c.l.b16 %v9605
      %v10031 = vunpack.c.l.b16 %v9606
      %v10032 = vunpack.c.l.b16 %v9607
      %v10033 = vunpack.c.l.b16 %v9608
      %v10034 = vunpack.c.l.b16 %v9609
      %v10035 = vunpack.c.l.b16 %v9610
      %v10036 = vunpack.c.l.b16 %v9611
      %v10037 = vunpack.c.l.b16 %v9612
      %v10038 = vunpack.c.l.b16 %v9613
      %v10039 = vunpack.c.l.b16 %v9614
      %v10040 = vunpack.c.l.b16 %v9615
      %v10041 = vunpack.c.l.b16 %v9616
      %v10042 = vpack.c.b16 %v10027, %v10026
      %v10043 = vpack.c.b16 %v10029, %v10028
      %v10044 = vpack.c.b16 %v10031, %v10030
      %v10045 = vpack.c.b16 %v10033, %v10032
      %v10046 = vpack.c.b16 %v10035, %v10034
      %v10047 = vpack.c.b16 %v10037, %v10036
      %v10048 = vpack.c.b16 %v10039, %v10038
      %v10049 = vpack.c.b16 %v10041, %v10040
      %10058 = vmatpush.bf16.msra.mxu0 %v10049
      %10059 = vmatpush.bf16.msra.mxu0 %v10048
      %10060 = vmatpush.bf16.msra.mxu0 %v10047
      %10061 = vmatpush.bf16.msra.mxu0 %v10046
      %10062 = vmatpush.bf16.msra.mxu0 %v10045
      %10063 = vmatpush.bf16.msra.mxu0 %v10044
      %10064 = vmatpush.bf16.msra.mxu0 %v10043
      %10065 = vmatpush.bf16.msra.mxu0 %v10042
      %10066 = vmatmul.bf16.gmra.mxu0 %v9994
      %v10067 = vpop.f32.mrf.mxu0
      %v10068 = vadd.f32 %v9923, %v10067
      %v10069 = vpop.f32.mrf.mxu0
      %v10070 = vadd.f32 %v9925, %v10069
      %10071 = vmatmul.bf16.gmra.mxu0 %v9995
      %v10072 = vpop.f32.mrf.mxu0
      %v10073 = vadd.f32 %v9928, %v10072
      %v10074 = vpop.f32.mrf.mxu0
      %v10075 = vadd.f32 %v9930, %v10074
      %10076 = vmatmul.bf16.gmra.mxu0 %v9996
      %v10077 = vpop.f32.mrf.mxu0
      %v10078 = vadd.f32 %v9933, %v10077
      %v10079 = vpop.f32.mrf.mxu0
      %v10080 = vadd.f32 %v9935, %v10079
      %10081 = vmatmul.bf16.gmra.mxu0 %v9997
      %v10082 = vpop.f32.mrf.mxu0
      %v10083 = vadd.f32 %v9938, %v10082
      %v10084 = vpop.f32.mrf.mxu0
      %v10085 = vadd.f32 %v9940, %v10084
      %10086 = vmatmul.bf16.gmra.mxu0 %v9998
      %v10087 = vpop.f32.mrf.mxu0
      %v10088 = vadd.f32 %v9943, %v10087
      %v10089 = vpop.f32.mrf.mxu0
      %v10090 = vadd.f32 %v9945, %v10089
      %10091 = vmatmul.bf16.gmra.mxu0 %v9999
      %v10092 = vpop.f32.mrf.mxu0
      %v10093 = vadd.f32 %v9948, %v10092
      %v10094 = vpop.f32.mrf.mxu0
      %v10095 = vadd.f32 %v9950, %v10094
      %10096 = vmatmul.bf16.gmra.mxu0 %v10000
      %v10097 = vpop.f32.mrf.mxu0
      %v10098 = vadd.f32 %v9953, %v10097
      %v10099 = vpop.f32.mrf.mxu0
      %v10100 = vadd.f32 %v9955, %v10099
      %10101 = vmatmul.bf16.gmra.mxu0 %v10001
      %v10102 = vpop.f32.mrf.mxu0
      %v10103 = vadd.f32 %v9958, %v10102
      %v10104 = vpop.f32.mrf.mxu0
      %v10105 = vadd.f32 %v9960, %v10104
      %10106 = vdwg.mxu0
      %v10107 = vld [vmem:[%s9584] sm:$0xe]
      %v10108 = vld [vmem:[%s9584 + $0xc] sm:$0xe]
      %v10109 = vld [vmem:[%s9584 + $0x18] sm:$0xe]
      %v10110 = vld [vmem:[%s9584 + $0x24] sm:$0xe]
      %v10111 = vld [vmem:[%s9584 + $0x30] sm:$0xe]
      %v10112 = vld [vmem:[%s9584 + $0x3c] sm:$0xe]
      %v10113 = vld [vmem:[%s9584 + $0x48] sm:$0xe]
      %v10114 = vld [vmem:[%s9584 + $0x54] sm:$0xe]
      %v10131 = vrot.slane %v10107, 5
      %v10132 = vrot.slane %v10131, 4
      %v10133 = vrot.slane %v9586, 5
      %v10134 = vsel %vm1045, %v10132, %v10133
      %v10135 = vrot.slane %v10133, 4
      %v10136 = vrot.slane %v9617, 5
      %v10137 = vsel %vm1045, %v10135, %v10136
      %v10138 = vrot.slane %v10108, 5
      %v10139 = vrot.slane %v10138, 4
      %v10140 = vrot.slane %v9588, 5
      %v10141 = vsel %vm1045, %v10139, %v10140
      %v10142 = vrot.slane %v10140, 4
      %v10143 = vrot.slane %v9618, 5
      %v10144 = vsel %vm1045, %v10142, %v10143
      %v10145 = vrot.slane %v10109, 5
      %v10146 = vrot.slane %v10145, 4
      %v10147 = vrot.slane %v9590, 5
      %v10148 = vsel %vm1045, %v10146, %v10147
      %v10149 = vrot.slane %v10147, 4
      %v10150 = vrot.slane %v9619, 5
      %v10151 = vsel %vm1045, %v10149, %v10150
      %v10152 = vrot.slane %v10110, 5
      %v10153 = vrot.slane %v10152, 4
      %v10154 = vrot.slane %v9592, 5
      %v10155 = vsel %vm1045, %v10153, %v10154
      %v10156 = vrot.slane %v10154, 4
      %v10157 = vrot.slane %v9620, 5
      %v10158 = vsel %vm1045, %v10156, %v10157
      %v10159 = vrot.slane %v10111, 5
      %v10160 = vrot.slane %v10159, 4
      %v10161 = vrot.slane %v9594, 5
      %v10162 = vsel %vm1045, %v10160, %v10161
      %v10163 = vrot.slane %v10161, 4
      %v10164 = vrot.slane %v9621, 5
      %v10165 = vsel %vm1045, %v10163, %v10164
      %v10166 = vrot.slane %v10112, 5
      %v10167 = vrot.slane %v10166, 4
      %v10168 = vrot.slane %v9596, 5
      %v10169 = vsel %vm1045, %v10167, %v10168
      %v10170 = vrot.slane %v10168, 4
      %v10171 = vrot.slane %v9622, 5
      %v10172 = vsel %vm1045, %v10170, %v10171
      %v10173 = vrot.slane %v10113, 5
      %v10174 = vrot.slane %v10173, 4
      %v10175 = vrot.slane %v9598, 5
      %v10176 = vsel %vm1045, %v10174, %v10175
      %v10177 = vrot.slane %v10175, 4
      %v10178 = vrot.slane %v9623, 5
      %v10179 = vsel %vm1045, %v10177, %v10178
      %v10180 = vrot.slane %v10114, 5
      %v10181 = vrot.slane %v10180, 4
      %v10182 = vrot.slane %v9600, 5
      %v10183 = vsel %vm1045, %v10181, %v10182
      %v10184 = vrot.slane %v10182, 4
      %v10185 = vrot.slane %v9624, 5
      %v10186 = vsel %vm1045, %v10184, %v10185
      %v10187 = vld [vmem:[%s7556] sm:$0xf]
      %v10188 = vld [vmem:[%s7556 + $0x4] sm:$0xf]
      %v10189 = vld [vmem:[%s7556 + $0x8] sm:$0xf]
      %v10190 = vld [vmem:[%s7556 + $0xc] sm:$0xf]
      %v10191 = vld [vmem:[%s7556 + $0x10] sm:$0xf]
      %v10192 = vld [vmem:[%s7556 + $0x14] sm:$0xf]
      %v10193 = vld [vmem:[%s7556 + $0x18] sm:$0xf]
      %v10194 = vld [vmem:[%s7556 + $0x1c] sm:$0xf]
      %v10195 = vld [vmem:[%s7556 + $0x20] sm:$0xf]
      %v10196 = vld [vmem:[%s7556 + $0x24] sm:$0xf]
      %v10197 = vld [vmem:[%s7556 + $0x28] sm:$0xf]
      %v10198 = vld [vmem:[%s7556 + $0x2c] sm:$0xf]
      %v10199 = vld [vmem:[%s7556 + $0x30] sm:$0xf]
      %v10200 = vld [vmem:[%s7556 + $0x34] sm:$0xf]
      %v10201 = vld [vmem:[%s7556 + $0x38] sm:$0xf]
      %v10202 = vld [vmem:[%s7556 + $0x3c] sm:$0xf]
      %v10203 = vunpack.c.l.b16 %v10134
      %v10204 = vunpack.c.l.b16 %v10137
      %v10205 = vunpack.c.l.b16 %v10141
      %v10206 = vunpack.c.l.b16 %v10144
      %v10207 = vunpack.c.l.b16 %v10148
      %v10208 = vunpack.c.l.b16 %v10151
      %v10209 = vunpack.c.l.b16 %v10155
      %v10210 = vunpack.c.l.b16 %v10158
      %v10211 = vunpack.c.l.b16 %v10162
      %v10212 = vunpack.c.l.b16 %v10165
      %v10213 = vunpack.c.l.b16 %v10169
      %v10214 = vunpack.c.l.b16 %v10172
      %v10215 = vunpack.c.l.b16 %v10176
      %v10216 = vunpack.c.l.b16 %v10179
      %v10217 = vunpack.c.l.b16 %v10183
      %v10218 = vunpack.c.l.b16 %v10186
      %v10219 = vpack.c.b16 %v10204, %v10203
      %v10220 = vpack.c.b16 %v10206, %v10205
      %v10221 = vpack.c.b16 %v10208, %v10207
      %v10222 = vpack.c.b16 %v10210, %v10209
      %v10223 = vpack.c.b16 %v10212, %v10211
      %v10224 = vpack.c.b16 %v10214, %v10213
      %v10225 = vpack.c.b16 %v10216, %v10215
      %v10226 = vpack.c.b16 %v10218, %v10217
      %v10251 = vunpack.c.l.b16 %v10187
      %v10252 = vunpack.c.l.b16 %v10188
      %v10253 = vunpack.c.l.b16 %v10189
      %v10254 = vunpack.c.l.b16 %v10190
      %v10255 = vunpack.c.l.b16 %v10191
      %v10256 = vunpack.c.l.b16 %v10192
      %v10257 = vunpack.c.l.b16 %v10193
      %v10258 = vunpack.c.l.b16 %v10194
      %v10259 = vunpack.c.l.b16 %v10195
      %v10260 = vunpack.c.l.b16 %v10196
      %v10261 = vunpack.c.l.b16 %v10197
      %v10262 = vunpack.c.l.b16 %v10198
      %v10263 = vunpack.c.l.b16 %v10199
      %v10264 = vunpack.c.l.b16 %v10200
      %v10265 = vunpack.c.l.b16 %v10201
      %v10266 = vunpack.c.l.b16 %v10202
      %v10267 = vpack.c.b16 %v10252, %v10251
      %v10268 = vpack.c.b16 %v10254, %v10253
      %v10269 = vpack.c.b16 %v10256, %v10255
      %v10270 = vpack.c.b16 %v10258, %v10257
      %v10271 = vpack.c.b16 %v10260, %v10259
      %v10272 = vpack.c.b16 %v10262, %v10261
      %v10273 = vpack.c.b16 %v10264, %v10263
      %v10274 = vpack.c.b16 %v10266, %v10265
      %10283 = vmatpush.bf16.msra.mxu0 %v10274
      %10284 = vmatpush.bf16.msra.mxu0 %v10273
      %10285 = vmatpush.bf16.msra.mxu0 %v10272
      %10286 = vmatpush.bf16.msra.mxu0 %v10271
      %10287 = vmatpush.bf16.msra.mxu0 %v10270
      %10288 = vmatpush.bf16.msra.mxu0 %v10269
      %10289 = vmatpush.bf16.msra.mxu0 %v10268
      %10290 = vmatpush.bf16.msra.mxu0 %v10267
      %10291 = vmatmul.bf16.gmra.mxu0 %v10219
      %v10292 = vpop.f32.mrf.mxu0
      %v10293 = vadd.f32 0.0, %v10292
      %v10294 = vpop.f32.mrf.mxu0
      %v10295 = vadd.f32 0.0, %v10294
      %10296 = vmatmul.bf16.gmra.mxu0 %v10220
      %v10297 = vpop.f32.mrf.mxu0
      %v10298 = vadd.f32 0.0, %v10297
      %v10299 = vpop.f32.mrf.mxu0
      %v10300 = vadd.f32 0.0, %v10299
      %10301 = vmatmul.bf16.gmra.mxu0 %v10221
      %v10302 = vpop.f32.mrf.mxu0
      %v10303 = vadd.f32 0.0, %v10302
      %v10304 = vpop.f32.mrf.mxu0
      %v10305 = vadd.f32 0.0, %v10304
      %10306 = vmatmul.bf16.gmra.mxu0 %v10222
      %v10307 = vpop.f32.mrf.mxu0
      %v10308 = vadd.f32 0.0, %v10307
      %v10309 = vpop.f32.mrf.mxu0
      %v10310 = vadd.f32 0.0, %v10309
      %10311 = vmatmul.bf16.gmra.mxu0 %v10223
      %v10312 = vpop.f32.mrf.mxu0
      %v10313 = vadd.f32 0.0, %v10312
      %v10314 = vpop.f32.mrf.mxu0
      %v10315 = vadd.f32 0.0, %v10314
      %10316 = vmatmul.bf16.gmra.mxu0 %v10224
      %v10317 = vpop.f32.mrf.mxu0
      %v10318 = vadd.f32 0.0, %v10317
      %v10319 = vpop.f32.mrf.mxu0
      %v10320 = vadd.f32 0.0, %v10319
      %10321 = vmatmul.bf16.gmra.mxu0 %v10225
      %v10322 = vpop.f32.mrf.mxu0
      %v10323 = vadd.f32 0.0, %v10322
      %v10324 = vpop.f32.mrf.mxu0
      %v10325 = vadd.f32 0.0, %v10324
      %10326 = vmatmul.bf16.gmra.mxu0 %v10226
      %v10327 = vpop.f32.mrf.mxu0
      %v10328 = vadd.f32 0.0, %v10327
      %v10329 = vpop.f32.mrf.mxu0
      %v10330 = vadd.f32 0.0, %v10329
      %10331 = vdwg.mxu0
      %v10332 = vadd.f32 %v10068, %v10293
      %v10333 = vadd.f32 %v10070, %v10295
      %v10334 = vadd.f32 %v10073, %v10298
      %v10335 = vadd.f32 %v10075, %v10300
      %v10336 = vadd.f32 %v10078, %v10303
      %v10337 = vadd.f32 %v10080, %v10305
      %v10338 = vadd.f32 %v10083, %v10308
      %v10339 = vadd.f32 %v10085, %v10310
      %v10340 = vadd.f32 %v10088, %v10313
      %v10341 = vadd.f32 %v10090, %v10315
      %v10342 = vadd.f32 %v10093, %v10318
      %v10343 = vadd.f32 %v10095, %v10320
      %v10344 = vadd.f32 %v10098, %v10323
      %v10345 = vadd.f32 %v10100, %v10325
      %v10346 = vadd.f32 %v10103, %v10328
      %v10347 = vadd.f32 %v10105, %v10330
      %v10348 = vld [vmem:[%s6925] sm:$0xf]
      %v10349 = vld [vmem:[%s6925 + $0x4] sm:$0xf]
      %v10350 = vld [vmem:[%s6925 + $0xc] sm:$0xf]
      %v10351 = vld [vmem:[%s6925 + $0x10] sm:$0xf]
      %v10352 = vld [vmem:[%s6925 + $0x18] sm:$0xf]
      %v10353 = vld [vmem:[%s6925 + $0x1c] sm:$0xf]
      %v10354 = vld [vmem:[%s6925 + $0x24] sm:$0xf]
      %v10355 = vld [vmem:[%s6925 + $0x28] sm:$0xf]
      %v10356 = vld [vmem:[%s6925 + $0x30] sm:$0xf]
      %v10357 = vld [vmem:[%s6925 + $0x34] sm:$0xf]
      %v10358 = vld [vmem:[%s6925 + $0x3c] sm:$0xf]
      %v10359 = vld [vmem:[%s6925 + $0x40] sm:$0xf]
      %v10360 = vld [vmem:[%s6925 + $0x48] sm:$0xf]
      %v10361 = vld [vmem:[%s6925 + $0x4c] sm:$0xf]
      %v10362 = vld [vmem:[%s6925 + $0x54] sm:$0xf]
      %v10363 = vld [vmem:[%s6925 + $0x58] sm:$0xf]
      %v10364 = vld [vmem:[%s7734] sm:$0xf]
      %v10365 = vld [vmem:[%s7734 + $0x4] sm:$0xf]
      %v10366 = vld [vmem:[%s7734 + $0x8] sm:$0xf]
      %v10367 = vld [vmem:[%s7734 + $0xc] sm:$0xf]
      %v10368 = vld [vmem:[%s7734 + $0x10] sm:$0xf]
      %v10369 = vld [vmem:[%s7734 + $0x14] sm:$0xf]
      %v10370 = vld [vmem:[%s7734 + $0x18] sm:$0xf]
      %v10371 = vld [vmem:[%s7734 + $0x1c] sm:$0xf]
      %v10372 = vld [vmem:[%s7734 + $0x20] sm:$0xf]
      %v10373 = vld [vmem:[%s7734 + $0x24] sm:$0xf]
      %v10374 = vld [vmem:[%s7734 + $0x28] sm:$0xf]
      %v10375 = vld [vmem:[%s7734 + $0x2c] sm:$0xf]
      %v10376 = vld [vmem:[%s7734 + $0x30] sm:$0xf]
      %v10377 = vld [vmem:[%s7734 + $0x34] sm:$0xf]
      %v10378 = vld [vmem:[%s7734 + $0x38] sm:$0xf]
      %v10379 = vld [vmem:[%s7734 + $0x3c] sm:$0xf]
      %v10396 = vunpack.c.l.b16 %v10348
      %v10397 = vunpack.c.l.b16 %v10349
      %v10398 = vunpack.c.l.b16 %v10350
      %v10399 = vunpack.c.l.b16 %v10351
      %v10400 = vunpack.c.l.b16 %v10352
      %v10401 = vunpack.c.l.b16 %v10353
      %v10402 = vunpack.c.l.b16 %v10354
      %v10403 = vunpack.c.l.b16 %v10355
      %v10404 = vunpack.c.l.b16 %v10356
      %v10405 = vunpack.c.l.b16 %v10357
      %v10406 = vunpack.c.l.b16 %v10358
      %v10407 = vunpack.c.l.b16 %v10359
      %v10408 = vunpack.c.l.b16 %v10360
      %v10409 = vunpack.c.l.b16 %v10361
      %v10410 = vunpack.c.l.b16 %v10362
      %v10411 = vunpack.c.l.b16 %v10363
      %v10412 = vpack.c.b16 %v10397, %v10396
      %v10413 = vpack.c.b16 %v10399, %v10398
      %v10414 = vpack.c.b16 %v10401, %v10400
      %v10415 = vpack.c.b16 %v10403, %v10402
      %v10416 = vpack.c.b16 %v10405, %v10404
      %v10417 = vpack.c.b16 %v10407, %v10406
      %v10418 = vpack.c.b16 %v10409, %v10408
      %v10419 = vpack.c.b16 %v10411, %v10410
      %v10444 = vunpack.c.l.b16 %v10364
      %v10445 = vunpack.c.l.b16 %v10365
      %v10446 = vunpack.c.l.b16 %v10366
      %v10447 = vunpack.c.l.b16 %v10367
      %v10448 = vunpack.c.l.b16 %v10368
      %v10449 = vunpack.c.l.b16 %v10369
      %v10450 = vunpack.c.l.b16 %v10370
      %v10451 = vunpack.c.l.b16 %v10371
      %v10452 = vunpack.c.l.b16 %v10372
      %v10453 = vunpack.c.l.b16 %v10373
      %v10454 = vunpack.c.l.b16 %v10374
      %v10455 = vunpack.c.l.b16 %v10375
      %v10456 = vunpack.c.l.b16 %v10376
      %v10457 = vunpack.c.l.b16 %v10377
      %v10458 = vunpack.c.l.b16 %v10378
      %v10459 = vunpack.c.l.b16 %v10379
      %v10460 = vpack.c.b16 %v10445, %v10444
      %v10461 = vpack.c.b16 %v10447, %v10446
      %v10462 = vpack.c.b16 %v10449, %v10448
      %v10463 = vpack.c.b16 %v10451, %v10450
      %v10464 = vpack.c.b16 %v10453, %v10452
      %v10465 = vpack.c.b16 %v10455, %v10454
      %v10466 = vpack.c.b16 %v10457, %v10456
      %v10467 = vpack.c.b16 %v10459, %v10458
      %10476 = vmatpush.bf16.msra.mxu0 %v10467
      %10477 = vmatpush.bf16.msra.mxu0 %v10466
      %10478 = vmatpush.bf16.msra.mxu0 %v10465
      %10479 = vmatpush.bf16.msra.mxu0 %v10464
      %10480 = vmatpush.bf16.msra.mxu0 %v10463
      %10481 = vmatpush.bf16.msra.mxu0 %v10462
      %10482 = vmatpush.bf16.msra.mxu0 %v10461
      %10483 = vmatpush.bf16.msra.mxu0 %v10460
      %10484 = vmatmul.bf16.gmra.mxu0 %v10412
      %v10485 = vpop.f32.mrf.mxu0
      %v10486 = vadd.f32 0.0, %v10485
      %v10487 = vpop.f32.mrf.mxu0
      %v10488 = vadd.f32 0.0, %v10487
      %10489 = vmatmul.bf16.gmra.mxu0 %v10413
      %v10490 = vpop.f32.mrf.mxu0
      %v10491 = vadd.f32 0.0, %v10490
      %v10492 = vpop.f32.mrf.mxu0
      %v10493 = vadd.f32 0.0, %v10492
      %10494 = vmatmul.bf16.gmra.mxu0 %v10414
      %v10495 = vpop.f32.mrf.mxu0
      %v10496 = vadd.f32 0.0, %v10495
      %v10497 = vpop.f32.mrf.mxu0
      %v10498 = vadd.f32 0.0, %v10497
      %10499 = vmatmul.bf16.gmra.mxu0 %v10415
      %v10500 = vpop.f32.mrf.mxu0
      %v10501 = vadd.f32 0.0, %v10500
      %v10502 = vpop.f32.mrf.mxu0
      %v10503 = vadd.f32 0.0, %v10502
      %10504 = vmatmul.bf16.gmra.mxu0 %v10416
      %v10505 = vpop.f32.mrf.mxu0
      %v10506 = vadd.f32 0.0, %v10505
      %v10507 = vpop.f32.mrf.mxu0
      %v10508 = vadd.f32 0.0, %v10507
      %10509 = vmatmul.bf16.gmra.mxu0 %v10417
      %v10510 = vpop.f32.mrf.mxu0
      %v10511 = vadd.f32 0.0, %v10510
      %v10512 = vpop.f32.mrf.mxu0
      %v10513 = vadd.f32 0.0, %v10512
      %10514 = vmatmul.bf16.gmra.mxu0 %v10418
      %v10515 = vpop.f32.mrf.mxu0
      %v10516 = vadd.f32 0.0, %v10515
      %v10517 = vpop.f32.mrf.mxu0
      %v10518 = vadd.f32 0.0, %v10517
      %10519 = vmatmul.bf16.gmra.mxu0 %v10419
      %v10520 = vpop.f32.mrf.mxu0
      %v10521 = vadd.f32 0.0, %v10520
      %v10522 = vpop.f32.mrf.mxu0
      %v10523 = vadd.f32 0.0, %v10522
      %10524 = vdwg.mxu0
      %v10525 = vadd.f32 %v10332, %v10486
      %v10526 = vadd.f32 %v10333, %v10488
      %v10527 = vadd.f32 %v10334, %v10491
      %v10528 = vadd.f32 %v10335, %v10493
      %v10529 = vadd.f32 %v10336, %v10496
      %v10530 = vadd.f32 %v10337, %v10498
      %v10531 = vadd.f32 %v10338, %v10501
      %v10532 = vadd.f32 %v10339, %v10503
      %v10533 = vadd.f32 %v10340, %v10506
      %v10534 = vadd.f32 %v10341, %v10508
      %v10535 = vadd.f32 %v10342, %v10511
      %v10536 = vadd.f32 %v10343, %v10513
      %v10537 = vadd.f32 %v10344, %v10516
      %v10538 = vadd.f32 %v10345, %v10518
      %v10539 = vadd.f32 %v10346, %v10521
      %v10540 = vadd.f32 %v10347, %v10523
      %v10541 = vld [vmem:[%s6925] sm:$0xf]
      %v10542 = vld [vmem:[%s6925 + $0x4] sm:$0xf]
      %v10543 = vld [vmem:[%s6925 + $0x8] sm:$0x1]
      %v10544 = vld [vmem:[%s6925 + $0xc] sm:$0xf]
      %v10545 = vld [vmem:[%s6925 + $0x10] sm:$0xf]
      %v10546 = vld [vmem:[%s6925 + $0x14] sm:$0x1]
      %v10547 = vld [vmem:[%s6925 + $0x18] sm:$0xf]
      %v10548 = vld [vmem:[%s6925 + $0x1c] sm:$0xf]
      %v10549 = vld [vmem:[%s6925 + $0x20] sm:$0x1]
      %v10550 = vld [vmem:[%s6925 + $0x24] sm:$0xf]
      %v10551 = vld [vmem:[%s6925 + $0x28] sm:$0xf]
      %v10552 = vld [vmem:[%s6925 + $0x2c] sm:$0x1]
      %v10553 = vld [vmem:[%s6925 + $0x30] sm:$0xf]
      %v10554 = vld [vmem:[%s6925 + $0x34] sm:$0xf]
      %v10555 = vld [vmem:[%s6925 + $0x38] sm:$0x1]
      %v10556 = vld [vmem:[%s6925 + $0x3c] sm:$0xf]
      %v10557 = vld [vmem:[%s6925 + $0x40] sm:$0xf]
      %v10558 = vld [vmem:[%s6925 + $0x44] sm:$0x1]
      %v10559 = vld [vmem:[%s6925 + $0x48] sm:$0xf]
      %v10560 = vld [vmem:[%s6925 + $0x4c] sm:$0xf]
      %v10561 = vld [vmem:[%s6925 + $0x50] sm:$0x1]
      %v10562 = vld [vmem:[%s6925 + $0x54] sm:$0xf]
      %v10563 = vld [vmem:[%s6925 + $0x58] sm:$0xf]
      %v10564 = vld [vmem:[%s6925 + $0x5c] sm:$0x1]
      %v10566 = vshrl.u32 %v10541, 16
      %v10568 = vrot.slane %v10566, 4
      %v10569 = vshll.u32 %v10541, 16
      %v10571 = vrot.slane %v10569, 5
      %v10572 = vor.u32 %v10568, %v10571
      %v10573 = vrot.slane %v10572, 4
      %v10575 = vshll.u32 %v10542, 16
      %v10577 = vrot.slane %v10575, 5
      %v10578 = vsel %vm375, %v10573, %v10577
      %v10579 = vshrl.u32 %v10542, 16
      %v10581 = vrot.slane %v10579, 4
      %v10582 = vor.u32 %v10581, %v10577
      %v10583 = vrot.slane %v10582, 4
      %v10585 = vshll.u32 %v10543, 16
      %v10587 = vrot.slane %v10585, 5
      %v10588 = vsel %vm375, %v10583, %v10587
      %v10590 = vshrl.u32 %v10544, 16
      %v10592 = vrot.slane %v10590, 4
      %v10593 = vshll.u32 %v10544, 16
      %v10595 = vrot.slane %v10593, 5
      %v10596 = vor.u32 %v10592, %v10595
      %v10597 = vrot.slane %v10596, 4
      %v10599 = vshll.u32 %v10545, 16
      %v10601 = vrot.slane %v10599, 5
      %v10602 = vsel %vm375, %v10597, %v10601
      %v10603 = vshrl.u32 %v10545, 16
      %v10605 = vrot.slane %v10603, 4
      %v10606 = vor.u32 %v10605, %v10601
      %v10607 = vrot.slane %v10606, 4
      %v10609 = vshll.u32 %v10546, 16
      %v10611 = vrot.slane %v10609, 5
      %v10612 = vsel %vm375, %v10607, %v10611
      %v10614 = vshrl.u32 %v10547, 16
      %v10616 = vrot.slane %v10614, 4
      %v10617 = vshll.u32 %v10547, 16
      %v10619 = vrot.slane %v10617, 5
      %v10620 = vor.u32 %v10616, %v10619
      %v10621 = vrot.slane %v10620, 4
      %v10623 = vshll.u32 %v10548, 16
      %v10625 = vrot.slane %v10623, 5
      %v10626 = vsel %vm375, %v10621, %v10625
      %v10627 = vshrl.u32 %v10548, 16
      %v10629 = vrot.slane %v10627, 4
      %v10630 = vor.u32 %v10629, %v10625
      %v10631 = vrot.slane %v10630, 4
      %v10633 = vshll.u32 %v10549, 16
      %v10635 = vrot.slane %v10633, 5
      %v10636 = vsel %vm375, %v10631, %v10635
      %v10638 = vshrl.u32 %v10550, 16
      %v10640 = vrot.slane %v10638, 4
      %v10641 = vshll.u32 %v10550, 16
      %v10643 = vrot.slane %v10641, 5
      %v10644 = vor.u32 %v10640, %v10643
      %v10645 = vrot.slane %v10644, 4
      %v10647 = vshll.u32 %v10551, 16
      %v10649 = vrot.slane %v10647, 5
      %v10650 = vsel %vm375, %v10645, %v10649
      %v10651 = vshrl.u32 %v10551, 16
      %v10653 = vrot.slane %v10651, 4
      %v10654 = vor.u32 %v10653, %v10649
      %v10655 = vrot.slane %v10654, 4
      %v10657 = vshll.u32 %v10552, 16
      %v10659 = vrot.slane %v10657, 5
      %v10660 = vsel %vm375, %v10655, %v10659
      %v10662 = vshrl.u32 %v10553, 16
      %v10664 = vrot.slane %v10662, 4
      %v10665 = vshll.u32 %v10553, 16
      %v10667 = vrot.slane %v10665, 5
      %v10668 = vor.u32 %v10664, %v10667
      %v10669 = vrot.slane %v10668, 4
      %v10671 = vshll.u32 %v10554, 16
      %v10673 = vrot.slane %v10671, 5
      %v10674 = vsel %vm375, %v10669, %v10673
      %v10675 = vshrl.u32 %v10554, 16
      %v10677 = vrot.slane %v10675, 4
      %v10678 = vor.u32 %v10677, %v10673
      %v10679 = vrot.slane %v10678, 4
      %v10681 = vshll.u32 %v10555, 16
      %v10683 = vrot.slane %v10681, 5
      %v10684 = vsel %vm375, %v10679, %v10683
      %v10686 = vshrl.u32 %v10556, 16
      %v10688 = vrot.slane %v10686, 4
      %v10689 = vshll.u32 %v10556, 16
      %v10691 = vrot.slane %v10689, 5
      %v10692 = vor.u32 %v10688, %v10691
      %v10693 = vrot.slane %v10692, 4
      %v10695 = vshll.u32 %v10557, 16
      %v10697 = vrot.slane %v10695, 5
      %v10698 = vsel %vm375, %v10693, %v10697
      %v10699 = vshrl.u32 %v10557, 16
      %v10701 = vrot.slane %v10699, 4
      %v10702 = vor.u32 %v10701, %v10697
      %v10703 = vrot.slane %v10702, 4
      %v10705 = vshll.u32 %v10558, 16
      %v10707 = vrot.slane %v10705, 5
      %v10708 = vsel %vm375, %v10703, %v10707
      %v10710 = vshrl.u32 %v10559, 16
      %v10712 = vrot.slane %v10710, 4
      %v10713 = vshll.u32 %v10559, 16
      %v10715 = vrot.slane %v10713, 5
      %v10716 = vor.u32 %v10712, %v10715
      %v10717 = vrot.slane %v10716, 4
      %v10719 = vshll.u32 %v10560, 16
      %v10721 = vrot.slane %v10719, 5
      %v10722 = vsel %vm375, %v10717, %v10721
      %v10723 = vshrl.u32 %v10560, 16
      %v10725 = vrot.slane %v10723, 4
      %v10726 = vor.u32 %v10725, %v10721
      %v10727 = vrot.slane %v10726, 4
      %v10729 = vshll.u32 %v10561, 16
      %v10731 = vrot.slane %v10729, 5
      %v10732 = vsel %vm375, %v10727, %v10731
      %v10734 = vshrl.u32 %v10562, 16
      %v10736 = vrot.slane %v10734, 4
      %v10737 = vshll.u32 %v10562, 16
      %v10739 = vrot.slane %v10737, 5
      %v10740 = vor.u32 %v10736, %v10739
      %v10741 = vrot.slane %v10740, 4
      %v10743 = vshll.u32 %v10563, 16
      %v10745 = vrot.slane %v10743, 5
      %v10746 = vsel %vm375, %v10741, %v10745
      %v10747 = vshrl.u32 %v10563, 16
      %v10749 = vrot.slane %v10747, 4
      %v10750 = vor.u32 %v10749, %v10745
      %v10751 = vrot.slane %v10750, 4
      %v10753 = vshll.u32 %v10564, 16
      %v10755 = vrot.slane %v10753, 5
      %v10756 = vsel %vm375, %v10751, %v10755
      %v10757 = vld [vmem:[%s8128] sm:$0xf]
      %v10758 = vld [vmem:[%s8128 + $0x4] sm:$0xf]
      %v10759 = vld [vmem:[%s8128 + $0x8] sm:$0xf]
      %v10760 = vld [vmem:[%s8128 + $0xc] sm:$0xf]
      %v10761 = vld [vmem:[%s8128 + $0x10] sm:$0xf]
      %v10762 = vld [vmem:[%s8128 + $0x14] sm:$0xf]
      %v10763 = vld [vmem:[%s8128 + $0x18] sm:$0xf]
      %v10764 = vld [vmem:[%s8128 + $0x1c] sm:$0xf]
      %v10765 = vld [vmem:[%s8128 + $0x20] sm:$0xf]
      %v10766 = vld [vmem:[%s8128 + $0x24] sm:$0xf]
      %v10767 = vld [vmem:[%s8128 + $0x28] sm:$0xf]
      %v10768 = vld [vmem:[%s8128 + $0x2c] sm:$0xf]
      %v10769 = vld [vmem:[%s8128 + $0x30] sm:$0xf]
      %v10770 = vld [vmem:[%s8128 + $0x34] sm:$0xf]
      %v10771 = vld [vmem:[%s8128 + $0x38] sm:$0xf]
      %v10772 = vld [vmem:[%s8128 + $0x3c] sm:$0xf]
      %v10773 = vunpack.c.l.b16 %v10578
      %v10774 = vunpack.c.l.b16 %v10588
      %v10775 = vunpack.c.l.b16 %v10602
      %v10776 = vunpack.c.l.b16 %v10612
      %v10777 = vunpack.c.l.b16 %v10626
      %v10778 = vunpack.c.l.b16 %v10636
      %v10779 = vunpack.c.l.b16 %v10650
      %v10780 = vunpack.c.l.b16 %v10660
      %v10781 = vunpack.c.l.b16 %v10674
      %v10782 = vunpack.c.l.b16 %v10684
      %v10783 = vunpack.c.l.b16 %v10698
      %v10784 = vunpack.c.l.b16 %v10708
      %v10785 = vunpack.c.l.b16 %v10722
      %v10786 = vunpack.c.l.b16 %v10732
      %v10787 = vunpack.c.l.b16 %v10746
      %v10788 = vunpack.c.l.b16 %v10756
      %v10789 = vpack.c.b16 %v10774, %v10773
      %v10790 = vpack.c.b16 %v10776, %v10775
      %v10791 = vpack.c.b16 %v10778, %v10777
      %v10792 = vpack.c.b16 %v10780, %v10779
      %v10793 = vpack.c.b16 %v10782, %v10781
      %v10794 = vpack.c.b16 %v10784, %v10783
      %v10795 = vpack.c.b16 %v10786, %v10785
      %v10796 = vpack.c.b16 %v10788, %v10787
      %v10821 = vunpack.c.l.b16 %v10757
      %v10822 = vunpack.c.l.b16 %v10758
      %v10823 = vunpack.c.l.b16 %v10759
      %v10824 = vunpack.c.l.b16 %v10760
      %v10825 = vunpack.c.l.b16 %v10761
      %v10826 = vunpack.c.l.b16 %v10762
      %v10827 = vunpack.c.l.b16 %v10763
      %v10828 = vunpack.c.l.b16 %v10764
      %v10829 = vunpack.c.l.b16 %v10765
      %v10830 = vunpack.c.l.b16 %v10766
      %v10831 = vunpack.c.l.b16 %v10767
      %v10832 = vunpack.c.l.b16 %v10768
      %v10833 = vunpack.c.l.b16 %v10769
      %v10834 = vunpack.c.l.b16 %v10770
      %v10835 = vunpack.c.l.b16 %v10771
      %v10836 = vunpack.c.l.b16 %v10772
      %v10837 = vpack.c.b16 %v10822, %v10821
      %v10838 = vpack.c.b16 %v10824, %v10823
      %v10839 = vpack.c.b16 %v10826, %v10825
      %v10840 = vpack.c.b16 %v10828, %v10827
      %v10841 = vpack.c.b16 %v10830, %v10829
      %v10842 = vpack.c.b16 %v10832, %v10831
      %v10843 = vpack.c.b16 %v10834, %v10833
      %v10844 = vpack.c.b16 %v10836, %v10835
      %10853 = vmatpush.bf16.msra.mxu0 %v10844
      %10854 = vmatpush.bf16.msra.mxu0 %v10843
      %10855 = vmatpush.bf16.msra.mxu0 %v10842
      %10856 = vmatpush.bf16.msra.mxu0 %v10841
      %10857 = vmatpush.bf16.msra.mxu0 %v10840
      %10858 = vmatpush.bf16.msra.mxu0 %v10839
      %10859 = vmatpush.bf16.msra.mxu0 %v10838
      %10860 = vmatpush.bf16.msra.mxu0 %v10837
      %10861 = vmatmul.bf16.gmra.mxu0 %v10789
      %v10862 = vpop.f32.mrf.mxu0
      %v10863 = vadd.f32 0.0, %v10862
      %v10864 = vpop.f32.mrf.mxu0
      %v10865 = vadd.f32 0.0, %v10864
      %10866 = vmatmul.bf16.gmra.mxu0 %v10790
      %v10867 = vpop.f32.mrf.mxu0
      %v10868 = vadd.f32 0.0, %v10867
      %v10869 = vpop.f32.mrf.mxu0
      %v10870 = vadd.f32 0.0, %v10869
      %10871 = vmatmul.bf16.gmra.mxu0 %v10791
      %v10872 = vpop.f32.mrf.mxu0
      %v10873 = vadd.f32 0.0, %v10872
      %v10874 = vpop.f32.mrf.mxu0
      %v10875 = vadd.f32 0.0, %v10874
      %10876 = vmatmul.bf16.gmra.mxu0 %v10792
      %v10877 = vpop.f32.mrf.mxu0
      %v10878 = vadd.f32 0.0, %v10877
      %v10879 = vpop.f32.mrf.mxu0
      %v10880 = vadd.f32 0.0, %v10879
      %10881 = vmatmul.bf16.gmra.mxu0 %v10793
      %v10882 = vpop.f32.mrf.mxu0
      %v10883 = vadd.f32 0.0, %v10882
      %v10884 = vpop.f32.mrf.mxu0
      %v10885 = vadd.f32 0.0, %v10884
      %10886 = vmatmul.bf16.gmra.mxu0 %v10794
      %v10887 = vpop.f32.mrf.mxu0
      %v10888 = vadd.f32 0.0, %v10887
      %v10889 = vpop.f32.mrf.mxu0
      %v10890 = vadd.f32 0.0, %v10889
      %10891 = vmatmul.bf16.gmra.mxu0 %v10795
      %v10892 = vpop.f32.mrf.mxu0
      %v10893 = vadd.f32 0.0, %v10892
      %v10894 = vpop.f32.mrf.mxu0
      %v10895 = vadd.f32 0.0, %v10894
      %10896 = vmatmul.bf16.gmra.mxu0 %v10796
      %v10897 = vpop.f32.mrf.mxu0
      %v10898 = vadd.f32 0.0, %v10897
      %v10899 = vpop.f32.mrf.mxu0
      %v10900 = vadd.f32 0.0, %v10899
      %10901 = vdwg.mxu0
      %v10902 = vadd.f32 %v10525, %v10863
      %v10903 = vadd.f32 %v10526, %v10865
      %v10904 = vadd.f32 %v10527, %v10868
      %v10905 = vadd.f32 %v10528, %v10870
      %v10906 = vadd.f32 %v10529, %v10873
      %v10907 = vadd.f32 %v10530, %v10875
      %v10908 = vadd.f32 %v10531, %v10878
      %v10909 = vadd.f32 %v10532, %v10880
      %v10910 = vadd.f32 %v10533, %v10883
      %v10911 = vadd.f32 %v10534, %v10885
      %v10912 = vadd.f32 %v10535, %v10888
      %v10913 = vadd.f32 %v10536, %v10890
      %v10914 = vadd.f32 %v10537, %v10893
      %v10915 = vadd.f32 %v10538, %v10895
      %v10916 = vadd.f32 %v10539, %v10898
      %v10917 = vadd.f32 %v10540, %v10900
      %v10918 = vld [vmem:[%s6925] sm:$0xe]
      %v10919 = vld [vmem:[%s6925 + $0xc] sm:$0xe]
      %v10920 = vld [vmem:[%s6925 + $0x18] sm:$0xe]
      %v10921 = vld [vmem:[%s6925 + $0x24] sm:$0xe]
      %v10922 = vld [vmem:[%s6925 + $0x30] sm:$0xe]
      %v10923 = vld [vmem:[%s6925 + $0x3c] sm:$0xe]
      %v10924 = vld [vmem:[%s6925 + $0x48] sm:$0xe]
      %v10925 = vld [vmem:[%s6925 + $0x54] sm:$0xe]
      %v10950 = vrot.slane %v10918, 5
      %v10951 = vrot.slane %v10950, 4
      %v10952 = vrot.slane %v10542, 5
      %v10953 = vsel %vm1045, %v10951, %v10952
      %v10954 = vrot.slane %v10952, 4
      %v10955 = vrot.slane %v10543, 5
      %v10956 = vsel %vm1045, %v10954, %v10955
      %v10957 = vrot.slane %v10919, 5
      %v10958 = vrot.slane %v10957, 4
      %v10959 = vrot.slane %v10545, 5
      %v10960 = vsel %vm1045, %v10958, %v10959
      %v10961 = vrot.slane %v10959, 4
      %v10962 = vrot.slane %v10546, 5
      %v10963 = vsel %vm1045, %v10961, %v10962
      %v10964 = vrot.slane %v10920, 5
      %v10965 = vrot.slane %v10964, 4
      %v10966 = vrot.slane %v10548, 5
      %v10967 = vsel %vm1045, %v10965, %v10966
      %v10968 = vrot.slane %v10966, 4
      %v10969 = vrot.slane %v10549, 5
      %v10970 = vsel %vm1045, %v10968, %v10969
      %v10971 = vrot.slane %v10921, 5
      %v10972 = vrot.slane %v10971, 4
      %v10973 = vrot.slane %v10551, 5
      %v10974 = vsel %vm1045, %v10972, %v10973
      %v10975 = vrot.slane %v10973, 4
      %v10976 = vrot.slane %v10552, 5
      %v10977 = vsel %vm1045, %v10975, %v10976
      %v10978 = vrot.slane %v10922, 5
      %v10979 = vrot.slane %v10978, 4
      %v10980 = vrot.slane %v10554, 5
      %v10981 = vsel %vm1045, %v10979, %v10980
      %v10982 = vrot.slane %v10980, 4
      %v10983 = vrot.slane %v10555, 5
      %v10984 = vsel %vm1045, %v10982, %v10983
      %v10985 = vrot.slane %v10923, 5
      %v10986 = vrot.slane %v10985, 4
      %v10987 = vrot.slane %v10557, 5
      %v10988 = vsel %vm1045, %v10986, %v10987
      %v10989 = vrot.slane %v10987, 4
      %v10990 = vrot.slane %v10558, 5
      %v10991 = vsel %vm1045, %v10989, %v10990
      %v10992 = vrot.slane %v10924, 5
      %v10993 = vrot.slane %v10992, 4
      %v10994 = vrot.slane %v10560, 5
      %v10995 = vsel %vm1045, %v10993, %v10994
      %v10996 = vrot.slane %v10994, 4
      %v10997 = vrot.slane %v10561, 5
      %v10998 = vsel %vm1045, %v10996, %v10997
      %v10999 = vrot.slane %v10925, 5
      %v11000 = vrot.slane %v10999, 4
      %v11001 = vrot.slane %v10563, 5
      %v11002 = vsel %vm1045, %v11000, %v11001
      %v11003 = vrot.slane %v11001, 4
      %v11004 = vrot.slane %v10564, 5
      %v11005 = vsel %vm1045, %v11003, %v11004
      %v11006 = vld [vmem:[%s8378] sm:$0xf]
      %v11007 = vld [vmem:[%s8378 + $0x4] sm:$0xf]
      %v11008 = vld [vmem:[%s8378 + $0x8] sm:$0xf]
      %v11009 = vld [vmem:[%s8378 + $0xc] sm:$0xf]
      %v11010 = vld [vmem:[%s8378 + $0x10] sm:$0xf]
      %v11011 = vld [vmem:[%s8378 + $0x14] sm:$0xf]
      %v11012 = vld [vmem:[%s8378 + $0x18] sm:$0xf]
      %v11013 = vld [vmem:[%s8378 + $0x1c] sm:$0xf]
      %v11014 = vld [vmem:[%s8378 + $0x20] sm:$0xf]
      %v11015 = vld [vmem:[%s8378 + $0x24] sm:$0xf]
      %v11016 = vld [vmem:[%s8378 + $0x28] sm:$0xf]
      %v11017 = vld [vmem:[%s8378 + $0x2c] sm:$0xf]
      %v11018 = vld [vmem:[%s8378 + $0x30] sm:$0xf]
      %v11019 = vld [vmem:[%s8378 + $0x34] sm:$0xf]
      %v11020 = vld [vmem:[%s8378 + $0x38] sm:$0xf]
      %v11021 = vld [vmem:[%s8378 + $0x3c] sm:$0xf]
      %v11022 = vunpack.c.l.b16 %v10953
      %v11023 = vunpack.c.l.b16 %v10956
      %v11024 = vunpack.c.l.b16 %v10960
      %v11025 = vunpack.c.l.b16 %v10963
      %v11026 = vunpack.c.l.b16 %v10967
      %v11027 = vunpack.c.l.b16 %v10970
      %v11028 = vunpack.c.l.b16 %v10974
      %v11029 = vunpack.c.l.b16 %v10977
      %v11030 = vunpack.c.l.b16 %v10981
      %v11031 = vunpack.c.l.b16 %v10984
      %v11032 = vunpack.c.l.b16 %v10988
      %v11033 = vunpack.c.l.b16 %v10991
      %v11034 = vunpack.c.l.b16 %v10995
      %v11035 = vunpack.c.l.b16 %v10998
      %v11036 = vunpack.c.l.b16 %v11002
      %v11037 = vunpack.c.l.b16 %v11005
      %v11038 = vpack.c.b16 %v11023, %v11022
      %v11039 = vpack.c.b16 %v11025, %v11024
      %v11040 = vpack.c.b16 %v11027, %v11026
      %v11041 = vpack.c.b16 %v11029, %v11028
      %v11042 = vpack.c.b16 %v11031, %v11030
      %v11043 = vpack.c.b16 %v11033, %v11032
      %v11044 = vpack.c.b16 %v11035, %v11034
      %v11045 = vpack.c.b16 %v11037, %v11036
      %v11070 = vunpack.c.l.b16 %v11006
      %v11071 = vunpack.c.l.b16 %v11007
      %v11072 = vunpack.c.l.b16 %v11008
      %v11073 = vunpack.c.l.b16 %v11009
      %v11074 = vunpack.c.l.b16 %v11010
      %v11075 = vunpack.c.l.b16 %v11011
      %v11076 = vunpack.c.l.b16 %v11012
      %v11077 = vunpack.c.l.b16 %v11013
      %v11078 = vunpack.c.l.b16 %v11014
      %v11079 = vunpack.c.l.b16 %v11015
      %v11080 = vunpack.c.l.b16 %v11016
      %v11081 = vunpack.c.l.b16 %v11017
      %v11082 = vunpack.c.l.b16 %v11018
      %v11083 = vunpack.c.l.b16 %v11019
      %v11084 = vunpack.c.l.b16 %v11020
      %v11085 = vunpack.c.l.b16 %v11021
      %v11086 = vpack.c.b16 %v11071, %v11070
      %v11087 = vpack.c.b16 %v11073, %v11072
      %v11088 = vpack.c.b16 %v11075, %v11074
      %v11089 = vpack.c.b16 %v11077, %v11076
      %v11090 = vpack.c.b16 %v11079, %v11078
      %v11091 = vpack.c.b16 %v11081, %v11080
      %v11092 = vpack.c.b16 %v11083, %v11082
      %v11093 = vpack.c.b16 %v11085, %v11084
      %11102 = vmatpush.bf16.msra.mxu0 %v11093
      %11103 = vmatpush.bf16.msra.mxu0 %v11092
      %11104 = vmatpush.bf16.msra.mxu0 %v11091
      %11105 = vmatpush.bf16.msra.mxu0 %v11090
      %11106 = vmatpush.bf16.msra.mxu0 %v11089
      %11107 = vmatpush.bf16.msra.mxu0 %v11088
      %11108 = vmatpush.bf16.msra.mxu0 %v11087
      %11109 = vmatpush.bf16.msra.mxu0 %v11086
      %11110 = vmatmul.bf16.gmra.mxu0 %v11038
      %v11111 = vpop.f32.mrf.mxu0
      %v11112 = vadd.f32 0.0, %v11111
      %v11113 = vpop.f32.mrf.mxu0
      %v11114 = vadd.f32 0.0, %v11113
      %11115 = vmatmul.bf16.gmra.mxu0 %v11039
      %v11116 = vpop.f32.mrf.mxu0
      %v11117 = vadd.f32 0.0, %v11116
      %v11118 = vpop.f32.mrf.mxu0
      %v11119 = vadd.f32 0.0, %v11118
      %11120 = vmatmul.bf16.gmra.mxu0 %v11040
      %v11121 = vpop.f32.mrf.mxu0
      %v11122 = vadd.f32 0.0, %v11121
      %v11123 = vpop.f32.mrf.mxu0
      %v11124 = vadd.f32 0.0, %v11123
      %11125 = vmatmul.bf16.gmra.mxu0 %v11041
      %v11126 = vpop.f32.mrf.mxu0
      %v11127 = vadd.f32 0.0, %v11126
      %v11128 = vpop.f32.mrf.mxu0
      %v11129 = vadd.f32 0.0, %v11128
      %11130 = vmatmul.bf16.gmra.mxu0 %v11042
      %v11131 = vpop.f32.mrf.mxu0
      %v11132 = vadd.f32 0.0, %v11131
      %v11133 = vpop.f32.mrf.mxu0
      %v11134 = vadd.f32 0.0, %v11133
      %11135 = vmatmul.bf16.gmra.mxu0 %v11043
      %v11136 = vpop.f32.mrf.mxu0
      %v11137 = vadd.f32 0.0, %v11136
      %v11138 = vpop.f32.mrf.mxu0
      %v11139 = vadd.f32 0.0, %v11138
      %11140 = vmatmul.bf16.gmra.mxu0 %v11044
      %v11141 = vpop.f32.mrf.mxu0
      %v11142 = vadd.f32 0.0, %v11141
      %v11143 = vpop.f32.mrf.mxu0
      %v11144 = vadd.f32 0.0, %v11143
      %11145 = vmatmul.bf16.gmra.mxu0 %v11045
      %v11146 = vpop.f32.mrf.mxu0
      %v11147 = vadd.f32 0.0, %v11146
      %v11148 = vpop.f32.mrf.mxu0
      %v11149 = vadd.f32 0.0, %v11148
      %11150 = vdwg.mxu0
      %v11151 = vadd.f32 %v10902, %v11112
      %v11152 = vadd.f32 %v10903, %v11114
      %v11153 = vadd.f32 %v10904, %v11117
      %v11154 = vadd.f32 %v10905, %v11119
      %v11155 = vadd.f32 %v10906, %v11122
      %v11156 = vadd.f32 %v10907, %v11124
      %v11157 = vadd.f32 %v10908, %v11127
      %v11158 = vadd.f32 %v10909, %v11129
      %v11159 = vadd.f32 %v10910, %v11132
      %v11160 = vadd.f32 %v10911, %v11134
      %v11161 = vadd.f32 %v10912, %v11137
      %v11162 = vadd.f32 %v10913, %v11139
      %v11163 = vadd.f32 %v10914, %v11142
      %v11164 = vadd.f32 %v10915, %v11144
      %v11165 = vadd.f32 %v10916, %v11147
      %v11166 = vadd.f32 %v10917, %v11149
      %s11167 = smul.u32 %s5736, 3
      %s11168 = smul.addr %s11167, 4
      %s11169 = scalar_lea.vmem [#allocation2], %s11168
      %v11170 = vld [vmem:[%s11169] sm:$0xf]
      %v11171 = vld [vmem:[%s11169 + $0x4] sm:$0xf]
      %v11172 = vld [vmem:[%s11169 + $0xc] sm:$0xf]
      %v11173 = vld [vmem:[%s11169 + $0x10] sm:$0xf]
      %v11174 = vld [vmem:[%s11169 + $0x18] sm:$0xf]
      %v11175 = vld [vmem:[%s11169 + $0x1c] sm:$0xf]
      %v11176 = vld [vmem:[%s11169 + $0x24] sm:$0xf]
      %v11177 = vld [vmem:[%s11169 + $0x28] sm:$0xf]
      %v11178 = vld [vmem:[%s11169 + $0x30] sm:$0xf]
      %v11179 = vld [vmem:[%s11169 + $0x34] sm:$0xf]
      %v11180 = vld [vmem:[%s11169 + $0x3c] sm:$0xf]
      %v11181 = vld [vmem:[%s11169 + $0x40] sm:$0xf]
      %v11182 = vld [vmem:[%s11169 + $0x48] sm:$0xf]
      %v11183 = vld [vmem:[%s11169 + $0x4c] sm:$0xf]
      %v11184 = vld [vmem:[%s11169 + $0x54] sm:$0xf]
      %v11185 = vld [vmem:[%s11169 + $0x58] sm:$0xf]
      %v11186 = vld [vmem:[%s8559] sm:$0xf]
      %v11187 = vld [vmem:[%s8559 + $0x4] sm:$0xf]
      %v11188 = vld [vmem:[%s8559 + $0x8] sm:$0xf]
      %v11189 = vld [vmem:[%s8559 + $0xc] sm:$0xf]
      %v11190 = vld [vmem:[%s8559 + $0x10] sm:$0xf]
      %v11191 = vld [vmem:[%s8559 + $0x14] sm:$0xf]
      %v11192 = vld [vmem:[%s8559 + $0x18] sm:$0xf]
      %v11193 = vld [vmem:[%s8559 + $0x1c] sm:$0xf]
      %v11194 = vld [vmem:[%s8559 + $0x20] sm:$0xf]
      %v11195 = vld [vmem:[%s8559 + $0x24] sm:$0xf]
      %v11196 = vld [vmem:[%s8559 + $0x28] sm:$0xf]
      %v11197 = vld [vmem:[%s8559 + $0x2c] sm:$0xf]
      %v11198 = vld [vmem:[%s8559 + $0x30] sm:$0xf]
      %v11199 = vld [vmem:[%s8559 + $0x34] sm:$0xf]
      %v11200 = vld [vmem:[%s8559 + $0x38] sm:$0xf]
      %v11201 = vld [vmem:[%s8559 + $0x3c] sm:$0xf]
      %v11218 = vunpack.c.l.b16 %v11170
      %v11219 = vunpack.c.l.b16 %v11171
      %v11220 = vunpack.c.l.b16 %v11172
      %v11221 = vunpack.c.l.b16 %v11173
      %v11222 = vunpack.c.l.b16 %v11174
      %v11223 = vunpack.c.l.b16 %v11175
      %v11224 = vunpack.c.l.b16 %v11176
      %v11225 = vunpack.c.l.b16 %v11177
      %v11226 = vunpack.c.l.b16 %v11178
      %v11227 = vunpack.c.l.b16 %v11179
      %v11228 = vunpack.c.l.b16 %v11180
      %v11229 = vunpack.c.l.b16 %v11181
      %v11230 = vunpack.c.l.b16 %v11182
      %v11231 = vunpack.c.l.b16 %v11183
      %v11232 = vunpack.c.l.b16 %v11184
      %v11233 = vunpack.c.l.b16 %v11185
      %v11234 = vpack.c.b16 %v11219, %v11218
      %v11235 = vpack.c.b16 %v11221, %v11220
      %v11236 = vpack.c.b16 %v11223, %v11222
      %v11237 = vpack.c.b16 %v11225, %v11224
      %v11238 = vpack.c.b16 %v11227, %v11226
      %v11239 = vpack.c.b16 %v11229, %v11228
      %v11240 = vpack.c.b16 %v11231, %v11230
      %v11241 = vpack.c.b16 %v11233, %v11232
      %v11266 = vunpack.c.l.b16 %v11186
      %v11267 = vunpack.c.l.b16 %v11187
      %v11268 = vunpack.c.l.b16 %v11188
      %v11269 = vunpack.c.l.b16 %v11189
      %v11270 = vunpack.c.l.b16 %v11190
      %v11271 = vunpack.c.l.b16 %v11191
      %v11272 = vunpack.c.l.b16 %v11192
      %v11273 = vunpack.c.l.b16 %v11193
      %v11274 = vunpack.c.l.b16 %v11194
      %v11275 = vunpack.c.l.b16 %v11195
      %v11276 = vunpack.c.l.b16 %v11196
      %v11277 = vunpack.c.l.b16 %v11197
      %v11278 = vunpack.c.l.b16 %v11198
      %v11279 = vunpack.c.l.b16 %v11199
      %v11280 = vunpack.c.l.b16 %v11200
      %v11281 = vunpack.c.l.b16 %v11201
      %v11282 = vpack.c.b16 %v11267, %v11266
      %v11283 = vpack.c.b16 %v11269, %v11268
      %v11284 = vpack.c.b16 %v11271, %v11270
      %v11285 = vpack.c.b16 %v11273, %v11272
      %v11286 = vpack.c.b16 %v11275, %v11274
      %v11287 = vpack.c.b16 %v11277, %v11276
      %v11288 = vpack.c.b16 %v11279, %v11278
      %v11289 = vpack.c.b16 %v11281, %v11280
      %11298 = vmatpush.bf16.msra.mxu0 %v11289
      %11299 = vmatpush.bf16.msra.mxu0 %v11288
      %11300 = vmatpush.bf16.msra.mxu0 %v11287
      %11301 = vmatpush.bf16.msra.mxu0 %v11286
      %11302 = vmatpush.bf16.msra.mxu0 %v11285
      %11303 = vmatpush.bf16.msra.mxu0 %v11284
      %11304 = vmatpush.bf16.msra.mxu0 %v11283
      %11305 = vmatpush.bf16.msra.mxu0 %v11282
      %11306 = vmatmul.bf16.gmra.mxu0 %v11234
      %v11307 = vpop.f32.mrf.mxu0
      %v11308 = vadd.f32 0.0, %v11307
      %v11309 = vpop.f32.mrf.mxu0
      %v11310 = vadd.f32 0.0, %v11309
      %11311 = vmatmul.bf16.gmra.mxu0 %v11235
      %v11312 = vpop.f32.mrf.mxu0
      %v11313 = vadd.f32 0.0, %v11312
      %v11314 = vpop.f32.mrf.mxu0
      %v11315 = vadd.f32 0.0, %v11314
      %11316 = vmatmul.bf16.gmra.mxu0 %v11236
      %v11317 = vpop.f32.mrf.mxu0
      %v11318 = vadd.f32 0.0, %v11317
      %v11319 = vpop.f32.mrf.mxu0
      %v11320 = vadd.f32 0.0, %v11319
      %11321 = vmatmul.bf16.gmra.mxu0 %v11237
      %v11322 = vpop.f32.mrf.mxu0
      %v11323 = vadd.f32 0.0, %v11322
      %v11324 = vpop.f32.mrf.mxu0
      %v11325 = vadd.f32 0.0, %v11324
      %11326 = vmatmul.bf16.gmra.mxu0 %v11238
      %v11327 = vpop.f32.mrf.mxu0
      %v11328 = vadd.f32 0.0, %v11327
      %v11329 = vpop.f32.mrf.mxu0
      %v11330 = vadd.f32 0.0, %v11329
      %11331 = vmatmul.bf16.gmra.mxu0 %v11239
      %v11332 = vpop.f32.mrf.mxu0
      %v11333 = vadd.f32 0.0, %v11332
      %v11334 = vpop.f32.mrf.mxu0
      %v11335 = vadd.f32 0.0, %v11334
      %11336 = vmatmul.bf16.gmra.mxu0 %v11240
      %v11337 = vpop.f32.mrf.mxu0
      %v11338 = vadd.f32 0.0, %v11337
      %v11339 = vpop.f32.mrf.mxu0
      %v11340 = vadd.f32 0.0, %v11339
      %11341 = vmatmul.bf16.gmra.mxu0 %v11241
      %v11342 = vpop.f32.mrf.mxu0
      %v11343 = vadd.f32 0.0, %v11342
      %v11344 = vpop.f32.mrf.mxu0
      %v11345 = vadd.f32 0.0, %v11344
      %11346 = vdwg.mxu0
      %v11347 = vadd.f32 %v11151, %v11308
      %v11348 = vadd.f32 %v11152, %v11310
      %v11349 = vadd.f32 %v11153, %v11313
      %v11350 = vadd.f32 %v11154, %v11315
      %v11351 = vadd.f32 %v11155, %v11318
      %v11352 = vadd.f32 %v11156, %v11320
      %v11353 = vadd.f32 %v11157, %v11323
      %v11354 = vadd.f32 %v11158, %v11325
      %v11355 = vadd.f32 %v11159, %v11328
      %v11356 = vadd.f32 %v11160, %v11330
      %v11357 = vadd.f32 %v11161, %v11333
      %v11358 = vadd.f32 %v11162, %v11335
      %v11359 = vadd.f32 %v11163, %v11338
      %v11360 = vadd.f32 %v11164, %v11340
      %v11361 = vadd.f32 %v11165, %v11343
      %v11362 = vadd.f32 %v11166, %v11345
      %v11363 = vld [vmem:[%s11169] sm:$0xf]
      %v11364 = vld [vmem:[%s11169 + $0x4] sm:$0xf]
      %v11365 = vld [vmem:[%s11169 + $0x8] sm:$0x1]
      %v11366 = vld [vmem:[%s11169 + $0xc] sm:$0xf]
      %v11367 = vld [vmem:[%s11169 + $0x10] sm:$0xf]
      %v11368 = vld [vmem:[%s11169 + $0x14] sm:$0x1]
      %v11369 = vld [vmem:[%s11169 + $0x18] sm:$0xf]
      %v11370 = vld [vmem:[%s11169 + $0x1c] sm:$0xf]
      %v11371 = vld [vmem:[%s11169 + $0x20] sm:$0x1]
      %v11372 = vld [vmem:[%s11169 + $0x24] sm:$0xf]
      %v11373 = vld [vmem:[%s11169 + $0x28] sm:$0xf]
      %v11374 = vld [vmem:[%s11169 + $0x2c] sm:$0x1]
      %v11375 = vld [vmem:[%s11169 + $0x30] sm:$0xf]
      %v11376 = vld [vmem:[%s11169 + $0x34] sm:$0xf]
      %v11377 = vld [vmem:[%s11169 + $0x38] sm:$0x1]
      %v11378 = vld [vmem:[%s11169 + $0x3c] sm:$0xf]
      %v11379 = vld [vmem:[%s11169 + $0x40] sm:$0xf]
      %v11380 = vld [vmem:[%s11169 + $0x44] sm:$0x1]
      %v11381 = vld [vmem:[%s11169 + $0x48] sm:$0xf]
      %v11382 = vld [vmem:[%s11169 + $0x4c] sm:$0xf]
      %v11383 = vld [vmem:[%s11169 + $0x50] sm:$0x1]
      %v11384 = vld [vmem:[%s11169 + $0x54] sm:$0xf]
      %v11385 = vld [vmem:[%s11169 + $0x58] sm:$0xf]
      %v11386 = vld [vmem:[%s11169 + $0x5c] sm:$0x1]
      %v11388 = vshrl.u32 %v11363, 16
      %v11390 = vrot.slane %v11388, 4
      %v11391 = vshll.u32 %v11363, 16
      %v11393 = vrot.slane %v11391, 5
      %v11394 = vor.u32 %v11390, %v11393
      %v11395 = vrot.slane %v11394, 4
      %v11397 = vshll.u32 %v11364, 16
      %v11399 = vrot.slane %v11397, 5
      %v11400 = vsel %vm375, %v11395, %v11399
      %v11401 = vshrl.u32 %v11364, 16
      %v11403 = vrot.slane %v11401, 4
      %v11404 = vor.u32 %v11403, %v11399
      %v11405 = vrot.slane %v11404, 4
      %v11407 = vshll.u32 %v11365, 16
      %v11409 = vrot.slane %v11407, 5
      %v11410 = vsel %vm375, %v11405, %v11409
      %v11412 = vshrl.u32 %v11366, 16
      %v11414 = vrot.slane %v11412, 4
      %v11415 = vshll.u32 %v11366, 16
      %v11417 = vrot.slane %v11415, 5
      %v11418 = vor.u32 %v11414, %v11417
      %v11419 = vrot.slane %v11418, 4
      %v11421 = vshll.u32 %v11367, 16
      %v11423 = vrot.slane %v11421, 5
      %v11424 = vsel %vm375, %v11419, %v11423
      %v11425 = vshrl.u32 %v11367, 16
      %v11427 = vrot.slane %v11425, 4
      %v11428 = vor.u32 %v11427, %v11423
      %v11429 = vrot.slane %v11428, 4
      %v11431 = vshll.u32 %v11368, 16
      %v11433 = vrot.slane %v11431, 5
      %v11434 = vsel %vm375, %v11429, %v11433
      %v11436 = vshrl.u32 %v11369, 16
      %v11438 = vrot.slane %v11436, 4
      %v11439 = vshll.u32 %v11369, 16
      %v11441 = vrot.slane %v11439, 5
      %v11442 = vor.u32 %v11438, %v11441
      %v11443 = vrot.slane %v11442, 4
      %v11445 = vshll.u32 %v11370, 16
      %v11447 = vrot.slane %v11445, 5
      %v11448 = vsel %vm375, %v11443, %v11447
      %v11449 = vshrl.u32 %v11370, 16
      %v11451 = vrot.slane %v11449, 4
      %v11452 = vor.u32 %v11451, %v11447
      %v11453 = vrot.slane %v11452, 4
      %v11455 = vshll.u32 %v11371, 16
      %v11457 = vrot.slane %v11455, 5
      %v11458 = vsel %vm375, %v11453, %v11457
      %v11460 = vshrl.u32 %v11372, 16
      %v11462 = vrot.slane %v11460, 4
      %v11463 = vshll.u32 %v11372, 16
      %v11465 = vrot.slane %v11463, 5
      %v11466 = vor.u32 %v11462, %v11465
      %v11467 = vrot.slane %v11466, 4
      %v11469 = vshll.u32 %v11373, 16
      %v11471 = vrot.slane %v11469, 5
      %v11472 = vsel %vm375, %v11467, %v11471
      %v11473 = vshrl.u32 %v11373, 16
      %v11475 = vrot.slane %v11473, 4
      %v11476 = vor.u32 %v11475, %v11471
      %v11477 = vrot.slane %v11476, 4
      %v11479 = vshll.u32 %v11374, 16
      %v11481 = vrot.slane %v11479, 5
      %v11482 = vsel %vm375, %v11477, %v11481
      %v11484 = vshrl.u32 %v11375, 16
      %v11486 = vrot.slane %v11484, 4
      %v11487 = vshll.u32 %v11375, 16
      %v11489 = vrot.slane %v11487, 5
      %v11490 = vor.u32 %v11486, %v11489
      %v11491 = vrot.slane %v11490, 4
      %v11493 = vshll.u32 %v11376, 16
      %v11495 = vrot.slane %v11493, 5
      %v11496 = vsel %vm375, %v11491, %v11495
      %v11497 = vshrl.u32 %v11376, 16
      %v11499 = vrot.slane %v11497, 4
      %v11500 = vor.u32 %v11499, %v11495
      %v11501 = vrot.slane %v11500, 4
      %v11503 = vshll.u32 %v11377, 16
      %v11505 = vrot.slane %v11503, 5
      %v11506 = vsel %vm375, %v11501, %v11505
      %v11508 = vshrl.u32 %v11378, 16
      %v11510 = vrot.slane %v11508, 4
      %v11511 = vshll.u32 %v11378, 16
      %v11513 = vrot.slane %v11511, 5
      %v11514 = vor.u32 %v11510, %v11513
      %v11515 = vrot.slane %v11514, 4
      %v11517 = vshll.u32 %v11379, 16
      %v11519 = vrot.slane %v11517, 5
      %v11520 = vsel %vm375, %v11515, %v11519
      %v11521 = vshrl.u32 %v11379, 16
      %v11523 = vrot.slane %v11521, 4
      %v11524 = vor.u32 %v11523, %v11519
      %v11525 = vrot.slane %v11524, 4
      %v11527 = vshll.u32 %v11380, 16
      %v11529 = vrot.slane %v11527, 5
      %v11530 = vsel %vm375, %v11525, %v11529
      %v11532 = vshrl.u32 %v11381, 16
      %v11534 = vrot.slane %v11532, 4
      %v11535 = vshll.u32 %v11381, 16
      %v11537 = vrot.slane %v11535, 5
      %v11538 = vor.u32 %v11534, %v11537
      %v11539 = vrot.slane %v11538, 4
      %v11541 = vshll.u32 %v11382, 16
      %v11543 = vrot.slane %v11541, 5
      %v11544 = vsel %vm375, %v11539, %v11543
      %v11545 = vshrl.u32 %v11382, 16
      %v11547 = vrot.slane %v11545, 4
      %v11548 = vor.u32 %v11547, %v11543
      %v11549 = vrot.slane %v11548, 4
      %v11551 = vshll.u32 %v11383, 16
      %v11553 = vrot.slane %v11551, 5
      %v11554 = vsel %vm375, %v11549, %v11553
      %v11556 = vshrl.u32 %v11384, 16
      %v11558 = vrot.slane %v11556, 4
      %v11559 = vshll.u32 %v11384, 16
      %v11561 = vrot.slane %v11559, 5
      %v11562 = vor.u32 %v11558, %v11561
      %v11563 = vrot.slane %v11562, 4
      %v11565 = vshll.u32 %v11385, 16
      %v11567 = vrot.slane %v11565, 5
      %v11568 = vsel %vm375, %v11563, %v11567
      %v11569 = vshrl.u32 %v11385, 16
      %v11571 = vrot.slane %v11569, 4
      %v11572 = vor.u32 %v11571, %v11567
      %v11573 = vrot.slane %v11572, 4
      %v11575 = vshll.u32 %v11386, 16
      %v11577 = vrot.slane %v11575, 5
      %v11578 = vsel %vm375, %v11573, %v11577
      %v11579 = vld [vmem:[%s8953] sm:$0xf]
      %v11580 = vld [vmem:[%s8953 + $0x4] sm:$0xf]
      %v11581 = vld [vmem:[%s8953 + $0x8] sm:$0xf]
      %v11582 = vld [vmem:[%s8953 + $0xc] sm:$0xf]
      %v11583 = vld [vmem:[%s8953 + $0x10] sm:$0xf]
      %v11584 = vld [vmem:[%s8953 + $0x14] sm:$0xf]
      %v11585 = vld [vmem:[%s8953 + $0x18] sm:$0xf]
      %v11586 = vld [vmem:[%s8953 + $0x1c] sm:$0xf]
      %v11587 = vld [vmem:[%s8953 + $0x20] sm:$0xf]
      %v11588 = vld [vmem:[%s8953 + $0x24] sm:$0xf]
      %v11589 = vld [vmem:[%s8953 + $0x28] sm:$0xf]
      %v11590 = vld [vmem:[%s8953 + $0x2c] sm:$0xf]
      %v11591 = vld [vmem:[%s8953 + $0x30] sm:$0xf]
      %v11592 = vld [vmem:[%s8953 + $0x34] sm:$0xf]
      %v11593 = vld [vmem:[%s8953 + $0x38] sm:$0xf]
      %v11594 = vld [vmem:[%s8953 + $0x3c] sm:$0xf]
      %v11595 = vunpack.c.l.b16 %v11400
      %v11596 = vunpack.c.l.b16 %v11410
      %v11597 = vunpack.c.l.b16 %v11424
      %v11598 = vunpack.c.l.b16 %v11434
      %v11599 = vunpack.c.l.b16 %v11448
      %v11600 = vunpack.c.l.b16 %v11458
      %v11601 = vunpack.c.l.b16 %v11472
      %v11602 = vunpack.c.l.b16 %v11482
      %v11603 = vunpack.c.l.b16 %v11496
      %v11604 = vunpack.c.l.b16 %v11506
      %v11605 = vunpack.c.l.b16 %v11520
      %v11606 = vunpack.c.l.b16 %v11530
      %v11607 = vunpack.c.l.b16 %v11544
      %v11608 = vunpack.c.l.b16 %v11554
      %v11609 = vunpack.c.l.b16 %v11568
      %v11610 = vunpack.c.l.b16 %v11578
      %v11611 = vpack.c.b16 %v11596, %v11595
      %v11612 = vpack.c.b16 %v11598, %v11597
      %v11613 = vpack.c.b16 %v11600, %v11599
      %v11614 = vpack.c.b16 %v11602, %v11601
      %v11615 = vpack.c.b16 %v11604, %v11603
      %v11616 = vpack.c.b16 %v11606, %v11605
      %v11617 = vpack.c.b16 %v11608, %v11607
      %v11618 = vpack.c.b16 %v11610, %v11609
      %v11643 = vunpack.c.l.b16 %v11579
      %v11644 = vunpack.c.l.b16 %v11580
      %v11645 = vunpack.c.l.b16 %v11581
      %v11646 = vunpack.c.l.b16 %v11582
      %v11647 = vunpack.c.l.b16 %v11583
      %v11648 = vunpack.c.l.b16 %v11584
      %v11649 = vunpack.c.l.b16 %v11585
      %v11650 = vunpack.c.l.b16 %v11586
      %v11651 = vunpack.c.l.b16 %v11587
      %v11652 = vunpack.c.l.b16 %v11588
      %v11653 = vunpack.c.l.b16 %v11589
      %v11654 = vunpack.c.l.b16 %v11590
      %v11655 = vunpack.c.l.b16 %v11591
      %v11656 = vunpack.c.l.b16 %v11592
      %v11657 = vunpack.c.l.b16 %v11593
      %v11658 = vunpack.c.l.b16 %v11594
      %v11659 = vpack.c.b16 %v11644, %v11643
      %v11660 = vpack.c.b16 %v11646, %v11645
      %v11661 = vpack.c.b16 %v11648, %v11647
      %v11662 = vpack.c.b16 %v11650, %v11649
      %v11663 = vpack.c.b16 %v11652, %v11651
      %v11664 = vpack.c.b16 %v11654, %v11653
      %v11665 = vpack.c.b16 %v11656, %v11655
      %v11666 = vpack.c.b16 %v11658, %v11657
      %11675 = vmatpush.bf16.msra.mxu0 %v11666
      %11676 = vmatpush.bf16.msra.mxu0 %v11665
      %11677 = vmatpush.bf16.msra.mxu0 %v11664
      %11678 = vmatpush.bf16.msra.mxu0 %v11663
      %11679 = vmatpush.bf16.msra.mxu0 %v11662
      %11680 = vmatpush.bf16.msra.mxu0 %v11661
      %11681 = vmatpush.bf16.msra.mxu0 %v11660
      %11682 = vmatpush.bf16.msra.mxu0 %v11659
      %11683 = vmatmul.bf16.gmra.mxu0 %v11611
      %v11684 = vpop.f32.mrf.mxu0
      %v11685 = vadd.f32 0.0, %v11684
      %v11686 = vpop.f32.mrf.mxu0
      %v11687 = vadd.f32 0.0, %v11686
      %11688 = vmatmul.bf16.gmra.mxu0 %v11612
      %v11689 = vpop.f32.mrf.mxu0
      %v11690 = vadd.f32 0.0, %v11689
      %v11691 = vpop.f32.mrf.mxu0
      %v11692 = vadd.f32 0.0, %v11691
      %11693 = vmatmul.bf16.gmra.mxu0 %v11613
      %v11694 = vpop.f32.mrf.mxu0
      %v11695 = vadd.f32 0.0, %v11694
      %v11696 = vpop.f32.mrf.mxu0
      %v11697 = vadd.f32 0.0, %v11696
      %11698 = vmatmul.bf16.gmra.mxu0 %v11614
      %v11699 = vpop.f32.mrf.mxu0
      %v11700 = vadd.f32 0.0, %v11699
      %v11701 = vpop.f32.mrf.mxu0
      %v11702 = vadd.f32 0.0, %v11701
      %11703 = vmatmul.bf16.gmra.mxu0 %v11615
      %v11704 = vpop.f32.mrf.mxu0
      %v11705 = vadd.f32 0.0, %v11704
      %v11706 = vpop.f32.mrf.mxu0
      %v11707 = vadd.f32 0.0, %v11706
      %11708 = vmatmul.bf16.gmra.mxu0 %v11616
      %v11709 = vpop.f32.mrf.mxu0
      %v11710 = vadd.f32 0.0, %v11709
      %v11711 = vpop.f32.mrf.mxu0
      %v11712 = vadd.f32 0.0, %v11711
      %11713 = vmatmul.bf16.gmra.mxu0 %v11617
      %v11714 = vpop.f32.mrf.mxu0
      %v11715 = vadd.f32 0.0, %v11714
      %v11716 = vpop.f32.mrf.mxu0
      %v11717 = vadd.f32 0.0, %v11716
      %11718 = vmatmul.bf16.gmra.mxu0 %v11618
      %v11719 = vpop.f32.mrf.mxu0
      %v11720 = vadd.f32 0.0, %v11719
      %v11721 = vpop.f32.mrf.mxu0
      %v11722 = vadd.f32 0.0, %v11721
      %11723 = vdwg.mxu0
      %v11724 = vadd.f32 %v11347, %v11685
      %v11725 = vadd.f32 %v11348, %v11687
      %v11726 = vadd.f32 %v11349, %v11690
      %v11727 = vadd.f32 %v11350, %v11692
      %v11728 = vadd.f32 %v11351, %v11695
      %v11729 = vadd.f32 %v11352, %v11697
      %v11730 = vadd.f32 %v11353, %v11700
      %v11731 = vadd.f32 %v11354, %v11702
      %v11732 = vadd.f32 %v11355, %v11705
      %v11733 = vadd.f32 %v11356, %v11707
      %v11734 = vadd.f32 %v11357, %v11710
      %v11735 = vadd.f32 %v11358, %v11712
      %v11736 = vadd.f32 %v11359, %v11715
      %v11737 = vadd.f32 %v11360, %v11717
      %v11738 = vadd.f32 %v11361, %v11720
      %v11739 = vadd.f32 %v11362, %v11722
      %v11740 = vld [vmem:[%s11169] sm:$0xe]
      %v11741 = vld [vmem:[%s11169 + $0xc] sm:$0xe]
      %v11742 = vld [vmem:[%s11169 + $0x18] sm:$0xe]
      %v11743 = vld [vmem:[%s11169 + $0x24] sm:$0xe]
      %v11744 = vld [vmem:[%s11169 + $0x30] sm:$0xe]
      %v11745 = vld [vmem:[%s11169 + $0x3c] sm:$0xe]
      %v11746 = vld [vmem:[%s11169 + $0x48] sm:$0xe]
      %v11747 = vld [vmem:[%s11169 + $0x54] sm:$0xe]
      %v11772 = vrot.slane %v11740, 5
      %v11773 = vrot.slane %v11772, 4
      %v11774 = vrot.slane %v11364, 5
      %v11775 = vsel %vm1045, %v11773, %v11774
      %v11776 = vrot.slane %v11774, 4
      %v11777 = vrot.slane %v11365, 5
      %v11778 = vsel %vm1045, %v11776, %v11777
      %v11779 = vrot.slane %v11741, 5
      %v11780 = vrot.slane %v11779, 4
      %v11781 = vrot.slane %v11367, 5
      %v11782 = vsel %vm1045, %v11780, %v11781
      %v11783 = vrot.slane %v11781, 4
      %v11784 = vrot.slane %v11368, 5
      %v11785 = vsel %vm1045, %v11783, %v11784
      %v11786 = vrot.slane %v11742, 5
      %v11787 = vrot.slane %v11786, 4
      %v11788 = vrot.slane %v11370, 5
      %v11789 = vsel %vm1045, %v11787, %v11788
      %v11790 = vrot.slane %v11788, 4
      %v11791 = vrot.slane %v11371, 5
      %v11792 = vsel %vm1045, %v11790, %v11791
      %v11793 = vrot.slane %v11743, 5
      %v11794 = vrot.slane %v11793, 4
      %v11795 = vrot.slane %v11373, 5
      %v11796 = vsel %vm1045, %v11794, %v11795
      %v11797 = vrot.slane %v11795, 4
      %v11798 = vrot.slane %v11374, 5
      %v11799 = vsel %vm1045, %v11797, %v11798
      %v11800 = vrot.slane %v11744, 5
      %v11801 = vrot.slane %v11800, 4
      %v11802 = vrot.slane %v11376, 5
      %v11803 = vsel %vm1045, %v11801, %v11802
      %v11804 = vrot.slane %v11802, 4
      %v11805 = vrot.slane %v11377, 5
      %v11806 = vsel %vm1045, %v11804, %v11805
      %v11807 = vrot.slane %v11745, 5
      %v11808 = vrot.slane %v11807, 4
      %v11809 = vrot.slane %v11379, 5
      %v11810 = vsel %vm1045, %v11808, %v11809
      %v11811 = vrot.slane %v11809, 4
      %v11812 = vrot.slane %v11380, 5
      %v11813 = vsel %vm1045, %v11811, %v11812
      %v11814 = vrot.slane %v11746, 5
      %v11815 = vrot.slane %v11814, 4
      %v11816 = vrot.slane %v11382, 5
      %v11817 = vsel %vm1045, %v11815, %v11816
      %v11818 = vrot.slane %v11816, 4
      %v11819 = vrot.slane %v11383, 5
      %v11820 = vsel %vm1045, %v11818, %v11819
      %v11821 = vrot.slane %v11747, 5
      %v11822 = vrot.slane %v11821, 4
      %v11823 = vrot.slane %v11385, 5
      %v11824 = vsel %vm1045, %v11822, %v11823
      %v11825 = vrot.slane %v11823, 4
      %v11826 = vrot.slane %v11386, 5
      %v11827 = vsel %vm1045, %v11825, %v11826
      %v11828 = vld [vmem:[%s9203] sm:$0xf]
      %v11829 = vld [vmem:[%s9203 + $0x4] sm:$0xf]
      %v11830 = vld [vmem:[%s9203 + $0x8] sm:$0xf]
      %v11831 = vld [vmem:[%s9203 + $0xc] sm:$0xf]
      %v11832 = vld [vmem:[%s9203 + $0x10] sm:$0xf]
      %v11833 = vld [vmem:[%s9203 + $0x14] sm:$0xf]
      %v11834 = vld [vmem:[%s9203 + $0x18] sm:$0xf]
      %v11835 = vld [vmem:[%s9203 + $0x1c] sm:$0xf]
      %v11836 = vld [vmem:[%s9203 + $0x20] sm:$0xf]
      %v11837 = vld [vmem:[%s9203 + $0x24] sm:$0xf]
      %v11838 = vld [vmem:[%s9203 + $0x28] sm:$0xf]
      %v11839 = vld [vmem:[%s9203 + $0x2c] sm:$0xf]
      %v11840 = vld [vmem:[%s9203 + $0x30] sm:$0xf]
      %v11841 = vld [vmem:[%s9203 + $0x34] sm:$0xf]
      %v11842 = vld [vmem:[%s9203 + $0x38] sm:$0xf]
      %v11843 = vld [vmem:[%s9203 + $0x3c] sm:$0xf]
      %v11844 = vunpack.c.l.b16 %v11775
      %v11845 = vunpack.c.l.b16 %v11778
      %v11846 = vunpack.c.l.b16 %v11782
      %v11847 = vunpack.c.l.b16 %v11785
      %v11848 = vunpack.c.l.b16 %v11789
      %v11849 = vunpack.c.l.b16 %v11792
      %v11850 = vunpack.c.l.b16 %v11796
      %v11851 = vunpack.c.l.b16 %v11799
      %v11852 = vunpack.c.l.b16 %v11803
      %v11853 = vunpack.c.l.b16 %v11806
      %v11854 = vunpack.c.l.b16 %v11810
      %v11855 = vunpack.c.l.b16 %v11813
      %v11856 = vunpack.c.l.b16 %v11817
      %v11857 = vunpack.c.l.b16 %v11820
      %v11858 = vunpack.c.l.b16 %v11824
      %v11859 = vunpack.c.l.b16 %v11827
      %v11860 = vpack.c.b16 %v11845, %v11844
      %v11861 = vpack.c.b16 %v11847, %v11846
      %v11862 = vpack.c.b16 %v11849, %v11848
      %v11863 = vpack.c.b16 %v11851, %v11850
      %v11864 = vpack.c.b16 %v11853, %v11852
      %v11865 = vpack.c.b16 %v11855, %v11854
      %v11866 = vpack.c.b16 %v11857, %v11856
      %v11867 = vpack.c.b16 %v11859, %v11858
      %v11892 = vunpack.c.l.b16 %v11828
      %v11893 = vunpack.c.l.b16 %v11829
      %v11894 = vunpack.c.l.b16 %v11830
      %v11895 = vunpack.c.l.b16 %v11831
      %v11896 = vunpack.c.l.b16 %v11832
      %v11897 = vunpack.c.l.b16 %v11833
      %v11898 = vunpack.c.l.b16 %v11834
      %v11899 = vunpack.c.l.b16 %v11835
      %v11900 = vunpack.c.l.b16 %v11836
      %v11901 = vunpack.c.l.b16 %v11837
      %v11902 = vunpack.c.l.b16 %v11838
      %v11903 = vunpack.c.l.b16 %v11839
      %v11904 = vunpack.c.l.b16 %v11840
      %v11905 = vunpack.c.l.b16 %v11841
      %v11906 = vunpack.c.l.b16 %v11842
      %v11907 = vunpack.c.l.b16 %v11843
      %v11908 = vpack.c.b16 %v11893, %v11892
      %v11909 = vpack.c.b16 %v11895, %v11894
      %v11910 = vpack.c.b16 %v11897, %v11896
      %v11911 = vpack.c.b16 %v11899, %v11898
      %v11912 = vpack.c.b16 %v11901, %v11900
      %v11913 = vpack.c.b16 %v11903, %v11902
      %v11914 = vpack.c.b16 %v11905, %v11904
      %v11915 = vpack.c.b16 %v11907, %v11906
      %11924 = vmatpush.bf16.msra.mxu0 %v11915
      %11925 = vmatpush.bf16.msra.mxu0 %v11914
      %11926 = vmatpush.bf16.msra.mxu0 %v11913
      %11927 = vmatpush.bf16.msra.mxu0 %v11912
      %11928 = vmatpush.bf16.msra.mxu0 %v11911
      %11929 = vmatpush.bf16.msra.mxu0 %v11910
      %11930 = vmatpush.bf16.msra.mxu0 %v11909
      %11931 = vmatpush.bf16.msra.mxu0 %v11908
      %11932 = vmatmul.bf16.gmra.mxu0 %v11860
      %v11933 = vpop.f32.mrf.mxu0
      %v11934 = vadd.f32 0.0, %v11933
      %v11935 = vpop.f32.mrf.mxu0
      %v11936 = vadd.f32 0.0, %v11935
      %11937 = vmatmul.bf16.gmra.mxu0 %v11861
      %v11938 = vpop.f32.mrf.mxu0
      %v11939 = vadd.f32 0.0, %v11938
      %v11940 = vpop.f32.mrf.mxu0
      %v11941 = vadd.f32 0.0, %v11940
      %11942 = vmatmul.bf16.gmra.mxu0 %v11862
      %v11943 = vpop.f32.mrf.mxu0
      %v11944 = vadd.f32 0.0, %v11943
      %v11945 = vpop.f32.mrf.mxu0
      %v11946 = vadd.f32 0.0, %v11945
      %11947 = vmatmul.bf16.gmra.mxu0 %v11863
      %v11948 = vpop.f32.mrf.mxu0
      %v11949 = vadd.f32 0.0, %v11948
      %v11950 = vpop.f32.mrf.mxu0
      %v11951 = vadd.f32 0.0, %v11950
      %11952 = vmatmul.bf16.gmra.mxu0 %v11864
      %v11953 = vpop.f32.mrf.mxu0
      %v11954 = vadd.f32 0.0, %v11953
      %v11955 = vpop.f32.mrf.mxu0
      %v11956 = vadd.f32 0.0, %v11955
      %11957 = vmatmul.bf16.gmra.mxu0 %v11865
      %v11958 = vpop.f32.mrf.mxu0
      %v11959 = vadd.f32 0.0, %v11958
      %v11960 = vpop.f32.mrf.mxu0
      %v11961 = vadd.f32 0.0, %v11960
      %11962 = vmatmul.bf16.gmra.mxu0 %v11866
      %v11963 = vpop.f32.mrf.mxu0
      %v11964 = vadd.f32 0.0, %v11963
      %v11965 = vpop.f32.mrf.mxu0
      %v11966 = vadd.f32 0.0, %v11965
      %11967 = vmatmul.bf16.gmra.mxu0 %v11867
      %v11968 = vpop.f32.mrf.mxu0
      %v11969 = vadd.f32 0.0, %v11968
      %v11970 = vpop.f32.mrf.mxu0
      %v11971 = vadd.f32 0.0, %v11970
      %11972 = vdwg.mxu0
      %v11973 = vadd.f32 %v11724, %v11934
      %v11974 = vadd.f32 %v11725, %v11936
      %v11975 = vadd.f32 %v11726, %v11939
      %v11976 = vadd.f32 %v11727, %v11941
      %v11977 = vadd.f32 %v11728, %v11944
      %v11978 = vadd.f32 %v11729, %v11946
      %v11979 = vadd.f32 %v11730, %v11949
      %v11980 = vadd.f32 %v11731, %v11951
      %v11981 = vadd.f32 %v11732, %v11954
      %v11982 = vadd.f32 %v11733, %v11956
      %v11983 = vadd.f32 %v11734, %v11959
      %v11984 = vadd.f32 %v11735, %v11961
      %v11985 = vadd.f32 %v11736, %v11964
      %v11986 = vadd.f32 %v11737, %v11966
      %v11987 = vadd.f32 %v11738, %v11969
      %v11988 = vadd.f32 %v11739, %v11971
      %v11989 = vld [vmem:[%s4648] sm:$0xe]
      %v11990 = vld [vmem:[%s4648 + $0x4] sm:$0xf]
      %v11991 = vld [vmem:[%s4648 + $0x8] sm:$0x1]
      %v11992 = vld [vmem:[%s4648 + $0x10] sm:$0xe]
      %v11993 = vld [vmem:[%s4648 + $0x14] sm:$0xf]
      %v11994 = vld [vmem:[%s4648 + $0x18] sm:$0x1]
      %v11995 = vld [vmem:[%s4648 + $0x20] sm:$0xe]
      %v11996 = vld [vmem:[%s4648 + $0x24] sm:$0xf]
      %v11997 = vld [vmem:[%s4648 + $0x28] sm:$0x1]
      %v11998 = vld [vmem:[%s4648 + $0x30] sm:$0xe]
      %v11999 = vld [vmem:[%s4648 + $0x34] sm:$0xf]
      %v12000 = vld [vmem:[%s4648 + $0x38] sm:$0x1]
      %v12001 = vld [vmem:[%s4648 + $0x40] sm:$0xe]
      %v12002 = vld [vmem:[%s4648 + $0x44] sm:$0xf]
      %v12003 = vld [vmem:[%s4648 + $0x48] sm:$0x1]
      %v12004 = vld [vmem:[%s4648 + $0x50] sm:$0xe]
      %v12005 = vld [vmem:[%s4648 + $0x54] sm:$0xf]
      %v12006 = vld [vmem:[%s4648 + $0x58] sm:$0x1]
      %v12007 = vld [vmem:[%s4648 + $0x60] sm:$0xe]
      %v12008 = vld [vmem:[%s4648 + $0x64] sm:$0xf]
      %v12009 = vld [vmem:[%s4648 + $0x68] sm:$0x1]
      %v12010 = vld [vmem:[%s4648 + $0x70] sm:$0xe]
      %v12011 = vld [vmem:[%s4648 + $0x74] sm:$0xf]
      %v12012 = vld [vmem:[%s4648 + $0x78] sm:$0x1]
      %v12013 = vunpack.c.l.bf16 %v11989
      %v12014 = vunpack.c.l.bf16 %v11990
      %v12015 = vunpack.c.l.bf16 %v11991
      %v12016 = vunpack.c.l.bf16 %v11992
      %v12017 = vunpack.c.l.bf16 %v11993
      %v12018 = vunpack.c.l.bf16 %v11994
      %v12019 = vunpack.c.l.bf16 %v11995
      %v12020 = vunpack.c.l.bf16 %v11996
      %v12021 = vunpack.c.l.bf16 %v11997
      %v12022 = vunpack.c.l.bf16 %v11998
      %v12023 = vunpack.c.l.bf16 %v11999
      %v12024 = vunpack.c.l.bf16 %v12000
      %v12025 = vunpack.c.l.bf16 %v12001
      %v12026 = vunpack.c.l.bf16 %v12002
      %v12027 = vunpack.c.l.bf16 %v12003
      %v12028 = vunpack.c.l.bf16 %v12004
      %v12029 = vunpack.c.l.bf16 %v12005
      %v12030 = vunpack.c.l.bf16 %v12006
      %v12031 = vunpack.c.l.bf16 %v12007
      %v12032 = vunpack.c.l.bf16 %v12008
      %v12033 = vunpack.c.l.bf16 %v12009
      %v12034 = vunpack.c.l.bf16 %v12010
      %v12035 = vunpack.c.l.bf16 %v12011
      %v12036 = vunpack.c.l.bf16 %v12012
      %v12037 = vmul.f32 %v11973, %v9414
      %v12038 = vmul.f32 %v11974, %v9414
      %v12039 = vmul.f32 %v11975, %v9414
      %v12040 = vmul.f32 %v11976, %v9414
      %v12041 = vmul.f32 %v11977, %v9414
      %v12042 = vmul.f32 %v11978, %v9414
      %v12043 = vmul.f32 %v11979, %v9414
      %v12044 = vmul.f32 %v11980, %v9414
      %v12045 = vmul.f32 %v11981, %v9414
      %v12046 = vmul.f32 %v11982, %v9414
      %v12047 = vmul.f32 %v11983, %v9414
      %v12048 = vmul.f32 %v11984, %v9414
      %v12049 = vmul.f32 %v11985, %v9414
      %v12050 = vmul.f32 %v11986, %v9414
      %v12051 = vmul.f32 %v11987, %v9414
      %v12052 = vmul.f32 %v11988, %v9414
      %v12053 = vadd.f32 %v12037, %v9433
      %v12054 = vadd.f32 %v12038, %v9433
      %v12055 = vadd.f32 %v12039, %v9433
      %v12056 = vadd.f32 %v12040, %v9433
      %v12057 = vadd.f32 %v12041, %v9433
      %v12058 = vadd.f32 %v12042, %v9433
      %v12059 = vadd.f32 %v12043, %v9433
      %v12060 = vadd.f32 %v12044, %v9433
      %v12061 = vadd.f32 %v12045, %v9433
      %v12062 = vadd.f32 %v12046, %v9433
      %v12063 = vadd.f32 %v12047, %v9433
      %v12064 = vadd.f32 %v12048, %v9433
      %v12065 = vadd.f32 %v12049, %v9433
      %v12066 = vadd.f32 %v12050, %v9433
      %v12067 = vadd.f32 %v12051, %v9433
      %v12068 = vadd.f32 %v12052, %v9433
      %v12093 = vrot.slane %v12013, 2
      %v12094 = vrot.slane %v12014, 2
      %v12095 = vsel %vm9475, %v12093, %v12094
      %v12096 = vrot.slane %v12015, 2
      %v12097 = vsel %vm9475, %v12094, %v12096
      %v12098 = vrot.slane %v12016, 2
      %v12099 = vrot.slane %v12017, 2
      %v12100 = vsel %vm9475, %v12098, %v12099
      %v12101 = vrot.slane %v12018, 2
      %v12102 = vsel %vm9475, %v12099, %v12101
      %v12103 = vrot.slane %v12019, 2
      %v12104 = vrot.slane %v12020, 2
      %v12105 = vsel %vm9475, %v12103, %v12104
      %v12106 = vrot.slane %v12021, 2
      %v12107 = vsel %vm9475, %v12104, %v12106
      %v12108 = vrot.slane %v12022, 2
      %v12109 = vrot.slane %v12023, 2
      %v12110 = vsel %vm9475, %v12108, %v12109
      %v12111 = vrot.slane %v12024, 2
      %v12112 = vsel %vm9475, %v12109, %v12111
      %v12113 = vrot.slane %v12025, 2
      %v12114 = vrot.slane %v12026, 2
      %v12115 = vsel %vm9475, %v12113, %v12114
      %v12116 = vrot.slane %v12027, 2
      %v12117 = vsel %vm9475, %v12114, %v12116
      %v12118 = vrot.slane %v12028, 2
      %v12119 = vrot.slane %v12029, 2
      %v12120 = vsel %vm9475, %v12118, %v12119
      %v12121 = vrot.slane %v12030, 2
      %v12122 = vsel %vm9475, %v12119, %v12121
      %v12123 = vrot.slane %v12031, 2
      %v12124 = vrot.slane %v12032, 2
      %v12125 = vsel %vm9475, %v12123, %v12124
      %v12126 = vrot.slane %v12033, 2
      %v12127 = vsel %vm9475, %v12124, %v12126
      %v12128 = vrot.slane %v12034, 2
      %v12129 = vrot.slane %v12035, 2
      %v12130 = vsel %vm9475, %v12128, %v12129
      %v12131 = vrot.slane %v12036, 2
      %v12132 = vsel %vm9475, %v12129, %v12131
      %v12149 = vadd.f32 %v12053, %v12095
      %v12150 = vadd.f32 %v12054, %v12097
      %v12151 = vadd.f32 %v12055, %v12100
      %v12152 = vadd.f32 %v12056, %v12102
      %v12153 = vadd.f32 %v12057, %v12105
      %v12154 = vadd.f32 %v12058, %v12107
      %v12155 = vadd.f32 %v12059, %v12110
      %v12156 = vadd.f32 %v12060, %v12112
      %v12157 = vadd.f32 %v12061, %v12115
      %v12158 = vadd.f32 %v12062, %v12117
      %v12159 = vadd.f32 %v12063, %v12120
      %v12160 = vadd.f32 %v12064, %v12122
      %v12161 = vadd.f32 %v12065, %v12125
      %v12162 = vadd.f32 %v12066, %v12127
      %v12163 = vadd.f32 %v12067, %v12130
      %v12164 = vadd.f32 %v12068, %v12132
      %v12165 = vmax.f32 %v12149, 0.0
      %v12166 = vmax.f32 %v12150, 0.0
      %v12167 = vmax.f32 %v12151, 0.0
      %v12168 = vmax.f32 %v12152, 0.0
      %v12169 = vmax.f32 %v12153, 0.0
      %v12170 = vmax.f32 %v12154, 0.0
      %v12171 = vmax.f32 %v12155, 0.0
      %v12172 = vmax.f32 %v12156, 0.0
      %v12173 = vmax.f32 %v12157, 0.0
      %v12174 = vmax.f32 %v12158, 0.0
      %v12175 = vmax.f32 %v12159, 0.0
      %v12176 = vmax.f32 %v12160, 0.0
      %v12177 = vmax.f32 %v12161, 0.0
      %v12178 = vmax.f32 %v12162, 0.0
      %v12179 = vmax.f32 %v12163, 0.0
      %v12180 = vmax.f32 %v12164, 0.0
      %s12181 = smul.u32 8, 16
      %s12182 = scalar_lea.vmem %s278, %s12181
      %12183 = vst [vmem:[%s12182] sm:$0xff] %v12165
      %12184 = vst [vmem:[%s12182 + $0x8] sm:$0xff] %v12166
      %12185 = vst [vmem:[%s12182 + $0x10] sm:$0xff] %v12167
      %12186 = vst [vmem:[%s12182 + $0x18] sm:$0xff] %v12168
      %12187 = vst [vmem:[%s12182 + $0x20] sm:$0xff] %v12169
      %12188 = vst [vmem:[%s12182 + $0x28] sm:$0xff] %v12170
      %12189 = vst [vmem:[%s12182 + $0x30] sm:$0xff] %v12171
      %12190 = vst [vmem:[%s12182 + $0x38] sm:$0xff] %v12172
      %12191 = vst [vmem:[%s12182 + $0x40] sm:$0xff] %v12173
      %12192 = vst [vmem:[%s12182 + $0x48] sm:$0xff] %v12174
      %12193 = vst [vmem:[%s12182 + $0x50] sm:$0xff] %v12175
      %12194 = vst [vmem:[%s12182 + $0x58] sm:$0xff] %v12176
      %12195 = vst [vmem:[%s12182 + $0x60] sm:$0xff] %v12177
      %12196 = vst [vmem:[%s12182 + $0x68] sm:$0xff] %v12178
      %12197 = vst [vmem:[%s12182 + $0x70] sm:$0xff] %v12179
      %12198 = vst [vmem:[%s12182 + $0x78] sm:$0xff] %v12180
      %p12199 = scmp.lt.s32.totalorder %s18, 1
      %s12200 = scalar_select %p12199, %s18, 1
      %s12201 = smul.addr %s12200, 32
      %s12202 = smul.addr %s12201, 8
      %s12203 = scalar_lea.vmem %s7, %s12202
      // Predicated region
      $region49: #{basic_block_pallas.1} parent=47 // pred_check
        %p12204 = pneg %p188
      $region50: #{basic_block_pallas.1} parent=47 // pred_check_branch
        %12206 = sbr.rel (%p12204) target = $region52
      $region51: #{basic_block_pallas.1} parent=47 // pred_region
        _
      $region52: #{basic_block_pallas.1} parent=47 // pred_fallthru
        _
    $region48: #{basic_block_pallas.1} parent=5 // pred_fallthru
      _
    %p12207 = scmp.le.s32.totalorder 2, %s13
    // Predicated region
    $region53: #{basic_block_pallas.1} parent=5 // pred_check
      %p12208 = pneg %p12207
    $region54: #{basic_block_pallas.1} parent=5 // pred_check_branch
      %12210 = sbr.rel (%p12208) target = $region56
    $region55: #{basic_block_pallas.1} parent=5 // pred_region
      %s12211 = ssub.s32 %s13, 2
      // Predicated region
      $region57: #{basic_block_pallas.1} parent=55 // pred_check
        %p12212 = pneg %p194
      $region58: #{basic_block_pallas.1} parent=55 // pred_check_branch
        %12214 = sbr.rel (%p12212) target = $region60
      $region59: #{basic_block_pallas.1} parent=55 // pred_region
        %p12215 = scmp.lt.s32.totalorder %s19, 1
        %s12216 = scalar_select %p12215, %s19, 1
        %s12217 = smul.addr %s12216, 32
        %s12218 = smul.addr %s12217, 8
        %s12219 = scalar_lea.vmem %s7, %s12218
      $region60: #{basic_block_pallas.1} parent=55 // pred_fallthru
        _
    $region56: #{basic_block_pallas.1} parent=5 // pred_fallthru
      _
  $region6: #{basic_block_pallas.1} parent=0 // loop_footer
    %s17 = sadd.s32 1, %s13
  $region7: #{basic_block_pallas.1} parent=0 // loop_footer_branch
    %12 = sbr.rel target = $region3
  $region8: #{basic_block_pallas.1} parent=0 // loop_exit
    _

</llo_original>
